<compile_context>
chip_gen: v7x
topology: tpu7x:2x2x1
jax: 0.10.0
libtpu: 0.0.40
codegen_flags: <defaults>
</compile_context>

<pallas_src>
import functools

import jax
import jax.numpy as jnp
from jax import lax
from jax.experimental import pallas as pl
from jax.experimental.pallas import tpu as pltpu

block_size = 128
n_embd = 384


def _pick_batch_block(batch, seq, target_rows=256, min_blocks=2):
    """Largest per-step batch block such that (a) B divides evenly,
    (b) the fused matmul M-dim ~= target_rows (fills the 256-row MXU on
    v6e/v7x), and (c) the grid keeps >= min_blocks parallel steps so both
    v7x TensorCores get work."""
    bblk = max(1, min(batch, max(1, target_rows // max(seq, 1))))
    while bblk > 1 and (batch % bblk != 0 or batch // bblk < min_blocks):
        bblk -= 1
    return bblk


def prepare_mha_params(wqkv, wproj, bias, num_heads, param_dtype=jnp.bfloat16):
    """One-time parameter prep (do at init time, not per call):
      * fold the attention scale C**-0.5 into the q columns of Wqkv
        (the PyTorch source scales scores by n_embd**-0.5, not head_dim**-0.5),
      * zero-pad every head's column block from D to Dp = round_up(D, 128) so
        all per-head slices / concat pieces inside the kernel are 128-lane
        aligned (zero columns / zero rows contribute nothing -> exact math),
      * cast the big weights to bf16 once (halves weight DMA; f32 accumulate
        in-kernel)."""
    C = wqkv.shape[0]
    hd = wproj.shape[0]
    assert hd % num_heads == 0
    D = hd // num_heads
    Dp = ((D + 127) // 128) * 128
    scale = float(C) ** (-0.5)

    w3 = wqkv.reshape(C, 3, num_heads, D)
    w3 = w3.at[:, 0].multiply(scale)                      # fold scale into q cols
    w3 = jnp.pad(w3, ((0, 0), (0, 0), (0, 0), (0, Dp - D)))
    wqkv_p = w3.reshape(C, 3 * num_heads * Dp).astype(param_dtype)

    wp = wproj.reshape(num_heads, D, C)
    wp = jnp.pad(wp, ((0, 0), (0, Dp - D), (0, 0)))       # zero rows at padded dims
    wproj_p = wp.reshape(num_heads * Dp, C).astype(param_dtype)

    return wqkv_p, wproj_p, bias.astype(jnp.float32), Dp


def _mha_kernel(x_ref, wqkv_ref, wproj_ref, bias_ref, o_ref, *,
                num_heads, head_dim_p, seq_len):
    """Grid = (num_batch_blocks,). One block of Bblk batch elements per step."""
    M, C = x_ref.shape                    # M = Bblk * T
    T = seq_len
    Bblk = M // T
    H, Dp = num_heads, head_dim_p
    hdp = H * Dp

    # Activations arrive in native dtype; cast to bf16 on the VPU (no extra
    # HBM pass in the wrapper).
    x = x_ref[...].astype(jnp.bfloat16)                                    # (M, C)

    # Fused QKV projection for the whole batch block, f32 accumulation.
    # Attention scale is pre-folded into the q columns of the weight.
    qkv = jnp.dot(x, wqkv_ref[...], preferred_element_type=jnp.float32)   # (M, 3*H*Dp)

    # Causal mask built once; broadcast over the batch block and all heads.
    row = lax.broadcasted_iota(jnp.int32, (T, T), 0)
    col = lax.broadcasted_iota(jnp.int32, (T, T), 1)
    causal = col <= row                                                    # (T, T)

    heads = []
    for h in range(H):                    # static unroll (H small)
        # All slice offsets are multiples of Dp=128 -> lane-aligned, no relayout.
        q = qkv[:, h * Dp:(h + 1) * Dp]
        k = qkv[:, hdp + h * Dp: hdp + (h + 1) * Dp]
        v = qkv[:, 2 * hdp + h * Dp: 2 * hdp + (h + 1) * Dp]
        # Leading-dim split only (T multiple of 8) -> layout-preserving reshape.
        q = q.reshape(Bblk, T, Dp).astype(jnp.bfloat16)
        k = k.reshape(Bblk, T, Dp).astype(jnp.bfloat16)
        v = v.reshape(Bblk, T, Dp).astype(jnp.bfloat16)

        # Batched over the batch block: one MXU stream per head instead of
        # Bblk standalone tiny matmuls.
        s = jnp.einsum('btd,bsd->bts', q, k,
                       preferred_element_type=jnp.float32)                # (Bblk, T, T)
        s = jnp.where(causal, s, -1e30)                                    # finite mask
        s = s - jnp.max(s, axis=-1, keepdims=True)
        p = jnp.exp(s)
        # approx reciprocal runs on the EUP (free slot); fine for eval/inference.
        p = p * pl.reciprocal(jnp.sum(p, axis=-1, keepdims=True), approx=True)

        o = jnp.einsum('bts,bsd->btd', p.astype(jnp.bfloat16), v,
                       preferred_element_type=jnp.float32)                 # (Bblk, T, Dp)
        heads.append(o.reshape(M, Dp).astype(jnp.bfloat16))

    # Every piece is 128 lanes wide -> aligned concat, unmasked stores.
    attn = jnp.concatenate(heads, axis=-1)                                 # (M, H*Dp)

    # Fused output projection + bias; lane-dense (C = 3*128) bf16 writeback.
    out = jnp.dot(attn, wproj_ref[...], preferred_element_type=jnp.float32)
    o_ref[...] = (out + bias_ref[...]).astype(o_ref.dtype)


def multi_head_attention(x, wqkv_p, wproj_p, bias_f32, num_heads, head_dim_p,
                         out_dtype=jnp.bfloat16):
    """x: (B, T, C) native dtype; wqkv_p: (C, 3*H*Dp) bf16; wproj_p: (H*Dp, C) bf16;
    bias_f32: (1, C) f32. Returns (B, T, C) in out_dtype."""
    B, T, C = x.shape
    assert T % 8 == 0, "sequence length must be a multiple of 8 (sublane tiling)"
    assert T <= block_size

    bblk = _pick_batch_block(B, T)
    num_blocks = B // bblk
    M = bblk * T

    # Contiguous reshape: no data movement, just presents (B*T, C) to the kernel.
    x2d = x.reshape(B * T, C)

    kernel = functools.partial(_mha_kernel, num_heads=num_heads,
                               head_dim_p=head_dim_p, seq_len=T)

    grid_spec = pltpu.PrefetchScalarGridSpec(
        num_scalar_prefetch=0,
        grid=(num_blocks,),
        in_specs=[
            pl.BlockSpec((M, C), lambda b: (b, 0)),            # activations
            # Grid-invariant weights/bias: constant index_map -> fetched once
            # across the grid. TODO(synk): single-buffer with
            # pipeline_mode=pl.Buffered(1) to halve weight VMEM when scaling up.
            pl.BlockSpec(wqkv_p.shape, lambda b: (0, 0)),      # fused Wqkv (bf16)
            pl.BlockSpec(wproj_p.shape, lambda b: (0, 0)),     # Wproj (bf16)
            pl.BlockSpec(bias_f32.shape, lambda b: (0, 0)),    # proj bias (f32)
        ],
        out_specs=pl.BlockSpec((M, C), lambda b: (b, 0)),
    )

    out2d = pl.pallas_call(
        kernel,
        grid_spec=grid_spec,
        out_shape=jax.ShapeDtypeStruct((B * T, C), out_dtype),
        compiler_params=pltpu.CompilerParams(
            dimension_semantics=("parallel",)),                # shards over v7x's 2 TCs
    )(x2d, wqkv_p, wproj_p, bias_f32)

    return out2d.reshape(B, T, C)


def multi_head_attention_ref(x, wqkv, wproj, bias, num_heads):
    """Pure-JAX f32 reference mirroring the PyTorch forward (dropout = identity)."""
    B, T, C = x.shape
    hd = wproj.shape[0]
    D = hd // num_heads
    scale = float(C) ** (-0.5)

    qkv = x @ wqkv                                  # (B, T, 3*H*D)
    q_all = qkv[..., :hd]
    k_all = qkv[..., hd:2 * hd]
    v_all = qkv[..., 2 * hd:]

    outs = []
    mask = jnp.tril(jnp.ones((T, T), dtype=bool))
    for h in range(num_heads):
        q = q_all[..., h * D:(h + 1) * D]
        k = k_all[..., h * D:(h + 1) * D]
        v = v_all[..., h * D:(h + 1) * D]
        s = (q @ jnp.swapaxes(k, -1, -2)) * scale
        s = jnp.where(mask, s, -jnp.inf)
        p = jax.nn.softmax(s, axis=-1)
        outs.append(p @ v)
    cat = jnp.concatenate(outs, axis=-1)            # (B, T, H*D)
    return cat @ wproj + bias[0]


if __name__ == "__main__":
    B, T = 8, 16
    C = n_embd          # 384
    H = 6
    D = C // H          # 64 (head_size * num_heads == n_embd)
    assert T <= block_size

    key = jax.random.PRNGKey(0)
    kx, kw, kp, kb = jax.random.split(key, 4)

    x = jax.random.normal(kx, (B, T, C), dtype=jnp.float32)
    # deterministic synthetic parameters (Linear layers; bias only on proj)
    wqkv = jax.random.normal(kw, (C, 3 * H * D), dtype=jnp.float32) * 0.02
    wproj = jax.random.normal(kp, (H * D, C), dtype=jnp.float32) * 0.02
    bias = jax.random.normal(kb, (1, C), dtype=jnp.float32) * 0.02

    # One-time parameter prep (bf16 cast, scale folding, 128-lane head padding).
    wqkv_p, wproj_p, bias_f32, Dp = prepare_mha_params(wqkv, wproj, bias, H)

    out = multi_head_attention(x, wqkv_p, wproj_p, bias_f32, H, Dp)
    out = jax.block_until_ready(out)

    ref = multi_head_attention_ref(x, wqkv, wproj, bias, H)
    assert out.shape == (B, T, C)
    # bf16 matmul inputs / bf16 output (f32 accumulate) vs f32 reference.
    assert jnp.allclose(out.astype(jnp.float32), ref, atol=2e-2, rtol=2e-2), \
        "mismatch vs reference"

    print("KERNEL_OK")
</pallas_src>

<mosaic_0001>
module attributes {stable_mosaic.version = 11 : i64} {
  func.func @_mha_kernel(%arg0: i32, %arg1: memref<64x384xf32, #tpu.memory_space<vmem>>, %arg2: memref<384x2304xbf16, #tpu.memory_space<vmem>>, %arg3: memref<768x384xbf16, #tpu.memory_space<vmem>>, %arg4: memref<1x384xf32, #tpu.memory_space<vmem>>, %arg5: memref<64x384xbf16, #tpu.memory_space<vmem>>) attributes {dimension_semantics = [#tpu.dimension_semantics<parallel>], iteration_bounds = array<i64: 2>, scalar_prefetch = 0 : i64, scratch_operands = 0 : i64, tpu.core_type = #tpu.core_type<tc>, window_params = [{transform_indices = @transform_0, window_bounds = array<i64: 64, 384>}, {pipeline_mode = #tpu.pipeline_mode<synchronous>, transform_indices = @transform_1, window_bounds = array<i64: 384, 2304>}, {pipeline_mode = #tpu.pipeline_mode<synchronous>, transform_indices = @transform_2, window_bounds = array<i64: 768, 384>}, {pipeline_mode = #tpu.pipeline_mode<synchronous>, transform_indices = @transform_3, window_bounds = array<i64: 1, 384>}, {transform_indices = @transform_4, window_bounds = array<i64: 64, 384>}]} {
    %c0 = arith.constant 0 : index
    %c0_0 = arith.constant 0 : index
    %0 = vector.load %arg1[%c0, %c0_0] : memref<64x384xf32, #tpu.memory_space<vmem>>, vector<64x384xf32>
    %1 = arith.truncf %0 : vector<64x384xf32> to vector<64x384xbf16>
    %c0_1 = arith.constant 0 : index
    %c0_2 = arith.constant 0 : index
    %2 = vector.load %arg2[%c0_1, %c0_2] : memref<384x2304xbf16, #tpu.memory_space<vmem>>, vector<384x2304xbf16>
    %cst = arith.constant dense<0.000000e+00> : vector<64x2304xf32>
    %3 = tpu.matmul %1, %2, %cst {dimension_numbers = #tpu.dot_dimension_numbers<[1], [0], [0], [1], [0, 0, 1, 1], [], []>} : vector<64x384xbf16>, vector<384x2304xbf16>, vector<64x2304xf32> -> vector<64x2304xf32>
    %4 = tpu.iota {dimensions = array<i32: 0>} : vector<16x16xi32>
    %5 = tpu.iota {dimensions = array<i32: 1>} : vector<16x16xi32>
    %6 = arith.cmpi sle, %5, %4 : vector<16x16xi32>
    %7 = vector.extract_strided_slice %3 {offsets = [0, 0], sizes = [64, 128], strides = [1, 1]} : vector<64x2304xf32> to vector<64x128xf32>
    %8 = vector.extract_strided_slice %3 {offsets = [0, 768], sizes = [64, 128], strides = [1, 1]} : vector<64x2304xf32> to vector<64x128xf32>
    %9 = vector.extract_strided_slice %3 {offsets = [0, 1536], sizes = [64, 128], strides = [1, 1]} : vector<64x2304xf32> to vector<64x128xf32>
    %10 = vector.shape_cast %7 : vector<64x128xf32> to vector<4x16x128xf32>
    %11 = arith.truncf %10 : vector<4x16x128xf32> to vector<4x16x128xbf16>
    %12 = vector.shape_cast %8 : vector<64x128xf32> to vector<4x16x128xf32>
    %13 = arith.truncf %12 : vector<4x16x128xf32> to vector<4x16x128xbf16>
    %14 = vector.shape_cast %9 : vector<64x128xf32> to vector<4x16x128xf32>
    %15 = arith.truncf %14 : vector<4x16x128xf32> to vector<4x16x128xbf16>
    "tpu.trace_start"() <{level = 10 : i32, message = "btd,bsd->bts"}> : () -> ()
    %cst_3 = arith.constant dense<0.000000e+00> : vector<4x16x16xf32>
    %16 = tpu.matmul %11, %13, %cst_3 {dimension_numbers = #tpu.dot_dimension_numbers<[2], [2], [1], [1], [0, 0, 0, 1, 1, 1], [0], [0]>} : vector<4x16x128xbf16>, vector<4x16x128xbf16>, vector<4x16x16xf32> -> vector<4x16x16xf32>
    %cst_4 = arith.constant -1.000000e+30 : f32
    "tpu.trace_stop"() : () -> ()
    %17 = vector.shape_cast %6 : vector<16x16xi1> to vector<1x16x16xi1>
    %18 = vector.broadcast %17 : vector<1x16x16xi1> to vector<4x16x16xi1>
    %19 = vector.broadcast %cst_4 : f32 to vector<4x16x16xf32>
    %20 = arith.select %18, %16, %19 : vector<4x16x16xi1>, vector<4x16x16xf32>
    %cst_5 = arith.constant dense<0xFF800000> : vector<4x16xf32>
    %21 = vector.multi_reduction <maximumf>, %20, %cst_5 [2] : vector<4x16x16xf32> to vector<4x16xf32>
    %22 = vector.shape_cast %21 : vector<4x16xf32> to vector<4x16x1xf32>
    %23 = vector.broadcast %22 : vector<4x16x1xf32> to vector<4x16x16xf32>
    %24 = arith.subf %20, %23 : vector<4x16x16xf32>
    %25 = math.exp %24 : vector<4x16x16xf32>
    %cst_6 = arith.constant dense<0.000000e+00> : vector<4x16xf32>
    %26 = vector.multi_reduction <add>, %25, %cst_6 [2] : vector<4x16x16xf32> to vector<4x16xf32>
    %27 = vector.shape_cast %26 : vector<4x16xf32> to vector<4x16x1xf32>
    %28 = tpu.reciprocal %27 {approx = true} : vector<4x16x1xf32> -> vector<4x16x1xf32>
    %29 = vector.broadcast %28 : vector<4x16x1xf32> to vector<4x16x16xf32>
    %30 = arith.mulf %25, %29 : vector<4x16x16xf32>
    %31 = arith.truncf %30 : vector<4x16x16xf32> to vector<4x16x16xbf16>
    "tpu.trace_start"() <{level = 10 : i32, message = "bts,bsd->btd"}> : () -> ()
    %cst_7 = arith.constant dense<0.000000e+00> : vector<4x16x128xf32>
    %32 = tpu.matmul %31, %15, %cst_7 {dimension_numbers = #tpu.dot_dimension_numbers<[2], [1], [1], [2], [0, 0, 0, 1, 1, 2], [0], [0]>} : vector<4x16x16xbf16>, vector<4x16x128xbf16>, vector<4x16x128xf32> -> vector<4x16x128xf32>
    "tpu.trace_stop"() : () -> ()
    %33 = vector.shape_cast %32 : vector<4x16x128xf32> to vector<64x128xf32>
    %34 = arith.truncf %33 : vector<64x128xf32> to vector<64x128xbf16>
    %35 = vector.extract_strided_slice %3 {offsets = [0, 128], sizes = [64, 128], strides = [1, 1]} : vector<64x2304xf32> to vector<64x128xf32>
    %36 = vector.extract_strided_slice %3 {offsets = [0, 896], sizes = [64, 128], strides = [1, 1]} : vector<64x2304xf32> to vector<64x128xf32>
    %37 = vector.extract_strided_slice %3 {offsets = [0, 1664], sizes = [64, 128], strides = [1, 1]} : vector<64x2304xf32> to vector<64x128xf32>
    %38 = vector.shape_cast %35 : vector<64x128xf32> to vector<4x16x128xf32>
    %39 = arith.truncf %38 : vector<4x16x128xf32> to vector<4x16x128xbf16>
    %40 = vector.shape_cast %36 : vector<64x128xf32> to vector<4x16x128xf32>
    %41 = arith.truncf %40 : vector<4x16x128xf32> to vector<4x16x128xbf16>
    %42 = vector.shape_cast %37 : vector<64x128xf32> to vector<4x16x128xf32>
    %43 = arith.truncf %42 : vector<4x16x128xf32> to vector<4x16x128xbf16>
    "tpu.trace_start"() <{level = 10 : i32, message = "btd,bsd->bts"}> : () -> ()
    %cst_8 = arith.constant dense<0.000000e+00> : vector<4x16x16xf32>
    %44 = tpu.matmul %39, %41, %cst_8 {dimension_numbers = #tpu.dot_dimension_numbers<[2], [2], [1], [1], [0, 0, 0, 1, 1, 1], [0], [0]>} : vector<4x16x128xbf16>, vector<4x16x128xbf16>, vector<4x16x16xf32> -> vector<4x16x16xf32>
    %cst_9 = arith.constant -1.000000e+30 : f32
    "tpu.trace_stop"() : () -> ()
    %45 = vector.shape_cast %6 : vector<16x16xi1> to vector<1x16x16xi1>
    %46 = vector.broadcast %45 : vector<1x16x16xi1> to vector<4x16x16xi1>
    %47 = vector.broadcast %cst_9 : f32 to vector<4x16x16xf32>
    %48 = arith.select %46, %44, %47 : vector<4x16x16xi1>, vector<4x16x16xf32>
    %cst_10 = arith.constant dense<0xFF800000> : vector<4x16xf32>
    %49 = vector.multi_reduction <maximumf>, %48, %cst_10 [2] : vector<4x16x16xf32> to vector<4x16xf32>
    %50 = vector.shape_cast %49 : vector<4x16xf32> to vector<4x16x1xf32>
    %51 = vector.broadcast %50 : vector<4x16x1xf32> to vector<4x16x16xf32>
    %52 = arith.subf %48, %51 : vector<4x16x16xf32>
    %53 = math.exp %52 : vector<4x16x16xf32>
    %cst_11 = arith.constant dense<0.000000e+00> : vector<4x16xf32>
    %54 = vector.multi_reduction <add>, %53, %cst_11 [2] : vector<4x16x16xf32> to vector<4x16xf32>
    %55 = vector.shape_cast %54 : vector<4x16xf32> to vector<4x16x1xf32>
    %56 = tpu.reciprocal %55 {approx = true} : vector<4x16x1xf32> -> vector<4x16x1xf32>
    %57 = vector.broadcast %56 : vector<4x16x1xf32> to vector<4x16x16xf32>
    %58 = arith.mulf %53, %57 : vector<4x16x16xf32>
    %59 = arith.truncf %58 : vector<4x16x16xf32> to vector<4x16x16xbf16>
    "tpu.trace_start"() <{level = 10 : i32, message = "bts,bsd->btd"}> : () -> ()
    %cst_12 = arith.constant dense<0.000000e+00> : vector<4x16x128xf32>
    %60 = tpu.matmul %59, %43, %cst_12 {dimension_numbers = #tpu.dot_dimension_numbers<[2], [1], [1], [2], [0, 0, 0, 1, 1, 2], [0], [0]>} : vector<4x16x16xbf16>, vector<4x16x128xbf16>, vector<4x16x128xf32> -> vector<4x16x128xf32>
    "tpu.trace_stop"() : () -> ()
    %61 = vector.shape_cast %60 : vector<4x16x128xf32> to vector<64x128xf32>
    %62 = arith.truncf %61 : vector<64x128xf32> to vector<64x128xbf16>
    %63 = vector.extract_strided_slice %3 {offsets = [0, 256], sizes = [64, 128], strides = [1, 1]} : vector<64x2304xf32> to vector<64x128xf32>
    %64 = vector.extract_strided_slice %3 {offsets = [0, 1024], sizes = [64, 128], strides = [1, 1]} : vector<64x2304xf32> to vector<64x128xf32>
    %65 = vector.extract_strided_slice %3 {offsets = [0, 1792], sizes = [64, 128], strides = [1, 1]} : vector<64x2304xf32> to vector<64x128xf32>
    %66 = vector.shape_cast %63 : vector<64x128xf32> to vector<4x16x128xf32>
    %67 = arith.truncf %66 : vector<4x16x128xf32> to vector<4x16x128xbf16>
    %68 = vector.shape_cast %64 : vector<64x128xf32> to vector<4x16x128xf32>
    %69 = arith.truncf %68 : vector<4x16x128xf32> to vector<4x16x128xbf16>
    %70 = vector.shape_cast %65 : vector<64x128xf32> to vector<4x16x128xf32>
    %71 = arith.truncf %70 : vector<4x16x128xf32> to vector<4x16x128xbf16>
    "tpu.trace_start"() <{level = 10 : i32, message = "btd,bsd->bts"}> : () -> ()
    %cst_13 = arith.constant dense<0.000000e+00> : vector<4x16x16xf32>
    %72 = tpu.matmul %67, %69, %cst_13 {dimension_numbers = #tpu.dot_dimension_numbers<[2], [2], [1], [1], [0, 0, 0, 1, 1, 1], [0], [0]>} : vector<4x16x128xbf16>, vector<4x16x128xbf16>, vector<4x16x16xf32> -> vector<4x16x16xf32>
    %cst_14 = arith.constant -1.000000e+30 : f32
    "tpu.trace_stop"() : () -> ()
    %73 = vector.shape_cast %6 : vector<16x16xi1> to vector<1x16x16xi1>
    %74 = vector.broadcast %73 : vector<1x16x16xi1> to vector<4x16x16xi1>
    %75 = vector.broadcast %cst_14 : f32 to vector<4x16x16xf32>
    %76 = arith.select %74, %72, %75 : vector<4x16x16xi1>, vector<4x16x16xf32>
    %cst_15 = arith.constant dense<0xFF800000> : vector<4x16xf32>
    %77 = vector.multi_reduction <maximumf>, %76, %cst_15 [2] : vector<4x16x16xf32> to vector<4x16xf32>
    %78 = vector.shape_cast %77 : vector<4x16xf32> to vector<4x16x1xf32>
    %79 = vector.broadcast %78 : vector<4x16x1xf32> to vector<4x16x16xf32>
    %80 = arith.subf %76, %79 : vector<4x16x16xf32>
    %81 = math.exp %80 : vector<4x16x16xf32>
    %cst_16 = arith.constant dense<0.000000e+00> : vector<4x16xf32>
    %82 = vector.multi_reduction <add>, %81, %cst_16 [2] : vector<4x16x16xf32> to vector<4x16xf32>
    %83 = vector.shape_cast %82 : vector<4x16xf32> to vector<4x16x1xf32>
    %84 = tpu.reciprocal %83 {approx = true} : vector<4x16x1xf32> -> vector<4x16x1xf32>
    %85 = vector.broadcast %84 : vector<4x16x1xf32> to vector<4x16x16xf32>
    %86 = arith.mulf %81, %85 : vector<4x16x16xf32>
    %87 = arith.truncf %86 : vector<4x16x16xf32> to vector<4x16x16xbf16>
    "tpu.trace_start"() <{level = 10 : i32, message = "bts,bsd->btd"}> : () -> ()
    %cst_17 = arith.constant dense<0.000000e+00> : vector<4x16x128xf32>
    %88 = tpu.matmul %87, %71, %cst_17 {dimension_numbers = #tpu.dot_dimension_numbers<[2], [1], [1], [2], [0, 0, 0, 1, 1, 2], [0], [0]>} : vector<4x16x16xbf16>, vector<4x16x128xbf16>, vector<4x16x128xf32> -> vector<4x16x128xf32>
    "tpu.trace_stop"() : () -> ()
    %89 = vector.shape_cast %88 : vector<4x16x128xf32> to vector<64x128xf32>
    %90 = arith.truncf %89 : vector<64x128xf32> to vector<64x128xbf16>
    %91 = vector.extract_strided_slice %3 {offsets = [0, 384], sizes = [64, 128], strides = [1, 1]} : vector<64x2304xf32> to vector<64x128xf32>
    %92 = vector.extract_strided_slice %3 {offsets = [0, 1152], sizes = [64, 128], strides = [1, 1]} : vector<64x2304xf32> to vector<64x128xf32>
    %93 = vector.extract_strided_slice %3 {offsets = [0, 1920], sizes = [64, 128], strides = [1, 1]} : vector<64x2304xf32> to vector<64x128xf32>
    %94 = vector.shape_cast %91 : vector<64x128xf32> to vector<4x16x128xf32>
    %95 = arith.truncf %94 : vector<4x16x128xf32> to vector<4x16x128xbf16>
    %96 = vector.shape_cast %92 : vector<64x128xf32> to vector<4x16x128xf32>
    %97 = arith.truncf %96 : vector<4x16x128xf32> to vector<4x16x128xbf16>
    %98 = vector.shape_cast %93 : vector<64x128xf32> to vector<4x16x128xf32>
    %99 = arith.truncf %98 : vector<4x16x128xf32> to vector<4x16x128xbf16>
    "tpu.trace_start"() <{level = 10 : i32, message = "btd,bsd->bts"}> : () -> ()
    %cst_18 = arith.constant dense<0.000000e+00> : vector<4x16x16xf32>
    %100 = tpu.matmul %95, %97, %cst_18 {dimension_numbers = #tpu.dot_dimension_numbers<[2], [2], [1], [1], [0, 0, 0, 1, 1, 1], [0], [0]>} : vector<4x16x128xbf16>, vector<4x16x128xbf16>, vector<4x16x16xf32> -> vector<4x16x16xf32>
    %cst_19 = arith.constant -1.000000e+30 : f32
    "tpu.trace_stop"() : () -> ()
    %101 = vector.shape_cast %6 : vector<16x16xi1> to vector<1x16x16xi1>
    %102 = vector.broadcast %101 : vector<1x16x16xi1> to vector<4x16x16xi1>
    %103 = vector.broadcast %cst_19 : f32 to vector<4x16x16xf32>
    %104 = arith.select %102, %100, %103 : vector<4x16x16xi1>, vector<4x16x16xf32>
    %cst_20 = arith.constant dense<0xFF800000> : vector<4x16xf32>
    %105 = vector.multi_reduction <maximumf>, %104, %cst_20 [2] : vector<4x16x16xf32> to vector<4x16xf32>
    %106 = vector.shape_cast %105 : vector<4x16xf32> to vector<4x16x1xf32>
    %107 = vector.broadcast %106 : vector<4x16x1xf32> to vector<4x16x16xf32>
    %108 = arith.subf %104, %107 : vector<4x16x16xf32>
    %109 = math.exp %108 : vector<4x16x16xf32>
    %cst_21 = arith.constant dense<0.000000e+00> : vector<4x16xf32>
    %110 = vector.multi_reduction <add>, %109, %cst_21 [2] : vector<4x16x16xf32> to vector<4x16xf32>
    %111 = vector.shape_cast %110 : vector<4x16xf32> to vector<4x16x1xf32>
    %112 = tpu.reciprocal %111 {approx = true} : vector<4x16x1xf32> -> vector<4x16x1xf32>
    %113 = vector.broadcast %112 : vector<4x16x1xf32> to vector<4x16x16xf32>
    %114 = arith.mulf %109, %113 : vector<4x16x16xf32>
    %115 = arith.truncf %114 : vector<4x16x16xf32> to vector<4x16x16xbf16>
    "tpu.trace_start"() <{level = 10 : i32, message = "bts,bsd->btd"}> : () -> ()
    %cst_22 = arith.constant dense<0.000000e+00> : vector<4x16x128xf32>
    %116 = tpu.matmul %115, %99, %cst_22 {dimension_numbers = #tpu.dot_dimension_numbers<[2], [1], [1], [2], [0, 0, 0, 1, 1, 2], [0], [0]>} : vector<4x16x16xbf16>, vector<4x16x128xbf16>, vector<4x16x128xf32> -> vector<4x16x128xf32>
    "tpu.trace_stop"() : () -> ()
    %117 = vector.shape_cast %116 : vector<4x16x128xf32> to vector<64x128xf32>
    %118 = arith.truncf %117 : vector<64x128xf32> to vector<64x128xbf16>
    %119 = vector.extract_strided_slice %3 {offsets = [0, 512], sizes = [64, 128], strides = [1, 1]} : vector<64x2304xf32> to vector<64x128xf32>
    %120 = vector.extract_strided_slice %3 {offsets = [0, 1280], sizes = [64, 128], strides = [1, 1]} : vector<64x2304xf32> to vector<64x128xf32>
    %121 = vector.extract_strided_slice %3 {offsets = [0, 2048], sizes = [64, 128], strides = [1, 1]} : vector<64x2304xf32> to vector<64x128xf32>
    %122 = vector.shape_cast %119 : vector<64x128xf32> to vector<4x16x128xf32>
    %123 = arith.truncf %122 : vector<4x16x128xf32> to vector<4x16x128xbf16>
    %124 = vector.shape_cast %120 : vector<64x128xf32> to vector<4x16x128xf32>
    %125 = arith.truncf %124 : vector<4x16x128xf32> to vector<4x16x128xbf16>
    %126 = vector.shape_cast %121 : vector<64x128xf32> to vector<4x16x128xf32>
    %127 = arith.truncf %126 : vector<4x16x128xf32> to vector<4x16x128xbf16>
    "tpu.trace_start"() <{level = 10 : i32, message = "btd,bsd->bts"}> : () -> ()
    %cst_23 = arith.constant dense<0.000000e+00> : vector<4x16x16xf32>
    %128 = tpu.matmul %123, %125, %cst_23 {dimension_numbers = #tpu.dot_dimension_numbers<[2], [2], [1], [1], [0, 0, 0, 1, 1, 1], [0], [0]>} : vector<4x16x128xbf16>, vector<4x16x128xbf16>, vector<4x16x16xf32> -> vector<4x16x16xf32>
    %cst_24 = arith.constant -1.000000e+30 : f32
    "tpu.trace_stop"() : () -> ()
    %129 = vector.shape_cast %6 : vector<16x16xi1> to vector<1x16x16xi1>
    %130 = vector.broadcast %129 : vector<1x16x16xi1> to vector<4x16x16xi1>
    %131 = vector.broadcast %cst_24 : f32 to vector<4x16x16xf32>
    %132 = arith.select %130, %128, %131 : vector<4x16x16xi1>, vector<4x16x16xf32>
    %cst_25 = arith.constant dense<0xFF800000> : vector<4x16xf32>
    %133 = vector.multi_reduction <maximumf>, %132, %cst_25 [2] : vector<4x16x16xf32> to vector<4x16xf32>
    %134 = vector.shape_cast %133 : vector<4x16xf32> to vector<4x16x1xf32>
    %135 = vector.broadcast %134 : vector<4x16x1xf32> to vector<4x16x16xf32>
    %136 = arith.subf %132, %135 : vector<4x16x16xf32>
    %137 = math.exp %136 : vector<4x16x16xf32>
    %cst_26 = arith.constant dense<0.000000e+00> : vector<4x16xf32>
    %138 = vector.multi_reduction <add>, %137, %cst_26 [2] : vector<4x16x16xf32> to vector<4x16xf32>
    %139 = vector.shape_cast %138 : vector<4x16xf32> to vector<4x16x1xf32>
    %140 = tpu.reciprocal %139 {approx = true} : vector<4x16x1xf32> -> vector<4x16x1xf32>
    %141 = vector.broadcast %140 : vector<4x16x1xf32> to vector<4x16x16xf32>
    %142 = arith.mulf %137, %141 : vector<4x16x16xf32>
    %143 = arith.truncf %142 : vector<4x16x16xf32> to vector<4x16x16xbf16>
    "tpu.trace_start"() <{level = 10 : i32, message = "bts,bsd->btd"}> : () -> ()
    %cst_27 = arith.constant dense<0.000000e+00> : vector<4x16x128xf32>
    %144 = tpu.matmul %143, %127, %cst_27 {dimension_numbers = #tpu.dot_dimension_numbers<[2], [1], [1], [2], [0, 0, 0, 1, 1, 2], [0], [0]>} : vector<4x16x16xbf16>, vector<4x16x128xbf16>, vector<4x16x128xf32> -> vector<4x16x128xf32>
    "tpu.trace_stop"() : () -> ()
    %145 = vector.shape_cast %144 : vector<4x16x128xf32> to vector<64x128xf32>
    %146 = arith.truncf %145 : vector<64x128xf32> to vector<64x128xbf16>
    %147 = vector.extract_strided_slice %3 {offsets = [0, 640], sizes = [64, 128], strides = [1, 1]} : vector<64x2304xf32> to vector<64x128xf32>
    %148 = vector.extract_strided_slice %3 {offsets = [0, 1408], sizes = [64, 128], strides = [1, 1]} : vector<64x2304xf32> to vector<64x128xf32>
    %149 = vector.extract_strided_slice %3 {offsets = [0, 2176], sizes = [64, 128], strides = [1, 1]} : vector<64x2304xf32> to vector<64x128xf32>
    %150 = vector.shape_cast %147 : vector<64x128xf32> to vector<4x16x128xf32>
    %151 = arith.truncf %150 : vector<4x16x128xf32> to vector<4x16x128xbf16>
    %152 = vector.shape_cast %148 : vector<64x128xf32> to vector<4x16x128xf32>
    %153 = arith.truncf %152 : vector<4x16x128xf32> to vector<4x16x128xbf16>
    %154 = vector.shape_cast %149 : vector<64x128xf32> to vector<4x16x128xf32>
    %155 = arith.truncf %154 : vector<4x16x128xf32> to vector<4x16x128xbf16>
    "tpu.trace_start"() <{level = 10 : i32, message = "btd,bsd->bts"}> : () -> ()
    %cst_28 = arith.constant dense<0.000000e+00> : vector<4x16x16xf32>
    %156 = tpu.matmul %151, %153, %cst_28 {dimension_numbers = #tpu.dot_dimension_numbers<[2], [2], [1], [1], [0, 0, 0, 1, 1, 1], [0], [0]>} : vector<4x16x128xbf16>, vector<4x16x128xbf16>, vector<4x16x16xf32> -> vector<4x16x16xf32>
    %cst_29 = arith.constant -1.000000e+30 : f32
    "tpu.trace_stop"() : () -> ()
    %157 = vector.shape_cast %6 : vector<16x16xi1> to vector<1x16x16xi1>
    %158 = vector.broadcast %157 : vector<1x16x16xi1> to vector<4x16x16xi1>
    %159 = vector.broadcast %cst_29 : f32 to vector<4x16x16xf32>
    %160 = arith.select %158, %156, %159 : vector<4x16x16xi1>, vector<4x16x16xf32>
    %cst_30 = arith.constant dense<0xFF800000> : vector<4x16xf32>
    %161 = vector.multi_reduction <maximumf>, %160, %cst_30 [2] : vector<4x16x16xf32> to vector<4x16xf32>
    %162 = vector.shape_cast %161 : vector<4x16xf32> to vector<4x16x1xf32>
    %163 = vector.broadcast %162 : vector<4x16x1xf32> to vector<4x16x16xf32>
    %164 = arith.subf %160, %163 : vector<4x16x16xf32>
    %165 = math.exp %164 : vector<4x16x16xf32>
    %cst_31 = arith.constant dense<0.000000e+00> : vector<4x16xf32>
    %166 = vector.multi_reduction <add>, %165, %cst_31 [2] : vector<4x16x16xf32> to vector<4x16xf32>
    %167 = vector.shape_cast %166 : vector<4x16xf32> to vector<4x16x1xf32>
    %168 = tpu.reciprocal %167 {approx = true} : vector<4x16x1xf32> -> vector<4x16x1xf32>
    %169 = vector.broadcast %168 : vector<4x16x1xf32> to vector<4x16x16xf32>
    %170 = arith.mulf %165, %169 : vector<4x16x16xf32>
    %171 = arith.truncf %170 : vector<4x16x16xf32> to vector<4x16x16xbf16>
    "tpu.trace_start"() <{level = 10 : i32, message = "bts,bsd->btd"}> : () -> ()
    %cst_32 = arith.constant dense<0.000000e+00> : vector<4x16x128xf32>
    %172 = tpu.matmul %171, %155, %cst_32 {dimension_numbers = #tpu.dot_dimension_numbers<[2], [1], [1], [2], [0, 0, 0, 1, 1, 2], [0], [0]>} : vector<4x16x16xbf16>, vector<4x16x128xbf16>, vector<4x16x128xf32> -> vector<4x16x128xf32>
    "tpu.trace_stop"() : () -> ()
    %173 = vector.shape_cast %172 : vector<4x16x128xf32> to vector<64x128xf32>
    %174 = arith.truncf %173 : vector<64x128xf32> to vector<64x128xbf16>
    %175 = tpu.concatenate %34, %62, %90, %118, %146, %174 in 1 : vector<64x128xbf16>, vector<64x128xbf16>, vector<64x128xbf16>, vector<64x128xbf16>, vector<64x128xbf16>, vector<64x128xbf16> -> vector<64x768xbf16>
    %c0_33 = arith.constant 0 : index
    %c0_34 = arith.constant 0 : index
    %176 = vector.load %arg3[%c0_33, %c0_34] : memref<768x384xbf16, #tpu.memory_space<vmem>>, vector<768x384xbf16>
    %cst_35 = arith.constant dense<0.000000e+00> : vector<64x384xf32>
    %177 = tpu.matmul %175, %176, %cst_35 {dimension_numbers = #tpu.dot_dimension_numbers<[1], [0], [0], [1], [0, 0, 1, 1], [], []>} : vector<64x768xbf16>, vector<768x384xbf16>, vector<64x384xf32> -> vector<64x384xf32>
    %c0_36 = arith.constant 0 : index
    %c0_37 = arith.constant 0 : index
    %178 = vector.load %arg4[%c0_36, %c0_37] : memref<1x384xf32, #tpu.memory_space<vmem>>, vector<1x384xf32>
    %179 = vector.broadcast %178 : vector<1x384xf32> to vector<64x384xf32>
    %180 = arith.addf %177, %179 : vector<64x384xf32>
    %181 = arith.truncf %180 : vector<64x384xf32> to vector<64x384xbf16>
    %c0_38 = arith.constant 0 : index
    %c0_39 = arith.constant 0 : index
    %182 = vector.load %arg5[%c0_38, %c0_39] : memref<64x384xbf16, #tpu.memory_space<vmem>>, vector<64x384xbf16>
    tpu.vector_store %arg5[%c0_38, %c0_39], %181 {strides = array<i32>} : memref<64x384xbf16, #tpu.memory_space<vmem>>, vector<64x384xbf16>,
    return
  }
  func.func @transform_0(%arg0: i32) -> (i32, i32) {
    %c0_i32 = arith.constant 0 : i32
    %c0_i32_0 = arith.constant 0 : i32
    return %arg0, %c0_i32 : i32, i32
  }
  func.func @transform_1(%arg0: i32) -> (i32, i32) {
    %c0_i32 = arith.constant 0 : i32
    %c0_i32_0 = arith.constant 0 : i32
    %c0_i32_1 = arith.constant 0 : i32
    return %c0_i32, %c0_i32_0 : i32, i32
  }
  func.func @transform_2(%arg0: i32) -> (i32, i32) {
    %c0_i32 = arith.constant 0 : i32
    %c0_i32_0 = arith.constant 0 : i32
    %c0_i32_1 = arith.constant 0 : i32
    return %c0_i32, %c0_i32_0 : i32, i32
  }
  func.func @transform_3(%arg0: i32) -> (i32, i32) {
    %c0_i32 = arith.constant 0 : i32
    %c0_i32_0 = arith.constant 0 : i32
    %c0_i32_1 = arith.constant 0 : i32
    return %c0_i32, %c0_i32_0 : i32, i32
  }
  func.func @transform_4(%arg0: i32) -> (i32, i32) {
    %c0_i32 = arith.constant 0 : i32
    %c0_i32_0 = arith.constant 0 : i32
    return %arg0, %c0_i32 : i32, i32
  }
}

</mosaic_0001>

<llo_original>
// kernel: tpu_custom_call.1
$region0: #{tpu_custom_call.1}
  #allocation0 [shape = 'u32[]', space=smem, size = 0x4, offset = 0x4, fixed_abs, tag = 'smem constant byte address 0x4 - core index']
  #allocation1 [shape = 'u32[144,128]{1,0:T(1,128)}', space=vmem, size = 0x12000, scoped, tag = 'internal scratch']
  %s0 = inlined_call_operand.hbm [shape: f32[128,384], index: 0, kind: input, shape index: {}]
  %s1 = inlined_call_operand.hbm [shape: bf16[384,2304], index: 1, kind: input, shape index: {}]
  %s2 = inlined_call_operand.hbm [shape: bf16[768,384], index: 2, kind: input, shape index: {}]
  %s3 = inlined_call_operand.hbm [shape: f32[1,384], index: 3, kind: input, shape index: {}]
  %s4 = inlined_call_operand.hbm [shape: bf16[128,384], index: 4, kind: output, shape index: {}]
  %s5 = sld [smem:[#allocation0]]
  $region65: #{tpu_custom_call.1} parent=0
    _
  %s7 = ssub.s32 1, %s5
  %s8 = scalar_select 0, %s7, %s5
  $region1: #{tpu_custom_call.1} parent=0
    #allocation2 [shape = 'u8[196608]{0}', space=vmem, size = 0x30000, scoped, tag = 'input window, operand 0']
    #allocation3 [shape = 's32[2]{0}', space=sflag, size = 0x8, scoped, tag = 'scoped memory for tpu_custom_call.1']
    #allocation4 [shape = 's32[2]{0}', space=sflag, size = 0x8, scoped, tag = 'scoped memory for tpu_custom_call.1']
    #allocation5 [shape = 'u8[1769472]{0}', space=vmem, size = 0x1b0000, scoped, tag = 'input window, operand 1, single buffered']
    #allocation6 [shape = 's32[1]{0}', space=sflag, size = 0x4, scoped, tag = 'scoped memory for tpu_custom_call.1']
    #allocation7 [shape = 'u8[589824]{0}', space=vmem, size = 0x90000, scoped, tag = 'input window, operand 2, single buffered']
    #allocation8 [shape = 'u8[1536]{0}', space=vmem, size = 0x800, scoped, tag = 'input window, operand 3, single buffered']
    #allocation9 [shape = 's32[1]{0}', space=sflag, size = 0x4, scoped, tag = 'scoped memory for tpu_custom_call.1']
    #allocation10 [shape = 'u8[98304]{0}', space=vmem, size = 0x18000, scoped, tag = 'output window, operand 0']
    %9 = vsyncpa [#allocation3], 0
    %s10 = scalar_lea.sflag [#allocation3], 1
    %11 = vsyncpa %s10, 0
    %12 = vsyncpa [#allocation6], 0
    %13 = vsyncpa [#allocation9], 0
    %14 = vsyncpa [#allocation4], 0
    %s15 = scalar_lea.sflag [#allocation4], 1
    %16 = vsyncpa %s15, 0
    loop: start=0, step=1, limit=4
    $region2: #{tpu_custom_call.1} parent=1 // loop_pre_header
      _
    $region3: #{tpu_custom_call.1} parent=1 // loop_header
      %s18 = sphi 0, %s22
      %p19 = scmp.ge.s32.totalorder %s18, 4
      %s28 = sphi 0, %s30
      %s31 = sphi 0, %s28
      %s32 = sphi 0, %s31
      %s48 = sphi 0, %s32
      %s52 = sphi 0, %s52
      %s54 = sphi 0, %s52
      %s55 = sphi 0, %s54
      %s69 = sphi 0, %s55
      %s73 = sphi 0, %s73
      %s75 = sphi 0, %s73
      %s76 = sphi 0, %s75
      %s90 = sphi 0, %s76
      %s94 = sphi 0, %s94
      %s96 = sphi 0, %s94
      %s97 = sphi 0, %s96
      %s111 = sphi 0, %s97
      %s117 = sphi 0, %s119
      %s120 = sphi 0, %s117
      %s121 = sphi 0, %s120
      %s137 = sphi 0, %s121
    $region4: #{tpu_custom_call.1} parent=1 // loop_header_branch
      %21 = sbr.rel (%p19) target = $region8
    $region5: #{tpu_custom_call.1} parent=1 // loop_body
      %s23 = ssub.s32 %s18, 1
      %s24 = ssub.s32 %s18, 2
      %s25 = sadd.s32 %s18, 1
      %s26 = ssub.s32 %s18, %s25
      %p27 = scmp.eq.s32.totalorder %s26, 0
      %s29 = sadd.s32 %s28, 1
      %s30 = scalar_select %p27, %s28, %s29
      %p33 = pneg %p27
      %p34 = scmp.eq.s32.totalorder %s18, 1
      %p35 = por %p33, %p34
      %p36 = scmp.ne.s32.totalorder %s28, %s31
      %p37 = scmp.eq.s32.totalorder %s18, 0
      %p38 = por %p36, %p37
      %p39 = scmp.ne.s32.totalorder %s28, %s31
      %p40 = scmp.eq.s32.totalorder %s23, 1
      %p41 = por %p39, %p40
      %p42 = scmp.ne.s32.totalorder %s31, %s32
      %p43 = scmp.eq.s32.totalorder %s23, 0
      %p44 = por %p42, %p43
      %p45 = scmp.ne.s32.totalorder %s31, %s32
      %p46 = scmp.eq.s32.totalorder %s24, 1
      %p47 = por %p45, %p46
      %p49 = scmp.ne.s32.totalorder %s32, %s48
      %p50 = scmp.eq.s32.totalorder %s24, 0
      %p51 = por %p49, %p50
      %s53 = sadd.s32 %s52, 1
      %p56 = scmp.eq.s32.totalorder %s18, 1
      %p57 = scmp.ne.s32.totalorder %s52, %s54
      %p58 = scmp.eq.s32.totalorder %s18, 0
      %p59 = por %p57, %p58
      %p60 = scmp.ne.s32.totalorder %s52, %s54
      %p61 = scmp.eq.s32.totalorder %s23, 1
      %p62 = por %p60, %p61
      %p63 = scmp.ne.s32.totalorder %s54, %s55
      %p64 = scmp.eq.s32.totalorder %s23, 0
      %p65 = por %p63, %p64
      %p66 = scmp.ne.s32.totalorder %s54, %s55
      %p67 = scmp.eq.s32.totalorder %s24, 1
      %p68 = por %p66, %p67
      %p70 = scmp.ne.s32.totalorder %s55, %s69
      %p71 = scmp.eq.s32.totalorder %s24, 0
      %p72 = por %p70, %p71
      %s74 = sadd.s32 %s73, 1
      %p77 = scmp.eq.s32.totalorder %s18, 1
      %p78 = scmp.ne.s32.totalorder %s73, %s75
      %p79 = scmp.eq.s32.totalorder %s18, 0
      %p80 = por %p78, %p79
      %p81 = scmp.ne.s32.totalorder %s73, %s75
      %p82 = scmp.eq.s32.totalorder %s23, 1
      %p83 = por %p81, %p82
      %p84 = scmp.ne.s32.totalorder %s75, %s76
      %p85 = scmp.eq.s32.totalorder %s23, 0
      %p86 = por %p84, %p85
      %p87 = scmp.ne.s32.totalorder %s75, %s76
      %p88 = scmp.eq.s32.totalorder %s24, 1
      %p89 = por %p87, %p88
      %p91 = scmp.ne.s32.totalorder %s76, %s90
      %p92 = scmp.eq.s32.totalorder %s24, 0
      %p93 = por %p91, %p92
      %s95 = sadd.s32 %s94, 1
      %p98 = scmp.eq.s32.totalorder %s18, 1
      %p99 = scmp.ne.s32.totalorder %s94, %s96
      %p100 = scmp.eq.s32.totalorder %s18, 0
      %p101 = por %p99, %p100
      %p102 = scmp.ne.s32.totalorder %s94, %s96
      %p103 = scmp.eq.s32.totalorder %s23, 1
      %p104 = por %p102, %p103
      %p105 = scmp.ne.s32.totalorder %s96, %s97
      %p106 = scmp.eq.s32.totalorder %s23, 0
      %p107 = por %p105, %p106
      %p108 = scmp.ne.s32.totalorder %s96, %s97
      %p109 = scmp.eq.s32.totalorder %s24, 1
      %p110 = por %p108, %p109
      %p112 = scmp.ne.s32.totalorder %s97, %s111
      %p113 = scmp.eq.s32.totalorder %s24, 0
      %p114 = por %p112, %p113
      %s115 = ssub.s32 %s18, %s25
      %p116 = scmp.eq.s32.totalorder %s115, 0
      %s118 = sadd.s32 %s117, 1
      %s119 = scalar_select %p116, %s117, %s118
      %p122 = pneg %p116
      %p123 = scmp.eq.s32.totalorder %s18, 1
      %p124 = por %p122, %p123
      %p125 = scmp.ne.s32.totalorder %s117, %s120
      %p126 = scmp.eq.s32.totalorder %s18, 0
      %p127 = por %p125, %p126
      %p128 = scmp.ne.s32.totalorder %s117, %s120
      %p129 = scmp.eq.s32.totalorder %s23, 1
      %p130 = por %p128, %p129
      %p131 = scmp.ne.s32.totalorder %s120, %s121
      %p132 = scmp.eq.s32.totalorder %s23, 0
      %p133 = por %p131, %p132
      %p134 = scmp.ne.s32.totalorder %s120, %s121
      %p135 = scmp.eq.s32.totalorder %s24, 1
      %p136 = por %p134, %p135
      %p138 = scmp.ne.s32.totalorder %s121, %s137
      %p139 = scmp.eq.s32.totalorder %s24, 0
      %p140 = por %p138, %p139
      %p141 = scmp.le.s32.totalorder 1, %s18
      %p142 = scmp.lt.s32.totalorder %s18, 3
      %p143 = pnand %p141, %p142
      %p144 = pneg %p143
      // Predicated region
      $region9: #{tpu_custom_call.1} parent=5 // pred_check
        _
      $region10: #{tpu_custom_call.1} parent=5 // pred_check_branch
        %146 = sbr.rel (%p143) target = $region12
      $region11: #{tpu_custom_call.1} parent=5 // pred_region
        %s147 = ssub.s32 %s18, 1
        // Predicated region
        $region13: #{tpu_custom_call.1} parent=11 // pred_check
          %p148 = pneg %p65
        $region14: #{tpu_custom_call.1} parent=11 // pred_check_branch
          %150 = sbr.rel (%p148) target = $region16
        $region15: #{tpu_custom_call.1} parent=11 // pred_region
          %s152 = ssub.s32 55296, 55296
          %153 = vsyncadd [#allocation6], %s152
          %s154 = sshll.u32 [#allocation5], 4
          %s155 = int_to_ptr.vmem [resolvable:$true] %s154
          %160 = dma.hbm_to_vmem [thread:$0]  %s1, 55296, %s155, [#allocation6], 1152, 1152, 72
        $region16: #{tpu_custom_call.1} parent=11 // pred_fallthru
          _
        // Predicated region
        $region17: #{tpu_custom_call.1} parent=11 // pred_check
          %p161 = pneg %p86
        $region18: #{tpu_custom_call.1} parent=11 // pred_check_branch
          %163 = sbr.rel (%p161) target = $region20
        $region19: #{tpu_custom_call.1} parent=11 // pred_region
          %s165 = ssub.s32 18432, 18432
          %166 = vsyncadd [#allocation6], %s165
          %s167 = sshll.u32 [#allocation7], 4
          %s168 = int_to_ptr.vmem [resolvable:$true] %s167
          %173 = dma.hbm_to_vmem [thread:$0]  %s2, 18432, %s168, [#allocation6], 192, 192, 12
        $region20: #{tpu_custom_call.1} parent=11 // pred_fallthru
          _
        // Predicated region
        $region21: #{tpu_custom_call.1} parent=11 // pred_check
          %p174 = pneg %p107
        $region22: #{tpu_custom_call.1} parent=11 // pred_check_branch
          %176 = sbr.rel (%p174) target = $region24
        $region23: #{tpu_custom_call.1} parent=11 // pred_region
          %s178 = ssub.s32 48, 48
          %179 = vsyncadd [#allocation9], %s178
          %s181 = sshll.u32 [#allocation8], 4
          %s182 = int_to_ptr.vmem [resolvable:$true] %s181
          %184 = dma.hbm_to_vmem [thread:$0]  %s3, 48, %s182, [#allocation9]
        $region24: #{tpu_custom_call.1} parent=11 // pred_fallthru
          _
      $region12: #{tpu_custom_call.1} parent=5 // pred_fallthru
        _
      %p185 = scmp.lt.s32.totalorder %s18, 2
      // Predicated region
      $region25: #{tpu_custom_call.1} parent=5 // pred_check
        %p186 = pneg %p185
      $region26: #{tpu_custom_call.1} parent=5 // pred_check_branch
        %188 = sbr.rel (%p186) target = $region28
      $region27: #{tpu_custom_call.1} parent=5 // pred_region
        // Predicated region
        $region29: #{tpu_custom_call.1} parent=27 // pred_check
          %p189 = pneg %p38
        $region30: #{tpu_custom_call.1} parent=27 // pred_check_branch
          %191 = sbr.rel (%p189) target = $region32
        $region31: #{tpu_custom_call.1} parent=27 // pred_region
          %s192 = sand.u32 %s28, 1
          %s193 = scalar_lea.sflag [#allocation3], %s192
          %s194 = sand.u32 %s28, 1
          %s195 = smul.addr %s194, 192
          %s196 = scalar_lea.vmem [#allocation2], %s195
          %s197 = smul.u32 8, %s18
          %s199 = ssub.s32 3072, 3072
          %200 = vsyncadd %s193, %s199
          %s201 = smul.addr %s197, 3
          %s202 = smul.addr %s201, 128
          %s203 = scalar_lea.hbm %s0, %s202
          %s204 = sshll.u32 %s196, 4
          %s205 = int_to_ptr.vmem [resolvable:$true] %s204
          %210 = dma.hbm_to_vmem [thread:$0]  %s203, 3072, %s205, %s193, 384, 384, 24
        $region32: #{tpu_custom_call.1} parent=27 // pred_fallthru
          _
      $region28: #{tpu_custom_call.1} parent=5 // pred_fallthru
        _
      %p211 = scmp.le.s32.totalorder 1, %s18
      %p212 = scmp.lt.s32.totalorder %s18, 3
      %p213 = pnand %p211, %p212
      %p214 = pneg %p213
      // Predicated region
      $region33: #{tpu_custom_call.1} parent=5 // pred_check
        _
      $region34: #{tpu_custom_call.1} parent=5 // pred_check_branch
        %216 = sbr.rel (%p213) target = $region36
      $region35: #{tpu_custom_call.1} parent=5 // pred_region
        %s217 = ssub.s32 %s18, 1
        %s218 = sand.u32 %s31, 1
        %s219 = scalar_lea.sflag [#allocation3], %s218
        %s220 = sand.u32 %s31, 1
        %s221 = smul.addr %s220, 192
        %s222 = scalar_lea.vmem [#allocation2], %s221
        // Predicated region
        $region37: #{tpu_custom_call.1} parent=35 // pred_check
          %p223 = pneg %p44
        $region38: #{tpu_custom_call.1} parent=35 // pred_check_branch
          %225 = sbr.rel (%p223) target = $region40
        $region39: #{tpu_custom_call.1} parent=35 // pred_region
          %226 = dma.done %s219, 3072
        $region40: #{tpu_custom_call.1} parent=35 // pred_fallthru
          _
        // Predicated region
        $region41: #{tpu_custom_call.1} parent=35 // pred_check
          %p227 = pneg %p65
        $region42: #{tpu_custom_call.1} parent=35 // pred_check_branch
          %229 = sbr.rel (%p227) target = $region44
        $region43: #{tpu_custom_call.1} parent=35 // pred_region
          %230 = dma.done [#allocation6], 55296
        $region44: #{tpu_custom_call.1} parent=35 // pred_fallthru
          _
        // Predicated region
        $region45: #{tpu_custom_call.1} parent=35 // pred_check
          %p231 = pneg %p86
        $region46: #{tpu_custom_call.1} parent=35 // pred_check_branch
          %233 = sbr.rel (%p231) target = $region48
        $region47: #{tpu_custom_call.1} parent=35 // pred_region
          %234 = dma.done [#allocation6], 18432
        $region48: #{tpu_custom_call.1} parent=35 // pred_fallthru
          _
        // Predicated region
        $region49: #{tpu_custom_call.1} parent=35 // pred_check
          %p235 = pneg %p107
        $region50: #{tpu_custom_call.1} parent=35 // pred_check_branch
          %237 = sbr.rel (%p235) target = $region52
        $region51: #{tpu_custom_call.1} parent=35 // pred_region
          %238 = dma.done [#allocation9], 48
        $region52: #{tpu_custom_call.1} parent=35 // pred_fallthru
          _
        %s239 = sand.u32 %s31, 1
        %s240 = scalar_lea.sflag [#allocation3], %s239
        %s241 = sand.u32 %s31, 1
        %s242 = smul.addr %s241, 192
        %s243 = scalar_lea.vmem [#allocation2], %s242
        %p244 = pneg %p44
        %p245 = pneg %p41
        %p246 = pneg %p65
        %p247 = pneg %p62
        %p248 = pneg %p86
        %p249 = pneg %p83
        %p250 = pneg %p107
        %p251 = pneg %p104
        %p252 = pneg %p133
        %p253 = pneg %p130
        %s254 = sand.u32 %s120, 1
        %s255 = scalar_lea.sflag [#allocation4], %s254
        %s256 = sand.u32 %s120, 1
        %s257 = smul.addr %s256, 96
        %s258 = scalar_lea.vmem [#allocation10], %s257
        %s259 = smul.u32 8, %s23
        %s260 = smul.u32 8, %s23
        %v262 = vld [vmem:[%s222] sm:$0xff]
        %v263 = vld [vmem:[%s222 + $0x8] sm:$0xff]
        %v264 = vld [vmem:[%s222 + $0x10] sm:$0xff]
        %v265 = vld [vmem:[%s222 + $0x18] sm:$0xff]
        %v266 = vld [vmem:[%s222 + $0x20] sm:$0xff]
        %v267 = vld [vmem:[%s222 + $0x28] sm:$0xff]
        %v268 = vld [vmem:[%s222 + $0x30] sm:$0xff]
        %v269 = vld [vmem:[%s222 + $0x38] sm:$0xff]
        %v270 = vld [vmem:[%s222 + $0x40] sm:$0xff]
        %v271 = vld [vmem:[%s222 + $0x48] sm:$0xff]
        %v272 = vld [vmem:[%s222 + $0x50] sm:$0xff]
        %v273 = vld [vmem:[%s222 + $0x58] sm:$0xff]
        %v274 = vld [vmem:[%s222 + $0x60] sm:$0xff]
        %v275 = vld [vmem:[%s222 + $0x68] sm:$0xff]
        %v276 = vld [vmem:[%s222 + $0x70] sm:$0xff]
        %v277 = vld [vmem:[%s222 + $0x78] sm:$0xff]
        %v278 = vld [vmem:[%s222 + $0x80] sm:$0xff]
        %v279 = vld [vmem:[%s222 + $0x88] sm:$0xff]
        %v280 = vld [vmem:[%s222 + $0x90] sm:$0xff]
        %v281 = vld [vmem:[%s222 + $0x98] sm:$0xff]
        %v282 = vld [vmem:[%s222 + $0xa0] sm:$0xff]
        %v283 = vld [vmem:[%s222 + $0xa8] sm:$0xff]
        %v284 = vld [vmem:[%s222 + $0xb0] sm:$0xff]
        %v285 = vld [vmem:[%s222 + $0xb8] sm:$0xff]
        %v286 = vpack.c.bf16 %v265, %v262
        %v287 = vpack.c.bf16 %v266, %v263
        %v288 = vpack.c.bf16 %v267, %v264
        %v289 = vpack.c.bf16 %v271, %v268
        %v290 = vpack.c.bf16 %v272, %v269
        %v291 = vpack.c.bf16 %v273, %v270
        %v292 = vpack.c.bf16 %v277, %v274
        %v293 = vpack.c.bf16 %v278, %v275
        %v294 = vpack.c.bf16 %v279, %v276
        %v295 = vpack.c.bf16 %v283, %v280
        %v296 = vpack.c.bf16 %v284, %v281
        %v297 = vpack.c.bf16 %v285, %v282
        %v298 = vld [vmem:[#allocation5] sm:$0xff]
        %v299 = vld [vmem:[#allocation5 + $0x8] sm:$0xff]
        %v300 = vld [vmem:[#allocation5 + $0x10] sm:$0xff]
        %v301 = vld [vmem:[#allocation5 + $0x18] sm:$0xff]
        %v302 = vld [vmem:[#allocation5 + $0x20] sm:$0xff]
        %v303 = vld [vmem:[#allocation5 + $0x28] sm:$0xff]
        %v304 = vld [vmem:[#allocation5 + $0x30] sm:$0xff]
        %v305 = vld [vmem:[#allocation5 + $0x38] sm:$0xff]
        %v306 = vld [vmem:[#allocation5 + $0x40] sm:$0xff]
        %v307 = vld [vmem:[#allocation5 + $0x48] sm:$0xff]
        %v308 = vld [vmem:[#allocation5 + $0x50] sm:$0xff]
        %v309 = vld [vmem:[#allocation5 + $0x58] sm:$0xff]
        %v310 = vld [vmem:[#allocation5 + $0x60] sm:$0xff]
        %v311 = vld [vmem:[#allocation5 + $0x68] sm:$0xff]
        %v312 = vld [vmem:[#allocation5 + $0x70] sm:$0xff]
        %v313 = vld [vmem:[#allocation5 + $0x78] sm:$0xff]
        %v314 = vld [vmem:[#allocation5 + $0x80] sm:$0xff]
        %v315 = vld [vmem:[#allocation5 + $0x88] sm:$0xff]
        %v316 = vld [vmem:[#allocation5 + $0x90] sm:$0xff]
        %v317 = vld [vmem:[#allocation5 + $0x98] sm:$0xff]
        %v318 = vld [vmem:[#allocation5 + $0xa0] sm:$0xff]
        %v319 = vld [vmem:[#allocation5 + $0xa8] sm:$0xff]
        %v320 = vld [vmem:[#allocation5 + $0xb0] sm:$0xff]
        %v321 = vld [vmem:[#allocation5 + $0xb8] sm:$0xff]
        %v322 = vld [vmem:[#allocation5 + $0xc0] sm:$0xff]
        %v323 = vld [vmem:[#allocation5 + $0xc8] sm:$0xff]
        %v324 = vld [vmem:[#allocation5 + $0xd0] sm:$0xff]
        %v325 = vld [vmem:[#allocation5 + $0xd8] sm:$0xff]
        %v326 = vld [vmem:[#allocation5 + $0xe0] sm:$0xff]
        %v327 = vld [vmem:[#allocation5 + $0xe8] sm:$0xff]
        %v328 = vld [vmem:[#allocation5 + $0xf0] sm:$0xff]
        %v329 = vld [vmem:[#allocation5 + $0xf8] sm:$0xff]
        %v330 = vld [vmem:[#allocation5 + $0x100] sm:$0xff]
        %v331 = vld [vmem:[#allocation5 + $0x108] sm:$0xff]
        %v332 = vld [vmem:[#allocation5 + $0x110] sm:$0xff]
        %v333 = vld [vmem:[#allocation5 + $0x118] sm:$0xff]
        %v334 = vld [vmem:[#allocation5 + $0x120] sm:$0xff]
        %v335 = vld [vmem:[#allocation5 + $0x128] sm:$0xff]
        %v336 = vld [vmem:[#allocation5 + $0x130] sm:$0xff]
        %v337 = vld [vmem:[#allocation5 + $0x138] sm:$0xff]
        %v338 = vld [vmem:[#allocation5 + $0x140] sm:$0xff]
        %v339 = vld [vmem:[#allocation5 + $0x148] sm:$0xff]
        %v340 = vld [vmem:[#allocation5 + $0x150] sm:$0xff]
        %v341 = vld [vmem:[#allocation5 + $0x158] sm:$0xff]
        %v342 = vld [vmem:[#allocation5 + $0x160] sm:$0xff]
        %v343 = vld [vmem:[#allocation5 + $0x168] sm:$0xff]
        %v344 = vld [vmem:[#allocation5 + $0x170] sm:$0xff]
        %v345 = vld [vmem:[#allocation5 + $0x178] sm:$0xff]
        %v346 = vld [vmem:[#allocation5 + $0x180] sm:$0xff]
        %v347 = vld [vmem:[#allocation5 + $0x188] sm:$0xff]
        %v348 = vld [vmem:[#allocation5 + $0x190] sm:$0xff]
        %v349 = vld [vmem:[#allocation5 + $0x198] sm:$0xff]
        %v350 = vld [vmem:[#allocation5 + $0x1a0] sm:$0xff]
        %v351 = vld [vmem:[#allocation5 + $0x1a8] sm:$0xff]
        %v352 = vld [vmem:[#allocation5 + $0x1b0] sm:$0xff]
        %v353 = vld [vmem:[#allocation5 + $0x1b8] sm:$0xff]
        %v354 = vld [vmem:[#allocation5 + $0x1c0] sm:$0xff]
        %v355 = vld [vmem:[#allocation5 + $0x1c8] sm:$0xff]
        %v356 = vld [vmem:[#allocation5 + $0x1d0] sm:$0xff]
        %v357 = vld [vmem:[#allocation5 + $0x1d8] sm:$0xff]
        %v358 = vld [vmem:[#allocation5 + $0x1e0] sm:$0xff]
        %v359 = vld [vmem:[#allocation5 + $0x1e8] sm:$0xff]
        %v360 = vld [vmem:[#allocation5 + $0x1f0] sm:$0xff]
        %v361 = vld [vmem:[#allocation5 + $0x1f8] sm:$0xff]
        %v362 = vld [vmem:[#allocation5 + $0x200] sm:$0xff]
        %v363 = vld [vmem:[#allocation5 + $0x208] sm:$0xff]
        %v364 = vld [vmem:[#allocation5 + $0x210] sm:$0xff]
        %v365 = vld [vmem:[#allocation5 + $0x218] sm:$0xff]
        %v366 = vld [vmem:[#allocation5 + $0x220] sm:$0xff]
        %v367 = vld [vmem:[#allocation5 + $0x228] sm:$0xff]
        %v368 = vld [vmem:[#allocation5 + $0x230] sm:$0xff]
        %v369 = vld [vmem:[#allocation5 + $0x238] sm:$0xff]
        %v370 = vld [vmem:[#allocation5 + $0x240] sm:$0xff]
        %v371 = vld [vmem:[#allocation5 + $0x248] sm:$0xff]
        %v372 = vld [vmem:[#allocation5 + $0x250] sm:$0xff]
        %v373 = vld [vmem:[#allocation5 + $0x258] sm:$0xff]
        %v374 = vld [vmem:[#allocation5 + $0x260] sm:$0xff]
        %v375 = vld [vmem:[#allocation5 + $0x268] sm:$0xff]
        %v376 = vld [vmem:[#allocation5 + $0x270] sm:$0xff]
        %v377 = vld [vmem:[#allocation5 + $0x278] sm:$0xff]
        %v378 = vld [vmem:[#allocation5 + $0x280] sm:$0xff]
        %v379 = vld [vmem:[#allocation5 + $0x288] sm:$0xff]
        %v380 = vld [vmem:[#allocation5 + $0x290] sm:$0xff]
        %v381 = vld [vmem:[#allocation5 + $0x298] sm:$0xff]
        %v382 = vld [vmem:[#allocation5 + $0x2a0] sm:$0xff]
        %v383 = vld [vmem:[#allocation5 + $0x2a8] sm:$0xff]
        %v384 = vld [vmem:[#allocation5 + $0x2b0] sm:$0xff]
        %v385 = vld [vmem:[#allocation5 + $0x2b8] sm:$0xff]
        %v386 = vld [vmem:[#allocation5 + $0x2c0] sm:$0xff]
        %v387 = vld [vmem:[#allocation5 + $0x2c8] sm:$0xff]
        %v388 = vld [vmem:[#allocation5 + $0x2d0] sm:$0xff]
        %v389 = vld [vmem:[#allocation5 + $0x2d8] sm:$0xff]
        %v390 = vld [vmem:[#allocation5 + $0x2e0] sm:$0xff]
        %v391 = vld [vmem:[#allocation5 + $0x2e8] sm:$0xff]
        %v392 = vld [vmem:[#allocation5 + $0x2f0] sm:$0xff]
        %v393 = vld [vmem:[#allocation5 + $0x2f8] sm:$0xff]
        %v394 = vld [vmem:[#allocation5 + $0x300] sm:$0xff]
        %v395 = vld [vmem:[#allocation5 + $0x308] sm:$0xff]
        %v396 = vld [vmem:[#allocation5 + $0x310] sm:$0xff]
        %v397 = vld [vmem:[#allocation5 + $0x318] sm:$0xff]
        %v398 = vld [vmem:[#allocation5 + $0x320] sm:$0xff]
        %v399 = vld [vmem:[#allocation5 + $0x328] sm:$0xff]
        %v400 = vld [vmem:[#allocation5 + $0x330] sm:$0xff]
        %v401 = vld [vmem:[#allocation5 + $0x338] sm:$0xff]
        %v402 = vld [vmem:[#allocation5 + $0x340] sm:$0xff]
        %v403 = vld [vmem:[#allocation5 + $0x348] sm:$0xff]
        %v404 = vld [vmem:[#allocation5 + $0x350] sm:$0xff]
        %v405 = vld [vmem:[#allocation5 + $0x358] sm:$0xff]
        %v406 = vld [vmem:[#allocation5 + $0x360] sm:$0xff]
        %v407 = vld [vmem:[#allocation5 + $0x368] sm:$0xff]
        %v408 = vld [vmem:[#allocation5 + $0x370] sm:$0xff]
        %v409 = vld [vmem:[#allocation5 + $0x378] sm:$0xff]
        %v410 = vld [vmem:[#allocation5 + $0x380] sm:$0xff]
        %v411 = vld [vmem:[#allocation5 + $0x388] sm:$0xff]
        %v412 = vld [vmem:[#allocation5 + $0x390] sm:$0xff]
        %v413 = vld [vmem:[#allocation5 + $0x398] sm:$0xff]
        %v414 = vld [vmem:[#allocation5 + $0x3a0] sm:$0xff]
        %v415 = vld [vmem:[#allocation5 + $0x3a8] sm:$0xff]
        %v416 = vld [vmem:[#allocation5 + $0x3b0] sm:$0xff]
        %v417 = vld [vmem:[#allocation5 + $0x3b8] sm:$0xff]
        %v418 = vld [vmem:[#allocation5 + $0x3c0] sm:$0xff]
        %v419 = vld [vmem:[#allocation5 + $0x3c8] sm:$0xff]
        %v420 = vld [vmem:[#allocation5 + $0x3d0] sm:$0xff]
        %v421 = vld [vmem:[#allocation5 + $0x3d8] sm:$0xff]
        %v422 = vld [vmem:[#allocation5 + $0x3e0] sm:$0xff]
        %v423 = vld [vmem:[#allocation5 + $0x3e8] sm:$0xff]
        %v424 = vld [vmem:[#allocation5 + $0x3f0] sm:$0xff]
        %v425 = vld [vmem:[#allocation5 + $0x3f8] sm:$0xff]
        %v426 = vld [vmem:[#allocation5 + $0x400] sm:$0xff]
        %v427 = vld [vmem:[#allocation5 + $0x408] sm:$0xff]
        %v428 = vld [vmem:[#allocation5 + $0x410] sm:$0xff]
        %v429 = vld [vmem:[#allocation5 + $0x418] sm:$0xff]
        %v430 = vld [vmem:[#allocation5 + $0x420] sm:$0xff]
        %v431 = vld [vmem:[#allocation5 + $0x428] sm:$0xff]
        %v432 = vld [vmem:[#allocation5 + $0x430] sm:$0xff]
        %v433 = vld [vmem:[#allocation5 + $0x438] sm:$0xff]
        %v434 = vld [vmem:[#allocation5 + $0x440] sm:$0xff]
        %v435 = vld [vmem:[#allocation5 + $0x448] sm:$0xff]
        %v436 = vld [vmem:[#allocation5 + $0x450] sm:$0xff]
        %v437 = vld [vmem:[#allocation5 + $0x458] sm:$0xff]
        %v438 = vld [vmem:[#allocation5 + $0x460] sm:$0xff]
        %v439 = vld [vmem:[#allocation5 + $0x468] sm:$0xff]
        %v440 = vld [vmem:[#allocation5 + $0x470] sm:$0xff]
        %v441 = vld [vmem:[#allocation5 + $0x478] sm:$0xff]
        %v442 = vld [vmem:[#allocation5 + $0x480] sm:$0xff]
        %v443 = vld [vmem:[#allocation5 + $0x488] sm:$0xff]
        %v444 = vld [vmem:[#allocation5 + $0x490] sm:$0xff]
        %v445 = vld [vmem:[#allocation5 + $0x498] sm:$0xff]
        %v446 = vld [vmem:[#allocation5 + $0x4a0] sm:$0xff]
        %v447 = vld [vmem:[#allocation5 + $0x4a8] sm:$0xff]
        %v448 = vld [vmem:[#allocation5 + $0x4b0] sm:$0xff]
        %v449 = vld [vmem:[#allocation5 + $0x4b8] sm:$0xff]
        %v450 = vld [vmem:[#allocation5 + $0x4c0] sm:$0xff]
        %v451 = vld [vmem:[#allocation5 + $0x4c8] sm:$0xff]
        %v452 = vld [vmem:[#allocation5 + $0x4d0] sm:$0xff]
        %v453 = vld [vmem:[#allocation5 + $0x4d8] sm:$0xff]
        %v454 = vld [vmem:[#allocation5 + $0x4e0] sm:$0xff]
        %v455 = vld [vmem:[#allocation5 + $0x4e8] sm:$0xff]
        %v456 = vld [vmem:[#allocation5 + $0x4f0] sm:$0xff]
        %v457 = vld [vmem:[#allocation5 + $0x4f8] sm:$0xff]
        %v458 = vld [vmem:[#allocation5 + $0x500] sm:$0xff]
        %v459 = vld [vmem:[#allocation5 + $0x508] sm:$0xff]
        %v460 = vld [vmem:[#allocation5 + $0x510] sm:$0xff]
        %v461 = vld [vmem:[#allocation5 + $0x518] sm:$0xff]
        %v462 = vld [vmem:[#allocation5 + $0x520] sm:$0xff]
        %v463 = vld [vmem:[#allocation5 + $0x528] sm:$0xff]
        %v464 = vld [vmem:[#allocation5 + $0x530] sm:$0xff]
        %v465 = vld [vmem:[#allocation5 + $0x538] sm:$0xff]
        %v466 = vld [vmem:[#allocation5 + $0x540] sm:$0xff]
        %v467 = vld [vmem:[#allocation5 + $0x548] sm:$0xff]
        %v468 = vld [vmem:[#allocation5 + $0x550] sm:$0xff]
        %v469 = vld [vmem:[#allocation5 + $0x558] sm:$0xff]
        %v470 = vld [vmem:[#allocation5 + $0x560] sm:$0xff]
        %v471 = vld [vmem:[#allocation5 + $0x568] sm:$0xff]
        %v472 = vld [vmem:[#allocation5 + $0x570] sm:$0xff]
        %v473 = vld [vmem:[#allocation5 + $0x578] sm:$0xff]
        %v474 = vld [vmem:[#allocation5 + $0x580] sm:$0xff]
        %v475 = vld [vmem:[#allocation5 + $0x588] sm:$0xff]
        %v476 = vld [vmem:[#allocation5 + $0x590] sm:$0xff]
        %v477 = vld [vmem:[#allocation5 + $0x598] sm:$0xff]
        %v478 = vld [vmem:[#allocation5 + $0x5a0] sm:$0xff]
        %v479 = vld [vmem:[#allocation5 + $0x5a8] sm:$0xff]
        %v480 = vld [vmem:[#allocation5 + $0x5b0] sm:$0xff]
        %v481 = vld [vmem:[#allocation5 + $0x5b8] sm:$0xff]
        %v482 = vld [vmem:[#allocation5 + $0x5c0] sm:$0xff]
        %v483 = vld [vmem:[#allocation5 + $0x5c8] sm:$0xff]
        %v484 = vld [vmem:[#allocation5 + $0x5d0] sm:$0xff]
        %v485 = vld [vmem:[#allocation5 + $0x5d8] sm:$0xff]
        %v486 = vld [vmem:[#allocation5 + $0x5e0] sm:$0xff]
        %v487 = vld [vmem:[#allocation5 + $0x5e8] sm:$0xff]
        %v488 = vld [vmem:[#allocation5 + $0x5f0] sm:$0xff]
        %v489 = vld [vmem:[#allocation5 + $0x5f8] sm:$0xff]
        %v490 = vld [vmem:[#allocation5 + $0x600] sm:$0xff]
        %v491 = vld [vmem:[#allocation5 + $0x608] sm:$0xff]
        %v492 = vld [vmem:[#allocation5 + $0x610] sm:$0xff]
        %v493 = vld [vmem:[#allocation5 + $0x618] sm:$0xff]
        %v494 = vld [vmem:[#allocation5 + $0x620] sm:$0xff]
        %v495 = vld [vmem:[#allocation5 + $0x628] sm:$0xff]
        %v496 = vld [vmem:[#allocation5 + $0x630] sm:$0xff]
        %v497 = vld [vmem:[#allocation5 + $0x638] sm:$0xff]
        %v498 = vld [vmem:[#allocation5 + $0x640] sm:$0xff]
        %v499 = vld [vmem:[#allocation5 + $0x648] sm:$0xff]
        %v500 = vld [vmem:[#allocation5 + $0x650] sm:$0xff]
        %v501 = vld [vmem:[#allocation5 + $0x658] sm:$0xff]
        %v502 = vld [vmem:[#allocation5 + $0x660] sm:$0xff]
        %v503 = vld [vmem:[#allocation5 + $0x668] sm:$0xff]
        %v504 = vld [vmem:[#allocation5 + $0x670] sm:$0xff]
        %v505 = vld [vmem:[#allocation5 + $0x678] sm:$0xff]
        %v506 = vld [vmem:[#allocation5 + $0x680] sm:$0xff]
        %v507 = vld [vmem:[#allocation5 + $0x688] sm:$0xff]
        %v508 = vld [vmem:[#allocation5 + $0x690] sm:$0xff]
        %v509 = vld [vmem:[#allocation5 + $0x698] sm:$0xff]
        %v510 = vld [vmem:[#allocation5 + $0x6a0] sm:$0xff]
        %v511 = vld [vmem:[#allocation5 + $0x6a8] sm:$0xff]
        %v512 = vld [vmem:[#allocation5 + $0x6b0] sm:$0xff]
        %v513 = vld [vmem:[#allocation5 + $0x6b8] sm:$0xff]
        %v514 = vld [vmem:[#allocation5 + $0x6c0] sm:$0xff]
        %v515 = vld [vmem:[#allocation5 + $0x6c8] sm:$0xff]
        %v516 = vld [vmem:[#allocation5 + $0x6d0] sm:$0xff]
        %v517 = vld [vmem:[#allocation5 + $0x6d8] sm:$0xff]
        %v518 = vld [vmem:[#allocation5 + $0x6e0] sm:$0xff]
        %v519 = vld [vmem:[#allocation5 + $0x6e8] sm:$0xff]
        %v520 = vld [vmem:[#allocation5 + $0x6f0] sm:$0xff]
        %v521 = vld [vmem:[#allocation5 + $0x6f8] sm:$0xff]
        %v522 = vld [vmem:[#allocation5 + $0x700] sm:$0xff]
        %v523 = vld [vmem:[#allocation5 + $0x708] sm:$0xff]
        %v524 = vld [vmem:[#allocation5 + $0x710] sm:$0xff]
        %v525 = vld [vmem:[#allocation5 + $0x718] sm:$0xff]
        %v526 = vld [vmem:[#allocation5 + $0x720] sm:$0xff]
        %v527 = vld [vmem:[#allocation5 + $0x728] sm:$0xff]
        %v528 = vld [vmem:[#allocation5 + $0x730] sm:$0xff]
        %v529 = vld [vmem:[#allocation5 + $0x738] sm:$0xff]
        %v530 = vld [vmem:[#allocation5 + $0x740] sm:$0xff]
        %v531 = vld [vmem:[#allocation5 + $0x748] sm:$0xff]
        %v532 = vld [vmem:[#allocation5 + $0x750] sm:$0xff]
        %v533 = vld [vmem:[#allocation5 + $0x758] sm:$0xff]
        %v534 = vld [vmem:[#allocation5 + $0x760] sm:$0xff]
        %v535 = vld [vmem:[#allocation5 + $0x768] sm:$0xff]
        %v536 = vld [vmem:[#allocation5 + $0x770] sm:$0xff]
        %v537 = vld [vmem:[#allocation5 + $0x778] sm:$0xff]
        %v538 = vld [vmem:[#allocation5 + $0x780] sm:$0xff]
        %v539 = vld [vmem:[#allocation5 + $0x788] sm:$0xff]
        %v540 = vld [vmem:[#allocation5 + $0x790] sm:$0xff]
        %v541 = vld [vmem:[#allocation5 + $0x798] sm:$0xff]
        %v542 = vld [vmem:[#allocation5 + $0x7a0] sm:$0xff]
        %v543 = vld [vmem:[#allocation5 + $0x7a8] sm:$0xff]
        %v544 = vld [vmem:[#allocation5 + $0x7b0] sm:$0xff]
        %v545 = vld [vmem:[#allocation5 + $0x7b8] sm:$0xff]
        %v546 = vld [vmem:[#allocation5 + $0x7c0] sm:$0xff]
        %v547 = vld [vmem:[#allocation5 + $0x7c8] sm:$0xff]
        %v548 = vld [vmem:[#allocation5 + $0x7d0] sm:$0xff]
        %v549 = vld [vmem:[#allocation5 + $0x7d8] sm:$0xff]
        %v550 = vld [vmem:[#allocation5 + $0x7e0] sm:$0xff]
        %v551 = vld [vmem:[#allocation5 + $0x7e8] sm:$0xff]
        %v552 = vld [vmem:[#allocation5 + $0x7f0] sm:$0xff]
        %v553 = vld [vmem:[#allocation5 + $0x7f8] sm:$0xff]
        %v554 = vld [vmem:[#allocation5 + $0x800] sm:$0xff]
        %v555 = vld [vmem:[#allocation5 + $0x808] sm:$0xff]
        %v556 = vld [vmem:[#allocation5 + $0x810] sm:$0xff]
        %v557 = vld [vmem:[#allocation5 + $0x818] sm:$0xff]
        %v558 = vld [vmem:[#allocation5 + $0x820] sm:$0xff]
        %v559 = vld [vmem:[#allocation5 + $0x828] sm:$0xff]
        %v560 = vld [vmem:[#allocation5 + $0x830] sm:$0xff]
        %v561 = vld [vmem:[#allocation5 + $0x838] sm:$0xff]
        %v562 = vld [vmem:[#allocation5 + $0x840] sm:$0xff]
        %v563 = vld [vmem:[#allocation5 + $0x848] sm:$0xff]
        %v564 = vld [vmem:[#allocation5 + $0x850] sm:$0xff]
        %v565 = vld [vmem:[#allocation5 + $0x858] sm:$0xff]
        %v566 = vld [vmem:[#allocation5 + $0x860] sm:$0xff]
        %v567 = vld [vmem:[#allocation5 + $0x868] sm:$0xff]
        %v568 = vld [vmem:[#allocation5 + $0x870] sm:$0xff]
        %v569 = vld [vmem:[#allocation5 + $0x878] sm:$0xff]
        %v570 = vld [vmem:[#allocation5 + $0x880] sm:$0xff]
        %v571 = vld [vmem:[#allocation5 + $0x888] sm:$0xff]
        %v572 = vld [vmem:[#allocation5 + $0x890] sm:$0xff]
        %v573 = vld [vmem:[#allocation5 + $0x898] sm:$0xff]
        %v574 = vld [vmem:[#allocation5 + $0x8a0] sm:$0xff]
        %v575 = vld [vmem:[#allocation5 + $0x8a8] sm:$0xff]
        %v576 = vld [vmem:[#allocation5 + $0x8b0] sm:$0xff]
        %v577 = vld [vmem:[#allocation5 + $0x8b8] sm:$0xff]
        %v578 = vld [vmem:[#allocation5 + $0x8c0] sm:$0xff]
        %v579 = vld [vmem:[#allocation5 + $0x8c8] sm:$0xff]
        %v580 = vld [vmem:[#allocation5 + $0x8d0] sm:$0xff]
        %v581 = vld [vmem:[#allocation5 + $0x8d8] sm:$0xff]
        %v582 = vld [vmem:[#allocation5 + $0x8e0] sm:$0xff]
        %v583 = vld [vmem:[#allocation5 + $0x8e8] sm:$0xff]
        %v584 = vld [vmem:[#allocation5 + $0x8f0] sm:$0xff]
        %v585 = vld [vmem:[#allocation5 + $0x8f8] sm:$0xff]
        %v586 = vld [vmem:[#allocation5 + $0x900] sm:$0xff]
        %v587 = vld [vmem:[#allocation5 + $0x908] sm:$0xff]
        %v588 = vld [vmem:[#allocation5 + $0x910] sm:$0xff]
        %v589 = vld [vmem:[#allocation5 + $0x918] sm:$0xff]
        %v590 = vld [vmem:[#allocation5 + $0x920] sm:$0xff]
        %v591 = vld [vmem:[#allocation5 + $0x928] sm:$0xff]
        %v592 = vld [vmem:[#allocation5 + $0x930] sm:$0xff]
        %v593 = vld [vmem:[#allocation5 + $0x938] sm:$0xff]
        %v594 = vld [vmem:[#allocation5 + $0x940] sm:$0xff]
        %v595 = vld [vmem:[#allocation5 + $0x948] sm:$0xff]
        %v596 = vld [vmem:[#allocation5 + $0x950] sm:$0xff]
        %v597 = vld [vmem:[#allocation5 + $0x958] sm:$0xff]
        %v598 = vld [vmem:[#allocation5 + $0x960] sm:$0xff]
        %v599 = vld [vmem:[#allocation5 + $0x968] sm:$0xff]
        %v600 = vld [vmem:[#allocation5 + $0x970] sm:$0xff]
        %v601 = vld [vmem:[#allocation5 + $0x978] sm:$0xff]
        %v602 = vld [vmem:[#allocation5 + $0x980] sm:$0xff]
        %v603 = vld [vmem:[#allocation5 + $0x988] sm:$0xff]
        %v604 = vld [vmem:[#allocation5 + $0x990] sm:$0xff]
        %v605 = vld [vmem:[#allocation5 + $0x998] sm:$0xff]
        %v606 = vld [vmem:[#allocation5 + $0x9a0] sm:$0xff]
        %v607 = vld [vmem:[#allocation5 + $0x9a8] sm:$0xff]
        %v608 = vld [vmem:[#allocation5 + $0x9b0] sm:$0xff]
        %v609 = vld [vmem:[#allocation5 + $0x9b8] sm:$0xff]
        %v610 = vld [vmem:[#allocation5 + $0x9c0] sm:$0xff]
        %v611 = vld [vmem:[#allocation5 + $0x9c8] sm:$0xff]
        %v612 = vld [vmem:[#allocation5 + $0x9d0] sm:$0xff]
        %v613 = vld [vmem:[#allocation5 + $0x9d8] sm:$0xff]
        %v614 = vld [vmem:[#allocation5 + $0x9e0] sm:$0xff]
        %v615 = vld [vmem:[#allocation5 + $0x9e8] sm:$0xff]
        %v616 = vld [vmem:[#allocation5 + $0x9f0] sm:$0xff]
        %v617 = vld [vmem:[#allocation5 + $0x9f8] sm:$0xff]
        %v618 = vld [vmem:[#allocation5 + $0xa00] sm:$0xff]
        %v619 = vld [vmem:[#allocation5 + $0xa08] sm:$0xff]
        %v620 = vld [vmem:[#allocation5 + $0xa10] sm:$0xff]
        %v621 = vld [vmem:[#allocation5 + $0xa18] sm:$0xff]
        %v622 = vld [vmem:[#allocation5 + $0xa20] sm:$0xff]
        %v623 = vld [vmem:[#allocation5 + $0xa28] sm:$0xff]
        %v624 = vld [vmem:[#allocation5 + $0xa30] sm:$0xff]
        %v625 = vld [vmem:[#allocation5 + $0xa38] sm:$0xff]
        %v626 = vld [vmem:[#allocation5 + $0xa40] sm:$0xff]
        %v627 = vld [vmem:[#allocation5 + $0xa48] sm:$0xff]
        %v628 = vld [vmem:[#allocation5 + $0xa50] sm:$0xff]
        %v629 = vld [vmem:[#allocation5 + $0xa58] sm:$0xff]
        %v630 = vld [vmem:[#allocation5 + $0xa60] sm:$0xff]
        %v631 = vld [vmem:[#allocation5 + $0xa68] sm:$0xff]
        %v632 = vld [vmem:[#allocation5 + $0xa70] sm:$0xff]
        %v633 = vld [vmem:[#allocation5 + $0xa78] sm:$0xff]
        %v634 = vld [vmem:[#allocation5 + $0xa80] sm:$0xff]
        %v635 = vld [vmem:[#allocation5 + $0xa88] sm:$0xff]
        %v636 = vld [vmem:[#allocation5 + $0xa90] sm:$0xff]
        %v637 = vld [vmem:[#allocation5 + $0xa98] sm:$0xff]
        %v638 = vld [vmem:[#allocation5 + $0xaa0] sm:$0xff]
        %v639 = vld [vmem:[#allocation5 + $0xaa8] sm:$0xff]
        %v640 = vld [vmem:[#allocation5 + $0xab0] sm:$0xff]
        %v641 = vld [vmem:[#allocation5 + $0xab8] sm:$0xff]
        %v642 = vld [vmem:[#allocation5 + $0xac0] sm:$0xff]
        %v643 = vld [vmem:[#allocation5 + $0xac8] sm:$0xff]
        %v644 = vld [vmem:[#allocation5 + $0xad0] sm:$0xff]
        %v645 = vld [vmem:[#allocation5 + $0xad8] sm:$0xff]
        %v646 = vld [vmem:[#allocation5 + $0xae0] sm:$0xff]
        %v647 = vld [vmem:[#allocation5 + $0xae8] sm:$0xff]
        %v648 = vld [vmem:[#allocation5 + $0xaf0] sm:$0xff]
        %v649 = vld [vmem:[#allocation5 + $0xaf8] sm:$0xff]
        %v650 = vld [vmem:[#allocation5 + $0xb00] sm:$0xff]
        %v651 = vld [vmem:[#allocation5 + $0xb08] sm:$0xff]
        %v652 = vld [vmem:[#allocation5 + $0xb10] sm:$0xff]
        %v653 = vld [vmem:[#allocation5 + $0xb18] sm:$0xff]
        %v654 = vld [vmem:[#allocation5 + $0xb20] sm:$0xff]
        %v655 = vld [vmem:[#allocation5 + $0xb28] sm:$0xff]
        %v656 = vld [vmem:[#allocation5 + $0xb30] sm:$0xff]
        %v657 = vld [vmem:[#allocation5 + $0xb38] sm:$0xff]
        %v658 = vld [vmem:[#allocation5 + $0xb40] sm:$0xff]
        %v659 = vld [vmem:[#allocation5 + $0xb48] sm:$0xff]
        %v660 = vld [vmem:[#allocation5 + $0xb50] sm:$0xff]
        %v661 = vld [vmem:[#allocation5 + $0xb58] sm:$0xff]
        %v662 = vld [vmem:[#allocation5 + $0xb60] sm:$0xff]
        %v663 = vld [vmem:[#allocation5 + $0xb68] sm:$0xff]
        %v664 = vld [vmem:[#allocation5 + $0xb70] sm:$0xff]
        %v665 = vld [vmem:[#allocation5 + $0xb78] sm:$0xff]
        %v666 = vld [vmem:[#allocation5 + $0xb80] sm:$0xff]
        %v667 = vld [vmem:[#allocation5 + $0xb88] sm:$0xff]
        %v668 = vld [vmem:[#allocation5 + $0xb90] sm:$0xff]
        %v669 = vld [vmem:[#allocation5 + $0xb98] sm:$0xff]
        %v670 = vld [vmem:[#allocation5 + $0xba0] sm:$0xff]
        %v671 = vld [vmem:[#allocation5 + $0xba8] sm:$0xff]
        %v672 = vld [vmem:[#allocation5 + $0xbb0] sm:$0xff]
        %v673 = vld [vmem:[#allocation5 + $0xbb8] sm:$0xff]
        %v674 = vld [vmem:[#allocation5 + $0xbc0] sm:$0xff]
        %v675 = vld [vmem:[#allocation5 + $0xbc8] sm:$0xff]
        %v676 = vld [vmem:[#allocation5 + $0xbd0] sm:$0xff]
        %v677 = vld [vmem:[#allocation5 + $0xbd8] sm:$0xff]
        %v678 = vld [vmem:[#allocation5 + $0xbe0] sm:$0xff]
        %v679 = vld [vmem:[#allocation5 + $0xbe8] sm:$0xff]
        %v680 = vld [vmem:[#allocation5 + $0xbf0] sm:$0xff]
        %v681 = vld [vmem:[#allocation5 + $0xbf8] sm:$0xff]
        %v682 = vld [vmem:[#allocation5 + $0xc00] sm:$0xff]
        %v683 = vld [vmem:[#allocation5 + $0xc08] sm:$0xff]
        %v684 = vld [vmem:[#allocation5 + $0xc10] sm:$0xff]
        %v685 = vld [vmem:[#allocation5 + $0xc18] sm:$0xff]
        %v686 = vld [vmem:[#allocation5 + $0xc20] sm:$0xff]
        %v687 = vld [vmem:[#allocation5 + $0xc28] sm:$0xff]
        %v688 = vld [vmem:[#allocation5 + $0xc30] sm:$0xff]
        %v689 = vld [vmem:[#allocation5 + $0xc38] sm:$0xff]
        %v690 = vld [vmem:[#allocation5 + $0xc40] sm:$0xff]
        %v691 = vld [vmem:[#allocation5 + $0xc48] sm:$0xff]
        %v692 = vld [vmem:[#allocation5 + $0xc50] sm:$0xff]
        %v693 = vld [vmem:[#allocation5 + $0xc58] sm:$0xff]
        %v694 = vld [vmem:[#allocation5 + $0xc60] sm:$0xff]
        %v695 = vld [vmem:[#allocation5 + $0xc68] sm:$0xff]
        %v696 = vld [vmem:[#allocation5 + $0xc70] sm:$0xff]
        %v697 = vld [vmem:[#allocation5 + $0xc78] sm:$0xff]
        %v698 = vld [vmem:[#allocation5 + $0xc80] sm:$0xff]
        %v699 = vld [vmem:[#allocation5 + $0xc88] sm:$0xff]
        %v700 = vld [vmem:[#allocation5 + $0xc90] sm:$0xff]
        %v701 = vld [vmem:[#allocation5 + $0xc98] sm:$0xff]
        %v702 = vld [vmem:[#allocation5 + $0xca0] sm:$0xff]
        %v703 = vld [vmem:[#allocation5 + $0xca8] sm:$0xff]
        %v704 = vld [vmem:[#allocation5 + $0xcb0] sm:$0xff]
        %v705 = vld [vmem:[#allocation5 + $0xcb8] sm:$0xff]
        %v706 = vld [vmem:[#allocation5 + $0xcc0] sm:$0xff]
        %v707 = vld [vmem:[#allocation5 + $0xcc8] sm:$0xff]
        %v708 = vld [vmem:[#allocation5 + $0xcd0] sm:$0xff]
        %v709 = vld [vmem:[#allocation5 + $0xcd8] sm:$0xff]
        %v710 = vld [vmem:[#allocation5 + $0xce0] sm:$0xff]
        %v711 = vld [vmem:[#allocation5 + $0xce8] sm:$0xff]
        %v712 = vld [vmem:[#allocation5 + $0xcf0] sm:$0xff]
        %v713 = vld [vmem:[#allocation5 + $0xcf8] sm:$0xff]
        %v714 = vld [vmem:[#allocation5 + $0xd00] sm:$0xff]
        %v715 = vld [vmem:[#allocation5 + $0xd08] sm:$0xff]
        %v716 = vld [vmem:[#allocation5 + $0xd10] sm:$0xff]
        %v717 = vld [vmem:[#allocation5 + $0xd18] sm:$0xff]
        %v718 = vld [vmem:[#allocation5 + $0xd20] sm:$0xff]
        %v719 = vld [vmem:[#allocation5 + $0xd28] sm:$0xff]
        %v720 = vld [vmem:[#allocation5 + $0xd30] sm:$0xff]
        %v721 = vld [vmem:[#allocation5 + $0xd38] sm:$0xff]
        %v722 = vld [vmem:[#allocation5 + $0xd40] sm:$0xff]
        %v723 = vld [vmem:[#allocation5 + $0xd48] sm:$0xff]
        %v724 = vld [vmem:[#allocation5 + $0xd50] sm:$0xff]
        %v725 = vld [vmem:[#allocation5 + $0xd58] sm:$0xff]
        %v726 = vld [vmem:[#allocation5 + $0xd60] sm:$0xff]
        %v727 = vld [vmem:[#allocation5 + $0xd68] sm:$0xff]
        %v728 = vld [vmem:[#allocation5 + $0xd70] sm:$0xff]
        %v729 = vld [vmem:[#allocation5 + $0xd78] sm:$0xff]
        %v1162 = vunpack.c.l.b16 %v298
        %v1163 = vunpack.c.h.b16 %v298
        %v1164 = vunpack.c.l.b16 %v299
        %v1165 = vunpack.c.h.b16 %v299
        %v1166 = vunpack.c.l.b16 %v300
        %v1167 = vunpack.c.h.b16 %v300
        %v1168 = vunpack.c.l.b16 %v301
        %v1169 = vunpack.c.h.b16 %v301
        %v1170 = vunpack.c.l.b16 %v302
        %v1171 = vunpack.c.h.b16 %v302
        %v1172 = vunpack.c.l.b16 %v303
        %v1173 = vunpack.c.h.b16 %v303
        %v1174 = vunpack.c.l.b16 %v304
        %v1175 = vunpack.c.h.b16 %v304
        %v1176 = vunpack.c.l.b16 %v305
        %v1177 = vunpack.c.h.b16 %v305
        %v1178 = vunpack.c.l.b16 %v306
        %v1179 = vunpack.c.h.b16 %v306
        %v1180 = vunpack.c.l.b16 %v307
        %v1181 = vunpack.c.h.b16 %v307
        %v1182 = vunpack.c.l.b16 %v308
        %v1183 = vunpack.c.h.b16 %v308
        %v1184 = vunpack.c.l.b16 %v309
        %v1185 = vunpack.c.h.b16 %v309
        %v1186 = vunpack.c.l.b16 %v310
        %v1187 = vunpack.c.h.b16 %v310
        %v1188 = vunpack.c.l.b16 %v311
        %v1189 = vunpack.c.h.b16 %v311
        %v1190 = vunpack.c.l.b16 %v312
        %v1191 = vunpack.c.h.b16 %v312
        %v1192 = vunpack.c.l.b16 %v313
        %v1193 = vunpack.c.h.b16 %v313
        %v1194 = vunpack.c.l.b16 %v314
        %v1195 = vunpack.c.h.b16 %v314
        %v1196 = vunpack.c.l.b16 %v315
        %v1197 = vunpack.c.h.b16 %v315
        %v1198 = vunpack.c.l.b16 %v316
        %v1199 = vunpack.c.h.b16 %v316
        %v1200 = vunpack.c.l.b16 %v317
        %v1201 = vunpack.c.h.b16 %v317
        %v1202 = vunpack.c.l.b16 %v318
        %v1203 = vunpack.c.h.b16 %v318
        %v1204 = vunpack.c.l.b16 %v319
        %v1205 = vunpack.c.h.b16 %v319
        %v1206 = vunpack.c.l.b16 %v320
        %v1207 = vunpack.c.h.b16 %v320
        %v1208 = vunpack.c.l.b16 %v321
        %v1209 = vunpack.c.h.b16 %v321
        %v1210 = vunpack.c.l.b16 %v322
        %v1211 = vunpack.c.h.b16 %v322
        %v1212 = vunpack.c.l.b16 %v323
        %v1213 = vunpack.c.h.b16 %v323
        %v1214 = vunpack.c.l.b16 %v324
        %v1215 = vunpack.c.h.b16 %v324
        %v1216 = vunpack.c.l.b16 %v325
        %v1217 = vunpack.c.h.b16 %v325
        %v1218 = vunpack.c.l.b16 %v326
        %v1219 = vunpack.c.h.b16 %v326
        %v1220 = vunpack.c.l.b16 %v327
        %v1221 = vunpack.c.h.b16 %v327
        %v1222 = vunpack.c.l.b16 %v328
        %v1223 = vunpack.c.h.b16 %v328
        %v1224 = vunpack.c.l.b16 %v329
        %v1225 = vunpack.c.h.b16 %v329
        %v1226 = vunpack.c.l.b16 %v330
        %v1227 = vunpack.c.h.b16 %v330
        %v1228 = vunpack.c.l.b16 %v331
        %v1229 = vunpack.c.h.b16 %v331
        %v1230 = vunpack.c.l.b16 %v332
        %v1231 = vunpack.c.h.b16 %v332
        %v1232 = vunpack.c.l.b16 %v333
        %v1233 = vunpack.c.h.b16 %v333
        %v1234 = vunpack.c.l.b16 %v334
        %v1235 = vunpack.c.h.b16 %v334
        %v1236 = vunpack.c.l.b16 %v335
        %v1237 = vunpack.c.h.b16 %v335
        %v1238 = vunpack.c.l.b16 %v336
        %v1239 = vunpack.c.h.b16 %v336
        %v1240 = vunpack.c.l.b16 %v337
        %v1241 = vunpack.c.h.b16 %v337
        %v1242 = vunpack.c.l.b16 %v338
        %v1243 = vunpack.c.h.b16 %v338
        %v1244 = vunpack.c.l.b16 %v339
        %v1245 = vunpack.c.h.b16 %v339
        %v1246 = vunpack.c.l.b16 %v340
        %v1247 = vunpack.c.h.b16 %v340
        %v1248 = vunpack.c.l.b16 %v341
        %v1249 = vunpack.c.h.b16 %v341
        %v1250 = vunpack.c.l.b16 %v342
        %v1251 = vunpack.c.h.b16 %v342
        %v1252 = vunpack.c.l.b16 %v343
        %v1253 = vunpack.c.h.b16 %v343
        %v1254 = vunpack.c.l.b16 %v344
        %v1255 = vunpack.c.h.b16 %v344
        %v1256 = vunpack.c.l.b16 %v345
        %v1257 = vunpack.c.h.b16 %v345
        %v1258 = vunpack.c.l.b16 %v346
        %v1259 = vunpack.c.h.b16 %v346
        %v1260 = vunpack.c.l.b16 %v347
        %v1261 = vunpack.c.h.b16 %v347
        %v1262 = vunpack.c.l.b16 %v348
        %v1263 = vunpack.c.h.b16 %v348
        %v1264 = vunpack.c.l.b16 %v349
        %v1265 = vunpack.c.h.b16 %v349
        %v1266 = vunpack.c.l.b16 %v350
        %v1267 = vunpack.c.h.b16 %v350
        %v1268 = vunpack.c.l.b16 %v351
        %v1269 = vunpack.c.h.b16 %v351
        %v1270 = vunpack.c.l.b16 %v352
        %v1271 = vunpack.c.h.b16 %v352
        %v1272 = vunpack.c.l.b16 %v353
        %v1273 = vunpack.c.h.b16 %v353
        %v1274 = vunpack.c.l.b16 %v354
        %v1275 = vunpack.c.h.b16 %v354
        %v1276 = vunpack.c.l.b16 %v355
        %v1277 = vunpack.c.h.b16 %v355
        %v1278 = vunpack.c.l.b16 %v356
        %v1279 = vunpack.c.h.b16 %v356
        %v1280 = vunpack.c.l.b16 %v357
        %v1281 = vunpack.c.h.b16 %v357
        %v1282 = vunpack.c.l.b16 %v358
        %v1283 = vunpack.c.h.b16 %v358
        %v1284 = vunpack.c.l.b16 %v359
        %v1285 = vunpack.c.h.b16 %v359
        %v1286 = vunpack.c.l.b16 %v360
        %v1287 = vunpack.c.h.b16 %v360
        %v1288 = vunpack.c.l.b16 %v361
        %v1289 = vunpack.c.h.b16 %v361
        %v1290 = vunpack.c.l.b16 %v362
        %v1291 = vunpack.c.h.b16 %v362
        %v1292 = vunpack.c.l.b16 %v363
        %v1293 = vunpack.c.h.b16 %v363
        %v1294 = vunpack.c.l.b16 %v364
        %v1295 = vunpack.c.h.b16 %v364
        %v1296 = vunpack.c.l.b16 %v365
        %v1297 = vunpack.c.h.b16 %v365
        %v1298 = vunpack.c.l.b16 %v366
        %v1299 = vunpack.c.h.b16 %v366
        %v1300 = vunpack.c.l.b16 %v367
        %v1301 = vunpack.c.h.b16 %v367
        %v1302 = vunpack.c.l.b16 %v368
        %v1303 = vunpack.c.h.b16 %v368
        %v1304 = vunpack.c.l.b16 %v369
        %v1305 = vunpack.c.h.b16 %v369
        %v1306 = vunpack.c.l.b16 %v370
        %v1307 = vunpack.c.h.b16 %v370
        %v1308 = vunpack.c.l.b16 %v371
        %v1309 = vunpack.c.h.b16 %v371
        %v1310 = vunpack.c.l.b16 %v372
        %v1311 = vunpack.c.h.b16 %v372
        %v1312 = vunpack.c.l.b16 %v373
        %v1313 = vunpack.c.h.b16 %v373
        %v1314 = vunpack.c.l.b16 %v374
        %v1315 = vunpack.c.h.b16 %v374
        %v1316 = vunpack.c.l.b16 %v375
        %v1317 = vunpack.c.h.b16 %v375
        %v1318 = vunpack.c.l.b16 %v376
        %v1319 = vunpack.c.h.b16 %v376
        %v1320 = vunpack.c.l.b16 %v377
        %v1321 = vunpack.c.h.b16 %v377
        %v1322 = vunpack.c.l.b16 %v378
        %v1323 = vunpack.c.h.b16 %v378
        %v1324 = vunpack.c.l.b16 %v379
        %v1325 = vunpack.c.h.b16 %v379
        %v1326 = vunpack.c.l.b16 %v380
        %v1327 = vunpack.c.h.b16 %v380
        %v1328 = vunpack.c.l.b16 %v381
        %v1329 = vunpack.c.h.b16 %v381
        %v1330 = vunpack.c.l.b16 %v382
        %v1331 = vunpack.c.h.b16 %v382
        %v1332 = vunpack.c.l.b16 %v383
        %v1333 = vunpack.c.h.b16 %v383
        %v1334 = vunpack.c.l.b16 %v384
        %v1335 = vunpack.c.h.b16 %v384
        %v1336 = vunpack.c.l.b16 %v385
        %v1337 = vunpack.c.h.b16 %v385
        %v1338 = vunpack.c.l.b16 %v386
        %v1339 = vunpack.c.h.b16 %v386
        %v1340 = vunpack.c.l.b16 %v387
        %v1341 = vunpack.c.h.b16 %v387
        %v1342 = vunpack.c.l.b16 %v388
        %v1343 = vunpack.c.h.b16 %v388
        %v1344 = vunpack.c.l.b16 %v389
        %v1345 = vunpack.c.h.b16 %v389
        %v1346 = vunpack.c.l.b16 %v390
        %v1347 = vunpack.c.h.b16 %v390
        %v1348 = vunpack.c.l.b16 %v391
        %v1349 = vunpack.c.h.b16 %v391
        %v1350 = vunpack.c.l.b16 %v392
        %v1351 = vunpack.c.h.b16 %v392
        %v1352 = vunpack.c.l.b16 %v393
        %v1353 = vunpack.c.h.b16 %v393
        %v1354 = vunpack.c.l.b16 %v394
        %v1355 = vunpack.c.h.b16 %v394
        %v1356 = vunpack.c.l.b16 %v395
        %v1357 = vunpack.c.h.b16 %v395
        %v1358 = vunpack.c.l.b16 %v396
        %v1359 = vunpack.c.h.b16 %v396
        %v1360 = vunpack.c.l.b16 %v397
        %v1361 = vunpack.c.h.b16 %v397
        %v1362 = vunpack.c.l.b16 %v398
        %v1363 = vunpack.c.h.b16 %v398
        %v1364 = vunpack.c.l.b16 %v399
        %v1365 = vunpack.c.h.b16 %v399
        %v1366 = vunpack.c.l.b16 %v400
        %v1367 = vunpack.c.h.b16 %v400
        %v1368 = vunpack.c.l.b16 %v401
        %v1369 = vunpack.c.h.b16 %v401
        %v1370 = vunpack.c.l.b16 %v402
        %v1371 = vunpack.c.h.b16 %v402
        %v1372 = vunpack.c.l.b16 %v403
        %v1373 = vunpack.c.h.b16 %v403
        %v1374 = vunpack.c.l.b16 %v404
        %v1375 = vunpack.c.h.b16 %v404
        %v1376 = vunpack.c.l.b16 %v405
        %v1377 = vunpack.c.h.b16 %v405
        %v1378 = vunpack.c.l.b16 %v406
        %v1379 = vunpack.c.h.b16 %v406
        %v1380 = vunpack.c.l.b16 %v407
        %v1381 = vunpack.c.h.b16 %v407
        %v1382 = vunpack.c.l.b16 %v408
        %v1383 = vunpack.c.h.b16 %v408
        %v1384 = vunpack.c.l.b16 %v409
        %v1385 = vunpack.c.h.b16 %v409
        %v1386 = vunpack.c.l.b16 %v410
        %v1387 = vunpack.c.h.b16 %v410
        %v1388 = vunpack.c.l.b16 %v411
        %v1389 = vunpack.c.h.b16 %v411
        %v1390 = vunpack.c.l.b16 %v412
        %v1391 = vunpack.c.h.b16 %v412
        %v1392 = vunpack.c.l.b16 %v413
        %v1393 = vunpack.c.h.b16 %v413
        %v1394 = vunpack.c.l.b16 %v414
        %v1395 = vunpack.c.h.b16 %v414
        %v1396 = vunpack.c.l.b16 %v415
        %v1397 = vunpack.c.h.b16 %v415
        %v1398 = vunpack.c.l.b16 %v416
        %v1399 = vunpack.c.h.b16 %v416
        %v1400 = vunpack.c.l.b16 %v417
        %v1401 = vunpack.c.h.b16 %v417
        %v1402 = vunpack.c.l.b16 %v418
        %v1403 = vunpack.c.h.b16 %v418
        %v1404 = vunpack.c.l.b16 %v419
        %v1405 = vunpack.c.h.b16 %v419
        %v1406 = vunpack.c.l.b16 %v420
        %v1407 = vunpack.c.h.b16 %v420
        %v1408 = vunpack.c.l.b16 %v421
        %v1409 = vunpack.c.h.b16 %v421
        %v1410 = vunpack.c.l.b16 %v422
        %v1411 = vunpack.c.h.b16 %v422
        %v1412 = vunpack.c.l.b16 %v423
        %v1413 = vunpack.c.h.b16 %v423
        %v1414 = vunpack.c.l.b16 %v424
        %v1415 = vunpack.c.h.b16 %v424
        %v1416 = vunpack.c.l.b16 %v425
        %v1417 = vunpack.c.h.b16 %v425
        %v1418 = vunpack.c.l.b16 %v426
        %v1419 = vunpack.c.h.b16 %v426
        %v1420 = vunpack.c.l.b16 %v427
        %v1421 = vunpack.c.h.b16 %v427
        %v1422 = vunpack.c.l.b16 %v428
        %v1423 = vunpack.c.h.b16 %v428
        %v1424 = vunpack.c.l.b16 %v429
        %v1425 = vunpack.c.h.b16 %v429
        %v1426 = vunpack.c.l.b16 %v430
        %v1427 = vunpack.c.h.b16 %v430
        %v1428 = vunpack.c.l.b16 %v431
        %v1429 = vunpack.c.h.b16 %v431
        %v1430 = vunpack.c.l.b16 %v432
        %v1431 = vunpack.c.h.b16 %v432
        %v1432 = vunpack.c.l.b16 %v433
        %v1433 = vunpack.c.h.b16 %v433
        %v1434 = vunpack.c.l.b16 %v434
        %v1435 = vunpack.c.h.b16 %v434
        %v1436 = vunpack.c.l.b16 %v435
        %v1437 = vunpack.c.h.b16 %v435
        %v1438 = vunpack.c.l.b16 %v436
        %v1439 = vunpack.c.h.b16 %v436
        %v1440 = vunpack.c.l.b16 %v437
        %v1441 = vunpack.c.h.b16 %v437
        %v1442 = vunpack.c.l.b16 %v438
        %v1443 = vunpack.c.h.b16 %v438
        %v1444 = vunpack.c.l.b16 %v439
        %v1445 = vunpack.c.h.b16 %v439
        %v1446 = vunpack.c.l.b16 %v440
        %v1447 = vunpack.c.h.b16 %v440
        %v1448 = vunpack.c.l.b16 %v441
        %v1449 = vunpack.c.h.b16 %v441
        %v1450 = vunpack.c.l.b16 %v442
        %v1451 = vunpack.c.h.b16 %v442
        %v1452 = vunpack.c.l.b16 %v443
        %v1453 = vunpack.c.h.b16 %v443
        %v1454 = vunpack.c.l.b16 %v444
        %v1455 = vunpack.c.h.b16 %v444
        %v1456 = vunpack.c.l.b16 %v445
        %v1457 = vunpack.c.h.b16 %v445
        %v1458 = vunpack.c.l.b16 %v446
        %v1459 = vunpack.c.h.b16 %v446
        %v1460 = vunpack.c.l.b16 %v447
        %v1461 = vunpack.c.h.b16 %v447
        %v1462 = vunpack.c.l.b16 %v448
        %v1463 = vunpack.c.h.b16 %v448
        %v1464 = vunpack.c.l.b16 %v449
        %v1465 = vunpack.c.h.b16 %v449
        %v1466 = vunpack.c.l.b16 %v450
        %v1467 = vunpack.c.h.b16 %v450
        %v1468 = vunpack.c.l.b16 %v451
        %v1469 = vunpack.c.h.b16 %v451
        %v1470 = vunpack.c.l.b16 %v452
        %v1471 = vunpack.c.h.b16 %v452
        %v1472 = vunpack.c.l.b16 %v453
        %v1473 = vunpack.c.h.b16 %v453
        %v1474 = vunpack.c.l.b16 %v454
        %v1475 = vunpack.c.h.b16 %v454
        %v1476 = vunpack.c.l.b16 %v455
        %v1477 = vunpack.c.h.b16 %v455
        %v1478 = vunpack.c.l.b16 %v456
        %v1479 = vunpack.c.h.b16 %v456
        %v1480 = vunpack.c.l.b16 %v457
        %v1481 = vunpack.c.h.b16 %v457
        %v1482 = vunpack.c.l.b16 %v458
        %v1483 = vunpack.c.h.b16 %v458
        %v1484 = vunpack.c.l.b16 %v459
        %v1485 = vunpack.c.h.b16 %v459
        %v1486 = vunpack.c.l.b16 %v460
        %v1487 = vunpack.c.h.b16 %v460
        %v1488 = vunpack.c.l.b16 %v461
        %v1489 = vunpack.c.h.b16 %v461
        %v1490 = vunpack.c.l.b16 %v462
        %v1491 = vunpack.c.h.b16 %v462
        %v1492 = vunpack.c.l.b16 %v463
        %v1493 = vunpack.c.h.b16 %v463
        %v1494 = vunpack.c.l.b16 %v464
        %v1495 = vunpack.c.h.b16 %v464
        %v1496 = vunpack.c.l.b16 %v465
        %v1497 = vunpack.c.h.b16 %v465
        %v1498 = vunpack.c.l.b16 %v466
        %v1499 = vunpack.c.h.b16 %v466
        %v1500 = vunpack.c.l.b16 %v467
        %v1501 = vunpack.c.h.b16 %v467
        %v1502 = vunpack.c.l.b16 %v468
        %v1503 = vunpack.c.h.b16 %v468
        %v1504 = vunpack.c.l.b16 %v469
        %v1505 = vunpack.c.h.b16 %v469
        %v1506 = vunpack.c.l.b16 %v470
        %v1507 = vunpack.c.h.b16 %v470
        %v1508 = vunpack.c.l.b16 %v471
        %v1509 = vunpack.c.h.b16 %v471
        %v1510 = vunpack.c.l.b16 %v472
        %v1511 = vunpack.c.h.b16 %v472
        %v1512 = vunpack.c.l.b16 %v473
        %v1513 = vunpack.c.h.b16 %v473
        %v1514 = vunpack.c.l.b16 %v474
        %v1515 = vunpack.c.h.b16 %v474
        %v1516 = vunpack.c.l.b16 %v475
        %v1517 = vunpack.c.h.b16 %v475
        %v1518 = vunpack.c.l.b16 %v476
        %v1519 = vunpack.c.h.b16 %v476
        %v1520 = vunpack.c.l.b16 %v477
        %v1521 = vunpack.c.h.b16 %v477
        %v1522 = vunpack.c.l.b16 %v478
        %v1523 = vunpack.c.h.b16 %v478
        %v1524 = vunpack.c.l.b16 %v479
        %v1525 = vunpack.c.h.b16 %v479
        %v1526 = vunpack.c.l.b16 %v480
        %v1527 = vunpack.c.h.b16 %v480
        %v1528 = vunpack.c.l.b16 %v481
        %v1529 = vunpack.c.h.b16 %v481
        %v1530 = vunpack.c.l.b16 %v482
        %v1531 = vunpack.c.h.b16 %v482
        %v1532 = vunpack.c.l.b16 %v483
        %v1533 = vunpack.c.h.b16 %v483
        %v1534 = vunpack.c.l.b16 %v484
        %v1535 = vunpack.c.h.b16 %v484
        %v1536 = vunpack.c.l.b16 %v485
        %v1537 = vunpack.c.h.b16 %v485
        %v1538 = vunpack.c.l.b16 %v486
        %v1539 = vunpack.c.h.b16 %v486
        %v1540 = vunpack.c.l.b16 %v487
        %v1541 = vunpack.c.h.b16 %v487
        %v1542 = vunpack.c.l.b16 %v488
        %v1543 = vunpack.c.h.b16 %v488
        %v1544 = vunpack.c.l.b16 %v489
        %v1545 = vunpack.c.h.b16 %v489
        %v1546 = vunpack.c.l.b16 %v490
        %v1547 = vunpack.c.h.b16 %v490
        %v1548 = vunpack.c.l.b16 %v491
        %v1549 = vunpack.c.h.b16 %v491
        %v1550 = vunpack.c.l.b16 %v492
        %v1551 = vunpack.c.h.b16 %v492
        %v1552 = vunpack.c.l.b16 %v493
        %v1553 = vunpack.c.h.b16 %v493
        %v1554 = vunpack.c.l.b16 %v494
        %v1555 = vunpack.c.h.b16 %v494
        %v1556 = vunpack.c.l.b16 %v495
        %v1557 = vunpack.c.h.b16 %v495
        %v1558 = vunpack.c.l.b16 %v496
        %v1559 = vunpack.c.h.b16 %v496
        %v1560 = vunpack.c.l.b16 %v497
        %v1561 = vunpack.c.h.b16 %v497
        %v1562 = vunpack.c.l.b16 %v498
        %v1563 = vunpack.c.h.b16 %v498
        %v1564 = vunpack.c.l.b16 %v499
        %v1565 = vunpack.c.h.b16 %v499
        %v1566 = vunpack.c.l.b16 %v500
        %v1567 = vunpack.c.h.b16 %v500
        %v1568 = vunpack.c.l.b16 %v501
        %v1569 = vunpack.c.h.b16 %v501
        %v1570 = vunpack.c.l.b16 %v502
        %v1571 = vunpack.c.h.b16 %v502
        %v1572 = vunpack.c.l.b16 %v503
        %v1573 = vunpack.c.h.b16 %v503
        %v1574 = vunpack.c.l.b16 %v504
        %v1575 = vunpack.c.h.b16 %v504
        %v1576 = vunpack.c.l.b16 %v505
        %v1577 = vunpack.c.h.b16 %v505
        %v1578 = vunpack.c.l.b16 %v506
        %v1579 = vunpack.c.h.b16 %v506
        %v1580 = vunpack.c.l.b16 %v507
        %v1581 = vunpack.c.h.b16 %v507
        %v1582 = vunpack.c.l.b16 %v508
        %v1583 = vunpack.c.h.b16 %v508
        %v1584 = vunpack.c.l.b16 %v509
        %v1585 = vunpack.c.h.b16 %v509
        %v1586 = vunpack.c.l.b16 %v510
        %v1587 = vunpack.c.h.b16 %v510
        %v1588 = vunpack.c.l.b16 %v511
        %v1589 = vunpack.c.h.b16 %v511
        %v1590 = vunpack.c.l.b16 %v512
        %v1591 = vunpack.c.h.b16 %v512
        %v1592 = vunpack.c.l.b16 %v513
        %v1593 = vunpack.c.h.b16 %v513
        %v1594 = vunpack.c.l.b16 %v514
        %v1595 = vunpack.c.h.b16 %v514
        %v1596 = vunpack.c.l.b16 %v515
        %v1597 = vunpack.c.h.b16 %v515
        %v1598 = vunpack.c.l.b16 %v516
        %v1599 = vunpack.c.h.b16 %v516
        %v1600 = vunpack.c.l.b16 %v517
        %v1601 = vunpack.c.h.b16 %v517
        %v1602 = vunpack.c.l.b16 %v518
        %v1603 = vunpack.c.h.b16 %v518
        %v1604 = vunpack.c.l.b16 %v519
        %v1605 = vunpack.c.h.b16 %v519
        %v1606 = vunpack.c.l.b16 %v520
        %v1607 = vunpack.c.h.b16 %v520
        %v1608 = vunpack.c.l.b16 %v521
        %v1609 = vunpack.c.h.b16 %v521
        %v1610 = vunpack.c.l.b16 %v522
        %v1611 = vunpack.c.h.b16 %v522
        %v1612 = vunpack.c.l.b16 %v523
        %v1613 = vunpack.c.h.b16 %v523
        %v1614 = vunpack.c.l.b16 %v524
        %v1615 = vunpack.c.h.b16 %v524
        %v1616 = vunpack.c.l.b16 %v525
        %v1617 = vunpack.c.h.b16 %v525
        %v1618 = vunpack.c.l.b16 %v526
        %v1619 = vunpack.c.h.b16 %v526
        %v1620 = vunpack.c.l.b16 %v527
        %v1621 = vunpack.c.h.b16 %v527
        %v1622 = vunpack.c.l.b16 %v528
        %v1623 = vunpack.c.h.b16 %v528
        %v1624 = vunpack.c.l.b16 %v529
        %v1625 = vunpack.c.h.b16 %v529
        %v1626 = vunpack.c.l.b16 %v530
        %v1627 = vunpack.c.h.b16 %v530
        %v1628 = vunpack.c.l.b16 %v531
        %v1629 = vunpack.c.h.b16 %v531
        %v1630 = vunpack.c.l.b16 %v532
        %v1631 = vunpack.c.h.b16 %v532
        %v1632 = vunpack.c.l.b16 %v533
        %v1633 = vunpack.c.h.b16 %v533
        %v1634 = vunpack.c.l.b16 %v534
        %v1635 = vunpack.c.h.b16 %v534
        %v1636 = vunpack.c.l.b16 %v535
        %v1637 = vunpack.c.h.b16 %v535
        %v1638 = vunpack.c.l.b16 %v536
        %v1639 = vunpack.c.h.b16 %v536
        %v1640 = vunpack.c.l.b16 %v537
        %v1641 = vunpack.c.h.b16 %v537
        %v1642 = vunpack.c.l.b16 %v538
        %v1643 = vunpack.c.h.b16 %v538
        %v1644 = vunpack.c.l.b16 %v539
        %v1645 = vunpack.c.h.b16 %v539
        %v1646 = vunpack.c.l.b16 %v540
        %v1647 = vunpack.c.h.b16 %v540
        %v1648 = vunpack.c.l.b16 %v541
        %v1649 = vunpack.c.h.b16 %v541
        %v1650 = vunpack.c.l.b16 %v542
        %v1651 = vunpack.c.h.b16 %v542
        %v1652 = vunpack.c.l.b16 %v543
        %v1653 = vunpack.c.h.b16 %v543
        %v1654 = vunpack.c.l.b16 %v544
        %v1655 = vunpack.c.h.b16 %v544
        %v1656 = vunpack.c.l.b16 %v545
        %v1657 = vunpack.c.h.b16 %v545
        %v1658 = vunpack.c.l.b16 %v546
        %v1659 = vunpack.c.h.b16 %v546
        %v1660 = vunpack.c.l.b16 %v547
        %v1661 = vunpack.c.h.b16 %v547
        %v1662 = vunpack.c.l.b16 %v548
        %v1663 = vunpack.c.h.b16 %v548
        %v1664 = vunpack.c.l.b16 %v549
        %v1665 = vunpack.c.h.b16 %v549
        %v1666 = vunpack.c.l.b16 %v550
        %v1667 = vunpack.c.h.b16 %v550
        %v1668 = vunpack.c.l.b16 %v551
        %v1669 = vunpack.c.h.b16 %v551
        %v1670 = vunpack.c.l.b16 %v552
        %v1671 = vunpack.c.h.b16 %v552
        %v1672 = vunpack.c.l.b16 %v553
        %v1673 = vunpack.c.h.b16 %v553
        %v1674 = vunpack.c.l.b16 %v554
        %v1675 = vunpack.c.h.b16 %v554
        %v1676 = vunpack.c.l.b16 %v555
        %v1677 = vunpack.c.h.b16 %v555
        %v1678 = vunpack.c.l.b16 %v556
        %v1679 = vunpack.c.h.b16 %v556
        %v1680 = vunpack.c.l.b16 %v557
        %v1681 = vunpack.c.h.b16 %v557
        %v1682 = vunpack.c.l.b16 %v558
        %v1683 = vunpack.c.h.b16 %v558
        %v1684 = vunpack.c.l.b16 %v559
        %v1685 = vunpack.c.h.b16 %v559
        %v1686 = vunpack.c.l.b16 %v560
        %v1687 = vunpack.c.h.b16 %v560
        %v1688 = vunpack.c.l.b16 %v561
        %v1689 = vunpack.c.h.b16 %v561
        %v1690 = vunpack.c.l.b16 %v562
        %v1691 = vunpack.c.h.b16 %v562
        %v1692 = vunpack.c.l.b16 %v563
        %v1693 = vunpack.c.h.b16 %v563
        %v1694 = vunpack.c.l.b16 %v564
        %v1695 = vunpack.c.h.b16 %v564
        %v1696 = vunpack.c.l.b16 %v565
        %v1697 = vunpack.c.h.b16 %v565
        %v1698 = vunpack.c.l.b16 %v566
        %v1699 = vunpack.c.h.b16 %v566
        %v1700 = vunpack.c.l.b16 %v567
        %v1701 = vunpack.c.h.b16 %v567
        %v1702 = vunpack.c.l.b16 %v568
        %v1703 = vunpack.c.h.b16 %v568
        %v1704 = vunpack.c.l.b16 %v569
        %v1705 = vunpack.c.h.b16 %v569
        %v1706 = vunpack.c.l.b16 %v570
        %v1707 = vunpack.c.h.b16 %v570
        %v1708 = vunpack.c.l.b16 %v571
        %v1709 = vunpack.c.h.b16 %v571
        %v1710 = vunpack.c.l.b16 %v572
        %v1711 = vunpack.c.h.b16 %v572
        %v1712 = vunpack.c.l.b16 %v573
        %v1713 = vunpack.c.h.b16 %v573
        %v1714 = vunpack.c.l.b16 %v574
        %v1715 = vunpack.c.h.b16 %v574
        %v1716 = vunpack.c.l.b16 %v575
        %v1717 = vunpack.c.h.b16 %v575
        %v1718 = vunpack.c.l.b16 %v576
        %v1719 = vunpack.c.h.b16 %v576
        %v1720 = vunpack.c.l.b16 %v577
        %v1721 = vunpack.c.h.b16 %v577
        %v1722 = vunpack.c.l.b16 %v578
        %v1723 = vunpack.c.h.b16 %v578
        %v1724 = vunpack.c.l.b16 %v579
        %v1725 = vunpack.c.h.b16 %v579
        %v1726 = vunpack.c.l.b16 %v580
        %v1727 = vunpack.c.h.b16 %v580
        %v1728 = vunpack.c.l.b16 %v581
        %v1729 = vunpack.c.h.b16 %v581
        %v1730 = vunpack.c.l.b16 %v582
        %v1731 = vunpack.c.h.b16 %v582
        %v1732 = vunpack.c.l.b16 %v583
        %v1733 = vunpack.c.h.b16 %v583
        %v1734 = vunpack.c.l.b16 %v584
        %v1735 = vunpack.c.h.b16 %v584
        %v1736 = vunpack.c.l.b16 %v585
        %v1737 = vunpack.c.h.b16 %v585
        %v1738 = vunpack.c.l.b16 %v586
        %v1739 = vunpack.c.h.b16 %v586
        %v1740 = vunpack.c.l.b16 %v587
        %v1741 = vunpack.c.h.b16 %v587
        %v1742 = vunpack.c.l.b16 %v588
        %v1743 = vunpack.c.h.b16 %v588
        %v1744 = vunpack.c.l.b16 %v589
        %v1745 = vunpack.c.h.b16 %v589
        %v1746 = vunpack.c.l.b16 %v590
        %v1747 = vunpack.c.h.b16 %v590
        %v1748 = vunpack.c.l.b16 %v591
        %v1749 = vunpack.c.h.b16 %v591
        %v1750 = vunpack.c.l.b16 %v592
        %v1751 = vunpack.c.h.b16 %v592
        %v1752 = vunpack.c.l.b16 %v593
        %v1753 = vunpack.c.h.b16 %v593
        %v1754 = vunpack.c.l.b16 %v594
        %v1755 = vunpack.c.h.b16 %v594
        %v1756 = vunpack.c.l.b16 %v595
        %v1757 = vunpack.c.h.b16 %v595
        %v1758 = vunpack.c.l.b16 %v596
        %v1759 = vunpack.c.h.b16 %v596
        %v1760 = vunpack.c.l.b16 %v597
        %v1761 = vunpack.c.h.b16 %v597
        %v1762 = vunpack.c.l.b16 %v598
        %v1763 = vunpack.c.h.b16 %v598
        %v1764 = vunpack.c.l.b16 %v599
        %v1765 = vunpack.c.h.b16 %v599
        %v1766 = vunpack.c.l.b16 %v600
        %v1767 = vunpack.c.h.b16 %v600
        %v1768 = vunpack.c.l.b16 %v601
        %v1769 = vunpack.c.h.b16 %v601
        %v1770 = vunpack.c.l.b16 %v602
        %v1771 = vunpack.c.h.b16 %v602
        %v1772 = vunpack.c.l.b16 %v603
        %v1773 = vunpack.c.h.b16 %v603
        %v1774 = vunpack.c.l.b16 %v604
        %v1775 = vunpack.c.h.b16 %v604
        %v1776 = vunpack.c.l.b16 %v605
        %v1777 = vunpack.c.h.b16 %v605
        %v1778 = vunpack.c.l.b16 %v606
        %v1779 = vunpack.c.h.b16 %v606
        %v1780 = vunpack.c.l.b16 %v607
        %v1781 = vunpack.c.h.b16 %v607
        %v1782 = vunpack.c.l.b16 %v608
        %v1783 = vunpack.c.h.b16 %v608
        %v1784 = vunpack.c.l.b16 %v609
        %v1785 = vunpack.c.h.b16 %v609
        %v1786 = vunpack.c.l.b16 %v610
        %v1787 = vunpack.c.h.b16 %v610
        %v1788 = vunpack.c.l.b16 %v611
        %v1789 = vunpack.c.h.b16 %v611
        %v1790 = vunpack.c.l.b16 %v612
        %v1791 = vunpack.c.h.b16 %v612
        %v1792 = vunpack.c.l.b16 %v613
        %v1793 = vunpack.c.h.b16 %v613
        %v1794 = vunpack.c.l.b16 %v614
        %v1795 = vunpack.c.h.b16 %v614
        %v1796 = vunpack.c.l.b16 %v615
        %v1797 = vunpack.c.h.b16 %v615
        %v1798 = vunpack.c.l.b16 %v616
        %v1799 = vunpack.c.h.b16 %v616
        %v1800 = vunpack.c.l.b16 %v617
        %v1801 = vunpack.c.h.b16 %v617
        %v1802 = vunpack.c.l.b16 %v618
        %v1803 = vunpack.c.h.b16 %v618
        %v1804 = vunpack.c.l.b16 %v619
        %v1805 = vunpack.c.h.b16 %v619
        %v1806 = vunpack.c.l.b16 %v620
        %v1807 = vunpack.c.h.b16 %v620
        %v1808 = vunpack.c.l.b16 %v621
        %v1809 = vunpack.c.h.b16 %v621
        %v1810 = vunpack.c.l.b16 %v622
        %v1811 = vunpack.c.h.b16 %v622
        %v1812 = vunpack.c.l.b16 %v623
        %v1813 = vunpack.c.h.b16 %v623
        %v1814 = vunpack.c.l.b16 %v624
        %v1815 = vunpack.c.h.b16 %v624
        %v1816 = vunpack.c.l.b16 %v625
        %v1817 = vunpack.c.h.b16 %v625
        %v1818 = vunpack.c.l.b16 %v626
        %v1819 = vunpack.c.h.b16 %v626
        %v1820 = vunpack.c.l.b16 %v627
        %v1821 = vunpack.c.h.b16 %v627
        %v1822 = vunpack.c.l.b16 %v628
        %v1823 = vunpack.c.h.b16 %v628
        %v1824 = vunpack.c.l.b16 %v629
        %v1825 = vunpack.c.h.b16 %v629
        %v1826 = vunpack.c.l.b16 %v630
        %v1827 = vunpack.c.h.b16 %v630
        %v1828 = vunpack.c.l.b16 %v631
        %v1829 = vunpack.c.h.b16 %v631
        %v1830 = vunpack.c.l.b16 %v632
        %v1831 = vunpack.c.h.b16 %v632
        %v1832 = vunpack.c.l.b16 %v633
        %v1833 = vunpack.c.h.b16 %v633
        %v1834 = vunpack.c.l.b16 %v634
        %v1835 = vunpack.c.h.b16 %v634
        %v1836 = vunpack.c.l.b16 %v635
        %v1837 = vunpack.c.h.b16 %v635
        %v1838 = vunpack.c.l.b16 %v636
        %v1839 = vunpack.c.h.b16 %v636
        %v1840 = vunpack.c.l.b16 %v637
        %v1841 = vunpack.c.h.b16 %v637
        %v1842 = vunpack.c.l.b16 %v638
        %v1843 = vunpack.c.h.b16 %v638
        %v1844 = vunpack.c.l.b16 %v639
        %v1845 = vunpack.c.h.b16 %v639
        %v1846 = vunpack.c.l.b16 %v640
        %v1847 = vunpack.c.h.b16 %v640
        %v1848 = vunpack.c.l.b16 %v641
        %v1849 = vunpack.c.h.b16 %v641
        %v1850 = vunpack.c.l.b16 %v642
        %v1851 = vunpack.c.h.b16 %v642
        %v1852 = vunpack.c.l.b16 %v643
        %v1853 = vunpack.c.h.b16 %v643
        %v1854 = vunpack.c.l.b16 %v644
        %v1855 = vunpack.c.h.b16 %v644
        %v1856 = vunpack.c.l.b16 %v645
        %v1857 = vunpack.c.h.b16 %v645
        %v1858 = vunpack.c.l.b16 %v646
        %v1859 = vunpack.c.h.b16 %v646
        %v1860 = vunpack.c.l.b16 %v647
        %v1861 = vunpack.c.h.b16 %v647
        %v1862 = vunpack.c.l.b16 %v648
        %v1863 = vunpack.c.h.b16 %v648
        %v1864 = vunpack.c.l.b16 %v649
        %v1865 = vunpack.c.h.b16 %v649
        %v1866 = vunpack.c.l.b16 %v650
        %v1867 = vunpack.c.h.b16 %v650
        %v1868 = vunpack.c.l.b16 %v651
        %v1869 = vunpack.c.h.b16 %v651
        %v1870 = vunpack.c.l.b16 %v652
        %v1871 = vunpack.c.h.b16 %v652
        %v1872 = vunpack.c.l.b16 %v653
        %v1873 = vunpack.c.h.b16 %v653
        %v1874 = vunpack.c.l.b16 %v654
        %v1875 = vunpack.c.h.b16 %v654
        %v1876 = vunpack.c.l.b16 %v655
        %v1877 = vunpack.c.h.b16 %v655
        %v1878 = vunpack.c.l.b16 %v656
        %v1879 = vunpack.c.h.b16 %v656
        %v1880 = vunpack.c.l.b16 %v657
        %v1881 = vunpack.c.h.b16 %v657
        %v1882 = vunpack.c.l.b16 %v658
        %v1883 = vunpack.c.h.b16 %v658
        %v1884 = vunpack.c.l.b16 %v659
        %v1885 = vunpack.c.h.b16 %v659
        %v1886 = vunpack.c.l.b16 %v660
        %v1887 = vunpack.c.h.b16 %v660
        %v1888 = vunpack.c.l.b16 %v661
        %v1889 = vunpack.c.h.b16 %v661
        %v1890 = vunpack.c.l.b16 %v662
        %v1891 = vunpack.c.h.b16 %v662
        %v1892 = vunpack.c.l.b16 %v663
        %v1893 = vunpack.c.h.b16 %v663
        %v1894 = vunpack.c.l.b16 %v664
        %v1895 = vunpack.c.h.b16 %v664
        %v1896 = vunpack.c.l.b16 %v665
        %v1897 = vunpack.c.h.b16 %v665
        %v1898 = vunpack.c.l.b16 %v666
        %v1899 = vunpack.c.h.b16 %v666
        %v1900 = vunpack.c.l.b16 %v667
        %v1901 = vunpack.c.h.b16 %v667
        %v1902 = vunpack.c.l.b16 %v668
        %v1903 = vunpack.c.h.b16 %v668
        %v1904 = vunpack.c.l.b16 %v669
        %v1905 = vunpack.c.h.b16 %v669
        %v1906 = vunpack.c.l.b16 %v670
        %v1907 = vunpack.c.h.b16 %v670
        %v1908 = vunpack.c.l.b16 %v671
        %v1909 = vunpack.c.h.b16 %v671
        %v1910 = vunpack.c.l.b16 %v672
        %v1911 = vunpack.c.h.b16 %v672
        %v1912 = vunpack.c.l.b16 %v673
        %v1913 = vunpack.c.h.b16 %v673
        %v1914 = vunpack.c.l.b16 %v674
        %v1915 = vunpack.c.h.b16 %v674
        %v1916 = vunpack.c.l.b16 %v675
        %v1917 = vunpack.c.h.b16 %v675
        %v1918 = vunpack.c.l.b16 %v676
        %v1919 = vunpack.c.h.b16 %v676
        %v1920 = vunpack.c.l.b16 %v677
        %v1921 = vunpack.c.h.b16 %v677
        %v1922 = vunpack.c.l.b16 %v678
        %v1923 = vunpack.c.h.b16 %v678
        %v1924 = vunpack.c.l.b16 %v679
        %v1925 = vunpack.c.h.b16 %v679
        %v1926 = vunpack.c.l.b16 %v680
        %v1927 = vunpack.c.h.b16 %v680
        %v1928 = vunpack.c.l.b16 %v681
        %v1929 = vunpack.c.h.b16 %v681
        %v1930 = vunpack.c.l.b16 %v682
        %v1931 = vunpack.c.h.b16 %v682
        %v1932 = vunpack.c.l.b16 %v683
        %v1933 = vunpack.c.h.b16 %v683
        %v1934 = vunpack.c.l.b16 %v684
        %v1935 = vunpack.c.h.b16 %v684
        %v1936 = vunpack.c.l.b16 %v685
        %v1937 = vunpack.c.h.b16 %v685
        %v1938 = vunpack.c.l.b16 %v686
        %v1939 = vunpack.c.h.b16 %v686
        %v1940 = vunpack.c.l.b16 %v687
        %v1941 = vunpack.c.h.b16 %v687
        %v1942 = vunpack.c.l.b16 %v688
        %v1943 = vunpack.c.h.b16 %v688
        %v1944 = vunpack.c.l.b16 %v689
        %v1945 = vunpack.c.h.b16 %v689
        %v1946 = vunpack.c.l.b16 %v690
        %v1947 = vunpack.c.h.b16 %v690
        %v1948 = vunpack.c.l.b16 %v691
        %v1949 = vunpack.c.h.b16 %v691
        %v1950 = vunpack.c.l.b16 %v692
        %v1951 = vunpack.c.h.b16 %v692
        %v1952 = vunpack.c.l.b16 %v693
        %v1953 = vunpack.c.h.b16 %v693
        %v1954 = vunpack.c.l.b16 %v694
        %v1955 = vunpack.c.h.b16 %v694
        %v1956 = vunpack.c.l.b16 %v695
        %v1957 = vunpack.c.h.b16 %v695
        %v1958 = vunpack.c.l.b16 %v696
        %v1959 = vunpack.c.h.b16 %v696
        %v1960 = vunpack.c.l.b16 %v697
        %v1961 = vunpack.c.h.b16 %v697
        %v1962 = vunpack.c.l.b16 %v698
        %v1963 = vunpack.c.h.b16 %v698
        %v1964 = vunpack.c.l.b16 %v699
        %v1965 = vunpack.c.h.b16 %v699
        %v1966 = vunpack.c.l.b16 %v700
        %v1967 = vunpack.c.h.b16 %v700
        %v1968 = vunpack.c.l.b16 %v701
        %v1969 = vunpack.c.h.b16 %v701
        %v1970 = vunpack.c.l.b16 %v702
        %v1971 = vunpack.c.h.b16 %v702
        %v1972 = vunpack.c.l.b16 %v703
        %v1973 = vunpack.c.h.b16 %v703
        %v1974 = vunpack.c.l.b16 %v704
        %v1975 = vunpack.c.h.b16 %v704
        %v1976 = vunpack.c.l.b16 %v705
        %v1977 = vunpack.c.h.b16 %v705
        %v1978 = vunpack.c.l.b16 %v706
        %v1979 = vunpack.c.h.b16 %v706
        %v1980 = vunpack.c.l.b16 %v707
        %v1981 = vunpack.c.h.b16 %v707
        %v1982 = vunpack.c.l.b16 %v708
        %v1983 = vunpack.c.h.b16 %v708
        %v1984 = vunpack.c.l.b16 %v709
        %v1985 = vunpack.c.h.b16 %v709
        %v1986 = vunpack.c.l.b16 %v710
        %v1987 = vunpack.c.h.b16 %v710
        %v1988 = vunpack.c.l.b16 %v711
        %v1989 = vunpack.c.h.b16 %v711
        %v1990 = vunpack.c.l.b16 %v712
        %v1991 = vunpack.c.h.b16 %v712
        %v1992 = vunpack.c.l.b16 %v713
        %v1993 = vunpack.c.h.b16 %v713
        %v1994 = vunpack.c.l.b16 %v714
        %v1995 = vunpack.c.h.b16 %v714
        %v1996 = vunpack.c.l.b16 %v715
        %v1997 = vunpack.c.h.b16 %v715
        %v1998 = vunpack.c.l.b16 %v716
        %v1999 = vunpack.c.h.b16 %v716
        %v2000 = vunpack.c.l.b16 %v717
        %v2001 = vunpack.c.h.b16 %v717
        %v2002 = vunpack.c.l.b16 %v718
        %v2003 = vunpack.c.h.b16 %v718
        %v2004 = vunpack.c.l.b16 %v719
        %v2005 = vunpack.c.h.b16 %v719
        %v2006 = vunpack.c.l.b16 %v720
        %v2007 = vunpack.c.h.b16 %v720
        %v2008 = vunpack.c.l.b16 %v721
        %v2009 = vunpack.c.h.b16 %v721
        %v2010 = vunpack.c.l.b16 %v722
        %v2011 = vunpack.c.h.b16 %v722
        %v2012 = vunpack.c.l.b16 %v723
        %v2013 = vunpack.c.h.b16 %v723
        %v2014 = vunpack.c.l.b16 %v724
        %v2015 = vunpack.c.h.b16 %v724
        %v2016 = vunpack.c.l.b16 %v725
        %v2017 = vunpack.c.h.b16 %v725
        %v2018 = vunpack.c.l.b16 %v726
        %v2019 = vunpack.c.h.b16 %v726
        %v2020 = vunpack.c.l.b16 %v727
        %v2021 = vunpack.c.h.b16 %v727
        %v2022 = vunpack.c.l.b16 %v728
        %v2023 = vunpack.c.h.b16 %v728
        %v2024 = vunpack.c.l.b16 %v729
        %v2025 = vunpack.c.h.b16 %v729
        %v2026 = vpack.c.b16 %v1180, %v1162
        %v2027 = vpack.c.b16 %v1181, %v1163
        %v2028 = vpack.c.b16 %v1182, %v1164
        %v2029 = vpack.c.b16 %v1183, %v1165
        %v2030 = vpack.c.b16 %v1184, %v1166
        %v2031 = vpack.c.b16 %v1185, %v1167
        %v2032 = vpack.c.b16 %v1186, %v1168
        %v2033 = vpack.c.b16 %v1187, %v1169
        %v2034 = vpack.c.b16 %v1188, %v1170
        %v2035 = vpack.c.b16 %v1189, %v1171
        %v2036 = vpack.c.b16 %v1190, %v1172
        %v2037 = vpack.c.b16 %v1191, %v1173
        %v2038 = vpack.c.b16 %v1192, %v1174
        %v2039 = vpack.c.b16 %v1193, %v1175
        %v2040 = vpack.c.b16 %v1194, %v1176
        %v2041 = vpack.c.b16 %v1195, %v1177
        %v2042 = vpack.c.b16 %v1196, %v1178
        %v2043 = vpack.c.b16 %v1197, %v1179
        %v2044 = vpack.c.b16 %v1216, %v1198
        %v2045 = vpack.c.b16 %v1217, %v1199
        %v2046 = vpack.c.b16 %v1218, %v1200
        %v2047 = vpack.c.b16 %v1219, %v1201
        %v2048 = vpack.c.b16 %v1220, %v1202
        %v2049 = vpack.c.b16 %v1221, %v1203
        %v2050 = vpack.c.b16 %v1222, %v1204
        %v2051 = vpack.c.b16 %v1223, %v1205
        %v2052 = vpack.c.b16 %v1224, %v1206
        %v2053 = vpack.c.b16 %v1225, %v1207
        %v2054 = vpack.c.b16 %v1226, %v1208
        %v2055 = vpack.c.b16 %v1227, %v1209
        %v2056 = vpack.c.b16 %v1228, %v1210
        %v2057 = vpack.c.b16 %v1229, %v1211
        %v2058 = vpack.c.b16 %v1230, %v1212
        %v2059 = vpack.c.b16 %v1231, %v1213
        %v2060 = vpack.c.b16 %v1232, %v1214
        %v2061 = vpack.c.b16 %v1233, %v1215
        %v2062 = vpack.c.b16 %v1252, %v1234
        %v2063 = vpack.c.b16 %v1253, %v1235
        %v2064 = vpack.c.b16 %v1254, %v1236
        %v2065 = vpack.c.b16 %v1255, %v1237
        %v2066 = vpack.c.b16 %v1256, %v1238
        %v2067 = vpack.c.b16 %v1257, %v1239
        %v2068 = vpack.c.b16 %v1258, %v1240
        %v2069 = vpack.c.b16 %v1259, %v1241
        %v2070 = vpack.c.b16 %v1260, %v1242
        %v2071 = vpack.c.b16 %v1261, %v1243
        %v2072 = vpack.c.b16 %v1262, %v1244
        %v2073 = vpack.c.b16 %v1263, %v1245
        %v2074 = vpack.c.b16 %v1264, %v1246
        %v2075 = vpack.c.b16 %v1265, %v1247
        %v2076 = vpack.c.b16 %v1266, %v1248
        %v2077 = vpack.c.b16 %v1267, %v1249
        %v2078 = vpack.c.b16 %v1268, %v1250
        %v2079 = vpack.c.b16 %v1269, %v1251
        %v2080 = vpack.c.b16 %v1288, %v1270
        %v2081 = vpack.c.b16 %v1289, %v1271
        %v2082 = vpack.c.b16 %v1290, %v1272
        %v2083 = vpack.c.b16 %v1291, %v1273
        %v2084 = vpack.c.b16 %v1292, %v1274
        %v2085 = vpack.c.b16 %v1293, %v1275
        %v2086 = vpack.c.b16 %v1294, %v1276
        %v2087 = vpack.c.b16 %v1295, %v1277
        %v2088 = vpack.c.b16 %v1296, %v1278
        %v2089 = vpack.c.b16 %v1297, %v1279
        %v2090 = vpack.c.b16 %v1298, %v1280
        %v2091 = vpack.c.b16 %v1299, %v1281
        %v2092 = vpack.c.b16 %v1300, %v1282
        %v2093 = vpack.c.b16 %v1301, %v1283
        %v2094 = vpack.c.b16 %v1302, %v1284
        %v2095 = vpack.c.b16 %v1303, %v1285
        %v2096 = vpack.c.b16 %v1304, %v1286
        %v2097 = vpack.c.b16 %v1305, %v1287
        %v2098 = vpack.c.b16 %v1324, %v1306
        %v2099 = vpack.c.b16 %v1325, %v1307
        %v2100 = vpack.c.b16 %v1326, %v1308
        %v2101 = vpack.c.b16 %v1327, %v1309
        %v2102 = vpack.c.b16 %v1328, %v1310
        %v2103 = vpack.c.b16 %v1329, %v1311
        %v2104 = vpack.c.b16 %v1330, %v1312
        %v2105 = vpack.c.b16 %v1331, %v1313
        %v2106 = vpack.c.b16 %v1332, %v1314
        %v2107 = vpack.c.b16 %v1333, %v1315
        %v2108 = vpack.c.b16 %v1334, %v1316
        %v2109 = vpack.c.b16 %v1335, %v1317
        %v2110 = vpack.c.b16 %v1336, %v1318
        %v2111 = vpack.c.b16 %v1337, %v1319
        %v2112 = vpack.c.b16 %v1338, %v1320
        %v2113 = vpack.c.b16 %v1339, %v1321
        %v2114 = vpack.c.b16 %v1340, %v1322
        %v2115 = vpack.c.b16 %v1341, %v1323
        %v2116 = vpack.c.b16 %v1360, %v1342
        %v2117 = vpack.c.b16 %v1361, %v1343
        %v2118 = vpack.c.b16 %v1362, %v1344
        %v2119 = vpack.c.b16 %v1363, %v1345
        %v2120 = vpack.c.b16 %v1364, %v1346
        %v2121 = vpack.c.b16 %v1365, %v1347
        %v2122 = vpack.c.b16 %v1366, %v1348
        %v2123 = vpack.c.b16 %v1367, %v1349
        %v2124 = vpack.c.b16 %v1368, %v1350
        %v2125 = vpack.c.b16 %v1369, %v1351
        %v2126 = vpack.c.b16 %v1370, %v1352
        %v2127 = vpack.c.b16 %v1371, %v1353
        %v2128 = vpack.c.b16 %v1372, %v1354
        %v2129 = vpack.c.b16 %v1373, %v1355
        %v2130 = vpack.c.b16 %v1374, %v1356
        %v2131 = vpack.c.b16 %v1375, %v1357
        %v2132 = vpack.c.b16 %v1376, %v1358
        %v2133 = vpack.c.b16 %v1377, %v1359
        %v2134 = vpack.c.b16 %v1396, %v1378
        %v2135 = vpack.c.b16 %v1397, %v1379
        %v2136 = vpack.c.b16 %v1398, %v1380
        %v2137 = vpack.c.b16 %v1399, %v1381
        %v2138 = vpack.c.b16 %v1400, %v1382
        %v2139 = vpack.c.b16 %v1401, %v1383
        %v2140 = vpack.c.b16 %v1402, %v1384
        %v2141 = vpack.c.b16 %v1403, %v1385
        %v2142 = vpack.c.b16 %v1404, %v1386
        %v2143 = vpack.c.b16 %v1405, %v1387
        %v2144 = vpack.c.b16 %v1406, %v1388
        %v2145 = vpack.c.b16 %v1407, %v1389
        %v2146 = vpack.c.b16 %v1408, %v1390
        %v2147 = vpack.c.b16 %v1409, %v1391
        %v2148 = vpack.c.b16 %v1410, %v1392
        %v2149 = vpack.c.b16 %v1411, %v1393
        %v2150 = vpack.c.b16 %v1412, %v1394
        %v2151 = vpack.c.b16 %v1413, %v1395
        %v2152 = vpack.c.b16 %v1432, %v1414
        %v2153 = vpack.c.b16 %v1433, %v1415
        %v2154 = vpack.c.b16 %v1434, %v1416
        %v2155 = vpack.c.b16 %v1435, %v1417
        %v2156 = vpack.c.b16 %v1436, %v1418
        %v2157 = vpack.c.b16 %v1437, %v1419
        %v2158 = vpack.c.b16 %v1438, %v1420
        %v2159 = vpack.c.b16 %v1439, %v1421
        %v2160 = vpack.c.b16 %v1440, %v1422
        %v2161 = vpack.c.b16 %v1441, %v1423
        %v2162 = vpack.c.b16 %v1442, %v1424
        %v2163 = vpack.c.b16 %v1443, %v1425
        %v2164 = vpack.c.b16 %v1444, %v1426
        %v2165 = vpack.c.b16 %v1445, %v1427
        %v2166 = vpack.c.b16 %v1446, %v1428
        %v2167 = vpack.c.b16 %v1447, %v1429
        %v2168 = vpack.c.b16 %v1448, %v1430
        %v2169 = vpack.c.b16 %v1449, %v1431
        %v2170 = vpack.c.b16 %v1468, %v1450
        %v2171 = vpack.c.b16 %v1469, %v1451
        %v2172 = vpack.c.b16 %v1470, %v1452
        %v2173 = vpack.c.b16 %v1471, %v1453
        %v2174 = vpack.c.b16 %v1472, %v1454
        %v2175 = vpack.c.b16 %v1473, %v1455
        %v2176 = vpack.c.b16 %v1474, %v1456
        %v2177 = vpack.c.b16 %v1475, %v1457
        %v2178 = vpack.c.b16 %v1476, %v1458
        %v2179 = vpack.c.b16 %v1477, %v1459
        %v2180 = vpack.c.b16 %v1478, %v1460
        %v2181 = vpack.c.b16 %v1479, %v1461
        %v2182 = vpack.c.b16 %v1480, %v1462
        %v2183 = vpack.c.b16 %v1481, %v1463
        %v2184 = vpack.c.b16 %v1482, %v1464
        %v2185 = vpack.c.b16 %v1483, %v1465
        %v2186 = vpack.c.b16 %v1484, %v1466
        %v2187 = vpack.c.b16 %v1485, %v1467
        %v2188 = vpack.c.b16 %v1504, %v1486
        %v2189 = vpack.c.b16 %v1505, %v1487
        %v2190 = vpack.c.b16 %v1506, %v1488
        %v2191 = vpack.c.b16 %v1507, %v1489
        %v2192 = vpack.c.b16 %v1508, %v1490
        %v2193 = vpack.c.b16 %v1509, %v1491
        %v2194 = vpack.c.b16 %v1510, %v1492
        %v2195 = vpack.c.b16 %v1511, %v1493
        %v2196 = vpack.c.b16 %v1512, %v1494
        %v2197 = vpack.c.b16 %v1513, %v1495
        %v2198 = vpack.c.b16 %v1514, %v1496
        %v2199 = vpack.c.b16 %v1515, %v1497
        %v2200 = vpack.c.b16 %v1516, %v1498
        %v2201 = vpack.c.b16 %v1517, %v1499
        %v2202 = vpack.c.b16 %v1518, %v1500
        %v2203 = vpack.c.b16 %v1519, %v1501
        %v2204 = vpack.c.b16 %v1520, %v1502
        %v2205 = vpack.c.b16 %v1521, %v1503
        %v2206 = vpack.c.b16 %v1540, %v1522
        %v2207 = vpack.c.b16 %v1541, %v1523
        %v2208 = vpack.c.b16 %v1542, %v1524
        %v2209 = vpack.c.b16 %v1543, %v1525
        %v2210 = vpack.c.b16 %v1544, %v1526
        %v2211 = vpack.c.b16 %v1545, %v1527
        %v2212 = vpack.c.b16 %v1546, %v1528
        %v2213 = vpack.c.b16 %v1547, %v1529
        %v2214 = vpack.c.b16 %v1548, %v1530
        %v2215 = vpack.c.b16 %v1549, %v1531
        %v2216 = vpack.c.b16 %v1550, %v1532
        %v2217 = vpack.c.b16 %v1551, %v1533
        %v2218 = vpack.c.b16 %v1552, %v1534
        %v2219 = vpack.c.b16 %v1553, %v1535
        %v2220 = vpack.c.b16 %v1554, %v1536
        %v2221 = vpack.c.b16 %v1555, %v1537
        %v2222 = vpack.c.b16 %v1556, %v1538
        %v2223 = vpack.c.b16 %v1557, %v1539
        %v2224 = vpack.c.b16 %v1576, %v1558
        %v2225 = vpack.c.b16 %v1577, %v1559
        %v2226 = vpack.c.b16 %v1578, %v1560
        %v2227 = vpack.c.b16 %v1579, %v1561
        %v2228 = vpack.c.b16 %v1580, %v1562
        %v2229 = vpack.c.b16 %v1581, %v1563
        %v2230 = vpack.c.b16 %v1582, %v1564
        %v2231 = vpack.c.b16 %v1583, %v1565
        %v2232 = vpack.c.b16 %v1584, %v1566
        %v2233 = vpack.c.b16 %v1585, %v1567
        %v2234 = vpack.c.b16 %v1586, %v1568
        %v2235 = vpack.c.b16 %v1587, %v1569
        %v2236 = vpack.c.b16 %v1588, %v1570
        %v2237 = vpack.c.b16 %v1589, %v1571
        %v2238 = vpack.c.b16 %v1590, %v1572
        %v2239 = vpack.c.b16 %v1591, %v1573
        %v2240 = vpack.c.b16 %v1592, %v1574
        %v2241 = vpack.c.b16 %v1593, %v1575
        %v2242 = vpack.c.b16 %v1612, %v1594
        %v2243 = vpack.c.b16 %v1613, %v1595
        %v2244 = vpack.c.b16 %v1614, %v1596
        %v2245 = vpack.c.b16 %v1615, %v1597
        %v2246 = vpack.c.b16 %v1616, %v1598
        %v2247 = vpack.c.b16 %v1617, %v1599
        %v2248 = vpack.c.b16 %v1618, %v1600
        %v2249 = vpack.c.b16 %v1619, %v1601
        %v2250 = vpack.c.b16 %v1620, %v1602
        %v2251 = vpack.c.b16 %v1621, %v1603
        %v2252 = vpack.c.b16 %v1622, %v1604
        %v2253 = vpack.c.b16 %v1623, %v1605
        %v2254 = vpack.c.b16 %v1624, %v1606
        %v2255 = vpack.c.b16 %v1625, %v1607
        %v2256 = vpack.c.b16 %v1626, %v1608
        %v2257 = vpack.c.b16 %v1627, %v1609
        %v2258 = vpack.c.b16 %v1628, %v1610
        %v2259 = vpack.c.b16 %v1629, %v1611
        %v2260 = vpack.c.b16 %v1648, %v1630
        %v2261 = vpack.c.b16 %v1649, %v1631
        %v2262 = vpack.c.b16 %v1650, %v1632
        %v2263 = vpack.c.b16 %v1651, %v1633
        %v2264 = vpack.c.b16 %v1652, %v1634
        %v2265 = vpack.c.b16 %v1653, %v1635
        %v2266 = vpack.c.b16 %v1654, %v1636
        %v2267 = vpack.c.b16 %v1655, %v1637
        %v2268 = vpack.c.b16 %v1656, %v1638
        %v2269 = vpack.c.b16 %v1657, %v1639
        %v2270 = vpack.c.b16 %v1658, %v1640
        %v2271 = vpack.c.b16 %v1659, %v1641
        %v2272 = vpack.c.b16 %v1660, %v1642
        %v2273 = vpack.c.b16 %v1661, %v1643
        %v2274 = vpack.c.b16 %v1662, %v1644
        %v2275 = vpack.c.b16 %v1663, %v1645
        %v2276 = vpack.c.b16 %v1664, %v1646
        %v2277 = vpack.c.b16 %v1665, %v1647
        %v2278 = vpack.c.b16 %v1684, %v1666
        %v2279 = vpack.c.b16 %v1685, %v1667
        %v2280 = vpack.c.b16 %v1686, %v1668
        %v2281 = vpack.c.b16 %v1687, %v1669
        %v2282 = vpack.c.b16 %v1688, %v1670
        %v2283 = vpack.c.b16 %v1689, %v1671
        %v2284 = vpack.c.b16 %v1690, %v1672
        %v2285 = vpack.c.b16 %v1691, %v1673
        %v2286 = vpack.c.b16 %v1692, %v1674
        %v2287 = vpack.c.b16 %v1693, %v1675
        %v2288 = vpack.c.b16 %v1694, %v1676
        %v2289 = vpack.c.b16 %v1695, %v1677
        %v2290 = vpack.c.b16 %v1696, %v1678
        %v2291 = vpack.c.b16 %v1697, %v1679
        %v2292 = vpack.c.b16 %v1698, %v1680
        %v2293 = vpack.c.b16 %v1699, %v1681
        %v2294 = vpack.c.b16 %v1700, %v1682
        %v2295 = vpack.c.b16 %v1701, %v1683
        %v2296 = vpack.c.b16 %v1720, %v1702
        %v2297 = vpack.c.b16 %v1721, %v1703
        %v2298 = vpack.c.b16 %v1722, %v1704
        %v2299 = vpack.c.b16 %v1723, %v1705
        %v2300 = vpack.c.b16 %v1724, %v1706
        %v2301 = vpack.c.b16 %v1725, %v1707
        %v2302 = vpack.c.b16 %v1726, %v1708
        %v2303 = vpack.c.b16 %v1727, %v1709
        %v2304 = vpack.c.b16 %v1728, %v1710
        %v2305 = vpack.c.b16 %v1729, %v1711
        %v2306 = vpack.c.b16 %v1730, %v1712
        %v2307 = vpack.c.b16 %v1731, %v1713
        %v2308 = vpack.c.b16 %v1732, %v1714
        %v2309 = vpack.c.b16 %v1733, %v1715
        %v2310 = vpack.c.b16 %v1734, %v1716
        %v2311 = vpack.c.b16 %v1735, %v1717
        %v2312 = vpack.c.b16 %v1736, %v1718
        %v2313 = vpack.c.b16 %v1737, %v1719
        %v2314 = vpack.c.b16 %v1756, %v1738
        %v2315 = vpack.c.b16 %v1757, %v1739
        %v2316 = vpack.c.b16 %v1758, %v1740
        %v2317 = vpack.c.b16 %v1759, %v1741
        %v2318 = vpack.c.b16 %v1760, %v1742
        %v2319 = vpack.c.b16 %v1761, %v1743
        %v2320 = vpack.c.b16 %v1762, %v1744
        %v2321 = vpack.c.b16 %v1763, %v1745
        %v2322 = vpack.c.b16 %v1764, %v1746
        %v2323 = vpack.c.b16 %v1765, %v1747
        %v2324 = vpack.c.b16 %v1766, %v1748
        %v2325 = vpack.c.b16 %v1767, %v1749
        %v2326 = vpack.c.b16 %v1768, %v1750
        %v2327 = vpack.c.b16 %v1769, %v1751
        %v2328 = vpack.c.b16 %v1770, %v1752
        %v2329 = vpack.c.b16 %v1771, %v1753
        %v2330 = vpack.c.b16 %v1772, %v1754
        %v2331 = vpack.c.b16 %v1773, %v1755
        %v2332 = vpack.c.b16 %v1792, %v1774
        %v2333 = vpack.c.b16 %v1793, %v1775
        %v2334 = vpack.c.b16 %v1794, %v1776
        %v2335 = vpack.c.b16 %v1795, %v1777
        %v2336 = vpack.c.b16 %v1796, %v1778
        %v2337 = vpack.c.b16 %v1797, %v1779
        %v2338 = vpack.c.b16 %v1798, %v1780
        %v2339 = vpack.c.b16 %v1799, %v1781
        %v2340 = vpack.c.b16 %v1800, %v1782
        %v2341 = vpack.c.b16 %v1801, %v1783
        %v2342 = vpack.c.b16 %v1802, %v1784
        %v2343 = vpack.c.b16 %v1803, %v1785
        %v2344 = vpack.c.b16 %v1804, %v1786
        %v2345 = vpack.c.b16 %v1805, %v1787
        %v2346 = vpack.c.b16 %v1806, %v1788
        %v2347 = vpack.c.b16 %v1807, %v1789
        %v2348 = vpack.c.b16 %v1808, %v1790
        %v2349 = vpack.c.b16 %v1809, %v1791
        %v2350 = vpack.c.b16 %v1828, %v1810
        %v2351 = vpack.c.b16 %v1829, %v1811
        %v2352 = vpack.c.b16 %v1830, %v1812
        %v2353 = vpack.c.b16 %v1831, %v1813
        %v2354 = vpack.c.b16 %v1832, %v1814
        %v2355 = vpack.c.b16 %v1833, %v1815
        %v2356 = vpack.c.b16 %v1834, %v1816
        %v2357 = vpack.c.b16 %v1835, %v1817
        %v2358 = vpack.c.b16 %v1836, %v1818
        %v2359 = vpack.c.b16 %v1837, %v1819
        %v2360 = vpack.c.b16 %v1838, %v1820
        %v2361 = vpack.c.b16 %v1839, %v1821
        %v2362 = vpack.c.b16 %v1840, %v1822
        %v2363 = vpack.c.b16 %v1841, %v1823
        %v2364 = vpack.c.b16 %v1842, %v1824
        %v2365 = vpack.c.b16 %v1843, %v1825
        %v2366 = vpack.c.b16 %v1844, %v1826
        %v2367 = vpack.c.b16 %v1845, %v1827
        %v2368 = vpack.c.b16 %v1864, %v1846
        %v2369 = vpack.c.b16 %v1865, %v1847
        %v2370 = vpack.c.b16 %v1866, %v1848
        %v2371 = vpack.c.b16 %v1867, %v1849
        %v2372 = vpack.c.b16 %v1868, %v1850
        %v2373 = vpack.c.b16 %v1869, %v1851
        %v2374 = vpack.c.b16 %v1870, %v1852
        %v2375 = vpack.c.b16 %v1871, %v1853
        %v2376 = vpack.c.b16 %v1872, %v1854
        %v2377 = vpack.c.b16 %v1873, %v1855
        %v2378 = vpack.c.b16 %v1874, %v1856
        %v2379 = vpack.c.b16 %v1875, %v1857
        %v2380 = vpack.c.b16 %v1876, %v1858
        %v2381 = vpack.c.b16 %v1877, %v1859
        %v2382 = vpack.c.b16 %v1878, %v1860
        %v2383 = vpack.c.b16 %v1879, %v1861
        %v2384 = vpack.c.b16 %v1880, %v1862
        %v2385 = vpack.c.b16 %v1881, %v1863
        %v2386 = vpack.c.b16 %v1900, %v1882
        %v2387 = vpack.c.b16 %v1901, %v1883
        %v2388 = vpack.c.b16 %v1902, %v1884
        %v2389 = vpack.c.b16 %v1903, %v1885
        %v2390 = vpack.c.b16 %v1904, %v1886
        %v2391 = vpack.c.b16 %v1905, %v1887
        %v2392 = vpack.c.b16 %v1906, %v1888
        %v2393 = vpack.c.b16 %v1907, %v1889
        %v2394 = vpack.c.b16 %v1908, %v1890
        %v2395 = vpack.c.b16 %v1909, %v1891
        %v2396 = vpack.c.b16 %v1910, %v1892
        %v2397 = vpack.c.b16 %v1911, %v1893
        %v2398 = vpack.c.b16 %v1912, %v1894
        %v2399 = vpack.c.b16 %v1913, %v1895
        %v2400 = vpack.c.b16 %v1914, %v1896
        %v2401 = vpack.c.b16 %v1915, %v1897
        %v2402 = vpack.c.b16 %v1916, %v1898
        %v2403 = vpack.c.b16 %v1917, %v1899
        %v2404 = vpack.c.b16 %v1936, %v1918
        %v2405 = vpack.c.b16 %v1937, %v1919
        %v2406 = vpack.c.b16 %v1938, %v1920
        %v2407 = vpack.c.b16 %v1939, %v1921
        %v2408 = vpack.c.b16 %v1940, %v1922
        %v2409 = vpack.c.b16 %v1941, %v1923
        %v2410 = vpack.c.b16 %v1942, %v1924
        %v2411 = vpack.c.b16 %v1943, %v1925
        %v2412 = vpack.c.b16 %v1944, %v1926
        %v2413 = vpack.c.b16 %v1945, %v1927
        %v2414 = vpack.c.b16 %v1946, %v1928
        %v2415 = vpack.c.b16 %v1947, %v1929
        %v2416 = vpack.c.b16 %v1948, %v1930
        %v2417 = vpack.c.b16 %v1949, %v1931
        %v2418 = vpack.c.b16 %v1950, %v1932
        %v2419 = vpack.c.b16 %v1951, %v1933
        %v2420 = vpack.c.b16 %v1952, %v1934
        %v2421 = vpack.c.b16 %v1953, %v1935
        %v2422 = vpack.c.b16 %v1972, %v1954
        %v2423 = vpack.c.b16 %v1973, %v1955
        %v2424 = vpack.c.b16 %v1974, %v1956
        %v2425 = vpack.c.b16 %v1975, %v1957
        %v2426 = vpack.c.b16 %v1976, %v1958
        %v2427 = vpack.c.b16 %v1977, %v1959
        %v2428 = vpack.c.b16 %v1978, %v1960
        %v2429 = vpack.c.b16 %v1979, %v1961
        %v2430 = vpack.c.b16 %v1980, %v1962
        %v2431 = vpack.c.b16 %v1981, %v1963
        %v2432 = vpack.c.b16 %v1982, %v1964
        %v2433 = vpack.c.b16 %v1983, %v1965
        %v2434 = vpack.c.b16 %v1984, %v1966
        %v2435 = vpack.c.b16 %v1985, %v1967
        %v2436 = vpack.c.b16 %v1986, %v1968
        %v2437 = vpack.c.b16 %v1987, %v1969
        %v2438 = vpack.c.b16 %v1988, %v1970
        %v2439 = vpack.c.b16 %v1989, %v1971
        %v2440 = vpack.c.b16 %v2008, %v1990
        %v2441 = vpack.c.b16 %v2009, %v1991
        %v2442 = vpack.c.b16 %v2010, %v1992
        %v2443 = vpack.c.b16 %v2011, %v1993
        %v2444 = vpack.c.b16 %v2012, %v1994
        %v2445 = vpack.c.b16 %v2013, %v1995
        %v2446 = vpack.c.b16 %v2014, %v1996
        %v2447 = vpack.c.b16 %v2015, %v1997
        %v2448 = vpack.c.b16 %v2016, %v1998
        %v2449 = vpack.c.b16 %v2017, %v1999
        %v2450 = vpack.c.b16 %v2018, %v2000
        %v2451 = vpack.c.b16 %v2019, %v2001
        %v2452 = vpack.c.b16 %v2020, %v2002
        %v2453 = vpack.c.b16 %v2021, %v2003
        %v2454 = vpack.c.b16 %v2022, %v2004
        %v2455 = vpack.c.b16 %v2023, %v2005
        %v2456 = vpack.c.b16 %v2024, %v2006
        %v2457 = vpack.c.b16 %v2025, %v2007
        %2890 = vmatprep.subr.bf16.mxu0 %v2027
        %2891 = vmatpush1.bf16.msra.mxu0 %v2026
        %2892 = vmatprep.subr.bf16.mxu0 %v2045
        %2893 = vmatpush1.bf16.msra.mxu0 %v2044
        %2894 = vmatprep.subr.bf16.mxu0 %v2063
        %2895 = vmatpush1.bf16.msra.mxu0 %v2062
        %2896 = vmatprep.subr.bf16.mxu0 %v2081
        %2897 = vmatpush1.bf16.msra.mxu0 %v2080
        %2898 = vmatprep.subr.bf16.mxu0 %v2099
        %2899 = vmatpush1.bf16.msra.mxu0 %v2098
        %2900 = vmatprep.subr.bf16.mxu0 %v2117
        %2901 = vmatpush1.bf16.msra.mxu0 %v2116
        %2902 = vmatprep.subr.bf16.mxu0 %v2135
        %2903 = vmatpush1.bf16.msra.mxu0 %v2134
        %2904 = vmatprep.subr.bf16.mxu0 %v2153
        %2905 = vmatpush1.bf16.msra.mxu0 %v2152
        %2906 = vmatprep.subr.bf16.mxu0 %v2171
        %2907 = vmatpush1.bf16.msra.mxu0 %v2170
        %2908 = vmatprep.subr.bf16.mxu0 %v2189
        %2909 = vmatpush1.bf16.msra.mxu0 %v2188
        %2910 = vmatprep.subr.bf16.mxu0 %v2207
        %2911 = vmatpush1.bf16.msra.mxu0 %v2206
        %2912 = vmatprep.subr.bf16.mxu0 %v2225
        %2913 = vmatpush1.bf16.msra.mxu0 %v2224
        %2914 = vmatprep.subr.bf16.mxu0 %v2243
        %2915 = vmatpush1.bf16.msra.mxu0 %v2242
        %2916 = vmatprep.subr.bf16.mxu0 %v2261
        %2917 = vmatpush1.bf16.msra.mxu0 %v2260
        %2918 = vmatprep.subr.bf16.mxu0 %v2279
        %2919 = vmatpush1.bf16.msra.mxu0 %v2278
        %2920 = vmatprep.subr.bf16.mxu0 %v2297
        %2921 = vmatpush1.bf16.msra.mxu0 %v2296
        %2922 = vmatprep.mubr.bf16.mxu0 %v287
        %2923 = vmatmul.mubr.bf16.gmra.mrb[0].mxu0 %v286
        %v2924 = vpop.f32.mrb[0].mxu0
        %v2925 = vadd.f32 0.0, %v2924
        %v2926 = vpop.f32.mrb[0].mxu0
        %v2927 = vadd.f32 0.0, %v2926
        %v2928 = vpop.f32.mrb[0].mxu0
        %v2929 = vadd.f32 0.0, %v2928
        %v2930 = vpop.f32.mrb[0].mxu0
        %v2931 = vadd.f32 0.0, %v2930
        %2932 = vmatprep.mubr.bf16.mxu0 %v290
        %2933 = vmatmul.mubr.bf16.gmra.mrb[0].mxu0 %v289
        %v2934 = vpop.f32.mrb[0].mxu0
        %v2935 = vadd.f32 0.0, %v2934
        %v2936 = vpop.f32.mrb[0].mxu0
        %v2937 = vadd.f32 0.0, %v2936
        %v2938 = vpop.f32.mrb[0].mxu0
        %v2939 = vadd.f32 0.0, %v2938
        %v2940 = vpop.f32.mrb[0].mxu0
        %v2941 = vadd.f32 0.0, %v2940
        %2942 = vmatprep.mubr.bf16.mxu0 %v293
        %2943 = vmatmul.mubr.bf16.gmra.mrb[0].mxu0 %v292
        %v2944 = vpop.f32.mrb[0].mxu0
        %v2945 = vadd.f32 0.0, %v2944
        %v2946 = vpop.f32.mrb[0].mxu0
        %v2947 = vadd.f32 0.0, %v2946
        %v2948 = vpop.f32.mrb[0].mxu0
        %v2949 = vadd.f32 0.0, %v2948
        %v2950 = vpop.f32.mrb[0].mxu0
        %v2951 = vadd.f32 0.0, %v2950
        %2952 = vmatprep.mubr.bf16.mxu0 %v296
        %2953 = vmatmul.mubr.bf16.gmra.mrb[0].mxu0 %v295
        %v2954 = vpop.f32.mrb[0].mxu0
        %v2955 = vadd.f32 0.0, %v2954
        %v2956 = vpop.f32.mrb[0].mxu0
        %v2957 = vadd.f32 0.0, %v2956
        %v2958 = vpop.f32.mrb[0].mxu0
        %v2959 = vadd.f32 0.0, %v2958
        %v2960 = vpop.f32.mrb[0].mxu0
        %v2961 = vadd.f32 0.0, %v2960
        %2962 = vdwg.mxu0
        %2963 = vmatprep.subr.bf16.mxu0 %v2315
        %2964 = vmatpush1.bf16.msra.mxu0 %v2314
        %2965 = vmatprep.subr.bf16.mxu0 %v2333
        %2966 = vmatpush1.bf16.msra.mxu0 %v2332
        %2967 = vmatprep.subr.bf16.mxu0 %v2351
        %2968 = vmatpush1.bf16.msra.mxu0 %v2350
        %2969 = vmatprep.subr.bf16.mxu0 %v2369
        %2970 = vmatpush1.bf16.msra.mxu0 %v2368
        %2971 = vmatprep.subr.bf16.mxu0 %v2387
        %2972 = vmatpush1.bf16.msra.mxu0 %v2386
        %2973 = vmatprep.subr.bf16.mxu0 %v2405
        %2974 = vmatpush1.bf16.msra.mxu0 %v2404
        %2975 = vmatprep.subr.bf16.mxu0 %v2423
        %2976 = vmatpush1.bf16.msra.mxu0 %v2422
        %2977 = vmatprep.subr.bf16.mxu0 %v2441
        %2978 = vmatpush1.bf16.msra.mxu0 %v2440
        %2979 = vmatprep.subr.bf16.mxu0 0
        %2980 = vmatpush1.bf16.msra.mxu0 0
        %2981 = vmatprep.subr.bf16.mxu0 0
        %2982 = vmatpush1.bf16.msra.mxu0 0
        %2983 = vmatprep.subr.bf16.mxu0 0
        %2984 = vmatpush1.bf16.msra.mxu0 0
        %2985 = vmatprep.subr.bf16.mxu0 0
        %2986 = vmatpush1.bf16.msra.mxu0 0
        %2987 = vmatprep.subr.bf16.mxu0 0
        %2988 = vmatpush1.bf16.msra.mxu0 0
        %2989 = vmatprep.subr.bf16.mxu0 0
        %2990 = vmatpush1.bf16.msra.mxu0 0
        %2991 = vmatprep.subr.bf16.mxu0 0
        %2992 = vmatpush1.bf16.msra.mxu0 0
        %2993 = vmatprep.subr.bf16.mxu0 0
        %2994 = vmatpush1.bf16.msra.mxu0 0
        %2995 = vmatprep.mubr.bf16.mxu0 0
        %2996 = vmatmul.mubr.bf16.gmra.mrb[0].mxu0 %v288
        %v2997 = vpop.f32.mrb[0].mxu0
        %v2998 = vadd.f32 %v2925, %v2997
        %v2999 = vpop.f32.mrb[0].mxu0
        %v3000 = vadd.f32 %v2927, %v2999
        %v3001 = vpop.f32.mrb[0].mxu0
        %v3002 = vadd.f32 %v2929, %v3001
        %v3003 = vpop.f32.mrb[0].mxu0
        %v3004 = vadd.f32 %v2931, %v3003
        %3005 = vmatprep.mubr.bf16.mxu0 0
        %3006 = vmatmul.mubr.bf16.gmra.mrb[0].mxu0 %v291
        %v3007 = vpop.f32.mrb[0].mxu0
        %v3008 = vadd.f32 %v2935, %v3007
        %v3009 = vpop.f32.mrb[0].mxu0
        %v3010 = vadd.f32 %v2937, %v3009
        %v3011 = vpop.f32.mrb[0].mxu0
        %v3012 = vadd.f32 %v2939, %v3011
        %v3013 = vpop.f32.mrb[0].mxu0
        %v3014 = vadd.f32 %v2941, %v3013
        %3015 = vmatprep.mubr.bf16.mxu0 0
        %3016 = vmatmul.mubr.bf16.gmra.mrb[0].mxu0 %v294
        %v3017 = vpop.f32.mrb[0].mxu0
        %v3018 = vadd.f32 %v2945, %v3017
        %v3019 = vpop.f32.mrb[0].mxu0
        %v3020 = vadd.f32 %v2947, %v3019
        %v3021 = vpop.f32.mrb[0].mxu0
        %v3022 = vadd.f32 %v2949, %v3021
        %v3023 = vpop.f32.mrb[0].mxu0
        %v3024 = vadd.f32 %v2951, %v3023
        %3025 = vmatprep.mubr.bf16.mxu0 0
        %3026 = vmatmul.mubr.bf16.gmra.mrb[0].mxu0 %v297
        %v3027 = vpop.f32.mrb[0].mxu0
        %v3028 = vadd.f32 %v2955, %v3027
        %v3029 = vpop.f32.mrb[0].mxu0
        %v3030 = vadd.f32 %v2957, %v3029
        %v3031 = vpop.f32.mrb[0].mxu0
        %v3032 = vadd.f32 %v2959, %v3031
        %v3033 = vpop.f32.mrb[0].mxu0
        %v3034 = vadd.f32 %v2961, %v3033
        %3035 = vdwg.mxu0
        %3036 = vmatprep.subr.bf16.mxu0 %v2029
        %3037 = vmatpush1.bf16.msra.mxu0 %v2028
        %3038 = vmatprep.subr.bf16.mxu0 %v2047
        %3039 = vmatpush1.bf16.msra.mxu0 %v2046
        %3040 = vmatprep.subr.bf16.mxu0 %v2065
        %3041 = vmatpush1.bf16.msra.mxu0 %v2064
        %3042 = vmatprep.subr.bf16.mxu0 %v2083
        %3043 = vmatpush1.bf16.msra.mxu0 %v2082
        %3044 = vmatprep.subr.bf16.mxu0 %v2101
        %3045 = vmatpush1.bf16.msra.mxu0 %v2100
        %3046 = vmatprep.subr.bf16.mxu0 %v2119
        %3047 = vmatpush1.bf16.msra.mxu0 %v2118
        %3048 = vmatprep.subr.bf16.mxu0 %v2137
        %3049 = vmatpush1.bf16.msra.mxu0 %v2136
        %3050 = vmatprep.subr.bf16.mxu0 %v2155
        %3051 = vmatpush1.bf16.msra.mxu0 %v2154
        %3052 = vmatprep.subr.bf16.mxu0 %v2173
        %3053 = vmatpush1.bf16.msra.mxu0 %v2172
        %3054 = vmatprep.subr.bf16.mxu0 %v2191
        %3055 = vmatpush1.bf16.msra.mxu0 %v2190
        %3056 = vmatprep.subr.bf16.mxu0 %v2209
        %3057 = vmatpush1.bf16.msra.mxu0 %v2208
        %3058 = vmatprep.subr.bf16.mxu0 %v2227
        %3059 = vmatpush1.bf16.msra.mxu0 %v2226
        %3060 = vmatprep.subr.bf16.mxu0 %v2245
        %3061 = vmatpush1.bf16.msra.mxu0 %v2244
        %3062 = vmatprep.subr.bf16.mxu0 %v2263
        %3063 = vmatpush1.bf16.msra.mxu0 %v2262
        %3064 = vmatprep.subr.bf16.mxu0 %v2281
        %3065 = vmatpush1.bf16.msra.mxu0 %v2280
        %3066 = vmatprep.subr.bf16.mxu0 %v2299
        %3067 = vmatpush1.bf16.msra.mxu0 %v2298
        %3068 = vmatprep.mubr.bf16.mxu0 %v287
        %3069 = vmatmul.mubr.bf16.gmra.mrb[0].mxu0 %v286
        %v3070 = vpop.f32.mrb[0].mxu0
        %v3071 = vadd.f32 0.0, %v3070
        %v3072 = vpop.f32.mrb[0].mxu0
        %v3073 = vadd.f32 0.0, %v3072
        %v3074 = vpop.f32.mrb[0].mxu0
        %v3075 = vadd.f32 0.0, %v3074
        %v3076 = vpop.f32.mrb[0].mxu0
        %v3077 = vadd.f32 0.0, %v3076
        %3078 = vmatprep.mubr.bf16.mxu0 %v290
        %3079 = vmatmul.mubr.bf16.gmra.mrb[0].mxu0 %v289
        %v3080 = vpop.f32.mrb[0].mxu0
        %v3081 = vadd.f32 0.0, %v3080
        %v3082 = vpop.f32.mrb[0].mxu0
        %v3083 = vadd.f32 0.0, %v3082
        %v3084 = vpop.f32.mrb[0].mxu0
        %v3085 = vadd.f32 0.0, %v3084
        %v3086 = vpop.f32.mrb[0].mxu0
        %v3087 = vadd.f32 0.0, %v3086
        %3088 = vmatprep.mubr.bf16.mxu0 %v293
        %3089 = vmatmul.mubr.bf16.gmra.mrb[0].mxu0 %v292
        %v3090 = vpop.f32.mrb[0].mxu0
        %v3091 = vadd.f32 0.0, %v3090
        %v3092 = vpop.f32.mrb[0].mxu0
        %v3093 = vadd.f32 0.0, %v3092
        %v3094 = vpop.f32.mrb[0].mxu0
        %v3095 = vadd.f32 0.0, %v3094
        %v3096 = vpop.f32.mrb[0].mxu0
        %v3097 = vadd.f32 0.0, %v3096
        %3098 = vmatprep.mubr.bf16.mxu0 %v296
        %3099 = vmatmul.mubr.bf16.gmra.mrb[0].mxu0 %v295
        %v3100 = vpop.f32.mrb[0].mxu0
        %v3101 = vadd.f32 0.0, %v3100
        %v3102 = vpop.f32.mrb[0].mxu0
        %v3103 = vadd.f32 0.0, %v3102
        %v3104 = vpop.f32.mrb[0].mxu0
        %v3105 = vadd.f32 0.0, %v3104
        %v3106 = vpop.f32.mrb[0].mxu0
        %v3107 = vadd.f32 0.0, %v3106
        %3108 = vdwg.mxu0
        %3109 = vmatprep.subr.bf16.mxu0 %v2317
        %3110 = vmatpush1.bf16.msra.mxu0 %v2316
        %3111 = vmatprep.subr.bf16.mxu0 %v2335
        %3112 = vmatpush1.bf16.msra.mxu0 %v2334
        %3113 = vmatprep.subr.bf16.mxu0 %v2353
        %3114 = vmatpush1.bf16.msra.mxu0 %v2352
        %3115 = vmatprep.subr.bf16.mxu0 %v2371
        %3116 = vmatpush1.bf16.msra.mxu0 %v2370
        %3117 = vmatprep.subr.bf16.mxu0 %v2389
        %3118 = vmatpush1.bf16.msra.mxu0 %v2388
        %3119 = vmatprep.subr.bf16.mxu0 %v2407
        %3120 = vmatpush1.bf16.msra.mxu0 %v2406
        %3121 = vmatprep.subr.bf16.mxu0 %v2425
        %3122 = vmatpush1.bf16.msra.mxu0 %v2424
        %3123 = vmatprep.subr.bf16.mxu0 %v2443
        %3124 = vmatpush1.bf16.msra.mxu0 %v2442
        %3125 = vmatprep.subr.bf16.mxu0 0
        %3126 = vmatpush1.bf16.msra.mxu0 0
        %3127 = vmatprep.subr.bf16.mxu0 0
        %3128 = vmatpush1.bf16.msra.mxu0 0
        %3129 = vmatprep.subr.bf16.mxu0 0
        %3130 = vmatpush1.bf16.msra.mxu0 0
        %3131 = vmatprep.subr.bf16.mxu0 0
        %3132 = vmatpush1.bf16.msra.mxu0 0
        %3133 = vmatprep.subr.bf16.mxu0 0
        %3134 = vmatpush1.bf16.msra.mxu0 0
        %3135 = vmatprep.subr.bf16.mxu0 0
        %3136 = vmatpush1.bf16.msra.mxu0 0
        %3137 = vmatprep.subr.bf16.mxu0 0
        %3138 = vmatpush1.bf16.msra.mxu0 0
        %3139 = vmatprep.subr.bf16.mxu0 0
        %3140 = vmatpush1.bf16.msra.mxu0 0
        %3141 = vmatprep.mubr.bf16.mxu0 0
        %3142 = vmatmul.mubr.bf16.gmra.mrb[0].mxu0 %v288
        %v3143 = vpop.f32.mrb[0].mxu0
        %v3144 = vadd.f32 %v3071, %v3143
        %v3145 = vpop.f32.mrb[0].mxu0
        %v3146 = vadd.f32 %v3073, %v3145
        %v3147 = vpop.f32.mrb[0].mxu0
        %v3148 = vadd.f32 %v3075, %v3147
        %v3149 = vpop.f32.mrb[0].mxu0
        %v3150 = vadd.f32 %v3077, %v3149
        %3151 = vmatprep.mubr.bf16.mxu0 0
        %3152 = vmatmul.mubr.bf16.gmra.mrb[0].mxu0 %v291
        %v3153 = vpop.f32.mrb[0].mxu0
        %v3154 = vadd.f32 %v3081, %v3153
        %v3155 = vpop.f32.mrb[0].mxu0
        %v3156 = vadd.f32 %v3083, %v3155
        %v3157 = vpop.f32.mrb[0].mxu0
        %v3158 = vadd.f32 %v3085, %v3157
        %v3159 = vpop.f32.mrb[0].mxu0
        %v3160 = vadd.f32 %v3087, %v3159
        %3161 = vmatprep.mubr.bf16.mxu0 0
        %3162 = vmatmul.mubr.bf16.gmra.mrb[0].mxu0 %v294
        %v3163 = vpop.f32.mrb[0].mxu0
        %v3164 = vadd.f32 %v3091, %v3163
        %v3165 = vpop.f32.mrb[0].mxu0
        %v3166 = vadd.f32 %v3093, %v3165
        %v3167 = vpop.f32.mrb[0].mxu0
        %v3168 = vadd.f32 %v3095, %v3167
        %v3169 = vpop.f32.mrb[0].mxu0
        %v3170 = vadd.f32 %v3097, %v3169
        %3171 = vmatprep.mubr.bf16.mxu0 0
        %3172 = vmatmul.mubr.bf16.gmra.mrb[0].mxu0 %v297
        %v3173 = vpop.f32.mrb[0].mxu0
        %v3174 = vadd.f32 %v3101, %v3173
        %v3175 = vpop.f32.mrb[0].mxu0
        %v3176 = vadd.f32 %v3103, %v3175
        %v3177 = vpop.f32.mrb[0].mxu0
        %v3178 = vadd.f32 %v3105, %v3177
        %v3179 = vpop.f32.mrb[0].mxu0
        %v3180 = vadd.f32 %v3107, %v3179
        %3181 = vdwg.mxu0
        %3182 = vmatprep.subr.bf16.mxu0 %v2031
        %3183 = vmatpush1.bf16.msra.mxu0 %v2030
        %3184 = vmatprep.subr.bf16.mxu0 %v2049
        %3185 = vmatpush1.bf16.msra.mxu0 %v2048
        %3186 = vmatprep.subr.bf16.mxu0 %v2067
        %3187 = vmatpush1.bf16.msra.mxu0 %v2066
        %3188 = vmatprep.subr.bf16.mxu0 %v2085
        %3189 = vmatpush1.bf16.msra.mxu0 %v2084
        %3190 = vmatprep.subr.bf16.mxu0 %v2103
        %3191 = vmatpush1.bf16.msra.mxu0 %v2102
        %3192 = vmatprep.subr.bf16.mxu0 %v2121
        %3193 = vmatpush1.bf16.msra.mxu0 %v2120
        %3194 = vmatprep.subr.bf16.mxu0 %v2139
        %3195 = vmatpush1.bf16.msra.mxu0 %v2138
        %3196 = vmatprep.subr.bf16.mxu0 %v2157
        %3197 = vmatpush1.bf16.msra.mxu0 %v2156
        %3198 = vmatprep.subr.bf16.mxu0 %v2175
        %3199 = vmatpush1.bf16.msra.mxu0 %v2174
        %3200 = vmatprep.subr.bf16.mxu0 %v2193
        %3201 = vmatpush1.bf16.msra.mxu0 %v2192
        %3202 = vmatprep.subr.bf16.mxu0 %v2211
        %3203 = vmatpush1.bf16.msra.mxu0 %v2210
        %3204 = vmatprep.subr.bf16.mxu0 %v2229
        %3205 = vmatpush1.bf16.msra.mxu0 %v2228
        %3206 = vmatprep.subr.bf16.mxu0 %v2247
        %3207 = vmatpush1.bf16.msra.mxu0 %v2246
        %3208 = vmatprep.subr.bf16.mxu0 %v2265
        %3209 = vmatpush1.bf16.msra.mxu0 %v2264
        %3210 = vmatprep.subr.bf16.mxu0 %v2283
        %3211 = vmatpush1.bf16.msra.mxu0 %v2282
        %3212 = vmatprep.subr.bf16.mxu0 %v2301
        %3213 = vmatpush1.bf16.msra.mxu0 %v2300
        %3214 = vmatprep.mubr.bf16.mxu0 %v287
        %3215 = vmatmul.mubr.bf16.gmra.mrb[0].mxu0 %v286
        %v3216 = vpop.f32.mrb[0].mxu0
        %v3217 = vadd.f32 0.0, %v3216
        %v3218 = vpop.f32.mrb[0].mxu0
        %v3219 = vadd.f32 0.0, %v3218
        %v3220 = vpop.f32.mrb[0].mxu0
        %v3221 = vadd.f32 0.0, %v3220
        %v3222 = vpop.f32.mrb[0].mxu0
        %v3223 = vadd.f32 0.0, %v3222
        %3224 = vmatprep.mubr.bf16.mxu0 %v290
        %3225 = vmatmul.mubr.bf16.gmra.mrb[0].mxu0 %v289
        %v3226 = vpop.f32.mrb[0].mxu0
        %v3227 = vadd.f32 0.0, %v3226
        %v3228 = vpop.f32.mrb[0].mxu0
        %v3229 = vadd.f32 0.0, %v3228
        %v3230 = vpop.f32.mrb[0].mxu0
        %v3231 = vadd.f32 0.0, %v3230
        %v3232 = vpop.f32.mrb[0].mxu0
        %v3233 = vadd.f32 0.0, %v3232
        %3234 = vmatprep.mubr.bf16.mxu0 %v293
        %3235 = vmatmul.mubr.bf16.gmra.mrb[0].mxu0 %v292
        %v3236 = vpop.f32.mrb[0].mxu0
        %v3237 = vadd.f32 0.0, %v3236
        %v3238 = vpop.f32.mrb[0].mxu0
        %v3239 = vadd.f32 0.0, %v3238
        %v3240 = vpop.f32.mrb[0].mxu0
        %v3241 = vadd.f32 0.0, %v3240
        %v3242 = vpop.f32.mrb[0].mxu0
        %v3243 = vadd.f32 0.0, %v3242
        %3244 = vmatprep.mubr.bf16.mxu0 %v296
        %3245 = vmatmul.mubr.bf16.gmra.mrb[0].mxu0 %v295
        %v3246 = vpop.f32.mrb[0].mxu0
        %v3247 = vadd.f32 0.0, %v3246
        %v3248 = vpop.f32.mrb[0].mxu0
        %v3249 = vadd.f32 0.0, %v3248
        %v3250 = vpop.f32.mrb[0].mxu0
        %v3251 = vadd.f32 0.0, %v3250
        %v3252 = vpop.f32.mrb[0].mxu0
        %v3253 = vadd.f32 0.0, %v3252
        %3254 = vdwg.mxu0
        %3255 = vmatprep.subr.bf16.mxu0 %v2319
        %3256 = vmatpush1.bf16.msra.mxu0 %v2318
        %3257 = vmatprep.subr.bf16.mxu0 %v2337
        %3258 = vmatpush1.bf16.msra.mxu0 %v2336
        %3259 = vmatprep.subr.bf16.mxu0 %v2355
        %3260 = vmatpush1.bf16.msra.mxu0 %v2354
        %3261 = vmatprep.subr.bf16.mxu0 %v2373
        %3262 = vmatpush1.bf16.msra.mxu0 %v2372
        %3263 = vmatprep.subr.bf16.mxu0 %v2391
        %3264 = vmatpush1.bf16.msra.mxu0 %v2390
        %3265 = vmatprep.subr.bf16.mxu0 %v2409
        %3266 = vmatpush1.bf16.msra.mxu0 %v2408
        %3267 = vmatprep.subr.bf16.mxu0 %v2427
        %3268 = vmatpush1.bf16.msra.mxu0 %v2426
        %3269 = vmatprep.subr.bf16.mxu0 %v2445
        %3270 = vmatpush1.bf16.msra.mxu0 %v2444
        %3271 = vmatprep.subr.bf16.mxu0 0
        %3272 = vmatpush1.bf16.msra.mxu0 0
        %3273 = vmatprep.subr.bf16.mxu0 0
        %3274 = vmatpush1.bf16.msra.mxu0 0
        %3275 = vmatprep.subr.bf16.mxu0 0
        %3276 = vmatpush1.bf16.msra.mxu0 0
        %3277 = vmatprep.subr.bf16.mxu0 0
        %3278 = vmatpush1.bf16.msra.mxu0 0
        %3279 = vmatprep.subr.bf16.mxu0 0
        %3280 = vmatpush1.bf16.msra.mxu0 0
        %3281 = vmatprep.subr.bf16.mxu0 0
        %3282 = vmatpush1.bf16.msra.mxu0 0
        %3283 = vmatprep.subr.bf16.mxu0 0
        %3284 = vmatpush1.bf16.msra.mxu0 0
        %3285 = vmatprep.subr.bf16.mxu0 0
        %3286 = vmatpush1.bf16.msra.mxu0 0
        %3287 = vmatprep.mubr.bf16.mxu0 0
        %3288 = vmatmul.mubr.bf16.gmra.mrb[0].mxu0 %v288
        %v3289 = vpop.f32.mrb[0].mxu0
        %v3290 = vadd.f32 %v3217, %v3289
        %v3291 = vpop.f32.mrb[0].mxu0
        %v3292 = vadd.f32 %v3219, %v3291
        %v3293 = vpop.f32.mrb[0].mxu0
        %v3294 = vadd.f32 %v3221, %v3293
        %v3295 = vpop.f32.mrb[0].mxu0
        %v3296 = vadd.f32 %v3223, %v3295
        %3297 = vmatprep.mubr.bf16.mxu0 0
        %3298 = vmatmul.mubr.bf16.gmra.mrb[0].mxu0 %v291
        %v3299 = vpop.f32.mrb[0].mxu0
        %v3300 = vadd.f32 %v3227, %v3299
        %v3301 = vpop.f32.mrb[0].mxu0
        %v3302 = vadd.f32 %v3229, %v3301
        %v3303 = vpop.f32.mrb[0].mxu0
        %v3304 = vadd.f32 %v3231, %v3303
        %v3305 = vpop.f32.mrb[0].mxu0
        %v3306 = vadd.f32 %v3233, %v3305
        %3307 = vmatprep.mubr.bf16.mxu0 0
        %3308 = vmatmul.mubr.bf16.gmra.mrb[0].mxu0 %v294
        %v3309 = vpop.f32.mrb[0].mxu0
        %v3310 = vadd.f32 %v3237, %v3309
        %v3311 = vpop.f32.mrb[0].mxu0
        %v3312 = vadd.f32 %v3239, %v3311
        %v3313 = vpop.f32.mrb[0].mxu0
        %v3314 = vadd.f32 %v3241, %v3313
        %v3315 = vpop.f32.mrb[0].mxu0
        %v3316 = vadd.f32 %v3243, %v3315
        %3317 = vmatprep.mubr.bf16.mxu0 0
        %3318 = vmatmul.mubr.bf16.gmra.mrb[0].mxu0 %v297
        %v3319 = vpop.f32.mrb[0].mxu0
        %v3320 = vadd.f32 %v3247, %v3319
        %v3321 = vpop.f32.mrb[0].mxu0
        %v3322 = vadd.f32 %v3249, %v3321
        %v3323 = vpop.f32.mrb[0].mxu0
        %v3324 = vadd.f32 %v3251, %v3323
        %v3325 = vpop.f32.mrb[0].mxu0
        %v3326 = vadd.f32 %v3253, %v3325
        %3327 = vdwg.mxu0
        %3328 = vmatprep.subr.bf16.mxu0 %v2033
        %3329 = vmatpush1.bf16.msra.mxu0 %v2032
        %3330 = vmatprep.subr.bf16.mxu0 %v2051
        %3331 = vmatpush1.bf16.msra.mxu0 %v2050
        %3332 = vmatprep.subr.bf16.mxu0 %v2069
        %3333 = vmatpush1.bf16.msra.mxu0 %v2068
        %3334 = vmatprep.subr.bf16.mxu0 %v2087
        %3335 = vmatpush1.bf16.msra.mxu0 %v2086
        %3336 = vmatprep.subr.bf16.mxu0 %v2105
        %3337 = vmatpush1.bf16.msra.mxu0 %v2104
        %3338 = vmatprep.subr.bf16.mxu0 %v2123
        %3339 = vmatpush1.bf16.msra.mxu0 %v2122
        %3340 = vmatprep.subr.bf16.mxu0 %v2141
        %3341 = vmatpush1.bf16.msra.mxu0 %v2140
        %3342 = vmatprep.subr.bf16.mxu0 %v2159
        %3343 = vmatpush1.bf16.msra.mxu0 %v2158
        %3344 = vmatprep.subr.bf16.mxu0 %v2177
        %3345 = vmatpush1.bf16.msra.mxu0 %v2176
        %3346 = vmatprep.subr.bf16.mxu0 %v2195
        %3347 = vmatpush1.bf16.msra.mxu0 %v2194
        %3348 = vmatprep.subr.bf16.mxu0 %v2213
        %3349 = vmatpush1.bf16.msra.mxu0 %v2212
        %3350 = vmatprep.subr.bf16.mxu0 %v2231
        %3351 = vmatpush1.bf16.msra.mxu0 %v2230
        %3352 = vmatprep.subr.bf16.mxu0 %v2249
        %3353 = vmatpush1.bf16.msra.mxu0 %v2248
        %3354 = vmatprep.subr.bf16.mxu0 %v2267
        %3355 = vmatpush1.bf16.msra.mxu0 %v2266
        %3356 = vmatprep.subr.bf16.mxu0 %v2285
        %3357 = vmatpush1.bf16.msra.mxu0 %v2284
        %3358 = vmatprep.subr.bf16.mxu0 %v2303
        %3359 = vmatpush1.bf16.msra.mxu0 %v2302
        %3360 = vmatprep.mubr.bf16.mxu0 %v287
        %3361 = vmatmul.mubr.bf16.gmra.mrb[0].mxu0 %v286
        %v3362 = vpop.f32.mrb[0].mxu0
        %v3363 = vadd.f32 0.0, %v3362
        %v3364 = vpop.f32.mrb[0].mxu0
        %v3365 = vadd.f32 0.0, %v3364
        %v3366 = vpop.f32.mrb[0].mxu0
        %v3367 = vadd.f32 0.0, %v3366
        %v3368 = vpop.f32.mrb[0].mxu0
        %v3369 = vadd.f32 0.0, %v3368
        %3370 = vmatprep.mubr.bf16.mxu0 %v290
        %3371 = vmatmul.mubr.bf16.gmra.mrb[0].mxu0 %v289
        %v3372 = vpop.f32.mrb[0].mxu0
        %v3373 = vadd.f32 0.0, %v3372
        %v3374 = vpop.f32.mrb[0].mxu0
        %v3375 = vadd.f32 0.0, %v3374
        %v3376 = vpop.f32.mrb[0].mxu0
        %v3377 = vadd.f32 0.0, %v3376
        %v3378 = vpop.f32.mrb[0].mxu0
        %v3379 = vadd.f32 0.0, %v3378
        %3380 = vmatprep.mubr.bf16.mxu0 %v293
        %3381 = vmatmul.mubr.bf16.gmra.mrb[0].mxu0 %v292
        %v3382 = vpop.f32.mrb[0].mxu0
        %v3383 = vadd.f32 0.0, %v3382
        %v3384 = vpop.f32.mrb[0].mxu0
        %v3385 = vadd.f32 0.0, %v3384
        %v3386 = vpop.f32.mrb[0].mxu0
        %v3387 = vadd.f32 0.0, %v3386
        %v3388 = vpop.f32.mrb[0].mxu0
        %v3389 = vadd.f32 0.0, %v3388
        %3390 = vmatprep.mubr.bf16.mxu0 %v296
        %3391 = vmatmul.mubr.bf16.gmra.mrb[0].mxu0 %v295
        %v3392 = vpop.f32.mrb[0].mxu0
        %v3393 = vadd.f32 0.0, %v3392
        %v3394 = vpop.f32.mrb[0].mxu0
        %v3395 = vadd.f32 0.0, %v3394
        %v3396 = vpop.f32.mrb[0].mxu0
        %v3397 = vadd.f32 0.0, %v3396
        %v3398 = vpop.f32.mrb[0].mxu0
        %v3399 = vadd.f32 0.0, %v3398
        %3400 = vdwg.mxu0
        %3401 = vmatprep.subr.bf16.mxu0 %v2321
        %3402 = vmatpush1.bf16.msra.mxu0 %v2320
        %3403 = vmatprep.subr.bf16.mxu0 %v2339
        %3404 = vmatpush1.bf16.msra.mxu0 %v2338
        %3405 = vmatprep.subr.bf16.mxu0 %v2357
        %3406 = vmatpush1.bf16.msra.mxu0 %v2356
        %3407 = vmatprep.subr.bf16.mxu0 %v2375
        %3408 = vmatpush1.bf16.msra.mxu0 %v2374
        %3409 = vmatprep.subr.bf16.mxu0 %v2393
        %3410 = vmatpush1.bf16.msra.mxu0 %v2392
        %3411 = vmatprep.subr.bf16.mxu0 %v2411
        %3412 = vmatpush1.bf16.msra.mxu0 %v2410
        %3413 = vmatprep.subr.bf16.mxu0 %v2429
        %3414 = vmatpush1.bf16.msra.mxu0 %v2428
        %3415 = vmatprep.subr.bf16.mxu0 %v2447
        %3416 = vmatpush1.bf16.msra.mxu0 %v2446
        %3417 = vmatprep.subr.bf16.mxu0 0
        %3418 = vmatpush1.bf16.msra.mxu0 0
        %3419 = vmatprep.subr.bf16.mxu0 0
        %3420 = vmatpush1.bf16.msra.mxu0 0
        %3421 = vmatprep.subr.bf16.mxu0 0
        %3422 = vmatpush1.bf16.msra.mxu0 0
        %3423 = vmatprep.subr.bf16.mxu0 0
        %3424 = vmatpush1.bf16.msra.mxu0 0
        %3425 = vmatprep.subr.bf16.mxu0 0
        %3426 = vmatpush1.bf16.msra.mxu0 0
        %3427 = vmatprep.subr.bf16.mxu0 0
        %3428 = vmatpush1.bf16.msra.mxu0 0
        %3429 = vmatprep.subr.bf16.mxu0 0
        %3430 = vmatpush1.bf16.msra.mxu0 0
        %3431 = vmatprep.subr.bf16.mxu0 0
        %3432 = vmatpush1.bf16.msra.mxu0 0
        %3433 = vmatprep.mubr.bf16.mxu0 0
        %3434 = vmatmul.mubr.bf16.gmra.mrb[0].mxu0 %v288
        %v3435 = vpop.f32.mrb[0].mxu0
        %v3436 = vadd.f32 %v3363, %v3435
        %v3437 = vpop.f32.mrb[0].mxu0
        %v3438 = vadd.f32 %v3365, %v3437
        %v3439 = vpop.f32.mrb[0].mxu0
        %v3440 = vadd.f32 %v3367, %v3439
        %v3441 = vpop.f32.mrb[0].mxu0
        %v3442 = vadd.f32 %v3369, %v3441
        %3443 = vmatprep.mubr.bf16.mxu0 0
        %3444 = vmatmul.mubr.bf16.gmra.mrb[0].mxu0 %v291
        %v3445 = vpop.f32.mrb[0].mxu0
        %v3446 = vadd.f32 %v3373, %v3445
        %v3447 = vpop.f32.mrb[0].mxu0
        %v3448 = vadd.f32 %v3375, %v3447
        %v3449 = vpop.f32.mrb[0].mxu0
        %v3450 = vadd.f32 %v3377, %v3449
        %v3451 = vpop.f32.mrb[0].mxu0
        %v3452 = vadd.f32 %v3379, %v3451
        %3453 = vmatprep.mubr.bf16.mxu0 0
        %3454 = vmatmul.mubr.bf16.gmra.mrb[0].mxu0 %v294
        %v3455 = vpop.f32.mrb[0].mxu0
        %v3456 = vadd.f32 %v3383, %v3455
        %v3457 = vpop.f32.mrb[0].mxu0
        %v3458 = vadd.f32 %v3385, %v3457
        %v3459 = vpop.f32.mrb[0].mxu0
        %v3460 = vadd.f32 %v3387, %v3459
        %v3461 = vpop.f32.mrb[0].mxu0
        %v3462 = vadd.f32 %v3389, %v3461
        %3463 = vmatprep.mubr.bf16.mxu0 0
        %3464 = vmatmul.mubr.bf16.gmra.mrb[0].mxu0 %v297
        %v3465 = vpop.f32.mrb[0].mxu0
        %v3466 = vadd.f32 %v3393, %v3465
        %v3467 = vpop.f32.mrb[0].mxu0
        %v3468 = vadd.f32 %v3395, %v3467
        %v3469 = vpop.f32.mrb[0].mxu0
        %v3470 = vadd.f32 %v3397, %v3469
        %v3471 = vpop.f32.mrb[0].mxu0
        %v3472 = vadd.f32 %v3399, %v3471
        %3473 = vdwg.mxu0
        %3474 = vmatprep.subr.bf16.mxu0 %v2035
        %3475 = vmatpush1.bf16.msra.mxu0 %v2034
        %3476 = vmatprep.subr.bf16.mxu0 %v2053
        %3477 = vmatpush1.bf16.msra.mxu0 %v2052
        %3478 = vmatprep.subr.bf16.mxu0 %v2071
        %3479 = vmatpush1.bf16.msra.mxu0 %v2070
        %3480 = vmatprep.subr.bf16.mxu0 %v2089
        %3481 = vmatpush1.bf16.msra.mxu0 %v2088
        %3482 = vmatprep.subr.bf16.mxu0 %v2107
        %3483 = vmatpush1.bf16.msra.mxu0 %v2106
        %3484 = vmatprep.subr.bf16.mxu0 %v2125
        %3485 = vmatpush1.bf16.msra.mxu0 %v2124
        %3486 = vmatprep.subr.bf16.mxu0 %v2143
        %3487 = vmatpush1.bf16.msra.mxu0 %v2142
        %3488 = vmatprep.subr.bf16.mxu0 %v2161
        %3489 = vmatpush1.bf16.msra.mxu0 %v2160
        %3490 = vmatprep.subr.bf16.mxu0 %v2179
        %3491 = vmatpush1.bf16.msra.mxu0 %v2178
        %3492 = vmatprep.subr.bf16.mxu0 %v2197
        %3493 = vmatpush1.bf16.msra.mxu0 %v2196
        %3494 = vmatprep.subr.bf16.mxu0 %v2215
        %3495 = vmatpush1.bf16.msra.mxu0 %v2214
        %3496 = vmatprep.subr.bf16.mxu0 %v2233
        %3497 = vmatpush1.bf16.msra.mxu0 %v2232
        %3498 = vmatprep.subr.bf16.mxu0 %v2251
        %3499 = vmatpush1.bf16.msra.mxu0 %v2250
        %3500 = vmatprep.subr.bf16.mxu0 %v2269
        %3501 = vmatpush1.bf16.msra.mxu0 %v2268
        %3502 = vmatprep.subr.bf16.mxu0 %v2287
        %3503 = vmatpush1.bf16.msra.mxu0 %v2286
        %3504 = vmatprep.subr.bf16.mxu0 %v2305
        %3505 = vmatpush1.bf16.msra.mxu0 %v2304
        %3506 = vmatprep.mubr.bf16.mxu0 %v287
        %3507 = vmatmul.mubr.bf16.gmra.mrb[0].mxu0 %v286
        %v3508 = vpop.f32.mrb[0].mxu0
        %v3509 = vadd.f32 0.0, %v3508
        %v3510 = vpop.f32.mrb[0].mxu0
        %v3511 = vadd.f32 0.0, %v3510
        %v3512 = vpop.f32.mrb[0].mxu0
        %v3513 = vadd.f32 0.0, %v3512
        %v3514 = vpop.f32.mrb[0].mxu0
        %v3515 = vadd.f32 0.0, %v3514
        %3516 = vmatprep.mubr.bf16.mxu0 %v290
        %3517 = vmatmul.mubr.bf16.gmra.mrb[0].mxu0 %v289
        %v3518 = vpop.f32.mrb[0].mxu0
        %v3519 = vadd.f32 0.0, %v3518
        %v3520 = vpop.f32.mrb[0].mxu0
        %v3521 = vadd.f32 0.0, %v3520
        %v3522 = vpop.f32.mrb[0].mxu0
        %v3523 = vadd.f32 0.0, %v3522
        %v3524 = vpop.f32.mrb[0].mxu0
        %v3525 = vadd.f32 0.0, %v3524
        %3526 = vmatprep.mubr.bf16.mxu0 %v293
        %3527 = vmatmul.mubr.bf16.gmra.mrb[0].mxu0 %v292
        %v3528 = vpop.f32.mrb[0].mxu0
        %v3529 = vadd.f32 0.0, %v3528
        %v3530 = vpop.f32.mrb[0].mxu0
        %v3531 = vadd.f32 0.0, %v3530
        %v3532 = vpop.f32.mrb[0].mxu0
        %v3533 = vadd.f32 0.0, %v3532
        %v3534 = vpop.f32.mrb[0].mxu0
        %v3535 = vadd.f32 0.0, %v3534
        %3536 = vmatprep.mubr.bf16.mxu0 %v296
        %3537 = vmatmul.mubr.bf16.gmra.mrb[0].mxu0 %v295
        %v3538 = vpop.f32.mrb[0].mxu0
        %v3539 = vadd.f32 0.0, %v3538
        %v3540 = vpop.f32.mrb[0].mxu0
        %v3541 = vadd.f32 0.0, %v3540
        %v3542 = vpop.f32.mrb[0].mxu0
        %v3543 = vadd.f32 0.0, %v3542
        %v3544 = vpop.f32.mrb[0].mxu0
        %v3545 = vadd.f32 0.0, %v3544
        %3546 = vdwg.mxu0
        %3547 = vmatprep.subr.bf16.mxu0 %v2323
        %3548 = vmatpush1.bf16.msra.mxu0 %v2322
        %3549 = vmatprep.subr.bf16.mxu0 %v2341
        %3550 = vmatpush1.bf16.msra.mxu0 %v2340
        %3551 = vmatprep.subr.bf16.mxu0 %v2359
        %3552 = vmatpush1.bf16.msra.mxu0 %v2358
        %3553 = vmatprep.subr.bf16.mxu0 %v2377
        %3554 = vmatpush1.bf16.msra.mxu0 %v2376
        %3555 = vmatprep.subr.bf16.mxu0 %v2395
        %3556 = vmatpush1.bf16.msra.mxu0 %v2394
        %3557 = vmatprep.subr.bf16.mxu0 %v2413
        %3558 = vmatpush1.bf16.msra.mxu0 %v2412
        %3559 = vmatprep.subr.bf16.mxu0 %v2431
        %3560 = vmatpush1.bf16.msra.mxu0 %v2430
        %3561 = vmatprep.subr.bf16.mxu0 %v2449
        %3562 = vmatpush1.bf16.msra.mxu0 %v2448
        %3563 = vmatprep.subr.bf16.mxu0 0
        %3564 = vmatpush1.bf16.msra.mxu0 0
        %3565 = vmatprep.subr.bf16.mxu0 0
        %3566 = vmatpush1.bf16.msra.mxu0 0
        %3567 = vmatprep.subr.bf16.mxu0 0
        %3568 = vmatpush1.bf16.msra.mxu0 0
        %3569 = vmatprep.subr.bf16.mxu0 0
        %3570 = vmatpush1.bf16.msra.mxu0 0
        %3571 = vmatprep.subr.bf16.mxu0 0
        %3572 = vmatpush1.bf16.msra.mxu0 0
        %3573 = vmatprep.subr.bf16.mxu0 0
        %3574 = vmatpush1.bf16.msra.mxu0 0
        %3575 = vmatprep.subr.bf16.mxu0 0
        %3576 = vmatpush1.bf16.msra.mxu0 0
        %3577 = vmatprep.subr.bf16.mxu0 0
        %3578 = vmatpush1.bf16.msra.mxu0 0
        %3579 = vmatprep.mubr.bf16.mxu0 0
        %3580 = vmatmul.mubr.bf16.gmra.mrb[0].mxu0 %v288
        %v3581 = vpop.f32.mrb[0].mxu0
        %v3582 = vadd.f32 %v3509, %v3581
        %v3583 = vpop.f32.mrb[0].mxu0
        %v3584 = vadd.f32 %v3511, %v3583
        %v3585 = vpop.f32.mrb[0].mxu0
        %v3586 = vadd.f32 %v3513, %v3585
        %v3587 = vpop.f32.mrb[0].mxu0
        %v3588 = vadd.f32 %v3515, %v3587
        %3589 = vmatprep.mubr.bf16.mxu0 0
        %3590 = vmatmul.mubr.bf16.gmra.mrb[0].mxu0 %v291
        %v3591 = vpop.f32.mrb[0].mxu0
        %v3592 = vadd.f32 %v3519, %v3591
        %v3593 = vpop.f32.mrb[0].mxu0
        %v3594 = vadd.f32 %v3521, %v3593
        %v3595 = vpop.f32.mrb[0].mxu0
        %v3596 = vadd.f32 %v3523, %v3595
        %v3597 = vpop.f32.mrb[0].mxu0
        %v3598 = vadd.f32 %v3525, %v3597
        %3599 = vmatprep.mubr.bf16.mxu0 0
        %3600 = vmatmul.mubr.bf16.gmra.mrb[0].mxu0 %v294
        %v3601 = vpop.f32.mrb[0].mxu0
        %v3602 = vadd.f32 %v3529, %v3601
        %v3603 = vpop.f32.mrb[0].mxu0
        %v3604 = vadd.f32 %v3531, %v3603
        %v3605 = vpop.f32.mrb[0].mxu0
        %v3606 = vadd.f32 %v3533, %v3605
        %v3607 = vpop.f32.mrb[0].mxu0
        %v3608 = vadd.f32 %v3535, %v3607
        %3609 = vmatprep.mubr.bf16.mxu0 0
        %3610 = vmatmul.mubr.bf16.gmra.mrb[0].mxu0 %v297
        %v3611 = vpop.f32.mrb[0].mxu0
        %v3612 = vadd.f32 %v3539, %v3611
        %v3613 = vpop.f32.mrb[0].mxu0
        %v3614 = vadd.f32 %v3541, %v3613
        %v3615 = vpop.f32.mrb[0].mxu0
        %v3616 = vadd.f32 %v3543, %v3615
        %v3617 = vpop.f32.mrb[0].mxu0
        %v3618 = vadd.f32 %v3545, %v3617
        %3619 = vdwg.mxu0
        %3620 = vmatprep.subr.bf16.mxu0 %v2037
        %3621 = vmatpush1.bf16.msra.mxu0 %v2036
        %3622 = vmatprep.subr.bf16.mxu0 %v2055
        %3623 = vmatpush1.bf16.msra.mxu0 %v2054
        %3624 = vmatprep.subr.bf16.mxu0 %v2073
        %3625 = vmatpush1.bf16.msra.mxu0 %v2072
        %3626 = vmatprep.subr.bf16.mxu0 %v2091
        %3627 = vmatpush1.bf16.msra.mxu0 %v2090
        %3628 = vmatprep.subr.bf16.mxu0 %v2109
        %3629 = vmatpush1.bf16.msra.mxu0 %v2108
        %3630 = vmatprep.subr.bf16.mxu0 %v2127
        %3631 = vmatpush1.bf16.msra.mxu0 %v2126
        %3632 = vmatprep.subr.bf16.mxu0 %v2145
        %3633 = vmatpush1.bf16.msra.mxu0 %v2144
        %3634 = vmatprep.subr.bf16.mxu0 %v2163
        %3635 = vmatpush1.bf16.msra.mxu0 %v2162
        %3636 = vmatprep.subr.bf16.mxu0 %v2181
        %3637 = vmatpush1.bf16.msra.mxu0 %v2180
        %3638 = vmatprep.subr.bf16.mxu0 %v2199
        %3639 = vmatpush1.bf16.msra.mxu0 %v2198
        %3640 = vmatprep.subr.bf16.mxu0 %v2217
        %3641 = vmatpush1.bf16.msra.mxu0 %v2216
        %3642 = vmatprep.subr.bf16.mxu0 %v2235
        %3643 = vmatpush1.bf16.msra.mxu0 %v2234
        %3644 = vmatprep.subr.bf16.mxu0 %v2253
        %3645 = vmatpush1.bf16.msra.mxu0 %v2252
        %3646 = vmatprep.subr.bf16.mxu0 %v2271
        %3647 = vmatpush1.bf16.msra.mxu0 %v2270
        %3648 = vmatprep.subr.bf16.mxu0 %v2289
        %3649 = vmatpush1.bf16.msra.mxu0 %v2288
        %3650 = vmatprep.subr.bf16.mxu0 %v2307
        %3651 = vmatpush1.bf16.msra.mxu0 %v2306
        %3652 = vmatprep.mubr.bf16.mxu0 %v287
        %3653 = vmatmul.mubr.bf16.gmra.mrb[0].mxu0 %v286
        %v3654 = vpop.f32.mrb[0].mxu0
        %v3655 = vadd.f32 0.0, %v3654
        %v3656 = vpop.f32.mrb[0].mxu0
        %v3657 = vadd.f32 0.0, %v3656
        %v3658 = vpop.f32.mrb[0].mxu0
        %v3659 = vadd.f32 0.0, %v3658
        %v3660 = vpop.f32.mrb[0].mxu0
        %v3661 = vadd.f32 0.0, %v3660
        %3662 = vmatprep.mubr.bf16.mxu0 %v290
        %3663 = vmatmul.mubr.bf16.gmra.mrb[0].mxu0 %v289
        %v3664 = vpop.f32.mrb[0].mxu0
        %v3665 = vadd.f32 0.0, %v3664
        %v3666 = vpop.f32.mrb[0].mxu0
        %v3667 = vadd.f32 0.0, %v3666
        %v3668 = vpop.f32.mrb[0].mxu0
        %v3669 = vadd.f32 0.0, %v3668
        %v3670 = vpop.f32.mrb[0].mxu0
        %v3671 = vadd.f32 0.0, %v3670
        %3672 = vmatprep.mubr.bf16.mxu0 %v293
        %3673 = vmatmul.mubr.bf16.gmra.mrb[0].mxu0 %v292
        %v3674 = vpop.f32.mrb[0].mxu0
        %v3675 = vadd.f32 0.0, %v3674
        %v3676 = vpop.f32.mrb[0].mxu0
        %v3677 = vadd.f32 0.0, %v3676
        %v3678 = vpop.f32.mrb[0].mxu0
        %v3679 = vadd.f32 0.0, %v3678
        %v3680 = vpop.f32.mrb[0].mxu0
        %v3681 = vadd.f32 0.0, %v3680
        %3682 = vmatprep.mubr.bf16.mxu0 %v296
        %3683 = vmatmul.mubr.bf16.gmra.mrb[0].mxu0 %v295
        %v3684 = vpop.f32.mrb[0].mxu0
        %v3685 = vadd.f32 0.0, %v3684
        %v3686 = vpop.f32.mrb[0].mxu0
        %v3687 = vadd.f32 0.0, %v3686
        %v3688 = vpop.f32.mrb[0].mxu0
        %v3689 = vadd.f32 0.0, %v3688
        %v3690 = vpop.f32.mrb[0].mxu0
        %v3691 = vadd.f32 0.0, %v3690
        %3692 = vdwg.mxu0
        %3693 = vmatprep.subr.bf16.mxu0 %v2325
        %3694 = vmatpush1.bf16.msra.mxu0 %v2324
        %3695 = vmatprep.subr.bf16.mxu0 %v2343
        %3696 = vmatpush1.bf16.msra.mxu0 %v2342
        %3697 = vmatprep.subr.bf16.mxu0 %v2361
        %3698 = vmatpush1.bf16.msra.mxu0 %v2360
        %3699 = vmatprep.subr.bf16.mxu0 %v2379
        %3700 = vmatpush1.bf16.msra.mxu0 %v2378
        %3701 = vmatprep.subr.bf16.mxu0 %v2397
        %3702 = vmatpush1.bf16.msra.mxu0 %v2396
        %3703 = vmatprep.subr.bf16.mxu0 %v2415
        %3704 = vmatpush1.bf16.msra.mxu0 %v2414
        %3705 = vmatprep.subr.bf16.mxu0 %v2433
        %3706 = vmatpush1.bf16.msra.mxu0 %v2432
        %3707 = vmatprep.subr.bf16.mxu0 %v2451
        %3708 = vmatpush1.bf16.msra.mxu0 %v2450
        %3709 = vmatprep.subr.bf16.mxu0 0
        %3710 = vmatpush1.bf16.msra.mxu0 0
        %3711 = vmatprep.subr.bf16.mxu0 0
        %3712 = vmatpush1.bf16.msra.mxu0 0
        %3713 = vmatprep.subr.bf16.mxu0 0
        %3714 = vmatpush1.bf16.msra.mxu0 0
        %3715 = vmatprep.subr.bf16.mxu0 0
        %3716 = vmatpush1.bf16.msra.mxu0 0
        %3717 = vmatprep.subr.bf16.mxu0 0
        %3718 = vmatpush1.bf16.msra.mxu0 0
        %3719 = vmatprep.subr.bf16.mxu0 0
        %3720 = vmatpush1.bf16.msra.mxu0 0
        %3721 = vmatprep.subr.bf16.mxu0 0
        %3722 = vmatpush1.bf16.msra.mxu0 0
        %3723 = vmatprep.subr.bf16.mxu0 0
        %3724 = vmatpush1.bf16.msra.mxu0 0
        %3725 = vmatprep.mubr.bf16.mxu0 0
        %3726 = vmatmul.mubr.bf16.gmra.mrb[0].mxu0 %v288
        %v3727 = vpop.f32.mrb[0].mxu0
        %v3728 = vadd.f32 %v3655, %v3727
        %v3729 = vpop.f32.mrb[0].mxu0
        %v3730 = vadd.f32 %v3657, %v3729
        %v3731 = vpop.f32.mrb[0].mxu0
        %v3732 = vadd.f32 %v3659, %v3731
        %v3733 = vpop.f32.mrb[0].mxu0
        %v3734 = vadd.f32 %v3661, %v3733
        %3735 = vmatprep.mubr.bf16.mxu0 0
        %3736 = vmatmul.mubr.bf16.gmra.mrb[0].mxu0 %v291
        %v3737 = vpop.f32.mrb[0].mxu0
        %v3738 = vadd.f32 %v3665, %v3737
        %v3739 = vpop.f32.mrb[0].mxu0
        %v3740 = vadd.f32 %v3667, %v3739
        %v3741 = vpop.f32.mrb[0].mxu0
        %v3742 = vadd.f32 %v3669, %v3741
        %v3743 = vpop.f32.mrb[0].mxu0
        %v3744 = vadd.f32 %v3671, %v3743
        %3745 = vmatprep.mubr.bf16.mxu0 0
        %3746 = vmatmul.mubr.bf16.gmra.mrb[0].mxu0 %v294
        %v3747 = vpop.f32.mrb[0].mxu0
        %v3748 = vadd.f32 %v3675, %v3747
        %v3749 = vpop.f32.mrb[0].mxu0
        %v3750 = vadd.f32 %v3677, %v3749
        %v3751 = vpop.f32.mrb[0].mxu0
        %v3752 = vadd.f32 %v3679, %v3751
        %v3753 = vpop.f32.mrb[0].mxu0
        %v3754 = vadd.f32 %v3681, %v3753
        %3755 = vmatprep.mubr.bf16.mxu0 0
        %3756 = vmatmul.mubr.bf16.gmra.mrb[0].mxu0 %v297
        %v3757 = vpop.f32.mrb[0].mxu0
        %v3758 = vadd.f32 %v3685, %v3757
        %v3759 = vpop.f32.mrb[0].mxu0
        %v3760 = vadd.f32 %v3687, %v3759
        %v3761 = vpop.f32.mrb[0].mxu0
        %v3762 = vadd.f32 %v3689, %v3761
        %v3763 = vpop.f32.mrb[0].mxu0
        %v3764 = vadd.f32 %v3691, %v3763
        %3765 = vdwg.mxu0
        %3766 = vmatprep.subr.bf16.mxu0 %v2039
        %3767 = vmatpush1.bf16.msra.mxu0 %v2038
        %3768 = vmatprep.subr.bf16.mxu0 %v2057
        %3769 = vmatpush1.bf16.msra.mxu0 %v2056
        %3770 = vmatprep.subr.bf16.mxu0 %v2075
        %3771 = vmatpush1.bf16.msra.mxu0 %v2074
        %3772 = vmatprep.subr.bf16.mxu0 %v2093
        %3773 = vmatpush1.bf16.msra.mxu0 %v2092
        %3774 = vmatprep.subr.bf16.mxu0 %v2111
        %3775 = vmatpush1.bf16.msra.mxu0 %v2110
        %3776 = vmatprep.subr.bf16.mxu0 %v2129
        %3777 = vmatpush1.bf16.msra.mxu0 %v2128
        %3778 = vmatprep.subr.bf16.mxu0 %v2147
        %3779 = vmatpush1.bf16.msra.mxu0 %v2146
        %3780 = vmatprep.subr.bf16.mxu0 %v2165
        %3781 = vmatpush1.bf16.msra.mxu0 %v2164
        %3782 = vmatprep.subr.bf16.mxu0 %v2183
        %3783 = vmatpush1.bf16.msra.mxu0 %v2182
        %3784 = vmatprep.subr.bf16.mxu0 %v2201
        %3785 = vmatpush1.bf16.msra.mxu0 %v2200
        %3786 = vmatprep.subr.bf16.mxu0 %v2219
        %3787 = vmatpush1.bf16.msra.mxu0 %v2218
        %3788 = vmatprep.subr.bf16.mxu0 %v2237
        %3789 = vmatpush1.bf16.msra.mxu0 %v2236
        %3790 = vmatprep.subr.bf16.mxu0 %v2255
        %3791 = vmatpush1.bf16.msra.mxu0 %v2254
        %3792 = vmatprep.subr.bf16.mxu0 %v2273
        %3793 = vmatpush1.bf16.msra.mxu0 %v2272
        %3794 = vmatprep.subr.bf16.mxu0 %v2291
        %3795 = vmatpush1.bf16.msra.mxu0 %v2290
        %3796 = vmatprep.subr.bf16.mxu0 %v2309
        %3797 = vmatpush1.bf16.msra.mxu0 %v2308
        %3798 = vmatprep.mubr.bf16.mxu0 %v287
        %3799 = vmatmul.mubr.bf16.gmra.mrb[0].mxu0 %v286
        %v3800 = vpop.f32.mrb[0].mxu0
        %v3801 = vadd.f32 0.0, %v3800
        %v3802 = vpop.f32.mrb[0].mxu0
        %v3803 = vadd.f32 0.0, %v3802
        %v3804 = vpop.f32.mrb[0].mxu0
        %v3805 = vadd.f32 0.0, %v3804
        %v3806 = vpop.f32.mrb[0].mxu0
        %v3807 = vadd.f32 0.0, %v3806
        %3808 = vmatprep.mubr.bf16.mxu0 %v290
        %3809 = vmatmul.mubr.bf16.gmra.mrb[0].mxu0 %v289
        %v3810 = vpop.f32.mrb[0].mxu0
        %v3811 = vadd.f32 0.0, %v3810
        %v3812 = vpop.f32.mrb[0].mxu0
        %v3813 = vadd.f32 0.0, %v3812
        %v3814 = vpop.f32.mrb[0].mxu0
        %v3815 = vadd.f32 0.0, %v3814
        %v3816 = vpop.f32.mrb[0].mxu0
        %v3817 = vadd.f32 0.0, %v3816
        %3818 = vmatprep.mubr.bf16.mxu0 %v293
        %3819 = vmatmul.mubr.bf16.gmra.mrb[0].mxu0 %v292
        %v3820 = vpop.f32.mrb[0].mxu0
        %v3821 = vadd.f32 0.0, %v3820
        %v3822 = vpop.f32.mrb[0].mxu0
        %v3823 = vadd.f32 0.0, %v3822
        %v3824 = vpop.f32.mrb[0].mxu0
        %v3825 = vadd.f32 0.0, %v3824
        %v3826 = vpop.f32.mrb[0].mxu0
        %v3827 = vadd.f32 0.0, %v3826
        %3828 = vmatprep.mubr.bf16.mxu0 %v296
        %3829 = vmatmul.mubr.bf16.gmra.mrb[0].mxu0 %v295
        %v3830 = vpop.f32.mrb[0].mxu0
        %v3831 = vadd.f32 0.0, %v3830
        %v3832 = vpop.f32.mrb[0].mxu0
        %v3833 = vadd.f32 0.0, %v3832
        %v3834 = vpop.f32.mrb[0].mxu0
        %v3835 = vadd.f32 0.0, %v3834
        %v3836 = vpop.f32.mrb[0].mxu0
        %v3837 = vadd.f32 0.0, %v3836
        %3838 = vdwg.mxu0
        %3839 = vmatprep.subr.bf16.mxu0 %v2327
        %3840 = vmatpush1.bf16.msra.mxu0 %v2326
        %3841 = vmatprep.subr.bf16.mxu0 %v2345
        %3842 = vmatpush1.bf16.msra.mxu0 %v2344
        %3843 = vmatprep.subr.bf16.mxu0 %v2363
        %3844 = vmatpush1.bf16.msra.mxu0 %v2362
        %3845 = vmatprep.subr.bf16.mxu0 %v2381
        %3846 = vmatpush1.bf16.msra.mxu0 %v2380
        %3847 = vmatprep.subr.bf16.mxu0 %v2399
        %3848 = vmatpush1.bf16.msra.mxu0 %v2398
        %3849 = vmatprep.subr.bf16.mxu0 %v2417
        %3850 = vmatpush1.bf16.msra.mxu0 %v2416
        %3851 = vmatprep.subr.bf16.mxu0 %v2435
        %3852 = vmatpush1.bf16.msra.mxu0 %v2434
        %3853 = vmatprep.subr.bf16.mxu0 %v2453
        %3854 = vmatpush1.bf16.msra.mxu0 %v2452
        %3855 = vmatprep.subr.bf16.mxu0 0
        %3856 = vmatpush1.bf16.msra.mxu0 0
        %3857 = vmatprep.subr.bf16.mxu0 0
        %3858 = vmatpush1.bf16.msra.mxu0 0
        %3859 = vmatprep.subr.bf16.mxu0 0
        %3860 = vmatpush1.bf16.msra.mxu0 0
        %3861 = vmatprep.subr.bf16.mxu0 0
        %3862 = vmatpush1.bf16.msra.mxu0 0
        %3863 = vmatprep.subr.bf16.mxu0 0
        %3864 = vmatpush1.bf16.msra.mxu0 0
        %3865 = vmatprep.subr.bf16.mxu0 0
        %3866 = vmatpush1.bf16.msra.mxu0 0
        %3867 = vmatprep.subr.bf16.mxu0 0
        %3868 = vmatpush1.bf16.msra.mxu0 0
        %3869 = vmatprep.subr.bf16.mxu0 0
        %3870 = vmatpush1.bf16.msra.mxu0 0
        %3871 = vmatprep.mubr.bf16.mxu0 0
        %3872 = vmatmul.mubr.bf16.gmra.mrb[0].mxu0 %v288
        %v3873 = vpop.f32.mrb[0].mxu0
        %v3874 = vadd.f32 %v3801, %v3873
        %v3875 = vpop.f32.mrb[0].mxu0
        %v3876 = vadd.f32 %v3803, %v3875
        %v3877 = vpop.f32.mrb[0].mxu0
        %v3878 = vadd.f32 %v3805, %v3877
        %v3879 = vpop.f32.mrb[0].mxu0
        %v3880 = vadd.f32 %v3807, %v3879
        %3881 = vmatprep.mubr.bf16.mxu0 0
        %3882 = vmatmul.mubr.bf16.gmra.mrb[0].mxu0 %v291
        %v3883 = vpop.f32.mrb[0].mxu0
        %v3884 = vadd.f32 %v3811, %v3883
        %v3885 = vpop.f32.mrb[0].mxu0
        %v3886 = vadd.f32 %v3813, %v3885
        %v3887 = vpop.f32.mrb[0].mxu0
        %v3888 = vadd.f32 %v3815, %v3887
        %v3889 = vpop.f32.mrb[0].mxu0
        %v3890 = vadd.f32 %v3817, %v3889
        %3891 = vmatprep.mubr.bf16.mxu0 0
        %3892 = vmatmul.mubr.bf16.gmra.mrb[0].mxu0 %v294
        %v3893 = vpop.f32.mrb[0].mxu0
        %v3894 = vadd.f32 %v3821, %v3893
        %v3895 = vpop.f32.mrb[0].mxu0
        %v3896 = vadd.f32 %v3823, %v3895
        %v3897 = vpop.f32.mrb[0].mxu0
        %v3898 = vadd.f32 %v3825, %v3897
        %v3899 = vpop.f32.mrb[0].mxu0
        %v3900 = vadd.f32 %v3827, %v3899
        %3901 = vmatprep.mubr.bf16.mxu0 0
        %3902 = vmatmul.mubr.bf16.gmra.mrb[0].mxu0 %v297
        %v3903 = vpop.f32.mrb[0].mxu0
        %v3904 = vadd.f32 %v3831, %v3903
        %v3905 = vpop.f32.mrb[0].mxu0
        %v3906 = vadd.f32 %v3833, %v3905
        %v3907 = vpop.f32.mrb[0].mxu0
        %v3908 = vadd.f32 %v3835, %v3907
        %v3909 = vpop.f32.mrb[0].mxu0
        %v3910 = vadd.f32 %v3837, %v3909
        %3911 = vdwg.mxu0
        %3912 = vmatprep.subr.bf16.mxu0 %v2041
        %3913 = vmatpush1.bf16.msra.mxu0 %v2040
        %3914 = vmatprep.subr.bf16.mxu0 %v2059
        %3915 = vmatpush1.bf16.msra.mxu0 %v2058
        %3916 = vmatprep.subr.bf16.mxu0 %v2077
        %3917 = vmatpush1.bf16.msra.mxu0 %v2076
        %3918 = vmatprep.subr.bf16.mxu0 %v2095
        %3919 = vmatpush1.bf16.msra.mxu0 %v2094
        %3920 = vmatprep.subr.bf16.mxu0 %v2113
        %3921 = vmatpush1.bf16.msra.mxu0 %v2112
        %3922 = vmatprep.subr.bf16.mxu0 %v2131
        %3923 = vmatpush1.bf16.msra.mxu0 %v2130
        %3924 = vmatprep.subr.bf16.mxu0 %v2149
        %3925 = vmatpush1.bf16.msra.mxu0 %v2148
        %3926 = vmatprep.subr.bf16.mxu0 %v2167
        %3927 = vmatpush1.bf16.msra.mxu0 %v2166
        %3928 = vmatprep.subr.bf16.mxu0 %v2185
        %3929 = vmatpush1.bf16.msra.mxu0 %v2184
        %3930 = vmatprep.subr.bf16.mxu0 %v2203
        %3931 = vmatpush1.bf16.msra.mxu0 %v2202
        %3932 = vmatprep.subr.bf16.mxu0 %v2221
        %3933 = vmatpush1.bf16.msra.mxu0 %v2220
        %3934 = vmatprep.subr.bf16.mxu0 %v2239
        %3935 = vmatpush1.bf16.msra.mxu0 %v2238
        %3936 = vmatprep.subr.bf16.mxu0 %v2257
        %3937 = vmatpush1.bf16.msra.mxu0 %v2256
        %3938 = vmatprep.subr.bf16.mxu0 %v2275
        %3939 = vmatpush1.bf16.msra.mxu0 %v2274
        %3940 = vmatprep.subr.bf16.mxu0 %v2293
        %3941 = vmatpush1.bf16.msra.mxu0 %v2292
        %3942 = vmatprep.subr.bf16.mxu0 %v2311
        %3943 = vmatpush1.bf16.msra.mxu0 %v2310
        %3944 = vmatprep.mubr.bf16.mxu0 %v287
        %3945 = vmatmul.mubr.bf16.gmra.mrb[0].mxu0 %v286
        %v3946 = vpop.f32.mrb[0].mxu0
        %v3947 = vadd.f32 0.0, %v3946
        %v3948 = vpop.f32.mrb[0].mxu0
        %v3949 = vadd.f32 0.0, %v3948
        %v3950 = vpop.f32.mrb[0].mxu0
        %v3951 = vadd.f32 0.0, %v3950
        %v3952 = vpop.f32.mrb[0].mxu0
        %v3953 = vadd.f32 0.0, %v3952
        %3954 = vmatprep.mubr.bf16.mxu0 %v290
        %3955 = vmatmul.mubr.bf16.gmra.mrb[0].mxu0 %v289
        %v3956 = vpop.f32.mrb[0].mxu0
        %v3957 = vadd.f32 0.0, %v3956
        %v3958 = vpop.f32.mrb[0].mxu0
        %v3959 = vadd.f32 0.0, %v3958
        %v3960 = vpop.f32.mrb[0].mxu0
        %v3961 = vadd.f32 0.0, %v3960
        %v3962 = vpop.f32.mrb[0].mxu0
        %v3963 = vadd.f32 0.0, %v3962
        %3964 = vmatprep.mubr.bf16.mxu0 %v293
        %3965 = vmatmul.mubr.bf16.gmra.mrb[0].mxu0 %v292
        %v3966 = vpop.f32.mrb[0].mxu0
        %v3967 = vadd.f32 0.0, %v3966
        %v3968 = vpop.f32.mrb[0].mxu0
        %v3969 = vadd.f32 0.0, %v3968
        %v3970 = vpop.f32.mrb[0].mxu0
        %v3971 = vadd.f32 0.0, %v3970
        %v3972 = vpop.f32.mrb[0].mxu0
        %v3973 = vadd.f32 0.0, %v3972
        %3974 = vmatprep.mubr.bf16.mxu0 %v296
        %3975 = vmatmul.mubr.bf16.gmra.mrb[0].mxu0 %v295
        %v3976 = vpop.f32.mrb[0].mxu0
        %v3977 = vadd.f32 0.0, %v3976
        %v3978 = vpop.f32.mrb[0].mxu0
        %v3979 = vadd.f32 0.0, %v3978
        %v3980 = vpop.f32.mrb[0].mxu0
        %v3981 = vadd.f32 0.0, %v3980
        %v3982 = vpop.f32.mrb[0].mxu0
        %v3983 = vadd.f32 0.0, %v3982
        %3984 = vdwg.mxu0
        %3985 = vmatprep.subr.bf16.mxu0 %v2329
        %3986 = vmatpush1.bf16.msra.mxu0 %v2328
        %3987 = vmatprep.subr.bf16.mxu0 %v2347
        %3988 = vmatpush1.bf16.msra.mxu0 %v2346
        %3989 = vmatprep.subr.bf16.mxu0 %v2365
        %3990 = vmatpush1.bf16.msra.mxu0 %v2364
        %3991 = vmatprep.subr.bf16.mxu0 %v2383
        %3992 = vmatpush1.bf16.msra.mxu0 %v2382
        %3993 = vmatprep.subr.bf16.mxu0 %v2401
        %3994 = vmatpush1.bf16.msra.mxu0 %v2400
        %3995 = vmatprep.subr.bf16.mxu0 %v2419
        %3996 = vmatpush1.bf16.msra.mxu0 %v2418
        %3997 = vmatprep.subr.bf16.mxu0 %v2437
        %3998 = vmatpush1.bf16.msra.mxu0 %v2436
        %3999 = vmatprep.subr.bf16.mxu0 %v2455
        %4000 = vmatpush1.bf16.msra.mxu0 %v2454
        %4001 = vmatprep.subr.bf16.mxu0 0
        %4002 = vmatpush1.bf16.msra.mxu0 0
        %4003 = vmatprep.subr.bf16.mxu0 0
        %4004 = vmatpush1.bf16.msra.mxu0 0
        %4005 = vmatprep.subr.bf16.mxu0 0
        %4006 = vmatpush1.bf16.msra.mxu0 0
        %4007 = vmatprep.subr.bf16.mxu0 0
        %4008 = vmatpush1.bf16.msra.mxu0 0
        %4009 = vmatprep.subr.bf16.mxu0 0
        %4010 = vmatpush1.bf16.msra.mxu0 0
        %4011 = vmatprep.subr.bf16.mxu0 0
        %4012 = vmatpush1.bf16.msra.mxu0 0
        %4013 = vmatprep.subr.bf16.mxu0 0
        %4014 = vmatpush1.bf16.msra.mxu0 0
        %4015 = vmatprep.subr.bf16.mxu0 0
        %4016 = vmatpush1.bf16.msra.mxu0 0
        %4017 = vmatprep.mubr.bf16.mxu0 0
        %4018 = vmatmul.mubr.bf16.gmra.mrb[0].mxu0 %v288
        %v4019 = vpop.f32.mrb[0].mxu0
        %v4020 = vadd.f32 %v3947, %v4019
        %v4021 = vpop.f32.mrb[0].mxu0
        %v4022 = vadd.f32 %v3949, %v4021
        %v4023 = vpop.f32.mrb[0].mxu0
        %v4024 = vadd.f32 %v3951, %v4023
        %v4025 = vpop.f32.mrb[0].mxu0
        %v4026 = vadd.f32 %v3953, %v4025
        %4027 = vmatprep.mubr.bf16.mxu0 0
        %4028 = vmatmul.mubr.bf16.gmra.mrb[0].mxu0 %v291
        %v4029 = vpop.f32.mrb[0].mxu0
        %v4030 = vadd.f32 %v3957, %v4029
        %v4031 = vpop.f32.mrb[0].mxu0
        %v4032 = vadd.f32 %v3959, %v4031
        %v4033 = vpop.f32.mrb[0].mxu0
        %v4034 = vadd.f32 %v3961, %v4033
        %v4035 = vpop.f32.mrb[0].mxu0
        %v4036 = vadd.f32 %v3963, %v4035
        %4037 = vmatprep.mubr.bf16.mxu0 0
        %4038 = vmatmul.mubr.bf16.gmra.mrb[0].mxu0 %v294
        %v4039 = vpop.f32.mrb[0].mxu0
        %v4040 = vadd.f32 %v3967, %v4039
        %v4041 = vpop.f32.mrb[0].mxu0
        %v4042 = vadd.f32 %v3969, %v4041
        %v4043 = vpop.f32.mrb[0].mxu0
        %v4044 = vadd.f32 %v3971, %v4043
        %v4045 = vpop.f32.mrb[0].mxu0
        %v4046 = vadd.f32 %v3973, %v4045
        %4047 = vmatprep.mubr.bf16.mxu0 0
        %4048 = vmatmul.mubr.bf16.gmra.mrb[0].mxu0 %v297
        %v4049 = vpop.f32.mrb[0].mxu0
        %v4050 = vadd.f32 %v3977, %v4049
        %v4051 = vpop.f32.mrb[0].mxu0
        %v4052 = vadd.f32 %v3979, %v4051
        %v4053 = vpop.f32.mrb[0].mxu0
        %v4054 = vadd.f32 %v3981, %v4053
        %v4055 = vpop.f32.mrb[0].mxu0
        %v4056 = vadd.f32 %v3983, %v4055
        %4057 = vdwg.mxu0
        %4058 = vmatprep.subr.bf16.mxu0 %v2043
        %4059 = vmatpush1.bf16.msra.mxu0 %v2042
        %4060 = vmatprep.subr.bf16.mxu0 %v2061
        %4061 = vmatpush1.bf16.msra.mxu0 %v2060
        %4062 = vmatprep.subr.bf16.mxu0 %v2079
        %4063 = vmatpush1.bf16.msra.mxu0 %v2078
        %4064 = vmatprep.subr.bf16.mxu0 %v2097
        %4065 = vmatpush1.bf16.msra.mxu0 %v2096
        %4066 = vmatprep.subr.bf16.mxu0 %v2115
        %4067 = vmatpush1.bf16.msra.mxu0 %v2114
        %4068 = vmatprep.subr.bf16.mxu0 %v2133
        %4069 = vmatpush1.bf16.msra.mxu0 %v2132
        %4070 = vmatprep.subr.bf16.mxu0 %v2151
        %4071 = vmatpush1.bf16.msra.mxu0 %v2150
        %4072 = vmatprep.subr.bf16.mxu0 %v2169
        %4073 = vmatpush1.bf16.msra.mxu0 %v2168
        %4074 = vmatprep.subr.bf16.mxu0 %v2187
        %4075 = vmatpush1.bf16.msra.mxu0 %v2186
        %4076 = vmatprep.subr.bf16.mxu0 %v2205
        %4077 = vmatpush1.bf16.msra.mxu0 %v2204
        %4078 = vmatprep.subr.bf16.mxu0 %v2223
        %4079 = vmatpush1.bf16.msra.mxu0 %v2222
        %4080 = vmatprep.subr.bf16.mxu0 %v2241
        %4081 = vmatpush1.bf16.msra.mxu0 %v2240
        %4082 = vmatprep.subr.bf16.mxu0 %v2259
        %4083 = vmatpush1.bf16.msra.mxu0 %v2258
        %4084 = vmatprep.subr.bf16.mxu0 %v2277
        %4085 = vmatpush1.bf16.msra.mxu0 %v2276
        %4086 = vmatprep.subr.bf16.mxu0 %v2295
        %4087 = vmatpush1.bf16.msra.mxu0 %v2294
        %4088 = vmatprep.subr.bf16.mxu0 %v2313
        %4089 = vmatpush1.bf16.msra.mxu0 %v2312
        %4090 = vmatprep.mubr.bf16.mxu0 %v287
        %4091 = vmatmul.mubr.bf16.gmra.mrb[0].mxu0 %v286
        %v4092 = vpop.f32.mrb[0].mxu0
        %v4093 = vadd.f32 0.0, %v4092
        %v4094 = vpop.f32.mrb[0].mxu0
        %v4095 = vadd.f32 0.0, %v4094
        %v4096 = vpop.f32.mrb[0].mxu0
        %v4097 = vadd.f32 0.0, %v4096
        %v4098 = vpop.f32.mrb[0].mxu0
        %v4099 = vadd.f32 0.0, %v4098
        %4100 = vmatprep.mubr.bf16.mxu0 %v290
        %4101 = vmatmul.mubr.bf16.gmra.mrb[0].mxu0 %v289
        %v4102 = vpop.f32.mrb[0].mxu0
        %v4103 = vadd.f32 0.0, %v4102
        %v4104 = vpop.f32.mrb[0].mxu0
        %v4105 = vadd.f32 0.0, %v4104
        %v4106 = vpop.f32.mrb[0].mxu0
        %v4107 = vadd.f32 0.0, %v4106
        %v4108 = vpop.f32.mrb[0].mxu0
        %v4109 = vadd.f32 0.0, %v4108
        %4110 = vmatprep.mubr.bf16.mxu0 %v293
        %4111 = vmatmul.mubr.bf16.gmra.mrb[0].mxu0 %v292
        %v4112 = vpop.f32.mrb[0].mxu0
        %v4113 = vadd.f32 0.0, %v4112
        %v4114 = vpop.f32.mrb[0].mxu0
        %v4115 = vadd.f32 0.0, %v4114
        %v4116 = vpop.f32.mrb[0].mxu0
        %v4117 = vadd.f32 0.0, %v4116
        %v4118 = vpop.f32.mrb[0].mxu0
        %v4119 = vadd.f32 0.0, %v4118
        %4120 = vmatprep.mubr.bf16.mxu0 %v296
        %4121 = vmatmul.mubr.bf16.gmra.mrb[0].mxu0 %v295
        %v4122 = vpop.f32.mrb[0].mxu0
        %v4123 = vadd.f32 0.0, %v4122
        %v4124 = vpop.f32.mrb[0].mxu0
        %v4125 = vadd.f32 0.0, %v4124
        %v4126 = vpop.f32.mrb[0].mxu0
        %v4127 = vadd.f32 0.0, %v4126
        %v4128 = vpop.f32.mrb[0].mxu0
        %v4129 = vadd.f32 0.0, %v4128
        %4130 = vdwg.mxu0
        %4131 = vmatprep.subr.bf16.mxu0 %v2331
        %4132 = vmatpush1.bf16.msra.mxu0 %v2330
        %4133 = vmatprep.subr.bf16.mxu0 %v2349
        %4134 = vmatpush1.bf16.msra.mxu0 %v2348
        %4135 = vmatprep.subr.bf16.mxu0 %v2367
        %4136 = vmatpush1.bf16.msra.mxu0 %v2366
        %4137 = vmatprep.subr.bf16.mxu0 %v2385
        %4138 = vmatpush1.bf16.msra.mxu0 %v2384
        %4139 = vmatprep.subr.bf16.mxu0 %v2403
        %4140 = vmatpush1.bf16.msra.mxu0 %v2402
        %4141 = vmatprep.subr.bf16.mxu0 %v2421
        %4142 = vmatpush1.bf16.msra.mxu0 %v2420
        %4143 = vmatprep.subr.bf16.mxu0 %v2439
        %4144 = vmatpush1.bf16.msra.mxu0 %v2438
        %4145 = vmatprep.subr.bf16.mxu0 %v2457
        %4146 = vmatpush1.bf16.msra.mxu0 %v2456
        %4147 = vmatprep.subr.bf16.mxu0 0
        %4148 = vmatpush1.bf16.msra.mxu0 0
        %4149 = vmatprep.subr.bf16.mxu0 0
        %4150 = vmatpush1.bf16.msra.mxu0 0
        %4151 = vmatprep.subr.bf16.mxu0 0
        %4152 = vmatpush1.bf16.msra.mxu0 0
        %4153 = vmatprep.subr.bf16.mxu0 0
        %4154 = vmatpush1.bf16.msra.mxu0 0
        %4155 = vmatprep.subr.bf16.mxu0 0
        %4156 = vmatpush1.bf16.msra.mxu0 0
        %4157 = vmatprep.subr.bf16.mxu0 0
        %4158 = vmatpush1.bf16.msra.mxu0 0
        %4159 = vmatprep.subr.bf16.mxu0 0
        %4160 = vmatpush1.bf16.msra.mxu0 0
        %4161 = vmatprep.subr.bf16.mxu0 0
        %4162 = vmatpush1.bf16.msra.mxu0 0
        %4163 = vmatprep.mubr.bf16.mxu0 0
        %4164 = vmatmul.mubr.bf16.gmra.mrb[0].mxu0 %v288
        %v4165 = vpop.f32.mrb[0].mxu0
        %v4166 = vadd.f32 %v4093, %v4165
        %v4167 = vpop.f32.mrb[0].mxu0
        %v4168 = vadd.f32 %v4095, %v4167
        %v4169 = vpop.f32.mrb[0].mxu0
        %v4170 = vadd.f32 %v4097, %v4169
        %v4171 = vpop.f32.mrb[0].mxu0
        %v4172 = vadd.f32 %v4099, %v4171
        %4173 = vmatprep.mubr.bf16.mxu0 0
        %4174 = vmatmul.mubr.bf16.gmra.mrb[0].mxu0 %v291
        %v4175 = vpop.f32.mrb[0].mxu0
        %v4176 = vadd.f32 %v4103, %v4175
        %v4177 = vpop.f32.mrb[0].mxu0
        %v4178 = vadd.f32 %v4105, %v4177
        %v4179 = vpop.f32.mrb[0].mxu0
        %v4180 = vadd.f32 %v4107, %v4179
        %v4181 = vpop.f32.mrb[0].mxu0
        %v4182 = vadd.f32 %v4109, %v4181
        %4183 = vmatprep.mubr.bf16.mxu0 0
        %4184 = vmatmul.mubr.bf16.gmra.mrb[0].mxu0 %v294
        %v4185 = vpop.f32.mrb[0].mxu0
        %v4186 = vadd.f32 %v4113, %v4185
        %v4187 = vpop.f32.mrb[0].mxu0
        %v4188 = vadd.f32 %v4115, %v4187
        %v4189 = vpop.f32.mrb[0].mxu0
        %v4190 = vadd.f32 %v4117, %v4189
        %v4191 = vpop.f32.mrb[0].mxu0
        %v4192 = vadd.f32 %v4119, %v4191
        %4193 = vmatprep.mubr.bf16.mxu0 0
        %4194 = vmatmul.mubr.bf16.gmra.mrb[0].mxu0 %v297
        %v4195 = vpop.f32.mrb[0].mxu0
        %v4196 = vadd.f32 %v4123, %v4195
        %v4197 = vpop.f32.mrb[0].mxu0
        %v4198 = vadd.f32 %v4125, %v4197
        %v4199 = vpop.f32.mrb[0].mxu0
        %v4200 = vadd.f32 %v4127, %v4199
        %v4201 = vpop.f32.mrb[0].mxu0
        %v4202 = vadd.f32 %v4129, %v4201
        %4203 = vdwg.mxu0
        %v4204 = vlaneseq
        %v4205 = vshrl.u32 %v4204, 7
        %v4206 = vadd.s32 %v4205, 8
        %v4207 = vlaneseq
        %v4208 = vand.u32 %v4207, 127
        %vm4209 = vcmp.le.s32.totalorder %v4208, %v4205
        %vm4210 = vcmp.le.s32.totalorder %v4208, %v4206
        %v4211 = vpack.c.bf16 %v3002, %v2998
        %v4212 = vpack.c.bf16 %v3012, %v3008
        %v4213 = vpack.c.bf16 %v3022, %v3018
        %v4214 = vpack.c.bf16 %v3032, %v3028
        %v4215 = vpack.c.bf16 %v3440, %v3436
        %v4216 = vpack.c.bf16 %v3450, %v3446
        %v4217 = vpack.c.bf16 %v3460, %v3456
        %v4218 = vpack.c.bf16 %v3470, %v3466
        %v4219 = vpack.c.bf16 %v3878, %v3874
        %v4220 = vpack.c.bf16 %v3888, %v3884
        %v4221 = vpack.c.bf16 %v3898, %v3894
        %v4222 = vpack.c.bf16 %v3908, %v3904
        %4223 = vmatprep.subr.bf16.mxu0 0
        %4224 = vmatpush1.bf16.xpose.msra.mxu0 %v4215
        %4225 = vmatprep.subr.bf16.mxu0 0
        %4226 = vmatpush1.bf16.xpose.msra.mxu0 0
        %4227 = vmatprep.subr.bf16.mxu0 0
        %4228 = vmatpush1.bf16.xpose.msra.mxu0 0
        %4229 = vmatprep.subr.bf16.mxu0 0
        %4230 = vmatpush1.bf16.xpose.msra.mxu0 0
        %4231 = vmatprep.subr.bf16.mxu0 0
        %4232 = vmatpush1.bf16.xpose.msra.mxu0 0
        %4233 = vmatprep.subr.bf16.mxu0 0
        %4234 = vmatpush1.bf16.xpose.msra.mxu0 0
        %4235 = vmatprep.subr.bf16.mxu0 0
        %4236 = vmatpush1.bf16.xpose.msra.mxu0 0
        %4237 = vmatprep.subr.bf16.mxu0 0
        %4238 = vmatpush1.bf16.xpose.msra.mxu0 0
        %4239 = vmatprep.subr.bf16.mxu0 0
        %4240 = vmatpush1.bf16.xpose.msra.mxu0 0
        %4241 = vmatprep.subr.bf16.mxu0 0
        %4242 = vmatpush1.bf16.xpose.msra.mxu0 0
        %4243 = vmatprep.subr.bf16.mxu0 0
        %4244 = vmatpush1.bf16.xpose.msra.mxu0 0
        %4245 = vmatprep.subr.bf16.mxu0 0
        %4246 = vmatpush1.bf16.xpose.msra.mxu0 0
        %4247 = vmatprep.subr.bf16.mxu0 0
        %4248 = vmatpush1.bf16.xpose.msra.mxu0 0
        %4249 = vmatprep.subr.bf16.mxu0 0
        %4250 = vmatpush1.bf16.xpose.msra.mxu0 0
        %4251 = vmatprep.subr.bf16.mxu0 0
        %4252 = vmatpush1.bf16.xpose.msra.mxu0 0
        %4253 = vmatprep.subr.bf16.mxu0 0
        %4254 = vmatpush1.bf16.xpose.msra.mxu0 0
        %4255 = vmatprep.mubr.bf16.mxu0 0
        %4256 = vmatmul.mubr.bf16.gmra.mrb[0].mxu0 %v4211
        %v4257 = vpop.f32.mrb[0].mxu0
        %v4258 = vadd.f32 0.0, %v4257
        %v4259 = vpop.f32.mrb[0].mxu0
        %v4260 = vpop.f32.mrb[0].mxu0
        %v4261 = vadd.f32 0.0, %v4260
        %v4262 = vpop.f32.mrb[0].mxu0
        %4263 = vdwg.mxu0
        %4264 = vmatprep.subr.bf16.mxu0 0
        %4265 = vmatpush1.bf16.xpose.msra.mxu0 %v4216
        %4266 = vmatprep.subr.bf16.mxu0 0
        %4267 = vmatpush1.bf16.xpose.msra.mxu0 0
        %4268 = vmatprep.subr.bf16.mxu0 0
        %4269 = vmatpush1.bf16.xpose.msra.mxu0 0
        %4270 = vmatprep.subr.bf16.mxu0 0
        %4271 = vmatpush1.bf16.xpose.msra.mxu0 0
        %4272 = vmatprep.subr.bf16.mxu0 0
        %4273 = vmatpush1.bf16.xpose.msra.mxu0 0
        %4274 = vmatprep.subr.bf16.mxu0 0
        %4275 = vmatpush1.bf16.xpose.msra.mxu0 0
        %4276 = vmatprep.subr.bf16.mxu0 0
        %4277 = vmatpush1.bf16.xpose.msra.mxu0 0
        %4278 = vmatprep.subr.bf16.mxu0 0
        %4279 = vmatpush1.bf16.xpose.msra.mxu0 0
        %4280 = vmatprep.subr.bf16.mxu0 0
        %4281 = vmatpush1.bf16.xpose.msra.mxu0 0
        %4282 = vmatprep.subr.bf16.mxu0 0
        %4283 = vmatpush1.bf16.xpose.msra.mxu0 0
        %4284 = vmatprep.subr.bf16.mxu0 0
        %4285 = vmatpush1.bf16.xpose.msra.mxu0 0
        %4286 = vmatprep.subr.bf16.mxu0 0
        %4287 = vmatpush1.bf16.xpose.msra.mxu0 0
        %4288 = vmatprep.subr.bf16.mxu0 0
        %4289 = vmatpush1.bf16.xpose.msra.mxu0 0
        %4290 = vmatprep.subr.bf16.mxu0 0
        %4291 = vmatpush1.bf16.xpose.msra.mxu0 0
        %4292 = vmatprep.subr.bf16.mxu0 0
        %4293 = vmatpush1.bf16.xpose.msra.mxu0 0
        %4294 = vmatprep.subr.bf16.mxu0 0
        %4295 = vmatpush1.bf16.xpose.msra.mxu0 0
        %4296 = vmatprep.mubr.bf16.mxu0 0
        %4297 = vmatmul.mubr.bf16.gmra.mrb[0].mxu0 %v4212
        %v4298 = vpop.f32.mrb[0].mxu0
        %v4299 = vadd.f32 0.0, %v4298
        %v4300 = vpop.f32.mrb[0].mxu0
        %v4301 = vpop.f32.mrb[0].mxu0
        %v4302 = vadd.f32 0.0, %v4301
        %v4303 = vpop.f32.mrb[0].mxu0
        %4304 = vdwg.mxu0
        %4305 = vmatprep.subr.bf16.mxu0 0
        %4306 = vmatpush1.bf16.xpose.msra.mxu0 %v4217
        %4307 = vmatprep.subr.bf16.mxu0 0
        %4308 = vmatpush1.bf16.xpose.msra.mxu0 0
        %4309 = vmatprep.subr.bf16.mxu0 0
        %4310 = vmatpush1.bf16.xpose.msra.mxu0 0
        %4311 = vmatprep.subr.bf16.mxu0 0
        %4312 = vmatpush1.bf16.xpose.msra.mxu0 0
        %4313 = vmatprep.subr.bf16.mxu0 0
        %4314 = vmatpush1.bf16.xpose.msra.mxu0 0
        %4315 = vmatprep.subr.bf16.mxu0 0
        %4316 = vmatpush1.bf16.xpose.msra.mxu0 0
        %4317 = vmatprep.subr.bf16.mxu0 0
        %4318 = vmatpush1.bf16.xpose.msra.mxu0 0
        %4319 = vmatprep.subr.bf16.mxu0 0
        %4320 = vmatpush1.bf16.xpose.msra.mxu0 0
        %4321 = vmatprep.subr.bf16.mxu0 0
        %4322 = vmatpush1.bf16.xpose.msra.mxu0 0
        %4323 = vmatprep.subr.bf16.mxu0 0
        %4324 = vmatpush1.bf16.xpose.msra.mxu0 0
        %4325 = vmatprep.subr.bf16.mxu0 0
        %4326 = vmatpush1.bf16.xpose.msra.mxu0 0
        %4327 = vmatprep.subr.bf16.mxu0 0
        %4328 = vmatpush1.bf16.xpose.msra.mxu0 0
        %4329 = vmatprep.subr.bf16.mxu0 0
        %4330 = vmatpush1.bf16.xpose.msra.mxu0 0
        %4331 = vmatprep.subr.bf16.mxu0 0
        %4332 = vmatpush1.bf16.xpose.msra.mxu0 0
        %4333 = vmatprep.subr.bf16.mxu0 0
        %4334 = vmatpush1.bf16.xpose.msra.mxu0 0
        %4335 = vmatprep.subr.bf16.mxu0 0
        %4336 = vmatpush1.bf16.xpose.msra.mxu0 0
        %4337 = vmatprep.mubr.bf16.mxu0 0
        %4338 = vmatmul.mubr.bf16.gmra.mrb[0].mxu0 %v4213
        %v4339 = vpop.f32.mrb[0].mxu0
        %v4340 = vadd.f32 0.0, %v4339
        %v4341 = vpop.f32.mrb[0].mxu0
        %v4342 = vpop.f32.mrb[0].mxu0
        %v4343 = vadd.f32 0.0, %v4342
        %v4344 = vpop.f32.mrb[0].mxu0
        %4345 = vdwg.mxu0
        %4346 = vmatprep.subr.bf16.mxu0 0
        %4347 = vmatpush1.bf16.xpose.msra.mxu0 %v4218
        %4348 = vmatprep.subr.bf16.mxu0 0
        %4349 = vmatpush1.bf16.xpose.msra.mxu0 0
        %4350 = vmatprep.subr.bf16.mxu0 0
        %4351 = vmatpush1.bf16.xpose.msra.mxu0 0
        %4352 = vmatprep.subr.bf16.mxu0 0
        %4353 = vmatpush1.bf16.xpose.msra.mxu0 0
        %4354 = vmatprep.subr.bf16.mxu0 0
        %4355 = vmatpush1.bf16.xpose.msra.mxu0 0
        %4356 = vmatprep.subr.bf16.mxu0 0
        %4357 = vmatpush1.bf16.xpose.msra.mxu0 0
        %4358 = vmatprep.subr.bf16.mxu0 0
        %4359 = vmatpush1.bf16.xpose.msra.mxu0 0
        %4360 = vmatprep.subr.bf16.mxu0 0
        %4361 = vmatpush1.bf16.xpose.msra.mxu0 0
        %4362 = vmatprep.subr.bf16.mxu0 0
        %4363 = vmatpush1.bf16.xpose.msra.mxu0 0
        %4364 = vmatprep.subr.bf16.mxu0 0
        %4365 = vmatpush1.bf16.xpose.msra.mxu0 0
        %4366 = vmatprep.subr.bf16.mxu0 0
        %4367 = vmatpush1.bf16.xpose.msra.mxu0 0
        %4368 = vmatprep.subr.bf16.mxu0 0
        %4369 = vmatpush1.bf16.xpose.msra.mxu0 0
        %4370 = vmatprep.subr.bf16.mxu0 0
        %4371 = vmatpush1.bf16.xpose.msra.mxu0 0
        %4372 = vmatprep.subr.bf16.mxu0 0
        %4373 = vmatpush1.bf16.xpose.msra.mxu0 0
        %4374 = vmatprep.subr.bf16.mxu0 0
        %4375 = vmatpush1.bf16.xpose.msra.mxu0 0
        %4376 = vmatprep.subr.bf16.mxu0 0
        %4377 = vmatpush1.bf16.xpose.msra.mxu0 0
        %4378 = vmatprep.mubr.bf16.mxu0 0
        %4379 = vmatmul.mubr.bf16.gmra.mrb[0].mxu0 %v4214
        %v4380 = vpop.f32.mrb[0].mxu0
        %v4381 = vadd.f32 0.0, %v4380
        %v4382 = vpop.f32.mrb[0].mxu0
        %v4383 = vpop.f32.mrb[0].mxu0
        %v4384 = vadd.f32 0.0, %v4383
        %v4385 = vpop.f32.mrb[0].mxu0
        %4386 = vdwg.mxu0
        %v4387 = vsel %vm4209, 1, 0
        %v4388 = vsel %vm4210, 1, 0
        %vm4389 = vcmp.eq.s32.totalorder %v4387, 1
        %vm4390 = vcmp.eq.s32.totalorder %v4388, 1
        %v4391 = vsel %vm4389, %v4258, -1e+30
        %v4392 = vsel %vm4390, %v4261, -1e+30
        %v4393 = vsel %vm4389, %v4299, -1e+30
        %v4394 = vsel %vm4390, %v4302, -1e+30
        %v4395 = vsel %vm4389, %v4340, -1e+30
        %v4396 = vsel %vm4390, %v4343, -1e+30
        %v4397 = vsel %vm4389, %v4381, -1e+30
        %v4398 = vsel %vm4390, %v4384, -1e+30
        %vm4399 = vcmask 130048
        %v4400 = vsel %vm4399, %v4391, -inf
        %4401 = vmax.xlane.f32.xlu0 %v4400
        %v4402 = vpop.xlane.xlu0 %4401
        %v4403 = vsel %vm4399, %v4392, -inf
        %4404 = vmax.xlane.f32.xlu0 %v4403
        %v4405 = vpop.xlane.xlu0 %4404
        %v4406 = vsel %vm4399, %v4393, -inf
        %4407 = vmax.xlane.f32.xlu0 %v4406
        %v4408 = vpop.xlane.xlu0 %4407
        %v4409 = vsel %vm4399, %v4394, -inf
        %4410 = vmax.xlane.f32.xlu0 %v4409
        %v4411 = vpop.xlane.xlu0 %4410
        %v4412 = vsel %vm4399, %v4395, -inf
        %4413 = vmax.xlane.f32.xlu0 %v4412
        %v4414 = vpop.xlane.xlu0 %4413
        %v4415 = vsel %vm4399, %v4396, -inf
        %4416 = vmax.xlane.f32.xlu0 %v4415
        %v4417 = vpop.xlane.xlu0 %4416
        %v4418 = vsel %vm4399, %v4397, -inf
        %4419 = vmax.xlane.f32.xlu0 %v4418
        %v4420 = vpop.xlane.xlu0 %4419
        %v4421 = vsel %vm4399, %v4398, -inf
        %4422 = vmax.xlane.f32.xlu0 %v4421
        %v4423 = vpop.xlane.xlu0 %4422
        %v4424 = vsub.f32 %v4391, %v4402
        %v4425 = vsub.f32 %v4392, %v4405
        %v4426 = vsub.f32 %v4393, %v4408
        %v4427 = vsub.f32 %v4394, %v4411
        %v4428 = vsub.f32 %v4395, %v4414
        %v4429 = vsub.f32 %v4396, %v4417
        %v4430 = vsub.f32 %v4397, %v4420
        %v4431 = vsub.f32 %v4398, %v4423
        %v4432 = vmul.f32 %v4424, 1.442695
        %v4433 = vpow.pop %v4432
        %v4434 = vmul.f32 %v4425, 1.442695
        %v4435 = vpow.pop %v4434
        %v4436 = vmul.f32 %v4426, 1.442695
        %v4437 = vpow.pop %v4436
        %v4438 = vmul.f32 %v4427, 1.442695
        %v4439 = vpow.pop %v4438
        %v4440 = vmul.f32 %v4428, 1.442695
        %v4441 = vpow.pop %v4440
        %v4442 = vmul.f32 %v4429, 1.442695
        %v4443 = vpow.pop %v4442
        %v4444 = vmul.f32 %v4430, 1.442695
        %v4445 = vpow.pop %v4444
        %v4446 = vmul.f32 %v4431, 1.442695
        %v4447 = vpow.pop %v4446
        %v4448 = vsel %vm4399, %v4433, 0.0
        %4449 = vadd.xlane.f32.xlu0 %v4448
        %v4450 = vpop.xlane.xlu0 %4449
        %v4451 = vsel %vm4399, %v4435, 0.0
        %4452 = vadd.xlane.f32.xlu0 %v4451
        %v4453 = vpop.xlane.xlu0 %4452
        %v4454 = vsel %vm4399, %v4437, 0.0
        %4455 = vadd.xlane.f32.xlu0 %v4454
        %v4456 = vpop.xlane.xlu0 %4455
        %v4457 = vsel %vm4399, %v4439, 0.0
        %4458 = vadd.xlane.f32.xlu0 %v4457
        %v4459 = vpop.xlane.xlu0 %4458
        %v4460 = vsel %vm4399, %v4441, 0.0
        %4461 = vadd.xlane.f32.xlu0 %v4460
        %v4462 = vpop.xlane.xlu0 %4461
        %v4463 = vsel %vm4399, %v4443, 0.0
        %4464 = vadd.xlane.f32.xlu0 %v4463
        %v4465 = vpop.xlane.xlu0 %4464
        %v4466 = vsel %vm4399, %v4445, 0.0
        %4467 = vadd.xlane.f32.xlu0 %v4466
        %v4468 = vpop.xlane.xlu0 %4467
        %v4469 = vsel %vm4399, %v4447, 0.0
        %4470 = vadd.xlane.f32.xlu0 %v4469
        %v4471 = vpop.xlane.xlu0 %4470
        %v4472 = vrcp.pop %v4450
        %v4473 = vrcp.pop %v4453
        %v4474 = vrcp.pop %v4456
        %v4475 = vrcp.pop %v4459
        %v4476 = vrcp.pop %v4462
        %v4477 = vrcp.pop %v4465
        %v4478 = vrcp.pop %v4468
        %v4479 = vrcp.pop %v4471
        %v4480 = vmul.f32 %v4433, %v4472
        %v4481 = vmul.f32 %v4435, %v4473
        %v4482 = vmul.f32 %v4437, %v4474
        %v4483 = vmul.f32 %v4439, %v4475
        %v4484 = vmul.f32 %v4441, %v4476
        %v4485 = vmul.f32 %v4443, %v4477
        %v4486 = vmul.f32 %v4445, %v4478
        %v4487 = vmul.f32 %v4447, %v4479
        %v4488 = vpack.c.bf16 %v4481, %v4480
        %v4489 = vpack.c.bf16 %v4483, %v4482
        %v4490 = vpack.c.bf16 %v4485, %v4484
        %v4491 = vpack.c.bf16 %v4487, %v4486
        %v4493 = vsel %vm4399, %v4488, 0
        %4495 = vmatprep.subr.bf16.mxu0 0
        %4496 = vmatpush1.bf16.msra.mxu0 %v4219
        %4497 = vmatprep.subr.bf16.mxu0 0
        %4498 = vmatpush1.bf16.msra.mxu0 0
        %4499 = vmatprep.subr.bf16.mxu0 0
        %4500 = vmatpush1.bf16.msra.mxu0 0
        %4501 = vmatprep.subr.bf16.mxu0 0
        %4502 = vmatpush1.bf16.msra.mxu0 0
        %4503 = vmatprep.subr.bf16.mxu0 0
        %4504 = vmatpush1.bf16.msra.mxu0 0
        %4505 = vmatprep.subr.bf16.mxu0 0
        %4506 = vmatpush1.bf16.msra.mxu0 0
        %4507 = vmatprep.subr.bf16.mxu0 0
        %4508 = vmatpush1.bf16.msra.mxu0 0
        %4509 = vmatprep.subr.bf16.mxu0 0
        %4510 = vmatpush1.bf16.msra.mxu0 0
        %4511 = vmatprep.subr.bf16.mxu0 0
        %4512 = vmatpush1.bf16.msra.mxu0 0
        %4513 = vmatprep.subr.bf16.mxu0 0
        %4514 = vmatpush1.bf16.msra.mxu0 0
        %4515 = vmatprep.subr.bf16.mxu0 0
        %4516 = vmatpush1.bf16.msra.mxu0 0
        %4517 = vmatprep.subr.bf16.mxu0 0
        %4518 = vmatpush1.bf16.msra.mxu0 0
        %4519 = vmatprep.subr.bf16.mxu0 0
        %4520 = vmatpush1.bf16.msra.mxu0 0
        %4521 = vmatprep.subr.bf16.mxu0 0
        %4522 = vmatpush1.bf16.msra.mxu0 0
        %4523 = vmatprep.subr.bf16.mxu0 0
        %4524 = vmatpush1.bf16.msra.mxu0 0
        %4525 = vmatprep.subr.bf16.mxu0 0
        %4526 = vmatpush1.bf16.msra.mxu0 0
        %4527 = vmatprep.mubr.bf16.mxu0 0
        %4528 = vmatmul.mubr.bf16.gmra.mrb[0].mxu0 %v4493
        %v4529 = vpop.f32.mrb[0].mxu0
        %v4530 = vadd.f32 0.0, %v4529
        %v4531 = vpop.f32.mrb[0].mxu0
        %v4532 = vpop.f32.mrb[0].mxu0
        %v4533 = vadd.f32 0.0, %v4532
        %v4534 = vpop.f32.mrb[0].mxu0
        %4535 = vdwg.mxu0
        %v4537 = vsel %vm4399, %v4489, 0
        %4539 = vmatprep.subr.bf16.mxu0 0
        %4540 = vmatpush1.bf16.msra.mxu0 %v4220
        %4541 = vmatprep.subr.bf16.mxu0 0
        %4542 = vmatpush1.bf16.msra.mxu0 0
        %4543 = vmatprep.subr.bf16.mxu0 0
        %4544 = vmatpush1.bf16.msra.mxu0 0
        %4545 = vmatprep.subr.bf16.mxu0 0
        %4546 = vmatpush1.bf16.msra.mxu0 0
        %4547 = vmatprep.subr.bf16.mxu0 0
        %4548 = vmatpush1.bf16.msra.mxu0 0
        %4549 = vmatprep.subr.bf16.mxu0 0
        %4550 = vmatpush1.bf16.msra.mxu0 0
        %4551 = vmatprep.subr.bf16.mxu0 0
        %4552 = vmatpush1.bf16.msra.mxu0 0
        %4553 = vmatprep.subr.bf16.mxu0 0
        %4554 = vmatpush1.bf16.msra.mxu0 0
        %4555 = vmatprep.subr.bf16.mxu0 0
        %4556 = vmatpush1.bf16.msra.mxu0 0
        %4557 = vmatprep.subr.bf16.mxu0 0
        %4558 = vmatpush1.bf16.msra.mxu0 0
        %4559 = vmatprep.subr.bf16.mxu0 0
        %4560 = vmatpush1.bf16.msra.mxu0 0
        %4561 = vmatprep.subr.bf16.mxu0 0
        %4562 = vmatpush1.bf16.msra.mxu0 0
        %4563 = vmatprep.subr.bf16.mxu0 0
        %4564 = vmatpush1.bf16.msra.mxu0 0
        %4565 = vmatprep.subr.bf16.mxu0 0
        %4566 = vmatpush1.bf16.msra.mxu0 0
        %4567 = vmatprep.subr.bf16.mxu0 0
        %4568 = vmatpush1.bf16.msra.mxu0 0
        %4569 = vmatprep.subr.bf16.mxu0 0
        %4570 = vmatpush1.bf16.msra.mxu0 0
        %4571 = vmatprep.mubr.bf16.mxu0 0
        %4572 = vmatmul.mubr.bf16.gmra.mrb[0].mxu0 %v4537
        %v4573 = vpop.f32.mrb[0].mxu0
        %v4574 = vadd.f32 0.0, %v4573
        %v4575 = vpop.f32.mrb[0].mxu0
        %v4576 = vpop.f32.mrb[0].mxu0
        %v4577 = vadd.f32 0.0, %v4576
        %v4578 = vpop.f32.mrb[0].mxu0
        %4579 = vdwg.mxu0
        %v4581 = vsel %vm4399, %v4490, 0
        %4583 = vmatprep.subr.bf16.mxu0 0
        %4584 = vmatpush1.bf16.msra.mxu0 %v4221
        %4585 = vmatprep.subr.bf16.mxu0 0
        %4586 = vmatpush1.bf16.msra.mxu0 0
        %4587 = vmatprep.subr.bf16.mxu0 0
        %4588 = vmatpush1.bf16.msra.mxu0 0
        %4589 = vmatprep.subr.bf16.mxu0 0
        %4590 = vmatpush1.bf16.msra.mxu0 0
        %4591 = vmatprep.subr.bf16.mxu0 0
        %4592 = vmatpush1.bf16.msra.mxu0 0
        %4593 = vmatprep.subr.bf16.mxu0 0
        %4594 = vmatpush1.bf16.msra.mxu0 0
        %4595 = vmatprep.subr.bf16.mxu0 0
        %4596 = vmatpush1.bf16.msra.mxu0 0
        %4597 = vmatprep.subr.bf16.mxu0 0
        %4598 = vmatpush1.bf16.msra.mxu0 0
        %4599 = vmatprep.subr.bf16.mxu0 0
        %4600 = vmatpush1.bf16.msra.mxu0 0
        %4601 = vmatprep.subr.bf16.mxu0 0
        %4602 = vmatpush1.bf16.msra.mxu0 0
        %4603 = vmatprep.subr.bf16.mxu0 0
        %4604 = vmatpush1.bf16.msra.mxu0 0
        %4605 = vmatprep.subr.bf16.mxu0 0
        %4606 = vmatpush1.bf16.msra.mxu0 0
        %4607 = vmatprep.subr.bf16.mxu0 0
        %4608 = vmatpush1.bf16.msra.mxu0 0
        %4609 = vmatprep.subr.bf16.mxu0 0
        %4610 = vmatpush1.bf16.msra.mxu0 0
        %4611 = vmatprep.subr.bf16.mxu0 0
        %4612 = vmatpush1.bf16.msra.mxu0 0
        %4613 = vmatprep.subr.bf16.mxu0 0
        %4614 = vmatpush1.bf16.msra.mxu0 0
        %4615 = vmatprep.mubr.bf16.mxu0 0
        %4616 = vmatmul.mubr.bf16.gmra.mrb[0].mxu0 %v4581
        %v4617 = vpop.f32.mrb[0].mxu0
        %v4618 = vadd.f32 0.0, %v4617
        %v4619 = vpop.f32.mrb[0].mxu0
        %v4620 = vpop.f32.mrb[0].mxu0
        %v4621 = vadd.f32 0.0, %v4620
        %v4622 = vpop.f32.mrb[0].mxu0
        %4623 = vdwg.mxu0
        %v4625 = vsel %vm4399, %v4491, 0
        %4627 = vmatprep.subr.bf16.mxu0 0
        %4628 = vmatpush1.bf16.msra.mxu0 %v4222
        %4629 = vmatprep.subr.bf16.mxu0 0
        %4630 = vmatpush1.bf16.msra.mxu0 0
        %4631 = vmatprep.subr.bf16.mxu0 0
        %4632 = vmatpush1.bf16.msra.mxu0 0
        %4633 = vmatprep.subr.bf16.mxu0 0
        %4634 = vmatpush1.bf16.msra.mxu0 0
        %4635 = vmatprep.subr.bf16.mxu0 0
        %4636 = vmatpush1.bf16.msra.mxu0 0
        %4637 = vmatprep.subr.bf16.mxu0 0
        %4638 = vmatpush1.bf16.msra.mxu0 0
        %4639 = vmatprep.subr.bf16.mxu0 0
        %4640 = vmatpush1.bf16.msra.mxu0 0
        %4641 = vmatprep.subr.bf16.mxu0 0
        %4642 = vmatpush1.bf16.msra.mxu0 0
        %4643 = vmatprep.subr.bf16.mxu0 0
        %4644 = vmatpush1.bf16.msra.mxu0 0
        %4645 = vmatprep.subr.bf16.mxu0 0
        %4646 = vmatpush1.bf16.msra.mxu0 0
        %4647 = vmatprep.subr.bf16.mxu0 0
        %4648 = vmatpush1.bf16.msra.mxu0 0
        %4649 = vmatprep.subr.bf16.mxu0 0
        %4650 = vmatpush1.bf16.msra.mxu0 0
        %4651 = vmatprep.subr.bf16.mxu0 0
        %4652 = vmatpush1.bf16.msra.mxu0 0
        %4653 = vmatprep.subr.bf16.mxu0 0
        %4654 = vmatpush1.bf16.msra.mxu0 0
        %4655 = vmatprep.subr.bf16.mxu0 0
        %4656 = vmatpush1.bf16.msra.mxu0 0
        %4657 = vmatprep.subr.bf16.mxu0 0
        %4658 = vmatpush1.bf16.msra.mxu0 0
        %4659 = vmatprep.mubr.bf16.mxu0 0
        %4660 = vmatmul.mubr.bf16.gmra.mrb[0].mxu0 %v4625
        %v4661 = vpop.f32.mrb[0].mxu0
        %v4662 = vadd.f32 0.0, %v4661
        %v4663 = vpop.f32.mrb[0].mxu0
        %v4664 = vpop.f32.mrb[0].mxu0
        %v4665 = vadd.f32 0.0, %v4664
        %v4666 = vpop.f32.mrb[0].mxu0
        %4667 = vdwg.mxu0
        %v4668 = vpack.c.bf16 %v4533, %v4530
        %v4669 = vpack.c.bf16 %v4577, %v4574
        %v4670 = vpack.c.bf16 %v4621, %v4618
        %v4671 = vpack.c.bf16 %v4665, %v4662
        %v4672 = vpack.c.bf16 %v3004, %v3000
        %v4673 = vpack.c.bf16 %v3014, %v3010
        %v4674 = vpack.c.bf16 %v3024, %v3020
        %v4675 = vpack.c.bf16 %v3034, %v3030
        %v4676 = vpack.c.bf16 %v3442, %v3438
        %v4677 = vpack.c.bf16 %v3452, %v3448
        %v4678 = vpack.c.bf16 %v3462, %v3458
        %v4679 = vpack.c.bf16 %v3472, %v3468
        %v4680 = vpack.c.bf16 %v3880, %v3876
        %v4681 = vpack.c.bf16 %v3890, %v3886
        %v4682 = vpack.c.bf16 %v3900, %v3896
        %v4683 = vpack.c.bf16 %v3910, %v3906
        %4684 = vmatprep.subr.bf16.mxu0 0
        %4685 = vmatpush1.bf16.xpose.msra.mxu0 %v4676
        %4686 = vmatprep.subr.bf16.mxu0 0
        %4687 = vmatpush1.bf16.xpose.msra.mxu0 0
        %4688 = vmatprep.subr.bf16.mxu0 0
        %4689 = vmatpush1.bf16.xpose.msra.mxu0 0
        %4690 = vmatprep.subr.bf16.mxu0 0
        %4691 = vmatpush1.bf16.xpose.msra.mxu0 0
        %4692 = vmatprep.subr.bf16.mxu0 0
        %4693 = vmatpush1.bf16.xpose.msra.mxu0 0
        %4694 = vmatprep.subr.bf16.mxu0 0
        %4695 = vmatpush1.bf16.xpose.msra.mxu0 0
        %4696 = vmatprep.subr.bf16.mxu0 0
        %4697 = vmatpush1.bf16.xpose.msra.mxu0 0
        %4698 = vmatprep.subr.bf16.mxu0 0
        %4699 = vmatpush1.bf16.xpose.msra.mxu0 0
        %4700 = vmatprep.subr.bf16.mxu0 0
        %4701 = vmatpush1.bf16.xpose.msra.mxu0 0
        %4702 = vmatprep.subr.bf16.mxu0 0
        %4703 = vmatpush1.bf16.xpose.msra.mxu0 0
        %4704 = vmatprep.subr.bf16.mxu0 0
        %4705 = vmatpush1.bf16.xpose.msra.mxu0 0
        %4706 = vmatprep.subr.bf16.mxu0 0
        %4707 = vmatpush1.bf16.xpose.msra.mxu0 0
        %4708 = vmatprep.subr.bf16.mxu0 0
        %4709 = vmatpush1.bf16.xpose.msra.mxu0 0
        %4710 = vmatprep.subr.bf16.mxu0 0
        %4711 = vmatpush1.bf16.xpose.msra.mxu0 0
        %4712 = vmatprep.subr.bf16.mxu0 0
        %4713 = vmatpush1.bf16.xpose.msra.mxu0 0
        %4714 = vmatprep.subr.bf16.mxu0 0
        %4715 = vmatpush1.bf16.xpose.msra.mxu0 0
        %4716 = vmatprep.mubr.bf16.mxu0 0
        %4717 = vmatmul.mubr.bf16.gmra.mrb[0].mxu0 %v4672
        %v4718 = vpop.f32.mrb[0].mxu0
        %v4719 = vadd.f32 0.0, %v4718
        %v4720 = vpop.f32.mrb[0].mxu0
        %v4721 = vpop.f32.mrb[0].mxu0
        %v4722 = vadd.f32 0.0, %v4721
        %v4723 = vpop.f32.mrb[0].mxu0
        %4724 = vdwg.mxu0
        %4725 = vmatprep.subr.bf16.mxu0 0
        %4726 = vmatpush1.bf16.xpose.msra.mxu0 %v4677
        %4727 = vmatprep.subr.bf16.mxu0 0
        %4728 = vmatpush1.bf16.xpose.msra.mxu0 0
        %4729 = vmatprep.subr.bf16.mxu0 0
        %4730 = vmatpush1.bf16.xpose.msra.mxu0 0
        %4731 = vmatprep.subr.bf16.mxu0 0
        %4732 = vmatpush1.bf16.xpose.msra.mxu0 0
        %4733 = vmatprep.subr.bf16.mxu0 0
        %4734 = vmatpush1.bf16.xpose.msra.mxu0 0
        %4735 = vmatprep.subr.bf16.mxu0 0
        %4736 = vmatpush1.bf16.xpose.msra.mxu0 0
        %4737 = vmatprep.subr.bf16.mxu0 0
        %4738 = vmatpush1.bf16.xpose.msra.mxu0 0
        %4739 = vmatprep.subr.bf16.mxu0 0
        %4740 = vmatpush1.bf16.xpose.msra.mxu0 0
        %4741 = vmatprep.subr.bf16.mxu0 0
        %4742 = vmatpush1.bf16.xpose.msra.mxu0 0
        %4743 = vmatprep.subr.bf16.mxu0 0
        %4744 = vmatpush1.bf16.xpose.msra.mxu0 0
        %4745 = vmatprep.subr.bf16.mxu0 0
        %4746 = vmatpush1.bf16.xpose.msra.mxu0 0
        %4747 = vmatprep.subr.bf16.mxu0 0
        %4748 = vmatpush1.bf16.xpose.msra.mxu0 0
        %4749 = vmatprep.subr.bf16.mxu0 0
        %4750 = vmatpush1.bf16.xpose.msra.mxu0 0
        %4751 = vmatprep.subr.bf16.mxu0 0
        %4752 = vmatpush1.bf16.xpose.msra.mxu0 0
        %4753 = vmatprep.subr.bf16.mxu0 0
        %4754 = vmatpush1.bf16.xpose.msra.mxu0 0
        %4755 = vmatprep.subr.bf16.mxu0 0
        %4756 = vmatpush1.bf16.xpose.msra.mxu0 0
        %4757 = vmatprep.mubr.bf16.mxu0 0
        %4758 = vmatmul.mubr.bf16.gmra.mrb[0].mxu0 %v4673
        %v4759 = vpop.f32.mrb[0].mxu0
        %v4760 = vadd.f32 0.0, %v4759
        %v4761 = vpop.f32.mrb[0].mxu0
        %v4762 = vpop.f32.mrb[0].mxu0
        %v4763 = vadd.f32 0.0, %v4762
        %v4764 = vpop.f32.mrb[0].mxu0
        %4765 = vdwg.mxu0
        %4766 = vmatprep.subr.bf16.mxu0 0
        %4767 = vmatpush1.bf16.xpose.msra.mxu0 %v4678
        %4768 = vmatprep.subr.bf16.mxu0 0
        %4769 = vmatpush1.bf16.xpose.msra.mxu0 0
        %4770 = vmatprep.subr.bf16.mxu0 0
        %4771 = vmatpush1.bf16.xpose.msra.mxu0 0
        %4772 = vmatprep.subr.bf16.mxu0 0
        %4773 = vmatpush1.bf16.xpose.msra.mxu0 0
        %4774 = vmatprep.subr.bf16.mxu0 0
        %4775 = vmatpush1.bf16.xpose.msra.mxu0 0
        %4776 = vmatprep.subr.bf16.mxu0 0
        %4777 = vmatpush1.bf16.xpose.msra.mxu0 0
        %4778 = vmatprep.subr.bf16.mxu0 0
        %4779 = vmatpush1.bf16.xpose.msra.mxu0 0
        %4780 = vmatprep.subr.bf16.mxu0 0
        %4781 = vmatpush1.bf16.xpose.msra.mxu0 0
        %4782 = vmatprep.subr.bf16.mxu0 0
        %4783 = vmatpush1.bf16.xpose.msra.mxu0 0
        %4784 = vmatprep.subr.bf16.mxu0 0
        %4785 = vmatpush1.bf16.xpose.msra.mxu0 0
        %4786 = vmatprep.subr.bf16.mxu0 0
        %4787 = vmatpush1.bf16.xpose.msra.mxu0 0
        %4788 = vmatprep.subr.bf16.mxu0 0
        %4789 = vmatpush1.bf16.xpose.msra.mxu0 0
        %4790 = vmatprep.subr.bf16.mxu0 0
        %4791 = vmatpush1.bf16.xpose.msra.mxu0 0
        %4792 = vmatprep.subr.bf16.mxu0 0
        %4793 = vmatpush1.bf16.xpose.msra.mxu0 0
        %4794 = vmatprep.subr.bf16.mxu0 0
        %4795 = vmatpush1.bf16.xpose.msra.mxu0 0
        %4796 = vmatprep.subr.bf16.mxu0 0
        %4797 = vmatpush1.bf16.xpose.msra.mxu0 0
        %4798 = vmatprep.mubr.bf16.mxu0 0
        %4799 = vmatmul.mubr.bf16.gmra.mrb[0].mxu0 %v4674
        %v4800 = vpop.f32.mrb[0].mxu0
        %v4801 = vadd.f32 0.0, %v4800
        %v4802 = vpop.f32.mrb[0].mxu0
        %v4803 = vpop.f32.mrb[0].mxu0
        %v4804 = vadd.f32 0.0, %v4803
        %v4805 = vpop.f32.mrb[0].mxu0
        %4806 = vdwg.mxu0
        %4807 = vmatprep.subr.bf16.mxu0 0
        %4808 = vmatpush1.bf16.xpose.msra.mxu0 %v4679
        %4809 = vmatprep.subr.bf16.mxu0 0
        %4810 = vmatpush1.bf16.xpose.msra.mxu0 0
        %4811 = vmatprep.subr.bf16.mxu0 0
        %4812 = vmatpush1.bf16.xpose.msra.mxu0 0
        %4813 = vmatprep.subr.bf16.mxu0 0
        %4814 = vmatpush1.bf16.xpose.msra.mxu0 0
        %4815 = vmatprep.subr.bf16.mxu0 0
        %4816 = vmatpush1.bf16.xpose.msra.mxu0 0
        %4817 = vmatprep.subr.bf16.mxu0 0
        %4818 = vmatpush1.bf16.xpose.msra.mxu0 0
        %4819 = vmatprep.subr.bf16.mxu0 0
        %4820 = vmatpush1.bf16.xpose.msra.mxu0 0
        %4821 = vmatprep.subr.bf16.mxu0 0
        %4822 = vmatpush1.bf16.xpose.msra.mxu0 0
        %4823 = vmatprep.subr.bf16.mxu0 0
        %4824 = vmatpush1.bf16.xpose.msra.mxu0 0
        %4825 = vmatprep.subr.bf16.mxu0 0
        %4826 = vmatpush1.bf16.xpose.msra.mxu0 0
        %4827 = vmatprep.subr.bf16.mxu0 0
        %4828 = vmatpush1.bf16.xpose.msra.mxu0 0
        %4829 = vmatprep.subr.bf16.mxu0 0
        %4830 = vmatpush1.bf16.xpose.msra.mxu0 0
        %4831 = vmatprep.subr.bf16.mxu0 0
        %4832 = vmatpush1.bf16.xpose.msra.mxu0 0
        %4833 = vmatprep.subr.bf16.mxu0 0
        %4834 = vmatpush1.bf16.xpose.msra.mxu0 0
        %4835 = vmatprep.subr.bf16.mxu0 0
        %4836 = vmatpush1.bf16.xpose.msra.mxu0 0
        %4837 = vmatprep.subr.bf16.mxu0 0
        %4838 = vmatpush1.bf16.xpose.msra.mxu0 0
        %4839 = vmatprep.mubr.bf16.mxu0 0
        %4840 = vmatmul.mubr.bf16.gmra.mrb[0].mxu0 %v4675
        %v4841 = vpop.f32.mrb[0].mxu0
        %v4842 = vadd.f32 0.0, %v4841
        %v4843 = vpop.f32.mrb[0].mxu0
        %v4844 = vpop.f32.mrb[0].mxu0
        %v4845 = vadd.f32 0.0, %v4844
        %v4846 = vpop.f32.mrb[0].mxu0
        %4847 = vdwg.mxu0
        %v4848 = vsel %vm4389, %v4719, -1e+30
        %v4849 = vsel %vm4390, %v4722, -1e+30
        %v4850 = vsel %vm4389, %v4760, -1e+30
        %v4851 = vsel %vm4390, %v4763, -1e+30
        %v4852 = vsel %vm4389, %v4801, -1e+30
        %v4853 = vsel %vm4390, %v4804, -1e+30
        %v4854 = vsel %vm4389, %v4842, -1e+30
        %v4855 = vsel %vm4390, %v4845, -1e+30
        %v4856 = vsel %vm4399, %v4848, -inf
        %4857 = vmax.xlane.f32.xlu0 %v4856
        %v4858 = vpop.xlane.xlu0 %4857
        %v4859 = vsel %vm4399, %v4849, -inf
        %4860 = vmax.xlane.f32.xlu0 %v4859
        %v4861 = vpop.xlane.xlu0 %4860
        %v4862 = vsel %vm4399, %v4850, -inf
        %4863 = vmax.xlane.f32.xlu0 %v4862
        %v4864 = vpop.xlane.xlu0 %4863
        %v4865 = vsel %vm4399, %v4851, -inf
        %4866 = vmax.xlane.f32.xlu0 %v4865
        %v4867 = vpop.xlane.xlu0 %4866
        %v4868 = vsel %vm4399, %v4852, -inf
        %4869 = vmax.xlane.f32.xlu0 %v4868
        %v4870 = vpop.xlane.xlu0 %4869
        %v4871 = vsel %vm4399, %v4853, -inf
        %4872 = vmax.xlane.f32.xlu0 %v4871
        %v4873 = vpop.xlane.xlu0 %4872
        %v4874 = vsel %vm4399, %v4854, -inf
        %4875 = vmax.xlane.f32.xlu0 %v4874
        %v4876 = vpop.xlane.xlu0 %4875
        %v4877 = vsel %vm4399, %v4855, -inf
        %4878 = vmax.xlane.f32.xlu0 %v4877
        %v4879 = vpop.xlane.xlu0 %4878
        %v4880 = vsub.f32 %v4848, %v4858
        %v4881 = vsub.f32 %v4849, %v4861
        %v4882 = vsub.f32 %v4850, %v4864
        %v4883 = vsub.f32 %v4851, %v4867
        %v4884 = vsub.f32 %v4852, %v4870
        %v4885 = vsub.f32 %v4853, %v4873
        %v4886 = vsub.f32 %v4854, %v4876
        %v4887 = vsub.f32 %v4855, %v4879
        %v4888 = vmul.f32 %v4880, 1.442695
        %v4889 = vpow.pop %v4888
        %v4890 = vmul.f32 %v4881, 1.442695
        %v4891 = vpow.pop %v4890
        %v4892 = vmul.f32 %v4882, 1.442695
        %v4893 = vpow.pop %v4892
        %v4894 = vmul.f32 %v4883, 1.442695
        %v4895 = vpow.pop %v4894
        %v4896 = vmul.f32 %v4884, 1.442695
        %v4897 = vpow.pop %v4896
        %v4898 = vmul.f32 %v4885, 1.442695
        %v4899 = vpow.pop %v4898
        %v4900 = vmul.f32 %v4886, 1.442695
        %v4901 = vpow.pop %v4900
        %v4902 = vmul.f32 %v4887, 1.442695
        %v4903 = vpow.pop %v4902
        %v4904 = vsel %vm4399, %v4889, 0.0
        %4905 = vadd.xlane.f32.xlu0 %v4904
        %v4906 = vpop.xlane.xlu0 %4905
        %v4907 = vsel %vm4399, %v4891, 0.0
        %4908 = vadd.xlane.f32.xlu0 %v4907
        %v4909 = vpop.xlane.xlu0 %4908
        %v4910 = vsel %vm4399, %v4893, 0.0
        %4911 = vadd.xlane.f32.xlu0 %v4910
        %v4912 = vpop.xlane.xlu0 %4911
        %v4913 = vsel %vm4399, %v4895, 0.0
        %4914 = vadd.xlane.f32.xlu0 %v4913
        %v4915 = vpop.xlane.xlu0 %4914
        %v4916 = vsel %vm4399, %v4897, 0.0
        %4917 = vadd.xlane.f32.xlu0 %v4916
        %v4918 = vpop.xlane.xlu0 %4917
        %v4919 = vsel %vm4399, %v4899, 0.0
        %4920 = vadd.xlane.f32.xlu0 %v4919
        %v4921 = vpop.xlane.xlu0 %4920
        %v4922 = vsel %vm4399, %v4901, 0.0
        %4923 = vadd.xlane.f32.xlu0 %v4922
        %v4924 = vpop.xlane.xlu0 %4923
        %v4925 = vsel %vm4399, %v4903, 0.0
        %4926 = vadd.xlane.f32.xlu0 %v4925
        %v4927 = vpop.xlane.xlu0 %4926
        %v4928 = vrcp.pop %v4906
        %v4929 = vrcp.pop %v4909
        %v4930 = vrcp.pop %v4912
        %v4931 = vrcp.pop %v4915
        %v4932 = vrcp.pop %v4918
        %v4933 = vrcp.pop %v4921
        %v4934 = vrcp.pop %v4924
        %v4935 = vrcp.pop %v4927
        %v4936 = vmul.f32 %v4889, %v4928
        %v4937 = vmul.f32 %v4891, %v4929
        %v4938 = vmul.f32 %v4893, %v4930
        %v4939 = vmul.f32 %v4895, %v4931
        %v4940 = vmul.f32 %v4897, %v4932
        %v4941 = vmul.f32 %v4899, %v4933
        %v4942 = vmul.f32 %v4901, %v4934
        %v4943 = vmul.f32 %v4903, %v4935
        %v4944 = vpack.c.bf16 %v4937, %v4936
        %v4945 = vpack.c.bf16 %v4939, %v4938
        %v4946 = vpack.c.bf16 %v4941, %v4940
        %v4947 = vpack.c.bf16 %v4943, %v4942
        %v4949 = vsel %vm4399, %v4944, 0
        %4951 = vmatprep.subr.bf16.mxu0 0
        %4952 = vmatpush1.bf16.msra.mxu0 %v4680
        %4953 = vmatprep.subr.bf16.mxu0 0
        %4954 = vmatpush1.bf16.msra.mxu0 0
        %4955 = vmatprep.subr.bf16.mxu0 0
        %4956 = vmatpush1.bf16.msra.mxu0 0
        %4957 = vmatprep.subr.bf16.mxu0 0
        %4958 = vmatpush1.bf16.msra.mxu0 0
        %4959 = vmatprep.subr.bf16.mxu0 0
        %4960 = vmatpush1.bf16.msra.mxu0 0
        %4961 = vmatprep.subr.bf16.mxu0 0
        %4962 = vmatpush1.bf16.msra.mxu0 0
        %4963 = vmatprep.subr.bf16.mxu0 0
        %4964 = vmatpush1.bf16.msra.mxu0 0
        %4965 = vmatprep.subr.bf16.mxu0 0
        %4966 = vmatpush1.bf16.msra.mxu0 0
        %4967 = vmatprep.subr.bf16.mxu0 0
        %4968 = vmatpush1.bf16.msra.mxu0 0
        %4969 = vmatprep.subr.bf16.mxu0 0
        %4970 = vmatpush1.bf16.msra.mxu0 0
        %4971 = vmatprep.subr.bf16.mxu0 0
        %4972 = vmatpush1.bf16.msra.mxu0 0
        %4973 = vmatprep.subr.bf16.mxu0 0
        %4974 = vmatpush1.bf16.msra.mxu0 0
        %4975 = vmatprep.subr.bf16.mxu0 0
        %4976 = vmatpush1.bf16.msra.mxu0 0
        %4977 = vmatprep.subr.bf16.mxu0 0
        %4978 = vmatpush1.bf16.msra.mxu0 0
        %4979 = vmatprep.subr.bf16.mxu0 0
        %4980 = vmatpush1.bf16.msra.mxu0 0
        %4981 = vmatprep.subr.bf16.mxu0 0
        %4982 = vmatpush1.bf16.msra.mxu0 0
        %4983 = vmatprep.mubr.bf16.mxu0 0
        %4984 = vmatmul.mubr.bf16.gmra.mrb[0].mxu0 %v4949
        %v4985 = vpop.f32.mrb[0].mxu0
        %v4986 = vadd.f32 0.0, %v4985
        %v4987 = vpop.f32.mrb[0].mxu0
        %v4988 = vpop.f32.mrb[0].mxu0
        %v4989 = vadd.f32 0.0, %v4988
        %v4990 = vpop.f32.mrb[0].mxu0
        %4991 = vdwg.mxu0
        %v4993 = vsel %vm4399, %v4945, 0
        %4995 = vmatprep.subr.bf16.mxu0 0
        %4996 = vmatpush1.bf16.msra.mxu0 %v4681
        %4997 = vmatprep.subr.bf16.mxu0 0
        %4998 = vmatpush1.bf16.msra.mxu0 0
        %4999 = vmatprep.subr.bf16.mxu0 0
        %5000 = vmatpush1.bf16.msra.mxu0 0
        %5001 = vmatprep.subr.bf16.mxu0 0
        %5002 = vmatpush1.bf16.msra.mxu0 0
        %5003 = vmatprep.subr.bf16.mxu0 0
        %5004 = vmatpush1.bf16.msra.mxu0 0
        %5005 = vmatprep.subr.bf16.mxu0 0
        %5006 = vmatpush1.bf16.msra.mxu0 0
        %5007 = vmatprep.subr.bf16.mxu0 0
        %5008 = vmatpush1.bf16.msra.mxu0 0
        %5009 = vmatprep.subr.bf16.mxu0 0
        %5010 = vmatpush1.bf16.msra.mxu0 0
        %5011 = vmatprep.subr.bf16.mxu0 0
        %5012 = vmatpush1.bf16.msra.mxu0 0
        %5013 = vmatprep.subr.bf16.mxu0 0
        %5014 = vmatpush1.bf16.msra.mxu0 0
        %5015 = vmatprep.subr.bf16.mxu0 0
        %5016 = vmatpush1.bf16.msra.mxu0 0
        %5017 = vmatprep.subr.bf16.mxu0 0
        %5018 = vmatpush1.bf16.msra.mxu0 0
        %5019 = vmatprep.subr.bf16.mxu0 0
        %5020 = vmatpush1.bf16.msra.mxu0 0
        %5021 = vmatprep.subr.bf16.mxu0 0
        %5022 = vmatpush1.bf16.msra.mxu0 0
        %5023 = vmatprep.subr.bf16.mxu0 0
        %5024 = vmatpush1.bf16.msra.mxu0 0
        %5025 = vmatprep.subr.bf16.mxu0 0
        %5026 = vmatpush1.bf16.msra.mxu0 0
        %5027 = vmatprep.mubr.bf16.mxu0 0
        %5028 = vmatmul.mubr.bf16.gmra.mrb[0].mxu0 %v4993
        %v5029 = vpop.f32.mrb[0].mxu0
        %v5030 = vadd.f32 0.0, %v5029
        %v5031 = vpop.f32.mrb[0].mxu0
        %v5032 = vpop.f32.mrb[0].mxu0
        %v5033 = vadd.f32 0.0, %v5032
        %v5034 = vpop.f32.mrb[0].mxu0
        %5035 = vdwg.mxu0
        %v5037 = vsel %vm4399, %v4946, 0
        %5039 = vmatprep.subr.bf16.mxu0 0
        %5040 = vmatpush1.bf16.msra.mxu0 %v4682
        %5041 = vmatprep.subr.bf16.mxu0 0
        %5042 = vmatpush1.bf16.msra.mxu0 0
        %5043 = vmatprep.subr.bf16.mxu0 0
        %5044 = vmatpush1.bf16.msra.mxu0 0
        %5045 = vmatprep.subr.bf16.mxu0 0
        %5046 = vmatpush1.bf16.msra.mxu0 0
        %5047 = vmatprep.subr.bf16.mxu0 0
        %5048 = vmatpush1.bf16.msra.mxu0 0
        %5049 = vmatprep.subr.bf16.mxu0 0
        %5050 = vmatpush1.bf16.msra.mxu0 0
        %5051 = vmatprep.subr.bf16.mxu0 0
        %5052 = vmatpush1.bf16.msra.mxu0 0
        %5053 = vmatprep.subr.bf16.mxu0 0
        %5054 = vmatpush1.bf16.msra.mxu0 0
        %5055 = vmatprep.subr.bf16.mxu0 0
        %5056 = vmatpush1.bf16.msra.mxu0 0
        %5057 = vmatprep.subr.bf16.mxu0 0
        %5058 = vmatpush1.bf16.msra.mxu0 0
        %5059 = vmatprep.subr.bf16.mxu0 0
        %5060 = vmatpush1.bf16.msra.mxu0 0
        %5061 = vmatprep.subr.bf16.mxu0 0
        %5062 = vmatpush1.bf16.msra.mxu0 0
        %5063 = vmatprep.subr.bf16.mxu0 0
        %5064 = vmatpush1.bf16.msra.mxu0 0
        %5065 = vmatprep.subr.bf16.mxu0 0
        %5066 = vmatpush1.bf16.msra.mxu0 0
        %5067 = vmatprep.subr.bf16.mxu0 0
        %5068 = vmatpush1.bf16.msra.mxu0 0
        %5069 = vmatprep.subr.bf16.mxu0 0
        %5070 = vmatpush1.bf16.msra.mxu0 0
        %5071 = vmatprep.mubr.bf16.mxu0 0
        %5072 = vmatmul.mubr.bf16.gmra.mrb[0].mxu0 %v5037
        %v5073 = vpop.f32.mrb[0].mxu0
        %v5074 = vadd.f32 0.0, %v5073
        %v5075 = vpop.f32.mrb[0].mxu0
        %v5076 = vpop.f32.mrb[0].mxu0
        %v5077 = vadd.f32 0.0, %v5076
        %v5078 = vpop.f32.mrb[0].mxu0
        %5079 = vdwg.mxu0
        %v5081 = vsel %vm4399, %v4947, 0
        %5083 = vmatprep.subr.bf16.mxu0 0
        %5084 = vmatpush1.bf16.msra.mxu0 %v4683
        %5085 = vmatprep.subr.bf16.mxu0 0
        %5086 = vmatpush1.bf16.msra.mxu0 0
        %5087 = vmatprep.subr.bf16.mxu0 0
        %5088 = vmatpush1.bf16.msra.mxu0 0
        %5089 = vmatprep.subr.bf16.mxu0 0
        %5090 = vmatpush1.bf16.msra.mxu0 0
        %5091 = vmatprep.subr.bf16.mxu0 0
        %5092 = vmatpush1.bf16.msra.mxu0 0
        %5093 = vmatprep.subr.bf16.mxu0 0
        %5094 = vmatpush1.bf16.msra.mxu0 0
        %5095 = vmatprep.subr.bf16.mxu0 0
        %5096 = vmatpush1.bf16.msra.mxu0 0
        %5097 = vmatprep.subr.bf16.mxu0 0
        %5098 = vmatpush1.bf16.msra.mxu0 0
        %5099 = vmatprep.subr.bf16.mxu0 0
        %5100 = vmatpush1.bf16.msra.mxu0 0
        %5101 = vmatprep.subr.bf16.mxu0 0
        %5102 = vmatpush1.bf16.msra.mxu0 0
        %5103 = vmatprep.subr.bf16.mxu0 0
        %5104 = vmatpush1.bf16.msra.mxu0 0
        %5105 = vmatprep.subr.bf16.mxu0 0
        %5106 = vmatpush1.bf16.msra.mxu0 0
        %5107 = vmatprep.subr.bf16.mxu0 0
        %5108 = vmatpush1.bf16.msra.mxu0 0
        %5109 = vmatprep.subr.bf16.mxu0 0
        %5110 = vmatpush1.bf16.msra.mxu0 0
        %5111 = vmatprep.subr.bf16.mxu0 0
        %5112 = vmatpush1.bf16.msra.mxu0 0
        %5113 = vmatprep.subr.bf16.mxu0 0
        %5114 = vmatpush1.bf16.msra.mxu0 0
        %5115 = vmatprep.mubr.bf16.mxu0 0
        %5116 = vmatmul.mubr.bf16.gmra.mrb[0].mxu0 %v5081
        %v5117 = vpop.f32.mrb[0].mxu0
        %v5118 = vadd.f32 0.0, %v5117
        %v5119 = vpop.f32.mrb[0].mxu0
        %v5120 = vpop.f32.mrb[0].mxu0
        %v5121 = vadd.f32 0.0, %v5120
        %v5122 = vpop.f32.mrb[0].mxu0
        %5123 = vdwg.mxu0
        %v5124 = vpack.c.bf16 %v4989, %v4986
        %v5125 = vpack.c.bf16 %v5033, %v5030
        %v5126 = vpack.c.bf16 %v5077, %v5074
        %v5127 = vpack.c.bf16 %v5121, %v5118
        %v5128 = vpack.c.bf16 %v3148, %v3144
        %v5129 = vpack.c.bf16 %v3158, %v3154
        %v5130 = vpack.c.bf16 %v3168, %v3164
        %v5131 = vpack.c.bf16 %v3178, %v3174
        %v5132 = vpack.c.bf16 %v3586, %v3582
        %v5133 = vpack.c.bf16 %v3596, %v3592
        %v5134 = vpack.c.bf16 %v3606, %v3602
        %v5135 = vpack.c.bf16 %v3616, %v3612
        %v5136 = vpack.c.bf16 %v4024, %v4020
        %v5137 = vpack.c.bf16 %v4034, %v4030
        %v5138 = vpack.c.bf16 %v4044, %v4040
        %v5139 = vpack.c.bf16 %v4054, %v4050
        %5140 = vmatprep.subr.bf16.mxu0 0
        %5141 = vmatpush1.bf16.xpose.msra.mxu0 %v5132
        %5142 = vmatprep.subr.bf16.mxu0 0
        %5143 = vmatpush1.bf16.xpose.msra.mxu0 0
        %5144 = vmatprep.subr.bf16.mxu0 0
        %5145 = vmatpush1.bf16.xpose.msra.mxu0 0
        %5146 = vmatprep.subr.bf16.mxu0 0
        %5147 = vmatpush1.bf16.xpose.msra.mxu0 0
        %5148 = vmatprep.subr.bf16.mxu0 0
        %5149 = vmatpush1.bf16.xpose.msra.mxu0 0
        %5150 = vmatprep.subr.bf16.mxu0 0
        %5151 = vmatpush1.bf16.xpose.msra.mxu0 0
        %5152 = vmatprep.subr.bf16.mxu0 0
        %5153 = vmatpush1.bf16.xpose.msra.mxu0 0
        %5154 = vmatprep.subr.bf16.mxu0 0
        %5155 = vmatpush1.bf16.xpose.msra.mxu0 0
        %5156 = vmatprep.subr.bf16.mxu0 0
        %5157 = vmatpush1.bf16.xpose.msra.mxu0 0
        %5158 = vmatprep.subr.bf16.mxu0 0
        %5159 = vmatpush1.bf16.xpose.msra.mxu0 0
        %5160 = vmatprep.subr.bf16.mxu0 0
        %5161 = vmatpush1.bf16.xpose.msra.mxu0 0
        %5162 = vmatprep.subr.bf16.mxu0 0
        %5163 = vmatpush1.bf16.xpose.msra.mxu0 0
        %5164 = vmatprep.subr.bf16.mxu0 0
        %5165 = vmatpush1.bf16.xpose.msra.mxu0 0
        %5166 = vmatprep.subr.bf16.mxu0 0
        %5167 = vmatpush1.bf16.xpose.msra.mxu0 0
        %5168 = vmatprep.subr.bf16.mxu0 0
        %5169 = vmatpush1.bf16.xpose.msra.mxu0 0
        %5170 = vmatprep.subr.bf16.mxu0 0
        %5171 = vmatpush1.bf16.xpose.msra.mxu0 0
        %5172 = vmatprep.mubr.bf16.mxu0 0
        %5173 = vmatmul.mubr.bf16.gmra.mrb[0].mxu0 %v5128
        %v5174 = vpop.f32.mrb[0].mxu0
        %v5175 = vadd.f32 0.0, %v5174
        %v5176 = vpop.f32.mrb[0].mxu0
        %v5177 = vpop.f32.mrb[0].mxu0
        %v5178 = vadd.f32 0.0, %v5177
        %v5179 = vpop.f32.mrb[0].mxu0
        %5180 = vdwg.mxu0
        %5181 = vmatprep.subr.bf16.mxu0 0
        %5182 = vmatpush1.bf16.xpose.msra.mxu0 %v5133
        %5183 = vmatprep.subr.bf16.mxu0 0
        %5184 = vmatpush1.bf16.xpose.msra.mxu0 0
        %5185 = vmatprep.subr.bf16.mxu0 0
        %5186 = vmatpush1.bf16.xpose.msra.mxu0 0
        %5187 = vmatprep.subr.bf16.mxu0 0
        %5188 = vmatpush1.bf16.xpose.msra.mxu0 0
        %5189 = vmatprep.subr.bf16.mxu0 0
        %5190 = vmatpush1.bf16.xpose.msra.mxu0 0
        %5191 = vmatprep.subr.bf16.mxu0 0
        %5192 = vmatpush1.bf16.xpose.msra.mxu0 0
        %5193 = vmatprep.subr.bf16.mxu0 0
        %5194 = vmatpush1.bf16.xpose.msra.mxu0 0
        %5195 = vmatprep.subr.bf16.mxu0 0
        %5196 = vmatpush1.bf16.xpose.msra.mxu0 0
        %5197 = vmatprep.subr.bf16.mxu0 0
        %5198 = vmatpush1.bf16.xpose.msra.mxu0 0
        %5199 = vmatprep.subr.bf16.mxu0 0
        %5200 = vmatpush1.bf16.xpose.msra.mxu0 0
        %5201 = vmatprep.subr.bf16.mxu0 0
        %5202 = vmatpush1.bf16.xpose.msra.mxu0 0
        %5203 = vmatprep.subr.bf16.mxu0 0
        %5204 = vmatpush1.bf16.xpose.msra.mxu0 0
        %5205 = vmatprep.subr.bf16.mxu0 0
        %5206 = vmatpush1.bf16.xpose.msra.mxu0 0
        %5207 = vmatprep.subr.bf16.mxu0 0
        %5208 = vmatpush1.bf16.xpose.msra.mxu0 0
        %5209 = vmatprep.subr.bf16.mxu0 0
        %5210 = vmatpush1.bf16.xpose.msra.mxu0 0
        %5211 = vmatprep.subr.bf16.mxu0 0
        %5212 = vmatpush1.bf16.xpose.msra.mxu0 0
        %5213 = vmatprep.mubr.bf16.mxu0 0
        %5214 = vmatmul.mubr.bf16.gmra.mrb[0].mxu0 %v5129
        %v5215 = vpop.f32.mrb[0].mxu0
        %v5216 = vadd.f32 0.0, %v5215
        %v5217 = vpop.f32.mrb[0].mxu0
        %v5218 = vpop.f32.mrb[0].mxu0
        %v5219 = vadd.f32 0.0, %v5218
        %v5220 = vpop.f32.mrb[0].mxu0
        %5221 = vdwg.mxu0
        %5222 = vmatprep.subr.bf16.mxu0 0
        %5223 = vmatpush1.bf16.xpose.msra.mxu0 %v5134
        %5224 = vmatprep.subr.bf16.mxu0 0
        %5225 = vmatpush1.bf16.xpose.msra.mxu0 0
        %5226 = vmatprep.subr.bf16.mxu0 0
        %5227 = vmatpush1.bf16.xpose.msra.mxu0 0
        %5228 = vmatprep.subr.bf16.mxu0 0
        %5229 = vmatpush1.bf16.xpose.msra.mxu0 0
        %5230 = vmatprep.subr.bf16.mxu0 0
        %5231 = vmatpush1.bf16.xpose.msra.mxu0 0
        %5232 = vmatprep.subr.bf16.mxu0 0
        %5233 = vmatpush1.bf16.xpose.msra.mxu0 0
        %5234 = vmatprep.subr.bf16.mxu0 0
        %5235 = vmatpush1.bf16.xpose.msra.mxu0 0
        %5236 = vmatprep.subr.bf16.mxu0 0
        %5237 = vmatpush1.bf16.xpose.msra.mxu0 0
        %5238 = vmatprep.subr.bf16.mxu0 0
        %5239 = vmatpush1.bf16.xpose.msra.mxu0 0
        %5240 = vmatprep.subr.bf16.mxu0 0
        %5241 = vmatpush1.bf16.xpose.msra.mxu0 0
        %5242 = vmatprep.subr.bf16.mxu0 0
        %5243 = vmatpush1.bf16.xpose.msra.mxu0 0
        %5244 = vmatprep.subr.bf16.mxu0 0
        %5245 = vmatpush1.bf16.xpose.msra.mxu0 0
        %5246 = vmatprep.subr.bf16.mxu0 0
        %5247 = vmatpush1.bf16.xpose.msra.mxu0 0
        %5248 = vmatprep.subr.bf16.mxu0 0
        %5249 = vmatpush1.bf16.xpose.msra.mxu0 0
        %5250 = vmatprep.subr.bf16.mxu0 0
        %5251 = vmatpush1.bf16.xpose.msra.mxu0 0
        %5252 = vmatprep.subr.bf16.mxu0 0
        %5253 = vmatpush1.bf16.xpose.msra.mxu0 0
        %5254 = vmatprep.mubr.bf16.mxu0 0
        %5255 = vmatmul.mubr.bf16.gmra.mrb[0].mxu0 %v5130
        %v5256 = vpop.f32.mrb[0].mxu0
        %v5257 = vadd.f32 0.0, %v5256
        %v5258 = vpop.f32.mrb[0].mxu0
        %v5259 = vpop.f32.mrb[0].mxu0
        %v5260 = vadd.f32 0.0, %v5259
        %v5261 = vpop.f32.mrb[0].mxu0
        %5262 = vdwg.mxu0
        %5263 = vmatprep.subr.bf16.mxu0 0
        %5264 = vmatpush1.bf16.xpose.msra.mxu0 %v5135
        %5265 = vmatprep.subr.bf16.mxu0 0
        %5266 = vmatpush1.bf16.xpose.msra.mxu0 0
        %5267 = vmatprep.subr.bf16.mxu0 0
        %5268 = vmatpush1.bf16.xpose.msra.mxu0 0
        %5269 = vmatprep.subr.bf16.mxu0 0
        %5270 = vmatpush1.bf16.xpose.msra.mxu0 0
        %5271 = vmatprep.subr.bf16.mxu0 0
        %5272 = vmatpush1.bf16.xpose.msra.mxu0 0
        %5273 = vmatprep.subr.bf16.mxu0 0
        %5274 = vmatpush1.bf16.xpose.msra.mxu0 0
        %5275 = vmatprep.subr.bf16.mxu0 0
        %5276 = vmatpush1.bf16.xpose.msra.mxu0 0
        %5277 = vmatprep.subr.bf16.mxu0 0
        %5278 = vmatpush1.bf16.xpose.msra.mxu0 0
        %5279 = vmatprep.subr.bf16.mxu0 0
        %5280 = vmatpush1.bf16.xpose.msra.mxu0 0
        %5281 = vmatprep.subr.bf16.mxu0 0
        %5282 = vmatpush1.bf16.xpose.msra.mxu0 0
        %5283 = vmatprep.subr.bf16.mxu0 0
        %5284 = vmatpush1.bf16.xpose.msra.mxu0 0
        %5285 = vmatprep.subr.bf16.mxu0 0
        %5286 = vmatpush1.bf16.xpose.msra.mxu0 0
        %5287 = vmatprep.subr.bf16.mxu0 0
        %5288 = vmatpush1.bf16.xpose.msra.mxu0 0
        %5289 = vmatprep.subr.bf16.mxu0 0
        %5290 = vmatpush1.bf16.xpose.msra.mxu0 0
        %5291 = vmatprep.subr.bf16.mxu0 0
        %5292 = vmatpush1.bf16.xpose.msra.mxu0 0
        %5293 = vmatprep.subr.bf16.mxu0 0
        %5294 = vmatpush1.bf16.xpose.msra.mxu0 0
        %5295 = vmatprep.mubr.bf16.mxu0 0
        %5296 = vmatmul.mubr.bf16.gmra.mrb[0].mxu0 %v5131
        %v5297 = vpop.f32.mrb[0].mxu0
        %v5298 = vadd.f32 0.0, %v5297
        %v5299 = vpop.f32.mrb[0].mxu0
        %v5300 = vpop.f32.mrb[0].mxu0
        %v5301 = vadd.f32 0.0, %v5300
        %v5302 = vpop.f32.mrb[0].mxu0
        %5303 = vdwg.mxu0
        %v5304 = vsel %vm4389, %v5175, -1e+30
        %v5305 = vsel %vm4390, %v5178, -1e+30
        %v5306 = vsel %vm4389, %v5216, -1e+30
        %v5307 = vsel %vm4390, %v5219, -1e+30
        %v5308 = vsel %vm4389, %v5257, -1e+30
        %v5309 = vsel %vm4390, %v5260, -1e+30
        %v5310 = vsel %vm4389, %v5298, -1e+30
        %v5311 = vsel %vm4390, %v5301, -1e+30
        %v5312 = vsel %vm4399, %v5304, -inf
        %5313 = vmax.xlane.f32.xlu0 %v5312
        %v5314 = vpop.xlane.xlu0 %5313
        %v5315 = vsel %vm4399, %v5305, -inf
        %5316 = vmax.xlane.f32.xlu0 %v5315
        %v5317 = vpop.xlane.xlu0 %5316
        %v5318 = vsel %vm4399, %v5306, -inf
        %5319 = vmax.xlane.f32.xlu0 %v5318
        %v5320 = vpop.xlane.xlu0 %5319
        %v5321 = vsel %vm4399, %v5307, -inf
        %5322 = vmax.xlane.f32.xlu0 %v5321
        %v5323 = vpop.xlane.xlu0 %5322
        %v5324 = vsel %vm4399, %v5308, -inf
        %5325 = vmax.xlane.f32.xlu0 %v5324
        %v5326 = vpop.xlane.xlu0 %5325
        %v5327 = vsel %vm4399, %v5309, -inf
        %5328 = vmax.xlane.f32.xlu0 %v5327
        %v5329 = vpop.xlane.xlu0 %5328
        %v5330 = vsel %vm4399, %v5310, -inf
        %5331 = vmax.xlane.f32.xlu0 %v5330
        %v5332 = vpop.xlane.xlu0 %5331
        %v5333 = vsel %vm4399, %v5311, -inf
        %5334 = vmax.xlane.f32.xlu0 %v5333
        %v5335 = vpop.xlane.xlu0 %5334
        %v5336 = vsub.f32 %v5304, %v5314
        %v5337 = vsub.f32 %v5305, %v5317
        %v5338 = vsub.f32 %v5306, %v5320
        %v5339 = vsub.f32 %v5307, %v5323
        %v5340 = vsub.f32 %v5308, %v5326
        %v5341 = vsub.f32 %v5309, %v5329
        %v5342 = vsub.f32 %v5310, %v5332
        %v5343 = vsub.f32 %v5311, %v5335
        %v5344 = vmul.f32 %v5336, 1.442695
        %v5345 = vpow.pop %v5344
        %v5346 = vmul.f32 %v5337, 1.442695
        %v5347 = vpow.pop %v5346
        %v5348 = vmul.f32 %v5338, 1.442695
        %v5349 = vpow.pop %v5348
        %v5350 = vmul.f32 %v5339, 1.442695
        %v5351 = vpow.pop %v5350
        %v5352 = vmul.f32 %v5340, 1.442695
        %v5353 = vpow.pop %v5352
        %v5354 = vmul.f32 %v5341, 1.442695
        %v5355 = vpow.pop %v5354
        %v5356 = vmul.f32 %v5342, 1.442695
        %v5357 = vpow.pop %v5356
        %v5358 = vmul.f32 %v5343, 1.442695
        %v5359 = vpow.pop %v5358
        %v5360 = vsel %vm4399, %v5345, 0.0
        %5361 = vadd.xlane.f32.xlu0 %v5360
        %v5362 = vpop.xlane.xlu0 %5361
        %v5363 = vsel %vm4399, %v5347, 0.0
        %5364 = vadd.xlane.f32.xlu0 %v5363
        %v5365 = vpop.xlane.xlu0 %5364
        %v5366 = vsel %vm4399, %v5349, 0.0
        %5367 = vadd.xlane.f32.xlu0 %v5366
        %v5368 = vpop.xlane.xlu0 %5367
        %v5369 = vsel %vm4399, %v5351, 0.0
        %5370 = vadd.xlane.f32.xlu0 %v5369
        %v5371 = vpop.xlane.xlu0 %5370
        %v5372 = vsel %vm4399, %v5353, 0.0
        %5373 = vadd.xlane.f32.xlu0 %v5372
        %v5374 = vpop.xlane.xlu0 %5373
        %v5375 = vsel %vm4399, %v5355, 0.0
        %5376 = vadd.xlane.f32.xlu0 %v5375
        %v5377 = vpop.xlane.xlu0 %5376
        %v5378 = vsel %vm4399, %v5357, 0.0
        %5379 = vadd.xlane.f32.xlu0 %v5378
        %v5380 = vpop.xlane.xlu0 %5379
        %v5381 = vsel %vm4399, %v5359, 0.0
        %5382 = vadd.xlane.f32.xlu0 %v5381
        %v5383 = vpop.xlane.xlu0 %5382
        %v5384 = vrcp.pop %v5362
        %v5385 = vrcp.pop %v5365
        %v5386 = vrcp.pop %v5368
        %v5387 = vrcp.pop %v5371
        %v5388 = vrcp.pop %v5374
        %v5389 = vrcp.pop %v5377
        %v5390 = vrcp.pop %v5380
        %v5391 = vrcp.pop %v5383
        %v5392 = vmul.f32 %v5345, %v5384
        %v5393 = vmul.f32 %v5347, %v5385
        %v5394 = vmul.f32 %v5349, %v5386
        %v5395 = vmul.f32 %v5351, %v5387
        %v5396 = vmul.f32 %v5353, %v5388
        %v5397 = vmul.f32 %v5355, %v5389
        %v5398 = vmul.f32 %v5357, %v5390
        %v5399 = vmul.f32 %v5359, %v5391
        %v5400 = vpack.c.bf16 %v5393, %v5392
        %v5401 = vpack.c.bf16 %v5395, %v5394
        %v5402 = vpack.c.bf16 %v5397, %v5396
        %v5403 = vpack.c.bf16 %v5399, %v5398
        %v5405 = vsel %vm4399, %v5400, 0
        %5407 = vmatprep.subr.bf16.mxu0 0
        %5408 = vmatpush1.bf16.msra.mxu0 %v5136
        %5409 = vmatprep.subr.bf16.mxu0 0
        %5410 = vmatpush1.bf16.msra.mxu0 0
        %5411 = vmatprep.subr.bf16.mxu0 0
        %5412 = vmatpush1.bf16.msra.mxu0 0
        %5413 = vmatprep.subr.bf16.mxu0 0
        %5414 = vmatpush1.bf16.msra.mxu0 0
        %5415 = vmatprep.subr.bf16.mxu0 0
        %5416 = vmatpush1.bf16.msra.mxu0 0
        %5417 = vmatprep.subr.bf16.mxu0 0
        %5418 = vmatpush1.bf16.msra.mxu0 0
        %5419 = vmatprep.subr.bf16.mxu0 0
        %5420 = vmatpush1.bf16.msra.mxu0 0
        %5421 = vmatprep.subr.bf16.mxu0 0
        %5422 = vmatpush1.bf16.msra.mxu0 0
        %5423 = vmatprep.subr.bf16.mxu0 0
        %5424 = vmatpush1.bf16.msra.mxu0 0
        %5425 = vmatprep.subr.bf16.mxu0 0
        %5426 = vmatpush1.bf16.msra.mxu0 0
        %5427 = vmatprep.subr.bf16.mxu0 0
        %5428 = vmatpush1.bf16.msra.mxu0 0
        %5429 = vmatprep.subr.bf16.mxu0 0
        %5430 = vmatpush1.bf16.msra.mxu0 0
        %5431 = vmatprep.subr.bf16.mxu0 0
        %5432 = vmatpush1.bf16.msra.mxu0 0
        %5433 = vmatprep.subr.bf16.mxu0 0
        %5434 = vmatpush1.bf16.msra.mxu0 0
        %5435 = vmatprep.subr.bf16.mxu0 0
        %5436 = vmatpush1.bf16.msra.mxu0 0
        %5437 = vmatprep.subr.bf16.mxu0 0
        %5438 = vmatpush1.bf16.msra.mxu0 0
        %5439 = vmatprep.mubr.bf16.mxu0 0
        %5440 = vmatmul.mubr.bf16.gmra.mrb[0].mxu0 %v5405
        %v5441 = vpop.f32.mrb[0].mxu0
        %v5442 = vadd.f32 0.0, %v5441
        %v5443 = vpop.f32.mrb[0].mxu0
        %v5444 = vpop.f32.mrb[0].mxu0
        %v5445 = vadd.f32 0.0, %v5444
        %v5446 = vpop.f32.mrb[0].mxu0
        %5447 = vdwg.mxu0
        %v5449 = vsel %vm4399, %v5401, 0
        %5451 = vmatprep.subr.bf16.mxu0 0
        %5452 = vmatpush1.bf16.msra.mxu0 %v5137
        %5453 = vmatprep.subr.bf16.mxu0 0
        %5454 = vmatpush1.bf16.msra.mxu0 0
        %5455 = vmatprep.subr.bf16.mxu0 0
        %5456 = vmatpush1.bf16.msra.mxu0 0
        %5457 = vmatprep.subr.bf16.mxu0 0
        %5458 = vmatpush1.bf16.msra.mxu0 0
        %5459 = vmatprep.subr.bf16.mxu0 0
        %5460 = vmatpush1.bf16.msra.mxu0 0
        %5461 = vmatprep.subr.bf16.mxu0 0
        %5462 = vmatpush1.bf16.msra.mxu0 0
        %5463 = vmatprep.subr.bf16.mxu0 0
        %5464 = vmatpush1.bf16.msra.mxu0 0
        %5465 = vmatprep.subr.bf16.mxu0 0
        %5466 = vmatpush1.bf16.msra.mxu0 0
        %5467 = vmatprep.subr.bf16.mxu0 0
        %5468 = vmatpush1.bf16.msra.mxu0 0
        %5469 = vmatprep.subr.bf16.mxu0 0
        %5470 = vmatpush1.bf16.msra.mxu0 0
        %5471 = vmatprep.subr.bf16.mxu0 0
        %5472 = vmatpush1.bf16.msra.mxu0 0
        %5473 = vmatprep.subr.bf16.mxu0 0
        %5474 = vmatpush1.bf16.msra.mxu0 0
        %5475 = vmatprep.subr.bf16.mxu0 0
        %5476 = vmatpush1.bf16.msra.mxu0 0
        %5477 = vmatprep.subr.bf16.mxu0 0
        %5478 = vmatpush1.bf16.msra.mxu0 0
        %5479 = vmatprep.subr.bf16.mxu0 0
        %5480 = vmatpush1.bf16.msra.mxu0 0
        %5481 = vmatprep.subr.bf16.mxu0 0
        %5482 = vmatpush1.bf16.msra.mxu0 0
        %5483 = vmatprep.mubr.bf16.mxu0 0
        %5484 = vmatmul.mubr.bf16.gmra.mrb[0].mxu0 %v5449
        %v5485 = vpop.f32.mrb[0].mxu0
        %v5486 = vadd.f32 0.0, %v5485
        %v5487 = vpop.f32.mrb[0].mxu0
        %v5488 = vpop.f32.mrb[0].mxu0
        %v5489 = vadd.f32 0.0, %v5488
        %v5490 = vpop.f32.mrb[0].mxu0
        %5491 = vdwg.mxu0
        %v5493 = vsel %vm4399, %v5402, 0
        %5495 = vmatprep.subr.bf16.mxu0 0
        %5496 = vmatpush1.bf16.msra.mxu0 %v5138
        %5497 = vmatprep.subr.bf16.mxu0 0
        %5498 = vmatpush1.bf16.msra.mxu0 0
        %5499 = vmatprep.subr.bf16.mxu0 0
        %5500 = vmatpush1.bf16.msra.mxu0 0
        %5501 = vmatprep.subr.bf16.mxu0 0
        %5502 = vmatpush1.bf16.msra.mxu0 0
        %5503 = vmatprep.subr.bf16.mxu0 0
        %5504 = vmatpush1.bf16.msra.mxu0 0
        %5505 = vmatprep.subr.bf16.mxu0 0
        %5506 = vmatpush1.bf16.msra.mxu0 0
        %5507 = vmatprep.subr.bf16.mxu0 0
        %5508 = vmatpush1.bf16.msra.mxu0 0
        %5509 = vmatprep.subr.bf16.mxu0 0
        %5510 = vmatpush1.bf16.msra.mxu0 0
        %5511 = vmatprep.subr.bf16.mxu0 0
        %5512 = vmatpush1.bf16.msra.mxu0 0
        %5513 = vmatprep.subr.bf16.mxu0 0
        %5514 = vmatpush1.bf16.msra.mxu0 0
        %5515 = vmatprep.subr.bf16.mxu0 0
        %5516 = vmatpush1.bf16.msra.mxu0 0
        %5517 = vmatprep.subr.bf16.mxu0 0
        %5518 = vmatpush1.bf16.msra.mxu0 0
        %5519 = vmatprep.subr.bf16.mxu0 0
        %5520 = vmatpush1.bf16.msra.mxu0 0
        %5521 = vmatprep.subr.bf16.mxu0 0
        %5522 = vmatpush1.bf16.msra.mxu0 0
        %5523 = vmatprep.subr.bf16.mxu0 0
        %5524 = vmatpush1.bf16.msra.mxu0 0
        %5525 = vmatprep.subr.bf16.mxu0 0
        %5526 = vmatpush1.bf16.msra.mxu0 0
        %5527 = vmatprep.mubr.bf16.mxu0 0
        %5528 = vmatmul.mubr.bf16.gmra.mrb[0].mxu0 %v5493
        %v5529 = vpop.f32.mrb[0].mxu0
        %v5530 = vadd.f32 0.0, %v5529
        %v5531 = vpop.f32.mrb[0].mxu0
        %v5532 = vpop.f32.mrb[0].mxu0
        %v5533 = vadd.f32 0.0, %v5532
        %v5534 = vpop.f32.mrb[0].mxu0
        %5535 = vdwg.mxu0
        %v5537 = vsel %vm4399, %v5403, 0
        %5539 = vmatprep.subr.bf16.mxu0 0
        %5540 = vmatpush1.bf16.msra.mxu0 %v5139
        %5541 = vmatprep.subr.bf16.mxu0 0
        %5542 = vmatpush1.bf16.msra.mxu0 0
        %5543 = vmatprep.subr.bf16.mxu0 0
        %5544 = vmatpush1.bf16.msra.mxu0 0
        %5545 = vmatprep.subr.bf16.mxu0 0
        %5546 = vmatpush1.bf16.msra.mxu0 0
        %5547 = vmatprep.subr.bf16.mxu0 0
        %5548 = vmatpush1.bf16.msra.mxu0 0
        %5549 = vmatprep.subr.bf16.mxu0 0
        %5550 = vmatpush1.bf16.msra.mxu0 0
        %5551 = vmatprep.subr.bf16.mxu0 0
        %5552 = vmatpush1.bf16.msra.mxu0 0
        %5553 = vmatprep.subr.bf16.mxu0 0
        %5554 = vmatpush1.bf16.msra.mxu0 0
        %5555 = vmatprep.subr.bf16.mxu0 0
        %5556 = vmatpush1.bf16.msra.mxu0 0
        %5557 = vmatprep.subr.bf16.mxu0 0
        %5558 = vmatpush1.bf16.msra.mxu0 0
        %5559 = vmatprep.subr.bf16.mxu0 0
        %5560 = vmatpush1.bf16.msra.mxu0 0
        %5561 = vmatprep.subr.bf16.mxu0 0
        %5562 = vmatpush1.bf16.msra.mxu0 0
        %5563 = vmatprep.subr.bf16.mxu0 0
        %5564 = vmatpush1.bf16.msra.mxu0 0
        %5565 = vmatprep.subr.bf16.mxu0 0
        %5566 = vmatpush1.bf16.msra.mxu0 0
        %5567 = vmatprep.subr.bf16.mxu0 0
        %5568 = vmatpush1.bf16.msra.mxu0 0
        %5569 = vmatprep.subr.bf16.mxu0 0
        %5570 = vmatpush1.bf16.msra.mxu0 0
        %5571 = vmatprep.mubr.bf16.mxu0 0
        %5572 = vmatmul.mubr.bf16.gmra.mrb[0].mxu0 %v5537
        %v5573 = vpop.f32.mrb[0].mxu0
        %v5574 = vadd.f32 0.0, %v5573
        %v5575 = vpop.f32.mrb[0].mxu0
        %v5576 = vpop.f32.mrb[0].mxu0
        %v5577 = vadd.f32 0.0, %v5576
        %v5578 = vpop.f32.mrb[0].mxu0
        %5579 = vdwg.mxu0
        %v5580 = vpack.c.bf16 %v5445, %v5442
        %v5581 = vpack.c.bf16 %v5489, %v5486
        %v5582 = vpack.c.bf16 %v5533, %v5530
        %v5583 = vpack.c.bf16 %v5577, %v5574
        %v5584 = vpack.c.bf16 %v3150, %v3146
        %v5585 = vpack.c.bf16 %v3160, %v3156
        %v5586 = vpack.c.bf16 %v3170, %v3166
        %v5587 = vpack.c.bf16 %v3180, %v3176
        %v5588 = vpack.c.bf16 %v3588, %v3584
        %v5589 = vpack.c.bf16 %v3598, %v3594
        %v5590 = vpack.c.bf16 %v3608, %v3604
        %v5591 = vpack.c.bf16 %v3618, %v3614
        %v5592 = vpack.c.bf16 %v4026, %v4022
        %v5593 = vpack.c.bf16 %v4036, %v4032
        %v5594 = vpack.c.bf16 %v4046, %v4042
        %v5595 = vpack.c.bf16 %v4056, %v4052
        %5596 = vmatprep.subr.bf16.mxu0 0
        %5597 = vmatpush1.bf16.xpose.msra.mxu0 %v5588
        %5598 = vmatprep.subr.bf16.mxu0 0
        %5599 = vmatpush1.bf16.xpose.msra.mxu0 0
        %5600 = vmatprep.subr.bf16.mxu0 0
        %5601 = vmatpush1.bf16.xpose.msra.mxu0 0
        %5602 = vmatprep.subr.bf16.mxu0 0
        %5603 = vmatpush1.bf16.xpose.msra.mxu0 0
        %5604 = vmatprep.subr.bf16.mxu0 0
        %5605 = vmatpush1.bf16.xpose.msra.mxu0 0
        %5606 = vmatprep.subr.bf16.mxu0 0
        %5607 = vmatpush1.bf16.xpose.msra.mxu0 0
        %5608 = vmatprep.subr.bf16.mxu0 0
        %5609 = vmatpush1.bf16.xpose.msra.mxu0 0
        %5610 = vmatprep.subr.bf16.mxu0 0
        %5611 = vmatpush1.bf16.xpose.msra.mxu0 0
        %5612 = vmatprep.subr.bf16.mxu0 0
        %5613 = vmatpush1.bf16.xpose.msra.mxu0 0
        %5614 = vmatprep.subr.bf16.mxu0 0
        %5615 = vmatpush1.bf16.xpose.msra.mxu0 0
        %5616 = vmatprep.subr.bf16.mxu0 0
        %5617 = vmatpush1.bf16.xpose.msra.mxu0 0
        %5618 = vmatprep.subr.bf16.mxu0 0
        %5619 = vmatpush1.bf16.xpose.msra.mxu0 0
        %5620 = vmatprep.subr.bf16.mxu0 0
        %5621 = vmatpush1.bf16.xpose.msra.mxu0 0
        %5622 = vmatprep.subr.bf16.mxu0 0
        %5623 = vmatpush1.bf16.xpose.msra.mxu0 0
        %5624 = vmatprep.subr.bf16.mxu0 0
        %5625 = vmatpush1.bf16.xpose.msra.mxu0 0
        %5626 = vmatprep.subr.bf16.mxu0 0
        %5627 = vmatpush1.bf16.xpose.msra.mxu0 0
        %5628 = vmatprep.mubr.bf16.mxu0 0
        %5629 = vmatmul.mubr.bf16.gmra.mrb[0].mxu0 %v5584
        %v5630 = vpop.f32.mrb[0].mxu0
        %v5631 = vadd.f32 0.0, %v5630
        %v5632 = vpop.f32.mrb[0].mxu0
        %v5633 = vpop.f32.mrb[0].mxu0
        %v5634 = vadd.f32 0.0, %v5633
        %v5635 = vpop.f32.mrb[0].mxu0
        %5636 = vdwg.mxu0
        %5637 = vmatprep.subr.bf16.mxu0 0
        %5638 = vmatpush1.bf16.xpose.msra.mxu0 %v5589
        %5639 = vmatprep.subr.bf16.mxu0 0
        %5640 = vmatpush1.bf16.xpose.msra.mxu0 0
        %5641 = vmatprep.subr.bf16.mxu0 0
        %5642 = vmatpush1.bf16.xpose.msra.mxu0 0
        %5643 = vmatprep.subr.bf16.mxu0 0
        %5644 = vmatpush1.bf16.xpose.msra.mxu0 0
        %5645 = vmatprep.subr.bf16.mxu0 0
        %5646 = vmatpush1.bf16.xpose.msra.mxu0 0
        %5647 = vmatprep.subr.bf16.mxu0 0
        %5648 = vmatpush1.bf16.xpose.msra.mxu0 0
        %5649 = vmatprep.subr.bf16.mxu0 0
        %5650 = vmatpush1.bf16.xpose.msra.mxu0 0
        %5651 = vmatprep.subr.bf16.mxu0 0
        %5652 = vmatpush1.bf16.xpose.msra.mxu0 0
        %5653 = vmatprep.subr.bf16.mxu0 0
        %5654 = vmatpush1.bf16.xpose.msra.mxu0 0
        %5655 = vmatprep.subr.bf16.mxu0 0
        %5656 = vmatpush1.bf16.xpose.msra.mxu0 0
        %5657 = vmatprep.subr.bf16.mxu0 0
        %5658 = vmatpush1.bf16.xpose.msra.mxu0 0
        %5659 = vmatprep.subr.bf16.mxu0 0
        %5660 = vmatpush1.bf16.xpose.msra.mxu0 0
        %5661 = vmatprep.subr.bf16.mxu0 0
        %5662 = vmatpush1.bf16.xpose.msra.mxu0 0
        %5663 = vmatprep.subr.bf16.mxu0 0
        %5664 = vmatpush1.bf16.xpose.msra.mxu0 0
        %5665 = vmatprep.subr.bf16.mxu0 0
        %5666 = vmatpush1.bf16.xpose.msra.mxu0 0
        %5667 = vmatprep.subr.bf16.mxu0 0
        %5668 = vmatpush1.bf16.xpose.msra.mxu0 0
        %5669 = vmatprep.mubr.bf16.mxu0 0
        %5670 = vmatmul.mubr.bf16.gmra.mrb[0].mxu0 %v5585
        %v5671 = vpop.f32.mrb[0].mxu0
        %v5672 = vadd.f32 0.0, %v5671
        %v5673 = vpop.f32.mrb[0].mxu0
        %v5674 = vpop.f32.mrb[0].mxu0
        %v5675 = vadd.f32 0.0, %v5674
        %v5676 = vpop.f32.mrb[0].mxu0
        %5677 = vdwg.mxu0
        %5678 = vmatprep.subr.bf16.mxu0 0
        %5679 = vmatpush1.bf16.xpose.msra.mxu0 %v5590
        %5680 = vmatprep.subr.bf16.mxu0 0
        %5681 = vmatpush1.bf16.xpose.msra.mxu0 0
        %5682 = vmatprep.subr.bf16.mxu0 0
        %5683 = vmatpush1.bf16.xpose.msra.mxu0 0
        %5684 = vmatprep.subr.bf16.mxu0 0
        %5685 = vmatpush1.bf16.xpose.msra.mxu0 0
        %5686 = vmatprep.subr.bf16.mxu0 0
        %5687 = vmatpush1.bf16.xpose.msra.mxu0 0
        %5688 = vmatprep.subr.bf16.mxu0 0
        %5689 = vmatpush1.bf16.xpose.msra.mxu0 0
        %5690 = vmatprep.subr.bf16.mxu0 0
        %5691 = vmatpush1.bf16.xpose.msra.mxu0 0
        %5692 = vmatprep.subr.bf16.mxu0 0
        %5693 = vmatpush1.bf16.xpose.msra.mxu0 0
        %5694 = vmatprep.subr.bf16.mxu0 0
        %5695 = vmatpush1.bf16.xpose.msra.mxu0 0
        %5696 = vmatprep.subr.bf16.mxu0 0
        %5697 = vmatpush1.bf16.xpose.msra.mxu0 0
        %5698 = vmatprep.subr.bf16.mxu0 0
        %5699 = vmatpush1.bf16.xpose.msra.mxu0 0
        %5700 = vmatprep.subr.bf16.mxu0 0
        %5701 = vmatpush1.bf16.xpose.msra.mxu0 0
        %5702 = vmatprep.subr.bf16.mxu0 0
        %5703 = vmatpush1.bf16.xpose.msra.mxu0 0
        %5704 = vmatprep.subr.bf16.mxu0 0
        %5705 = vmatpush1.bf16.xpose.msra.mxu0 0
        %5706 = vmatprep.subr.bf16.mxu0 0
        %5707 = vmatpush1.bf16.xpose.msra.mxu0 0
        %5708 = vmatprep.subr.bf16.mxu0 0
        %5709 = vmatpush1.bf16.xpose.msra.mxu0 0
        %5710 = vmatprep.mubr.bf16.mxu0 0
        %5711 = vmatmul.mubr.bf16.gmra.mrb[0].mxu0 %v5586
        %v5712 = vpop.f32.mrb[0].mxu0
        %v5713 = vadd.f32 0.0, %v5712
        %v5714 = vpop.f32.mrb[0].mxu0
        %v5715 = vpop.f32.mrb[0].mxu0
        %v5716 = vadd.f32 0.0, %v5715
        %v5717 = vpop.f32.mrb[0].mxu0
        %5718 = vdwg.mxu0
        %5719 = vmatprep.subr.bf16.mxu0 0
        %5720 = vmatpush1.bf16.xpose.msra.mxu0 %v5591
        %5721 = vmatprep.subr.bf16.mxu0 0
        %5722 = vmatpush1.bf16.xpose.msra.mxu0 0
        %5723 = vmatprep.subr.bf16.mxu0 0
        %5724 = vmatpush1.bf16.xpose.msra.mxu0 0
        %5725 = vmatprep.subr.bf16.mxu0 0
        %5726 = vmatpush1.bf16.xpose.msra.mxu0 0
        %5727 = vmatprep.subr.bf16.mxu0 0
        %5728 = vmatpush1.bf16.xpose.msra.mxu0 0
        %5729 = vmatprep.subr.bf16.mxu0 0
        %5730 = vmatpush1.bf16.xpose.msra.mxu0 0
        %5731 = vmatprep.subr.bf16.mxu0 0
        %5732 = vmatpush1.bf16.xpose.msra.mxu0 0
        %5733 = vmatprep.subr.bf16.mxu0 0
        %5734 = vmatpush1.bf16.xpose.msra.mxu0 0
        %5735 = vmatprep.subr.bf16.mxu0 0
        %5736 = vmatpush1.bf16.xpose.msra.mxu0 0
        %5737 = vmatprep.subr.bf16.mxu0 0
        %5738 = vmatpush1.bf16.xpose.msra.mxu0 0
        %5739 = vmatprep.subr.bf16.mxu0 0
        %5740 = vmatpush1.bf16.xpose.msra.mxu0 0
        %5741 = vmatprep.subr.bf16.mxu0 0
        %5742 = vmatpush1.bf16.xpose.msra.mxu0 0
        %5743 = vmatprep.subr.bf16.mxu0 0
        %5744 = vmatpush1.bf16.xpose.msra.mxu0 0
        %5745 = vmatprep.subr.bf16.mxu0 0
        %5746 = vmatpush1.bf16.xpose.msra.mxu0 0
        %5747 = vmatprep.subr.bf16.mxu0 0
        %5748 = vmatpush1.bf16.xpose.msra.mxu0 0
        %5749 = vmatprep.subr.bf16.mxu0 0
        %5750 = vmatpush1.bf16.xpose.msra.mxu0 0
        %5751 = vmatprep.mubr.bf16.mxu0 0
        %5752 = vmatmul.mubr.bf16.gmra.mrb[0].mxu0 %v5587
        %v5753 = vpop.f32.mrb[0].mxu0
        %v5754 = vadd.f32 0.0, %v5753
        %v5755 = vpop.f32.mrb[0].mxu0
        %v5756 = vpop.f32.mrb[0].mxu0
        %v5757 = vadd.f32 0.0, %v5756
        %v5758 = vpop.f32.mrb[0].mxu0
        %5759 = vdwg.mxu0
        %v5760 = vsel %vm4389, %v5631, -1e+30
        %v5761 = vsel %vm4390, %v5634, -1e+30
        %v5762 = vsel %vm4389, %v5672, -1e+30
        %v5763 = vsel %vm4390, %v5675, -1e+30
        %v5764 = vsel %vm4389, %v5713, -1e+30
        %v5765 = vsel %vm4390, %v5716, -1e+30
        %v5766 = vsel %vm4389, %v5754, -1e+30
        %v5767 = vsel %vm4390, %v5757, -1e+30
        %v5768 = vsel %vm4399, %v5760, -inf
        %5769 = vmax.xlane.f32.xlu0 %v5768
        %v5770 = vpop.xlane.xlu0 %5769
        %v5771 = vsel %vm4399, %v5761, -inf
        %5772 = vmax.xlane.f32.xlu0 %v5771
        %v5773 = vpop.xlane.xlu0 %5772
        %v5774 = vsel %vm4399, %v5762, -inf
        %5775 = vmax.xlane.f32.xlu0 %v5774
        %v5776 = vpop.xlane.xlu0 %5775
        %v5777 = vsel %vm4399, %v5763, -inf
        %5778 = vmax.xlane.f32.xlu0 %v5777
        %v5779 = vpop.xlane.xlu0 %5778
        %v5780 = vsel %vm4399, %v5764, -inf
        %5781 = vmax.xlane.f32.xlu0 %v5780
        %v5782 = vpop.xlane.xlu0 %5781
        %v5783 = vsel %vm4399, %v5765, -inf
        %5784 = vmax.xlane.f32.xlu0 %v5783
        %v5785 = vpop.xlane.xlu0 %5784
        %v5786 = vsel %vm4399, %v5766, -inf
        %5787 = vmax.xlane.f32.xlu0 %v5786
        %v5788 = vpop.xlane.xlu0 %5787
        %v5789 = vsel %vm4399, %v5767, -inf
        %5790 = vmax.xlane.f32.xlu0 %v5789
        %v5791 = vpop.xlane.xlu0 %5790
        %v5792 = vsub.f32 %v5760, %v5770
        %v5793 = vsub.f32 %v5761, %v5773
        %v5794 = vsub.f32 %v5762, %v5776
        %v5795 = vsub.f32 %v5763, %v5779
        %v5796 = vsub.f32 %v5764, %v5782
        %v5797 = vsub.f32 %v5765, %v5785
        %v5798 = vsub.f32 %v5766, %v5788
        %v5799 = vsub.f32 %v5767, %v5791
        %v5800 = vmul.f32 %v5792, 1.442695
        %v5801 = vpow.pop %v5800
        %v5802 = vmul.f32 %v5793, 1.442695
        %v5803 = vpow.pop %v5802
        %v5804 = vmul.f32 %v5794, 1.442695
        %v5805 = vpow.pop %v5804
        %v5806 = vmul.f32 %v5795, 1.442695
        %v5807 = vpow.pop %v5806
        %v5808 = vmul.f32 %v5796, 1.442695
        %v5809 = vpow.pop %v5808
        %v5810 = vmul.f32 %v5797, 1.442695
        %v5811 = vpow.pop %v5810
        %v5812 = vmul.f32 %v5798, 1.442695
        %v5813 = vpow.pop %v5812
        %v5814 = vmul.f32 %v5799, 1.442695
        %v5815 = vpow.pop %v5814
        %v5816 = vsel %vm4399, %v5801, 0.0
        %5817 = vadd.xlane.f32.xlu0 %v5816
        %v5818 = vpop.xlane.xlu0 %5817
        %v5819 = vsel %vm4399, %v5803, 0.0
        %5820 = vadd.xlane.f32.xlu0 %v5819
        %v5821 = vpop.xlane.xlu0 %5820
        %v5822 = vsel %vm4399, %v5805, 0.0
        %5823 = vadd.xlane.f32.xlu0 %v5822
        %v5824 = vpop.xlane.xlu0 %5823
        %v5825 = vsel %vm4399, %v5807, 0.0
        %5826 = vadd.xlane.f32.xlu0 %v5825
        %v5827 = vpop.xlane.xlu0 %5826
        %v5828 = vsel %vm4399, %v5809, 0.0
        %5829 = vadd.xlane.f32.xlu0 %v5828
        %v5830 = vpop.xlane.xlu0 %5829
        %v5831 = vsel %vm4399, %v5811, 0.0
        %5832 = vadd.xlane.f32.xlu0 %v5831
        %v5833 = vpop.xlane.xlu0 %5832
        %v5834 = vsel %vm4399, %v5813, 0.0
        %5835 = vadd.xlane.f32.xlu0 %v5834
        %v5836 = vpop.xlane.xlu0 %5835
        %v5837 = vsel %vm4399, %v5815, 0.0
        %5838 = vadd.xlane.f32.xlu0 %v5837
        %v5839 = vpop.xlane.xlu0 %5838
        %v5840 = vrcp.pop %v5818
        %v5841 = vrcp.pop %v5821
        %v5842 = vrcp.pop %v5824
        %v5843 = vrcp.pop %v5827
        %v5844 = vrcp.pop %v5830
        %v5845 = vrcp.pop %v5833
        %v5846 = vrcp.pop %v5836
        %v5847 = vrcp.pop %v5839
        %v5848 = vmul.f32 %v5801, %v5840
        %v5849 = vmul.f32 %v5803, %v5841
        %v5850 = vmul.f32 %v5805, %v5842
        %v5851 = vmul.f32 %v5807, %v5843
        %v5852 = vmul.f32 %v5809, %v5844
        %v5853 = vmul.f32 %v5811, %v5845
        %v5854 = vmul.f32 %v5813, %v5846
        %v5855 = vmul.f32 %v5815, %v5847
        %v5856 = vpack.c.bf16 %v5849, %v5848
        %v5857 = vpack.c.bf16 %v5851, %v5850
        %v5858 = vpack.c.bf16 %v5853, %v5852
        %v5859 = vpack.c.bf16 %v5855, %v5854
        %v5861 = vsel %vm4399, %v5856, 0
        %5863 = vmatprep.subr.bf16.mxu0 0
        %5864 = vmatpush1.bf16.msra.mxu0 %v5592
        %5865 = vmatprep.subr.bf16.mxu0 0
        %5866 = vmatpush1.bf16.msra.mxu0 0
        %5867 = vmatprep.subr.bf16.mxu0 0
        %5868 = vmatpush1.bf16.msra.mxu0 0
        %5869 = vmatprep.subr.bf16.mxu0 0
        %5870 = vmatpush1.bf16.msra.mxu0 0
        %5871 = vmatprep.subr.bf16.mxu0 0
        %5872 = vmatpush1.bf16.msra.mxu0 0
        %5873 = vmatprep.subr.bf16.mxu0 0
        %5874 = vmatpush1.bf16.msra.mxu0 0
        %5875 = vmatprep.subr.bf16.mxu0 0
        %5876 = vmatpush1.bf16.msra.mxu0 0
        %5877 = vmatprep.subr.bf16.mxu0 0
        %5878 = vmatpush1.bf16.msra.mxu0 0
        %5879 = vmatprep.subr.bf16.mxu0 0
        %5880 = vmatpush1.bf16.msra.mxu0 0
        %5881 = vmatprep.subr.bf16.mxu0 0
        %5882 = vmatpush1.bf16.msra.mxu0 0
        %5883 = vmatprep.subr.bf16.mxu0 0
        %5884 = vmatpush1.bf16.msra.mxu0 0
        %5885 = vmatprep.subr.bf16.mxu0 0
        %5886 = vmatpush1.bf16.msra.mxu0 0
        %5887 = vmatprep.subr.bf16.mxu0 0
        %5888 = vmatpush1.bf16.msra.mxu0 0
        %5889 = vmatprep.subr.bf16.mxu0 0
        %5890 = vmatpush1.bf16.msra.mxu0 0
        %5891 = vmatprep.subr.bf16.mxu0 0
        %5892 = vmatpush1.bf16.msra.mxu0 0
        %5893 = vmatprep.subr.bf16.mxu0 0
        %5894 = vmatpush1.bf16.msra.mxu0 0
        %5895 = vmatprep.mubr.bf16.mxu0 0
        %5896 = vmatmul.mubr.bf16.gmra.mrb[0].mxu0 %v5861
        %v5897 = vpop.f32.mrb[0].mxu0
        %v5898 = vadd.f32 0.0, %v5897
        %v5899 = vpop.f32.mrb[0].mxu0
        %v5900 = vpop.f32.mrb[0].mxu0
        %v5901 = vadd.f32 0.0, %v5900
        %v5902 = vpop.f32.mrb[0].mxu0
        %5903 = vdwg.mxu0
        %v5905 = vsel %vm4399, %v5857, 0
        %5907 = vmatprep.subr.bf16.mxu0 0
        %5908 = vmatpush1.bf16.msra.mxu0 %v5593
        %5909 = vmatprep.subr.bf16.mxu0 0
        %5910 = vmatpush1.bf16.msra.mxu0 0
        %5911 = vmatprep.subr.bf16.mxu0 0
        %5912 = vmatpush1.bf16.msra.mxu0 0
        %5913 = vmatprep.subr.bf16.mxu0 0
        %5914 = vmatpush1.bf16.msra.mxu0 0
        %5915 = vmatprep.subr.bf16.mxu0 0
        %5916 = vmatpush1.bf16.msra.mxu0 0
        %5917 = vmatprep.subr.bf16.mxu0 0
        %5918 = vmatpush1.bf16.msra.mxu0 0
        %5919 = vmatprep.subr.bf16.mxu0 0
        %5920 = vmatpush1.bf16.msra.mxu0 0
        %5921 = vmatprep.subr.bf16.mxu0 0
        %5922 = vmatpush1.bf16.msra.mxu0 0
        %5923 = vmatprep.subr.bf16.mxu0 0
        %5924 = vmatpush1.bf16.msra.mxu0 0
        %5925 = vmatprep.subr.bf16.mxu0 0
        %5926 = vmatpush1.bf16.msra.mxu0 0
        %5927 = vmatprep.subr.bf16.mxu0 0
        %5928 = vmatpush1.bf16.msra.mxu0 0
        %5929 = vmatprep.subr.bf16.mxu0 0
        %5930 = vmatpush1.bf16.msra.mxu0 0
        %5931 = vmatprep.subr.bf16.mxu0 0
        %5932 = vmatpush1.bf16.msra.mxu0 0
        %5933 = vmatprep.subr.bf16.mxu0 0
        %5934 = vmatpush1.bf16.msra.mxu0 0
        %5935 = vmatprep.subr.bf16.mxu0 0
        %5936 = vmatpush1.bf16.msra.mxu0 0
        %5937 = vmatprep.subr.bf16.mxu0 0
        %5938 = vmatpush1.bf16.msra.mxu0 0
        %5939 = vmatprep.mubr.bf16.mxu0 0
        %5940 = vmatmul.mubr.bf16.gmra.mrb[0].mxu0 %v5905
        %v5941 = vpop.f32.mrb[0].mxu0
        %v5942 = vadd.f32 0.0, %v5941
        %v5943 = vpop.f32.mrb[0].mxu0
        %v5944 = vpop.f32.mrb[0].mxu0
        %v5945 = vadd.f32 0.0, %v5944
        %v5946 = vpop.f32.mrb[0].mxu0
        %5947 = vdwg.mxu0
        %v5949 = vsel %vm4399, %v5858, 0
        %5951 = vmatprep.subr.bf16.mxu0 0
        %5952 = vmatpush1.bf16.msra.mxu0 %v5594
        %5953 = vmatprep.subr.bf16.mxu0 0
        %5954 = vmatpush1.bf16.msra.mxu0 0
        %5955 = vmatprep.subr.bf16.mxu0 0
        %5956 = vmatpush1.bf16.msra.mxu0 0
        %5957 = vmatprep.subr.bf16.mxu0 0
        %5958 = vmatpush1.bf16.msra.mxu0 0
        %5959 = vmatprep.subr.bf16.mxu0 0
        %5960 = vmatpush1.bf16.msra.mxu0 0
        %5961 = vmatprep.subr.bf16.mxu0 0
        %5962 = vmatpush1.bf16.msra.mxu0 0
        %5963 = vmatprep.subr.bf16.mxu0 0
        %5964 = vmatpush1.bf16.msra.mxu0 0
        %5965 = vmatprep.subr.bf16.mxu0 0
        %5966 = vmatpush1.bf16.msra.mxu0 0
        %5967 = vmatprep.subr.bf16.mxu0 0
        %5968 = vmatpush1.bf16.msra.mxu0 0
        %5969 = vmatprep.subr.bf16.mxu0 0
        %5970 = vmatpush1.bf16.msra.mxu0 0
        %5971 = vmatprep.subr.bf16.mxu0 0
        %5972 = vmatpush1.bf16.msra.mxu0 0
        %5973 = vmatprep.subr.bf16.mxu0 0
        %5974 = vmatpush1.bf16.msra.mxu0 0
        %5975 = vmatprep.subr.bf16.mxu0 0
        %5976 = vmatpush1.bf16.msra.mxu0 0
        %5977 = vmatprep.subr.bf16.mxu0 0
        %5978 = vmatpush1.bf16.msra.mxu0 0
        %5979 = vmatprep.subr.bf16.mxu0 0
        %5980 = vmatpush1.bf16.msra.mxu0 0
        %5981 = vmatprep.subr.bf16.mxu0 0
        %5982 = vmatpush1.bf16.msra.mxu0 0
        %5983 = vmatprep.mubr.bf16.mxu0 0
        %5984 = vmatmul.mubr.bf16.gmra.mrb[0].mxu0 %v5949
        %v5985 = vpop.f32.mrb[0].mxu0
        %v5986 = vadd.f32 0.0, %v5985
        %v5987 = vpop.f32.mrb[0].mxu0
        %v5988 = vpop.f32.mrb[0].mxu0
        %v5989 = vadd.f32 0.0, %v5988
        %v5990 = vpop.f32.mrb[0].mxu0
        %5991 = vdwg.mxu0
        %v5993 = vsel %vm4399, %v5859, 0
        %5995 = vmatprep.subr.bf16.mxu0 0
        %5996 = vmatpush1.bf16.msra.mxu0 %v5595
        %5997 = vmatprep.subr.bf16.mxu0 0
        %5998 = vmatpush1.bf16.msra.mxu0 0
        %5999 = vmatprep.subr.bf16.mxu0 0
        %6000 = vmatpush1.bf16.msra.mxu0 0
        %6001 = vmatprep.subr.bf16.mxu0 0
        %6002 = vmatpush1.bf16.msra.mxu0 0
        %6003 = vmatprep.subr.bf16.mxu0 0
        %6004 = vmatpush1.bf16.msra.mxu0 0
        %6005 = vmatprep.subr.bf16.mxu0 0
        %6006 = vmatpush1.bf16.msra.mxu0 0
        %6007 = vmatprep.subr.bf16.mxu0 0
        %6008 = vmatpush1.bf16.msra.mxu0 0
        %6009 = vmatprep.subr.bf16.mxu0 0
        %6010 = vmatpush1.bf16.msra.mxu0 0
        %6011 = vmatprep.subr.bf16.mxu0 0
        %6012 = vmatpush1.bf16.msra.mxu0 0
        %6013 = vmatprep.subr.bf16.mxu0 0
        %6014 = vmatpush1.bf16.msra.mxu0 0
        %6015 = vmatprep.subr.bf16.mxu0 0
        %6016 = vmatpush1.bf16.msra.mxu0 0
        %6017 = vmatprep.subr.bf16.mxu0 0
        %6018 = vmatpush1.bf16.msra.mxu0 0
        %6019 = vmatprep.subr.bf16.mxu0 0
        %6020 = vmatpush1.bf16.msra.mxu0 0
        %6021 = vmatprep.subr.bf16.mxu0 0
        %6022 = vmatpush1.bf16.msra.mxu0 0
        %6023 = vmatprep.subr.bf16.mxu0 0
        %6024 = vmatpush1.bf16.msra.mxu0 0
        %6025 = vmatprep.subr.bf16.mxu0 0
        %6026 = vmatpush1.bf16.msra.mxu0 0
        %6027 = vmatprep.mubr.bf16.mxu0 0
        %6028 = vmatmul.mubr.bf16.gmra.mrb[0].mxu0 %v5993
        %v6029 = vpop.f32.mrb[0].mxu0
        %v6030 = vadd.f32 0.0, %v6029
        %v6031 = vpop.f32.mrb[0].mxu0
        %v6032 = vpop.f32.mrb[0].mxu0
        %v6033 = vadd.f32 0.0, %v6032
        %v6034 = vpop.f32.mrb[0].mxu0
        %6035 = vdwg.mxu0
        %v6036 = vpack.c.bf16 %v5901, %v5898
        %v6037 = vpack.c.bf16 %v5945, %v5942
        %v6038 = vpack.c.bf16 %v5989, %v5986
        %v6039 = vpack.c.bf16 %v6033, %v6030
        %v6040 = vpack.c.bf16 %v3294, %v3290
        %v6041 = vpack.c.bf16 %v3304, %v3300
        %v6042 = vpack.c.bf16 %v3314, %v3310
        %v6043 = vpack.c.bf16 %v3324, %v3320
        %v6044 = vpack.c.bf16 %v3732, %v3728
        %v6045 = vpack.c.bf16 %v3742, %v3738
        %v6046 = vpack.c.bf16 %v3752, %v3748
        %v6047 = vpack.c.bf16 %v3762, %v3758
        %v6048 = vpack.c.bf16 %v4170, %v4166
        %v6049 = vpack.c.bf16 %v4180, %v4176
        %v6050 = vpack.c.bf16 %v4190, %v4186
        %v6051 = vpack.c.bf16 %v4200, %v4196
        %6052 = vmatprep.subr.bf16.mxu0 0
        %6053 = vmatpush1.bf16.xpose.msra.mxu0 %v6044
        %6054 = vmatprep.subr.bf16.mxu0 0
        %6055 = vmatpush1.bf16.xpose.msra.mxu0 0
        %6056 = vmatprep.subr.bf16.mxu0 0
        %6057 = vmatpush1.bf16.xpose.msra.mxu0 0
        %6058 = vmatprep.subr.bf16.mxu0 0
        %6059 = vmatpush1.bf16.xpose.msra.mxu0 0
        %6060 = vmatprep.subr.bf16.mxu0 0
        %6061 = vmatpush1.bf16.xpose.msra.mxu0 0
        %6062 = vmatprep.subr.bf16.mxu0 0
        %6063 = vmatpush1.bf16.xpose.msra.mxu0 0
        %6064 = vmatprep.subr.bf16.mxu0 0
        %6065 = vmatpush1.bf16.xpose.msra.mxu0 0
        %6066 = vmatprep.subr.bf16.mxu0 0
        %6067 = vmatpush1.bf16.xpose.msra.mxu0 0
        %6068 = vmatprep.subr.bf16.mxu0 0
        %6069 = vmatpush1.bf16.xpose.msra.mxu0 0
        %6070 = vmatprep.subr.bf16.mxu0 0
        %6071 = vmatpush1.bf16.xpose.msra.mxu0 0
        %6072 = vmatprep.subr.bf16.mxu0 0
        %6073 = vmatpush1.bf16.xpose.msra.mxu0 0
        %6074 = vmatprep.subr.bf16.mxu0 0
        %6075 = vmatpush1.bf16.xpose.msra.mxu0 0
        %6076 = vmatprep.subr.bf16.mxu0 0
        %6077 = vmatpush1.bf16.xpose.msra.mxu0 0
        %6078 = vmatprep.subr.bf16.mxu0 0
        %6079 = vmatpush1.bf16.xpose.msra.mxu0 0
        %6080 = vmatprep.subr.bf16.mxu0 0
        %6081 = vmatpush1.bf16.xpose.msra.mxu0 0
        %6082 = vmatprep.subr.bf16.mxu0 0
        %6083 = vmatpush1.bf16.xpose.msra.mxu0 0
        %6084 = vmatprep.mubr.bf16.mxu0 0
        %6085 = vmatmul.mubr.bf16.gmra.mrb[0].mxu0 %v6040
        %v6086 = vpop.f32.mrb[0].mxu0
        %v6087 = vadd.f32 0.0, %v6086
        %v6088 = vpop.f32.mrb[0].mxu0
        %v6089 = vpop.f32.mrb[0].mxu0
        %v6090 = vadd.f32 0.0, %v6089
        %v6091 = vpop.f32.mrb[0].mxu0
        %6092 = vdwg.mxu0
        %6093 = vmatprep.subr.bf16.mxu0 0
        %6094 = vmatpush1.bf16.xpose.msra.mxu0 %v6045
        %6095 = vmatprep.subr.bf16.mxu0 0
        %6096 = vmatpush1.bf16.xpose.msra.mxu0 0
        %6097 = vmatprep.subr.bf16.mxu0 0
        %6098 = vmatpush1.bf16.xpose.msra.mxu0 0
        %6099 = vmatprep.subr.bf16.mxu0 0
        %6100 = vmatpush1.bf16.xpose.msra.mxu0 0
        %6101 = vmatprep.subr.bf16.mxu0 0
        %6102 = vmatpush1.bf16.xpose.msra.mxu0 0
        %6103 = vmatprep.subr.bf16.mxu0 0
        %6104 = vmatpush1.bf16.xpose.msra.mxu0 0
        %6105 = vmatprep.subr.bf16.mxu0 0
        %6106 = vmatpush1.bf16.xpose.msra.mxu0 0
        %6107 = vmatprep.subr.bf16.mxu0 0
        %6108 = vmatpush1.bf16.xpose.msra.mxu0 0
        %6109 = vmatprep.subr.bf16.mxu0 0
        %6110 = vmatpush1.bf16.xpose.msra.mxu0 0
        %6111 = vmatprep.subr.bf16.mxu0 0
        %6112 = vmatpush1.bf16.xpose.msra.mxu0 0
        %6113 = vmatprep.subr.bf16.mxu0 0
        %6114 = vmatpush1.bf16.xpose.msra.mxu0 0
        %6115 = vmatprep.subr.bf16.mxu0 0
        %6116 = vmatpush1.bf16.xpose.msra.mxu0 0
        %6117 = vmatprep.subr.bf16.mxu0 0
        %6118 = vmatpush1.bf16.xpose.msra.mxu0 0
        %6119 = vmatprep.subr.bf16.mxu0 0
        %6120 = vmatpush1.bf16.xpose.msra.mxu0 0
        %6121 = vmatprep.subr.bf16.mxu0 0
        %6122 = vmatpush1.bf16.xpose.msra.mxu0 0
        %6123 = vmatprep.subr.bf16.mxu0 0
        %6124 = vmatpush1.bf16.xpose.msra.mxu0 0
        %6125 = vmatprep.mubr.bf16.mxu0 0
        %6126 = vmatmul.mubr.bf16.gmra.mrb[0].mxu0 %v6041
        %v6127 = vpop.f32.mrb[0].mxu0
        %v6128 = vadd.f32 0.0, %v6127
        %v6129 = vpop.f32.mrb[0].mxu0
        %v6130 = vpop.f32.mrb[0].mxu0
        %v6131 = vadd.f32 0.0, %v6130
        %v6132 = vpop.f32.mrb[0].mxu0
        %6133 = vdwg.mxu0
        %6134 = vmatprep.subr.bf16.mxu0 0
        %6135 = vmatpush1.bf16.xpose.msra.mxu0 %v6046
        %6136 = vmatprep.subr.bf16.mxu0 0
        %6137 = vmatpush1.bf16.xpose.msra.mxu0 0
        %6138 = vmatprep.subr.bf16.mxu0 0
        %6139 = vmatpush1.bf16.xpose.msra.mxu0 0
        %6140 = vmatprep.subr.bf16.mxu0 0
        %6141 = vmatpush1.bf16.xpose.msra.mxu0 0
        %6142 = vmatprep.subr.bf16.mxu0 0
        %6143 = vmatpush1.bf16.xpose.msra.mxu0 0
        %6144 = vmatprep.subr.bf16.mxu0 0
        %6145 = vmatpush1.bf16.xpose.msra.mxu0 0
        %6146 = vmatprep.subr.bf16.mxu0 0
        %6147 = vmatpush1.bf16.xpose.msra.mxu0 0
        %6148 = vmatprep.subr.bf16.mxu0 0
        %6149 = vmatpush1.bf16.xpose.msra.mxu0 0
        %6150 = vmatprep.subr.bf16.mxu0 0
        %6151 = vmatpush1.bf16.xpose.msra.mxu0 0
        %6152 = vmatprep.subr.bf16.mxu0 0
        %6153 = vmatpush1.bf16.xpose.msra.mxu0 0
        %6154 = vmatprep.subr.bf16.mxu0 0
        %6155 = vmatpush1.bf16.xpose.msra.mxu0 0
        %6156 = vmatprep.subr.bf16.mxu0 0
        %6157 = vmatpush1.bf16.xpose.msra.mxu0 0
        %6158 = vmatprep.subr.bf16.mxu0 0
        %6159 = vmatpush1.bf16.xpose.msra.mxu0 0
        %6160 = vmatprep.subr.bf16.mxu0 0
        %6161 = vmatpush1.bf16.xpose.msra.mxu0 0
        %6162 = vmatprep.subr.bf16.mxu0 0
        %6163 = vmatpush1.bf16.xpose.msra.mxu0 0
        %6164 = vmatprep.subr.bf16.mxu0 0
        %6165 = vmatpush1.bf16.xpose.msra.mxu0 0
        %6166 = vmatprep.mubr.bf16.mxu0 0
        %6167 = vmatmul.mubr.bf16.gmra.mrb[0].mxu0 %v6042
        %v6168 = vpop.f32.mrb[0].mxu0
        %v6169 = vadd.f32 0.0, %v6168
        %v6170 = vpop.f32.mrb[0].mxu0
        %v6171 = vpop.f32.mrb[0].mxu0
        %v6172 = vadd.f32 0.0, %v6171
        %v6173 = vpop.f32.mrb[0].mxu0
        %6174 = vdwg.mxu0
        %6175 = vmatprep.subr.bf16.mxu0 0
        %6176 = vmatpush1.bf16.xpose.msra.mxu0 %v6047
        %6177 = vmatprep.subr.bf16.mxu0 0
        %6178 = vmatpush1.bf16.xpose.msra.mxu0 0
        %6179 = vmatprep.subr.bf16.mxu0 0
        %6180 = vmatpush1.bf16.xpose.msra.mxu0 0
        %6181 = vmatprep.subr.bf16.mxu0 0
        %6182 = vmatpush1.bf16.xpose.msra.mxu0 0
        %6183 = vmatprep.subr.bf16.mxu0 0
        %6184 = vmatpush1.bf16.xpose.msra.mxu0 0
        %6185 = vmatprep.subr.bf16.mxu0 0
        %6186 = vmatpush1.bf16.xpose.msra.mxu0 0
        %6187 = vmatprep.subr.bf16.mxu0 0
        %6188 = vmatpush1.bf16.xpose.msra.mxu0 0
        %6189 = vmatprep.subr.bf16.mxu0 0
        %6190 = vmatpush1.bf16.xpose.msra.mxu0 0
        %6191 = vmatprep.subr.bf16.mxu0 0
        %6192 = vmatpush1.bf16.xpose.msra.mxu0 0
        %6193 = vmatprep.subr.bf16.mxu0 0
        %6194 = vmatpush1.bf16.xpose.msra.mxu0 0
        %6195 = vmatprep.subr.bf16.mxu0 0
        %6196 = vmatpush1.bf16.xpose.msra.mxu0 0
        %6197 = vmatprep.subr.bf16.mxu0 0
        %6198 = vmatpush1.bf16.xpose.msra.mxu0 0
        %6199 = vmatprep.subr.bf16.mxu0 0
        %6200 = vmatpush1.bf16.xpose.msra.mxu0 0
        %6201 = vmatprep.subr.bf16.mxu0 0
        %6202 = vmatpush1.bf16.xpose.msra.mxu0 0
        %6203 = vmatprep.subr.bf16.mxu0 0
        %6204 = vmatpush1.bf16.xpose.msra.mxu0 0
        %6205 = vmatprep.subr.bf16.mxu0 0
        %6206 = vmatpush1.bf16.xpose.msra.mxu0 0
        %6207 = vmatprep.mubr.bf16.mxu0 0
        %6208 = vmatmul.mubr.bf16.gmra.mrb[0].mxu0 %v6043
        %v6209 = vpop.f32.mrb[0].mxu0
        %v6210 = vadd.f32 0.0, %v6209
        %v6211 = vpop.f32.mrb[0].mxu0
        %v6212 = vpop.f32.mrb[0].mxu0
        %v6213 = vadd.f32 0.0, %v6212
        %v6214 = vpop.f32.mrb[0].mxu0
        %6215 = vdwg.mxu0
        %v6216 = vsel %vm4389, %v6087, -1e+30
        %v6217 = vsel %vm4390, %v6090, -1e+30
        %v6218 = vsel %vm4389, %v6128, -1e+30
        %v6219 = vsel %vm4390, %v6131, -1e+30
        %v6220 = vsel %vm4389, %v6169, -1e+30
        %v6221 = vsel %vm4390, %v6172, -1e+30
        %v6222 = vsel %vm4389, %v6210, -1e+30
        %v6223 = vsel %vm4390, %v6213, -1e+30
        %v6224 = vsel %vm4399, %v6216, -inf
        %6225 = vmax.xlane.f32.xlu0 %v6224
        %v6226 = vpop.xlane.xlu0 %6225
        %v6227 = vsel %vm4399, %v6217, -inf
        %6228 = vmax.xlane.f32.xlu0 %v6227
        %v6229 = vpop.xlane.xlu0 %6228
        %v6230 = vsel %vm4399, %v6218, -inf
        %6231 = vmax.xlane.f32.xlu0 %v6230
        %v6232 = vpop.xlane.xlu0 %6231
        %v6233 = vsel %vm4399, %v6219, -inf
        %6234 = vmax.xlane.f32.xlu0 %v6233
        %v6235 = vpop.xlane.xlu0 %6234
        %v6236 = vsel %vm4399, %v6220, -inf
        %6237 = vmax.xlane.f32.xlu0 %v6236
        %v6238 = vpop.xlane.xlu0 %6237
        %v6239 = vsel %vm4399, %v6221, -inf
        %6240 = vmax.xlane.f32.xlu0 %v6239
        %v6241 = vpop.xlane.xlu0 %6240
        %v6242 = vsel %vm4399, %v6222, -inf
        %6243 = vmax.xlane.f32.xlu0 %v6242
        %v6244 = vpop.xlane.xlu0 %6243
        %v6245 = vsel %vm4399, %v6223, -inf
        %6246 = vmax.xlane.f32.xlu0 %v6245
        %v6247 = vpop.xlane.xlu0 %6246
        %v6248 = vsub.f32 %v6216, %v6226
        %v6249 = vsub.f32 %v6217, %v6229
        %v6250 = vsub.f32 %v6218, %v6232
        %v6251 = vsub.f32 %v6219, %v6235
        %v6252 = vsub.f32 %v6220, %v6238
        %v6253 = vsub.f32 %v6221, %v6241
        %v6254 = vsub.f32 %v6222, %v6244
        %v6255 = vsub.f32 %v6223, %v6247
        %v6256 = vmul.f32 %v6248, 1.442695
        %v6257 = vpow.pop %v6256
        %v6258 = vmul.f32 %v6249, 1.442695
        %v6259 = vpow.pop %v6258
        %v6260 = vmul.f32 %v6250, 1.442695
        %v6261 = vpow.pop %v6260
        %v6262 = vmul.f32 %v6251, 1.442695
        %v6263 = vpow.pop %v6262
        %v6264 = vmul.f32 %v6252, 1.442695
        %v6265 = vpow.pop %v6264
        %v6266 = vmul.f32 %v6253, 1.442695
        %v6267 = vpow.pop %v6266
        %v6268 = vmul.f32 %v6254, 1.442695
        %v6269 = vpow.pop %v6268
        %v6270 = vmul.f32 %v6255, 1.442695
        %v6271 = vpow.pop %v6270
        %v6272 = vsel %vm4399, %v6257, 0.0
        %6273 = vadd.xlane.f32.xlu0 %v6272
        %v6274 = vpop.xlane.xlu0 %6273
        %v6275 = vsel %vm4399, %v6259, 0.0
        %6276 = vadd.xlane.f32.xlu0 %v6275
        %v6277 = vpop.xlane.xlu0 %6276
        %v6278 = vsel %vm4399, %v6261, 0.0
        %6279 = vadd.xlane.f32.xlu0 %v6278
        %v6280 = vpop.xlane.xlu0 %6279
        %v6281 = vsel %vm4399, %v6263, 0.0
        %6282 = vadd.xlane.f32.xlu0 %v6281
        %v6283 = vpop.xlane.xlu0 %6282
        %v6284 = vsel %vm4399, %v6265, 0.0
        %6285 = vadd.xlane.f32.xlu0 %v6284
        %v6286 = vpop.xlane.xlu0 %6285
        %v6287 = vsel %vm4399, %v6267, 0.0
        %6288 = vadd.xlane.f32.xlu0 %v6287
        %v6289 = vpop.xlane.xlu0 %6288
        %v6290 = vsel %vm4399, %v6269, 0.0
        %6291 = vadd.xlane.f32.xlu0 %v6290
        %v6292 = vpop.xlane.xlu0 %6291
        %v6293 = vsel %vm4399, %v6271, 0.0
        %6294 = vadd.xlane.f32.xlu0 %v6293
        %v6295 = vpop.xlane.xlu0 %6294
        %v6296 = vrcp.pop %v6274
        %v6297 = vrcp.pop %v6277
        %v6298 = vrcp.pop %v6280
        %v6299 = vrcp.pop %v6283
        %v6300 = vrcp.pop %v6286
        %v6301 = vrcp.pop %v6289
        %v6302 = vrcp.pop %v6292
        %v6303 = vrcp.pop %v6295
        %v6304 = vmul.f32 %v6257, %v6296
        %v6305 = vmul.f32 %v6259, %v6297
        %v6306 = vmul.f32 %v6261, %v6298
        %v6307 = vmul.f32 %v6263, %v6299
        %v6308 = vmul.f32 %v6265, %v6300
        %v6309 = vmul.f32 %v6267, %v6301
        %v6310 = vmul.f32 %v6269, %v6302
        %v6311 = vmul.f32 %v6271, %v6303
        %v6312 = vpack.c.bf16 %v6305, %v6304
        %v6313 = vpack.c.bf16 %v6307, %v6306
        %v6314 = vpack.c.bf16 %v6309, %v6308
        %v6315 = vpack.c.bf16 %v6311, %v6310
        %v6317 = vsel %vm4399, %v6312, 0
        %6319 = vmatprep.subr.bf16.mxu0 0
        %6320 = vmatpush1.bf16.msra.mxu0 %v6048
        %6321 = vmatprep.subr.bf16.mxu0 0
        %6322 = vmatpush1.bf16.msra.mxu0 0
        %6323 = vmatprep.subr.bf16.mxu0 0
        %6324 = vmatpush1.bf16.msra.mxu0 0
        %6325 = vmatprep.subr.bf16.mxu0 0
        %6326 = vmatpush1.bf16.msra.mxu0 0
        %6327 = vmatprep.subr.bf16.mxu0 0
        %6328 = vmatpush1.bf16.msra.mxu0 0
        %6329 = vmatprep.subr.bf16.mxu0 0
        %6330 = vmatpush1.bf16.msra.mxu0 0
        %6331 = vmatprep.subr.bf16.mxu0 0
        %6332 = vmatpush1.bf16.msra.mxu0 0
        %6333 = vmatprep.subr.bf16.mxu0 0
        %6334 = vmatpush1.bf16.msra.mxu0 0
        %6335 = vmatprep.subr.bf16.mxu0 0
        %6336 = vmatpush1.bf16.msra.mxu0 0
        %6337 = vmatprep.subr.bf16.mxu0 0
        %6338 = vmatpush1.bf16.msra.mxu0 0
        %6339 = vmatprep.subr.bf16.mxu0 0
        %6340 = vmatpush1.bf16.msra.mxu0 0
        %6341 = vmatprep.subr.bf16.mxu0 0
        %6342 = vmatpush1.bf16.msra.mxu0 0
        %6343 = vmatprep.subr.bf16.mxu0 0
        %6344 = vmatpush1.bf16.msra.mxu0 0
        %6345 = vmatprep.subr.bf16.mxu0 0
        %6346 = vmatpush1.bf16.msra.mxu0 0
        %6347 = vmatprep.subr.bf16.mxu0 0
        %6348 = vmatpush1.bf16.msra.mxu0 0
        %6349 = vmatprep.subr.bf16.mxu0 0
        %6350 = vmatpush1.bf16.msra.mxu0 0
        %6351 = vmatprep.mubr.bf16.mxu0 0
        %6352 = vmatmul.mubr.bf16.gmra.mrb[0].mxu0 %v6317
        %v6353 = vpop.f32.mrb[0].mxu0
        %v6354 = vadd.f32 0.0, %v6353
        %v6355 = vpop.f32.mrb[0].mxu0
        %v6356 = vpop.f32.mrb[0].mxu0
        %v6357 = vadd.f32 0.0, %v6356
        %v6358 = vpop.f32.mrb[0].mxu0
        %6359 = vdwg.mxu0
        %v6361 = vsel %vm4399, %v6313, 0
        %6363 = vmatprep.subr.bf16.mxu0 0
        %6364 = vmatpush1.bf16.msra.mxu0 %v6049
        %6365 = vmatprep.subr.bf16.mxu0 0
        %6366 = vmatpush1.bf16.msra.mxu0 0
        %6367 = vmatprep.subr.bf16.mxu0 0
        %6368 = vmatpush1.bf16.msra.mxu0 0
        %6369 = vmatprep.subr.bf16.mxu0 0
        %6370 = vmatpush1.bf16.msra.mxu0 0
        %6371 = vmatprep.subr.bf16.mxu0 0
        %6372 = vmatpush1.bf16.msra.mxu0 0
        %6373 = vmatprep.subr.bf16.mxu0 0
        %6374 = vmatpush1.bf16.msra.mxu0 0
        %6375 = vmatprep.subr.bf16.mxu0 0
        %6376 = vmatpush1.bf16.msra.mxu0 0
        %6377 = vmatprep.subr.bf16.mxu0 0
        %6378 = vmatpush1.bf16.msra.mxu0 0
        %6379 = vmatprep.subr.bf16.mxu0 0
        %6380 = vmatpush1.bf16.msra.mxu0 0
        %6381 = vmatprep.subr.bf16.mxu0 0
        %6382 = vmatpush1.bf16.msra.mxu0 0
        %6383 = vmatprep.subr.bf16.mxu0 0
        %6384 = vmatpush1.bf16.msra.mxu0 0
        %6385 = vmatprep.subr.bf16.mxu0 0
        %6386 = vmatpush1.bf16.msra.mxu0 0
        %6387 = vmatprep.subr.bf16.mxu0 0
        %6388 = vmatpush1.bf16.msra.mxu0 0
        %6389 = vmatprep.subr.bf16.mxu0 0
        %6390 = vmatpush1.bf16.msra.mxu0 0
        %6391 = vmatprep.subr.bf16.mxu0 0
        %6392 = vmatpush1.bf16.msra.mxu0 0
        %6393 = vmatprep.subr.bf16.mxu0 0
        %6394 = vmatpush1.bf16.msra.mxu0 0
        %6395 = vmatprep.mubr.bf16.mxu0 0
        %6396 = vmatmul.mubr.bf16.gmra.mrb[0].mxu0 %v6361
        %v6397 = vpop.f32.mrb[0].mxu0
        %v6398 = vadd.f32 0.0, %v6397
        %v6399 = vpop.f32.mrb[0].mxu0
        %v6400 = vpop.f32.mrb[0].mxu0
        %v6401 = vadd.f32 0.0, %v6400
        %v6402 = vpop.f32.mrb[0].mxu0
        %6403 = vdwg.mxu0
        %v6405 = vsel %vm4399, %v6314, 0
        %6407 = vmatprep.subr.bf16.mxu0 0
        %6408 = vmatpush1.bf16.msra.mxu0 %v6050
        %6409 = vmatprep.subr.bf16.mxu0 0
        %6410 = vmatpush1.bf16.msra.mxu0 0
        %6411 = vmatprep.subr.bf16.mxu0 0
        %6412 = vmatpush1.bf16.msra.mxu0 0
        %6413 = vmatprep.subr.bf16.mxu0 0
        %6414 = vmatpush1.bf16.msra.mxu0 0
        %6415 = vmatprep.subr.bf16.mxu0 0
        %6416 = vmatpush1.bf16.msra.mxu0 0
        %6417 = vmatprep.subr.bf16.mxu0 0
        %6418 = vmatpush1.bf16.msra.mxu0 0
        %6419 = vmatprep.subr.bf16.mxu0 0
        %6420 = vmatpush1.bf16.msra.mxu0 0
        %6421 = vmatprep.subr.bf16.mxu0 0
        %6422 = vmatpush1.bf16.msra.mxu0 0
        %6423 = vmatprep.subr.bf16.mxu0 0
        %6424 = vmatpush1.bf16.msra.mxu0 0
        %6425 = vmatprep.subr.bf16.mxu0 0
        %6426 = vmatpush1.bf16.msra.mxu0 0
        %6427 = vmatprep.subr.bf16.mxu0 0
        %6428 = vmatpush1.bf16.msra.mxu0 0
        %6429 = vmatprep.subr.bf16.mxu0 0
        %6430 = vmatpush1.bf16.msra.mxu0 0
        %6431 = vmatprep.subr.bf16.mxu0 0
        %6432 = vmatpush1.bf16.msra.mxu0 0
        %6433 = vmatprep.subr.bf16.mxu0 0
        %6434 = vmatpush1.bf16.msra.mxu0 0
        %6435 = vmatprep.subr.bf16.mxu0 0
        %6436 = vmatpush1.bf16.msra.mxu0 0
        %6437 = vmatprep.subr.bf16.mxu0 0
        %6438 = vmatpush1.bf16.msra.mxu0 0
        %6439 = vmatprep.mubr.bf16.mxu0 0
        %6440 = vmatmul.mubr.bf16.gmra.mrb[0].mxu0 %v6405
        %v6441 = vpop.f32.mrb[0].mxu0
        %v6442 = vadd.f32 0.0, %v6441
        %v6443 = vpop.f32.mrb[0].mxu0
        %v6444 = vpop.f32.mrb[0].mxu0
        %v6445 = vadd.f32 0.0, %v6444
        %v6446 = vpop.f32.mrb[0].mxu0
        %6447 = vdwg.mxu0
        %v6449 = vsel %vm4399, %v6315, 0
        %6451 = vmatprep.subr.bf16.mxu0 0
        %6452 = vmatpush1.bf16.msra.mxu0 %v6051
        %6453 = vmatprep.subr.bf16.mxu0 0
        %6454 = vmatpush1.bf16.msra.mxu0 0
        %6455 = vmatprep.subr.bf16.mxu0 0
        %6456 = vmatpush1.bf16.msra.mxu0 0
        %6457 = vmatprep.subr.bf16.mxu0 0
        %6458 = vmatpush1.bf16.msra.mxu0 0
        %6459 = vmatprep.subr.bf16.mxu0 0
        %6460 = vmatpush1.bf16.msra.mxu0 0
        %6461 = vmatprep.subr.bf16.mxu0 0
        %6462 = vmatpush1.bf16.msra.mxu0 0
        %6463 = vmatprep.subr.bf16.mxu0 0
        %6464 = vmatpush1.bf16.msra.mxu0 0
        %6465 = vmatprep.subr.bf16.mxu0 0
        %6466 = vmatpush1.bf16.msra.mxu0 0
        %6467 = vmatprep.subr.bf16.mxu0 0
        %6468 = vmatpush1.bf16.msra.mxu0 0
        %6469 = vmatprep.subr.bf16.mxu0 0
        %6470 = vmatpush1.bf16.msra.mxu0 0
        %6471 = vmatprep.subr.bf16.mxu0 0
        %6472 = vmatpush1.bf16.msra.mxu0 0
        %6473 = vmatprep.subr.bf16.mxu0 0
        %6474 = vmatpush1.bf16.msra.mxu0 0
        %6475 = vmatprep.subr.bf16.mxu0 0
        %6476 = vmatpush1.bf16.msra.mxu0 0
        %6477 = vmatprep.subr.bf16.mxu0 0
        %6478 = vmatpush1.bf16.msra.mxu0 0
        %6479 = vmatprep.subr.bf16.mxu0 0
        %6480 = vmatpush1.bf16.msra.mxu0 0
        %6481 = vmatprep.subr.bf16.mxu0 0
        %6482 = vmatpush1.bf16.msra.mxu0 0
        %6483 = vmatprep.mubr.bf16.mxu0 0
        %6484 = vmatmul.mubr.bf16.gmra.mrb[0].mxu0 %v6449
        %v6485 = vpop.f32.mrb[0].mxu0
        %v6486 = vadd.f32 0.0, %v6485
        %v6487 = vpop.f32.mrb[0].mxu0
        %v6488 = vpop.f32.mrb[0].mxu0
        %v6489 = vadd.f32 0.0, %v6488
        %v6490 = vpop.f32.mrb[0].mxu0
        %6491 = vdwg.mxu0
        %v6492 = vpack.c.bf16 %v6357, %v6354
        %v6493 = vpack.c.bf16 %v6401, %v6398
        %v6494 = vpack.c.bf16 %v6445, %v6442
        %v6495 = vpack.c.bf16 %v6489, %v6486
        %v6496 = vpack.c.bf16 %v3296, %v3292
        %v6497 = vpack.c.bf16 %v3306, %v3302
        %v6498 = vpack.c.bf16 %v3316, %v3312
        %v6499 = vpack.c.bf16 %v3326, %v3322
        %v6500 = vpack.c.bf16 %v3734, %v3730
        %v6501 = vpack.c.bf16 %v3744, %v3740
        %v6502 = vpack.c.bf16 %v3754, %v3750
        %v6503 = vpack.c.bf16 %v3764, %v3760
        %v6504 = vpack.c.bf16 %v4172, %v4168
        %v6505 = vpack.c.bf16 %v4182, %v4178
        %v6506 = vpack.c.bf16 %v4192, %v4188
        %v6507 = vpack.c.bf16 %v4202, %v4198
        %6508 = vmatprep.subr.bf16.mxu0 0
        %6509 = vmatpush1.bf16.xpose.msra.mxu0 %v6500
        %6510 = vmatprep.subr.bf16.mxu0 0
        %6511 = vmatpush1.bf16.xpose.msra.mxu0 0
        %6512 = vmatprep.subr.bf16.mxu0 0
        %6513 = vmatpush1.bf16.xpose.msra.mxu0 0
        %6514 = vmatprep.subr.bf16.mxu0 0
        %6515 = vmatpush1.bf16.xpose.msra.mxu0 0
        %6516 = vmatprep.subr.bf16.mxu0 0
        %6517 = vmatpush1.bf16.xpose.msra.mxu0 0
        %6518 = vmatprep.subr.bf16.mxu0 0
        %6519 = vmatpush1.bf16.xpose.msra.mxu0 0
        %6520 = vmatprep.subr.bf16.mxu0 0
        %6521 = vmatpush1.bf16.xpose.msra.mxu0 0
        %6522 = vmatprep.subr.bf16.mxu0 0
        %6523 = vmatpush1.bf16.xpose.msra.mxu0 0
        %6524 = vmatprep.subr.bf16.mxu0 0
        %6525 = vmatpush1.bf16.xpose.msra.mxu0 0
        %6526 = vmatprep.subr.bf16.mxu0 0
        %6527 = vmatpush1.bf16.xpose.msra.mxu0 0
        %6528 = vmatprep.subr.bf16.mxu0 0
        %6529 = vmatpush1.bf16.xpose.msra.mxu0 0
        %6530 = vmatprep.subr.bf16.mxu0 0
        %6531 = vmatpush1.bf16.xpose.msra.mxu0 0
        %6532 = vmatprep.subr.bf16.mxu0 0
        %6533 = vmatpush1.bf16.xpose.msra.mxu0 0
        %6534 = vmatprep.subr.bf16.mxu0 0
        %6535 = vmatpush1.bf16.xpose.msra.mxu0 0
        %6536 = vmatprep.subr.bf16.mxu0 0
        %6537 = vmatpush1.bf16.xpose.msra.mxu0 0
        %6538 = vmatprep.subr.bf16.mxu0 0
        %6539 = vmatpush1.bf16.xpose.msra.mxu0 0
        %6540 = vmatprep.mubr.bf16.mxu0 0
        %6541 = vmatmul.mubr.bf16.gmra.mrb[0].mxu0 %v6496
        %v6542 = vpop.f32.mrb[0].mxu0
        %v6543 = vadd.f32 0.0, %v6542
        %v6544 = vpop.f32.mrb[0].mxu0
        %v6545 = vpop.f32.mrb[0].mxu0
        %v6546 = vadd.f32 0.0, %v6545
        %v6547 = vpop.f32.mrb[0].mxu0
        %6548 = vdwg.mxu0
        %6549 = vmatprep.subr.bf16.mxu0 0
        %6550 = vmatpush1.bf16.xpose.msra.mxu0 %v6501
        %6551 = vmatprep.subr.bf16.mxu0 0
        %6552 = vmatpush1.bf16.xpose.msra.mxu0 0
        %6553 = vmatprep.subr.bf16.mxu0 0
        %6554 = vmatpush1.bf16.xpose.msra.mxu0 0
        %6555 = vmatprep.subr.bf16.mxu0 0
        %6556 = vmatpush1.bf16.xpose.msra.mxu0 0
        %6557 = vmatprep.subr.bf16.mxu0 0
        %6558 = vmatpush1.bf16.xpose.msra.mxu0 0
        %6559 = vmatprep.subr.bf16.mxu0 0
        %6560 = vmatpush1.bf16.xpose.msra.mxu0 0
        %6561 = vmatprep.subr.bf16.mxu0 0
        %6562 = vmatpush1.bf16.xpose.msra.mxu0 0
        %6563 = vmatprep.subr.bf16.mxu0 0
        %6564 = vmatpush1.bf16.xpose.msra.mxu0 0
        %6565 = vmatprep.subr.bf16.mxu0 0
        %6566 = vmatpush1.bf16.xpose.msra.mxu0 0
        %6567 = vmatprep.subr.bf16.mxu0 0
        %6568 = vmatpush1.bf16.xpose.msra.mxu0 0
        %6569 = vmatprep.subr.bf16.mxu0 0
        %6570 = vmatpush1.bf16.xpose.msra.mxu0 0
        %6571 = vmatprep.subr.bf16.mxu0 0
        %6572 = vmatpush1.bf16.xpose.msra.mxu0 0
        %6573 = vmatprep.subr.bf16.mxu0 0
        %6574 = vmatpush1.bf16.xpose.msra.mxu0 0
        %6575 = vmatprep.subr.bf16.mxu0 0
        %6576 = vmatpush1.bf16.xpose.msra.mxu0 0
        %6577 = vmatprep.subr.bf16.mxu0 0
        %6578 = vmatpush1.bf16.xpose.msra.mxu0 0
        %6579 = vmatprep.subr.bf16.mxu0 0
        %6580 = vmatpush1.bf16.xpose.msra.mxu0 0
        %6581 = vmatprep.mubr.bf16.mxu0 0
        %6582 = vmatmul.mubr.bf16.gmra.mrb[0].mxu0 %v6497
        %v6583 = vpop.f32.mrb[0].mxu0
        %v6584 = vadd.f32 0.0, %v6583
        %v6585 = vpop.f32.mrb[0].mxu0
        %v6586 = vpop.f32.mrb[0].mxu0
        %v6587 = vadd.f32 0.0, %v6586
        %v6588 = vpop.f32.mrb[0].mxu0
        %6589 = vdwg.mxu0
        %6590 = vmatprep.subr.bf16.mxu0 0
        %6591 = vmatpush1.bf16.xpose.msra.mxu0 %v6502
        %6592 = vmatprep.subr.bf16.mxu0 0
        %6593 = vmatpush1.bf16.xpose.msra.mxu0 0
        %6594 = vmatprep.subr.bf16.mxu0 0
        %6595 = vmatpush1.bf16.xpose.msra.mxu0 0
        %6596 = vmatprep.subr.bf16.mxu0 0
        %6597 = vmatpush1.bf16.xpose.msra.mxu0 0
        %6598 = vmatprep.subr.bf16.mxu0 0
        %6599 = vmatpush1.bf16.xpose.msra.mxu0 0
        %6600 = vmatprep.subr.bf16.mxu0 0
        %6601 = vmatpush1.bf16.xpose.msra.mxu0 0
        %6602 = vmatprep.subr.bf16.mxu0 0
        %6603 = vmatpush1.bf16.xpose.msra.mxu0 0
        %6604 = vmatprep.subr.bf16.mxu0 0
        %6605 = vmatpush1.bf16.xpose.msra.mxu0 0
        %6606 = vmatprep.subr.bf16.mxu0 0
        %6607 = vmatpush1.bf16.xpose.msra.mxu0 0
        %6608 = vmatprep.subr.bf16.mxu0 0
        %6609 = vmatpush1.bf16.xpose.msra.mxu0 0
        %6610 = vmatprep.subr.bf16.mxu0 0
        %6611 = vmatpush1.bf16.xpose.msra.mxu0 0
        %6612 = vmatprep.subr.bf16.mxu0 0
        %6613 = vmatpush1.bf16.xpose.msra.mxu0 0
        %6614 = vmatprep.subr.bf16.mxu0 0
        %6615 = vmatpush1.bf16.xpose.msra.mxu0 0
        %6616 = vmatprep.subr.bf16.mxu0 0
        %6617 = vmatpush1.bf16.xpose.msra.mxu0 0
        %6618 = vmatprep.subr.bf16.mxu0 0
        %6619 = vmatpush1.bf16.xpose.msra.mxu0 0
        %6620 = vmatprep.subr.bf16.mxu0 0
        %6621 = vmatpush1.bf16.xpose.msra.mxu0 0
        %6622 = vmatprep.mubr.bf16.mxu0 0
        %6623 = vmatmul.mubr.bf16.gmra.mrb[0].mxu0 %v6498
        %v6624 = vpop.f32.mrb[0].mxu0
        %v6625 = vadd.f32 0.0, %v6624
        %v6626 = vpop.f32.mrb[0].mxu0
        %v6627 = vpop.f32.mrb[0].mxu0
        %v6628 = vadd.f32 0.0, %v6627
        %v6629 = vpop.f32.mrb[0].mxu0
        %6630 = vdwg.mxu0
        %6631 = vmatprep.subr.bf16.mxu0 0
        %6632 = vmatpush1.bf16.xpose.msra.mxu0 %v6503
        %6633 = vmatprep.subr.bf16.mxu0 0
        %6634 = vmatpush1.bf16.xpose.msra.mxu0 0
        %6635 = vmatprep.subr.bf16.mxu0 0
        %6636 = vmatpush1.bf16.xpose.msra.mxu0 0
        %6637 = vmatprep.subr.bf16.mxu0 0
        %6638 = vmatpush1.bf16.xpose.msra.mxu0 0
        %6639 = vmatprep.subr.bf16.mxu0 0
        %6640 = vmatpush1.bf16.xpose.msra.mxu0 0
        %6641 = vmatprep.subr.bf16.mxu0 0
        %6642 = vmatpush1.bf16.xpose.msra.mxu0 0
        %6643 = vmatprep.subr.bf16.mxu0 0
        %6644 = vmatpush1.bf16.xpose.msra.mxu0 0
        %6645 = vmatprep.subr.bf16.mxu0 0
        %6646 = vmatpush1.bf16.xpose.msra.mxu0 0
        %6647 = vmatprep.subr.bf16.mxu0 0
        %6648 = vmatpush1.bf16.xpose.msra.mxu0 0
        %6649 = vmatprep.subr.bf16.mxu0 0
        %6650 = vmatpush1.bf16.xpose.msra.mxu0 0
        %6651 = vmatprep.subr.bf16.mxu0 0
        %6652 = vmatpush1.bf16.xpose.msra.mxu0 0
        %6653 = vmatprep.subr.bf16.mxu0 0
        %6654 = vmatpush1.bf16.xpose.msra.mxu0 0
        %6655 = vmatprep.subr.bf16.mxu0 0
        %6656 = vmatpush1.bf16.xpose.msra.mxu0 0
        %6657 = vmatprep.subr.bf16.mxu0 0
        %6658 = vmatpush1.bf16.xpose.msra.mxu0 0
        %6659 = vmatprep.subr.bf16.mxu0 0
        %6660 = vmatpush1.bf16.xpose.msra.mxu0 0
        %6661 = vmatprep.subr.bf16.mxu0 0
        %6662 = vmatpush1.bf16.xpose.msra.mxu0 0
        %6663 = vmatprep.mubr.bf16.mxu0 0
        %6664 = vmatmul.mubr.bf16.gmra.mrb[0].mxu0 %v6499
        %v6665 = vpop.f32.mrb[0].mxu0
        %v6666 = vadd.f32 0.0, %v6665
        %v6667 = vpop.f32.mrb[0].mxu0
        %v6668 = vpop.f32.mrb[0].mxu0
        %v6669 = vadd.f32 0.0, %v6668
        %v6670 = vpop.f32.mrb[0].mxu0
        %6671 = vdwg.mxu0
        %v6672 = vsel %vm4389, %v6543, -1e+30
        %v6673 = vsel %vm4390, %v6546, -1e+30
        %v6674 = vsel %vm4389, %v6584, -1e+30
        %v6675 = vsel %vm4390, %v6587, -1e+30
        %v6676 = vsel %vm4389, %v6625, -1e+30
        %v6677 = vsel %vm4390, %v6628, -1e+30
        %v6678 = vsel %vm4389, %v6666, -1e+30
        %v6679 = vsel %vm4390, %v6669, -1e+30
        %v6680 = vsel %vm4399, %v6672, -inf
        %6681 = vmax.xlane.f32.xlu0 %v6680
        %v6682 = vpop.xlane.xlu0 %6681
        %v6683 = vsel %vm4399, %v6673, -inf
        %6684 = vmax.xlane.f32.xlu0 %v6683
        %v6685 = vpop.xlane.xlu0 %6684
        %v6686 = vsel %vm4399, %v6674, -inf
        %6687 = vmax.xlane.f32.xlu0 %v6686
        %v6688 = vpop.xlane.xlu0 %6687
        %v6689 = vsel %vm4399, %v6675, -inf
        %6690 = vmax.xlane.f32.xlu0 %v6689
        %v6691 = vpop.xlane.xlu0 %6690
        %v6692 = vsel %vm4399, %v6676, -inf
        %6693 = vmax.xlane.f32.xlu0 %v6692
        %v6694 = vpop.xlane.xlu0 %6693
        %v6695 = vsel %vm4399, %v6677, -inf
        %6696 = vmax.xlane.f32.xlu0 %v6695
        %v6697 = vpop.xlane.xlu0 %6696
        %v6698 = vsel %vm4399, %v6678, -inf
        %6699 = vmax.xlane.f32.xlu0 %v6698
        %v6700 = vpop.xlane.xlu0 %6699
        %v6701 = vsel %vm4399, %v6679, -inf
        %6702 = vmax.xlane.f32.xlu0 %v6701
        %v6703 = vpop.xlane.xlu0 %6702
        %v6704 = vsub.f32 %v6672, %v6682
        %v6705 = vsub.f32 %v6673, %v6685
        %v6706 = vsub.f32 %v6674, %v6688
        %v6707 = vsub.f32 %v6675, %v6691
        %v6708 = vsub.f32 %v6676, %v6694
        %v6709 = vsub.f32 %v6677, %v6697
        %v6710 = vsub.f32 %v6678, %v6700
        %v6711 = vsub.f32 %v6679, %v6703
        %v6712 = vmul.f32 %v6704, 1.442695
        %v6713 = vpow.pop %v6712
        %v6714 = vmul.f32 %v6705, 1.442695
        %v6715 = vpow.pop %v6714
        %v6716 = vmul.f32 %v6706, 1.442695
        %v6717 = vpow.pop %v6716
        %v6718 = vmul.f32 %v6707, 1.442695
        %v6719 = vpow.pop %v6718
        %v6720 = vmul.f32 %v6708, 1.442695
        %v6721 = vpow.pop %v6720
        %v6722 = vmul.f32 %v6709, 1.442695
        %v6723 = vpow.pop %v6722
        %v6724 = vmul.f32 %v6710, 1.442695
        %v6725 = vpow.pop %v6724
        %v6726 = vmul.f32 %v6711, 1.442695
        %v6727 = vpow.pop %v6726
        %v6728 = vsel %vm4399, %v6713, 0.0
        %6729 = vadd.xlane.f32.xlu0 %v6728
        %v6730 = vpop.xlane.xlu0 %6729
        %v6731 = vsel %vm4399, %v6715, 0.0
        %6732 = vadd.xlane.f32.xlu0 %v6731
        %v6733 = vpop.xlane.xlu0 %6732
        %v6734 = vsel %vm4399, %v6717, 0.0
        %6735 = vadd.xlane.f32.xlu0 %v6734
        %v6736 = vpop.xlane.xlu0 %6735
        %v6737 = vsel %vm4399, %v6719, 0.0
        %6738 = vadd.xlane.f32.xlu0 %v6737
        %v6739 = vpop.xlane.xlu0 %6738
        %v6740 = vsel %vm4399, %v6721, 0.0
        %6741 = vadd.xlane.f32.xlu0 %v6740
        %v6742 = vpop.xlane.xlu0 %6741
        %v6743 = vsel %vm4399, %v6723, 0.0
        %6744 = vadd.xlane.f32.xlu0 %v6743
        %v6745 = vpop.xlane.xlu0 %6744
        %v6746 = vsel %vm4399, %v6725, 0.0
        %6747 = vadd.xlane.f32.xlu0 %v6746
        %v6748 = vpop.xlane.xlu0 %6747
        %v6749 = vsel %vm4399, %v6727, 0.0
        %6750 = vadd.xlane.f32.xlu0 %v6749
        %v6751 = vpop.xlane.xlu0 %6750
        %v6752 = vrcp.pop %v6730
        %v6753 = vrcp.pop %v6733
        %v6754 = vrcp.pop %v6736
        %v6755 = vrcp.pop %v6739
        %v6756 = vrcp.pop %v6742
        %v6757 = vrcp.pop %v6745
        %v6758 = vrcp.pop %v6748
        %v6759 = vrcp.pop %v6751
        %v6760 = vmul.f32 %v6713, %v6752
        %v6761 = vmul.f32 %v6715, %v6753
        %v6762 = vmul.f32 %v6717, %v6754
        %v6763 = vmul.f32 %v6719, %v6755
        %v6764 = vmul.f32 %v6721, %v6756
        %v6765 = vmul.f32 %v6723, %v6757
        %v6766 = vmul.f32 %v6725, %v6758
        %v6767 = vmul.f32 %v6727, %v6759
        %v6768 = vpack.c.bf16 %v6761, %v6760
        %v6769 = vpack.c.bf16 %v6763, %v6762
        %v6770 = vpack.c.bf16 %v6765, %v6764
        %v6771 = vpack.c.bf16 %v6767, %v6766
        %v6773 = vsel %vm4399, %v6768, 0
        %6775 = vmatprep.subr.bf16.mxu0 0
        %6776 = vmatpush1.bf16.msra.mxu0 %v6504
        %6777 = vmatprep.subr.bf16.mxu0 0
        %6778 = vmatpush1.bf16.msra.mxu0 0
        %6779 = vmatprep.subr.bf16.mxu0 0
        %6780 = vmatpush1.bf16.msra.mxu0 0
        %6781 = vmatprep.subr.bf16.mxu0 0
        %6782 = vmatpush1.bf16.msra.mxu0 0
        %6783 = vmatprep.subr.bf16.mxu0 0
        %6784 = vmatpush1.bf16.msra.mxu0 0
        %6785 = vmatprep.subr.bf16.mxu0 0
        %6786 = vmatpush1.bf16.msra.mxu0 0
        %6787 = vmatprep.subr.bf16.mxu0 0
        %6788 = vmatpush1.bf16.msra.mxu0 0
        %6789 = vmatprep.subr.bf16.mxu0 0
        %6790 = vmatpush1.bf16.msra.mxu0 0
        %6791 = vmatprep.subr.bf16.mxu0 0
        %6792 = vmatpush1.bf16.msra.mxu0 0
        %6793 = vmatprep.subr.bf16.mxu0 0
        %6794 = vmatpush1.bf16.msra.mxu0 0
        %6795 = vmatprep.subr.bf16.mxu0 0
        %6796 = vmatpush1.bf16.msra.mxu0 0
        %6797 = vmatprep.subr.bf16.mxu0 0
        %6798 = vmatpush1.bf16.msra.mxu0 0
        %6799 = vmatprep.subr.bf16.mxu0 0
        %6800 = vmatpush1.bf16.msra.mxu0 0
        %6801 = vmatprep.subr.bf16.mxu0 0
        %6802 = vmatpush1.bf16.msra.mxu0 0
        %6803 = vmatprep.subr.bf16.mxu0 0
        %6804 = vmatpush1.bf16.msra.mxu0 0
        %6805 = vmatprep.subr.bf16.mxu0 0
        %6806 = vmatpush1.bf16.msra.mxu0 0
        %6807 = vmatprep.mubr.bf16.mxu0 0
        %6808 = vmatmul.mubr.bf16.gmra.mrb[0].mxu0 %v6773
        %v6809 = vpop.f32.mrb[0].mxu0
        %v6810 = vadd.f32 0.0, %v6809
        %v6811 = vpop.f32.mrb[0].mxu0
        %v6812 = vpop.f32.mrb[0].mxu0
        %v6813 = vadd.f32 0.0, %v6812
        %v6814 = vpop.f32.mrb[0].mxu0
        %6815 = vdwg.mxu0
        %v6817 = vsel %vm4399, %v6769, 0
        %6819 = vmatprep.subr.bf16.mxu0 0
        %6820 = vmatpush1.bf16.msra.mxu0 %v6505
        %6821 = vmatprep.subr.bf16.mxu0 0
        %6822 = vmatpush1.bf16.msra.mxu0 0
        %6823 = vmatprep.subr.bf16.mxu0 0
        %6824 = vmatpush1.bf16.msra.mxu0 0
        %6825 = vmatprep.subr.bf16.mxu0 0
        %6826 = vmatpush1.bf16.msra.mxu0 0
        %6827 = vmatprep.subr.bf16.mxu0 0
        %6828 = vmatpush1.bf16.msra.mxu0 0
        %6829 = vmatprep.subr.bf16.mxu0 0
        %6830 = vmatpush1.bf16.msra.mxu0 0
        %6831 = vmatprep.subr.bf16.mxu0 0
        %6832 = vmatpush1.bf16.msra.mxu0 0
        %6833 = vmatprep.subr.bf16.mxu0 0
        %6834 = vmatpush1.bf16.msra.mxu0 0
        %6835 = vmatprep.subr.bf16.mxu0 0
        %6836 = vmatpush1.bf16.msra.mxu0 0
        %6837 = vmatprep.subr.bf16.mxu0 0
        %6838 = vmatpush1.bf16.msra.mxu0 0
        %6839 = vmatprep.subr.bf16.mxu0 0
        %6840 = vmatpush1.bf16.msra.mxu0 0
        %6841 = vmatprep.subr.bf16.mxu0 0
        %6842 = vmatpush1.bf16.msra.mxu0 0
        %6843 = vmatprep.subr.bf16.mxu0 0
        %6844 = vmatpush1.bf16.msra.mxu0 0
        %6845 = vmatprep.subr.bf16.mxu0 0
        %6846 = vmatpush1.bf16.msra.mxu0 0
        %6847 = vmatprep.subr.bf16.mxu0 0
        %6848 = vmatpush1.bf16.msra.mxu0 0
        %6849 = vmatprep.subr.bf16.mxu0 0
        %6850 = vmatpush1.bf16.msra.mxu0 0
        %6851 = vmatprep.mubr.bf16.mxu0 0
        %6852 = vmatmul.mubr.bf16.gmra.mrb[0].mxu0 %v6817
        %v6853 = vpop.f32.mrb[0].mxu0
        %v6854 = vadd.f32 0.0, %v6853
        %v6855 = vpop.f32.mrb[0].mxu0
        %v6856 = vpop.f32.mrb[0].mxu0
        %v6857 = vadd.f32 0.0, %v6856
        %v6858 = vpop.f32.mrb[0].mxu0
        %6859 = vdwg.mxu0
        %v6861 = vsel %vm4399, %v6770, 0
        %6863 = vmatprep.subr.bf16.mxu0 0
        %6864 = vmatpush1.bf16.msra.mxu0 %v6506
        %6865 = vmatprep.subr.bf16.mxu0 0
        %6866 = vmatpush1.bf16.msra.mxu0 0
        %6867 = vmatprep.subr.bf16.mxu0 0
        %6868 = vmatpush1.bf16.msra.mxu0 0
        %6869 = vmatprep.subr.bf16.mxu0 0
        %6870 = vmatpush1.bf16.msra.mxu0 0
        %6871 = vmatprep.subr.bf16.mxu0 0
        %6872 = vmatpush1.bf16.msra.mxu0 0
        %6873 = vmatprep.subr.bf16.mxu0 0
        %6874 = vmatpush1.bf16.msra.mxu0 0
        %6875 = vmatprep.subr.bf16.mxu0 0
        %6876 = vmatpush1.bf16.msra.mxu0 0
        %6877 = vmatprep.subr.bf16.mxu0 0
        %6878 = vmatpush1.bf16.msra.mxu0 0
        %6879 = vmatprep.subr.bf16.mxu0 0
        %6880 = vmatpush1.bf16.msra.mxu0 0
        %6881 = vmatprep.subr.bf16.mxu0 0
        %6882 = vmatpush1.bf16.msra.mxu0 0
        %6883 = vmatprep.subr.bf16.mxu0 0
        %6884 = vmatpush1.bf16.msra.mxu0 0
        %6885 = vmatprep.subr.bf16.mxu0 0
        %6886 = vmatpush1.bf16.msra.mxu0 0
        %6887 = vmatprep.subr.bf16.mxu0 0
        %6888 = vmatpush1.bf16.msra.mxu0 0
        %6889 = vmatprep.subr.bf16.mxu0 0
        %6890 = vmatpush1.bf16.msra.mxu0 0
        %6891 = vmatprep.subr.bf16.mxu0 0
        %6892 = vmatpush1.bf16.msra.mxu0 0
        %6893 = vmatprep.subr.bf16.mxu0 0
        %6894 = vmatpush1.bf16.msra.mxu0 0
        %6895 = vmatprep.mubr.bf16.mxu0 0
        %6896 = vmatmul.mubr.bf16.gmra.mrb[0].mxu0 %v6861
        %v6897 = vpop.f32.mrb[0].mxu0
        %v6898 = vadd.f32 0.0, %v6897
        %v6899 = vpop.f32.mrb[0].mxu0
        %v6900 = vpop.f32.mrb[0].mxu0
        %v6901 = vadd.f32 0.0, %v6900
        %v6902 = vpop.f32.mrb[0].mxu0
        %6903 = vdwg.mxu0
        %v6905 = vsel %vm4399, %v6771, 0
        %6907 = vmatprep.subr.bf16.mxu0 0
        %6908 = vmatpush1.bf16.msra.mxu0 %v6507
        %6909 = vmatprep.subr.bf16.mxu0 0
        %6910 = vmatpush1.bf16.msra.mxu0 0
        %6911 = vmatprep.subr.bf16.mxu0 0
        %6912 = vmatpush1.bf16.msra.mxu0 0
        %6913 = vmatprep.subr.bf16.mxu0 0
        %6914 = vmatpush1.bf16.msra.mxu0 0
        %6915 = vmatprep.subr.bf16.mxu0 0
        %6916 = vmatpush1.bf16.msra.mxu0 0
        %6917 = vmatprep.subr.bf16.mxu0 0
        %6918 = vmatpush1.bf16.msra.mxu0 0
        %6919 = vmatprep.subr.bf16.mxu0 0
        %6920 = vmatpush1.bf16.msra.mxu0 0
        %6921 = vmatprep.subr.bf16.mxu0 0
        %6922 = vmatpush1.bf16.msra.mxu0 0
        %6923 = vmatprep.subr.bf16.mxu0 0
        %6924 = vmatpush1.bf16.msra.mxu0 0
        %6925 = vmatprep.subr.bf16.mxu0 0
        %6926 = vmatpush1.bf16.msra.mxu0 0
        %6927 = vmatprep.subr.bf16.mxu0 0
        %6928 = vmatpush1.bf16.msra.mxu0 0
        %6929 = vmatprep.subr.bf16.mxu0 0
        %6930 = vmatpush1.bf16.msra.mxu0 0
        %6931 = vmatprep.subr.bf16.mxu0 0
        %6932 = vmatpush1.bf16.msra.mxu0 0
        %6933 = vmatprep.subr.bf16.mxu0 0
        %6934 = vmatpush1.bf16.msra.mxu0 0
        %6935 = vmatprep.subr.bf16.mxu0 0
        %6936 = vmatpush1.bf16.msra.mxu0 0
        %6937 = vmatprep.subr.bf16.mxu0 0
        %6938 = vmatpush1.bf16.msra.mxu0 0
        %6939 = vmatprep.mubr.bf16.mxu0 0
        %6940 = vmatmul.mubr.bf16.gmra.mrb[0].mxu0 %v6905
        %v6941 = vpop.f32.mrb[0].mxu0
        %v6942 = vadd.f32 0.0, %v6941
        %v6943 = vpop.f32.mrb[0].mxu0
        %v6944 = vpop.f32.mrb[0].mxu0
        %v6945 = vadd.f32 0.0, %v6944
        %v6946 = vpop.f32.mrb[0].mxu0
        %6947 = vdwg.mxu0
        %v6948 = vpack.c.bf16 %v6813, %v6810
        %v6949 = vpack.c.bf16 %v6857, %v6854
        %v6950 = vpack.c.bf16 %v6901, %v6898
        %v6951 = vpack.c.bf16 %v6945, %v6942
        %v6952 = vld [vmem:[#allocation7] sm:$0xff]
        %v6953 = vld [vmem:[#allocation7 + $0x8] sm:$0xf]
        %v6954 = vld [vmem:[#allocation7 + $0xc] sm:$0xff]
        %v6955 = vld [vmem:[#allocation7 + $0x14] sm:$0xf]
        %v6956 = vld [vmem:[#allocation7 + $0x18] sm:$0xff]
        %v6957 = vld [vmem:[#allocation7 + $0x20] sm:$0xf]
        %v6958 = vld [vmem:[#allocation7 + $0x24] sm:$0xff]
        %v6959 = vld [vmem:[#allocation7 + $0x2c] sm:$0xf]
        %v6960 = vld [vmem:[#allocation7 + $0x30] sm:$0xff]
        %v6961 = vld [vmem:[#allocation7 + $0x38] sm:$0xf]
        %v6962 = vld [vmem:[#allocation7 + $0x3c] sm:$0xff]
        %v6963 = vld [vmem:[#allocation7 + $0x44] sm:$0xf]
        %v6964 = vld [vmem:[#allocation7 + $0x48] sm:$0xff]
        %v6965 = vld [vmem:[#allocation7 + $0x50] sm:$0xf]
        %v6966 = vld [vmem:[#allocation7 + $0x54] sm:$0xff]
        %v6967 = vld [vmem:[#allocation7 + $0x5c] sm:$0xf]
        %v6968 = vld [vmem:[#allocation7 + $0x60] sm:$0xff]
        %v6969 = vld [vmem:[#allocation7 + $0x68] sm:$0xf]
        %v6970 = vld [vmem:[#allocation7 + $0x6c] sm:$0xff]
        %v6971 = vld [vmem:[#allocation7 + $0x74] sm:$0xf]
        %v6972 = vld [vmem:[#allocation7 + $0x78] sm:$0xff]
        %v6973 = vld [vmem:[#allocation7 + $0x80] sm:$0xf]
        %v6974 = vld [vmem:[#allocation7 + $0x84] sm:$0xff]
        %v6975 = vld [vmem:[#allocation7 + $0x8c] sm:$0xf]
        %v6976 = vld [vmem:[#allocation7 + $0x90] sm:$0xff]
        %v6977 = vld [vmem:[#allocation7 + $0x98] sm:$0xf]
        %v6978 = vld [vmem:[#allocation7 + $0x9c] sm:$0xff]
        %v6979 = vld [vmem:[#allocation7 + $0xa4] sm:$0xf]
        %v6980 = vld [vmem:[#allocation7 + $0xa8] sm:$0xff]
        %v6981 = vld [vmem:[#allocation7 + $0xb0] sm:$0xf]
        %v6982 = vld [vmem:[#allocation7 + $0xb4] sm:$0xff]
        %v6983 = vld [vmem:[#allocation7 + $0xbc] sm:$0xf]
        %v6984 = vld [vmem:[#allocation7 + $0xc0] sm:$0xff]
        %v6985 = vld [vmem:[#allocation7 + $0xc8] sm:$0xf]
        %v6986 = vld [vmem:[#allocation7 + $0xcc] sm:$0xff]
        %v6987 = vld [vmem:[#allocation7 + $0xd4] sm:$0xf]
        %v6988 = vld [vmem:[#allocation7 + $0xd8] sm:$0xff]
        %v6989 = vld [vmem:[#allocation7 + $0xe0] sm:$0xf]
        %v6990 = vld [vmem:[#allocation7 + $0xe4] sm:$0xff]
        %v6991 = vld [vmem:[#allocation7 + $0xec] sm:$0xf]
        %v6992 = vld [vmem:[#allocation7 + $0xf0] sm:$0xff]
        %v6993 = vld [vmem:[#allocation7 + $0xf8] sm:$0xf]
        %v6994 = vld [vmem:[#allocation7 + $0xfc] sm:$0xff]
        %v6995 = vld [vmem:[#allocation7 + $0x104] sm:$0xf]
        %v6996 = vld [vmem:[#allocation7 + $0x108] sm:$0xff]
        %v6997 = vld [vmem:[#allocation7 + $0x110] sm:$0xf]
        %v6998 = vld [vmem:[#allocation7 + $0x114] sm:$0xff]
        %v6999 = vld [vmem:[#allocation7 + $0x11c] sm:$0xf]
        %v7000 = vld [vmem:[#allocation7 + $0x120] sm:$0xff]
        %v7001 = vld [vmem:[#allocation7 + $0x128] sm:$0xf]
        %v7002 = vld [vmem:[#allocation7 + $0x12c] sm:$0xff]
        %v7003 = vld [vmem:[#allocation7 + $0x134] sm:$0xf]
        %v7004 = vld [vmem:[#allocation7 + $0x138] sm:$0xff]
        %v7005 = vld [vmem:[#allocation7 + $0x140] sm:$0xf]
        %v7006 = vld [vmem:[#allocation7 + $0x144] sm:$0xff]
        %v7007 = vld [vmem:[#allocation7 + $0x14c] sm:$0xf]
        %v7008 = vld [vmem:[#allocation7 + $0x150] sm:$0xff]
        %v7009 = vld [vmem:[#allocation7 + $0x158] sm:$0xf]
        %v7010 = vld [vmem:[#allocation7 + $0x15c] sm:$0xff]
        %v7011 = vld [vmem:[#allocation7 + $0x164] sm:$0xf]
        %v7012 = vld [vmem:[#allocation7 + $0x168] sm:$0xff]
        %v7013 = vld [vmem:[#allocation7 + $0x170] sm:$0xf]
        %v7014 = vld [vmem:[#allocation7 + $0x174] sm:$0xff]
        %v7015 = vld [vmem:[#allocation7 + $0x17c] sm:$0xf]
        %v7016 = vld [vmem:[#allocation7 + $0x180] sm:$0xff]
        %v7017 = vld [vmem:[#allocation7 + $0x188] sm:$0xf]
        %v7018 = vld [vmem:[#allocation7 + $0x18c] sm:$0xff]
        %v7019 = vld [vmem:[#allocation7 + $0x194] sm:$0xf]
        %v7020 = vld [vmem:[#allocation7 + $0x198] sm:$0xff]
        %v7021 = vld [vmem:[#allocation7 + $0x1a0] sm:$0xf]
        %v7022 = vld [vmem:[#allocation7 + $0x1a4] sm:$0xff]
        %v7023 = vld [vmem:[#allocation7 + $0x1ac] sm:$0xf]
        %v7024 = vld [vmem:[#allocation7 + $0x1b0] sm:$0xff]
        %v7025 = vld [vmem:[#allocation7 + $0x1b8] sm:$0xf]
        %v7026 = vld [vmem:[#allocation7 + $0x1bc] sm:$0xff]
        %v7027 = vld [vmem:[#allocation7 + $0x1c4] sm:$0xf]
        %v7028 = vld [vmem:[#allocation7 + $0x1c8] sm:$0xff]
        %v7029 = vld [vmem:[#allocation7 + $0x1d0] sm:$0xf]
        %v7030 = vld [vmem:[#allocation7 + $0x1d4] sm:$0xff]
        %v7031 = vld [vmem:[#allocation7 + $0x1dc] sm:$0xf]
        %v7032 = vld [vmem:[#allocation7 + $0x1e0] sm:$0xff]
        %v7033 = vld [vmem:[#allocation7 + $0x1e8] sm:$0xf]
        %v7034 = vld [vmem:[#allocation7 + $0x1ec] sm:$0xff]
        %v7035 = vld [vmem:[#allocation7 + $0x1f4] sm:$0xf]
        %v7036 = vld [vmem:[#allocation7 + $0x1f8] sm:$0xff]
        %v7037 = vld [vmem:[#allocation7 + $0x200] sm:$0xf]
        %v7038 = vld [vmem:[#allocation7 + $0x204] sm:$0xff]
        %v7039 = vld [vmem:[#allocation7 + $0x20c] sm:$0xf]
        %v7040 = vld [vmem:[#allocation7 + $0x210] sm:$0xff]
        %v7041 = vld [vmem:[#allocation7 + $0x218] sm:$0xf]
        %v7042 = vld [vmem:[#allocation7 + $0x21c] sm:$0xff]
        %v7043 = vld [vmem:[#allocation7 + $0x224] sm:$0xf]
        %v7044 = vld [vmem:[#allocation7 + $0x228] sm:$0xff]
        %v7045 = vld [vmem:[#allocation7 + $0x230] sm:$0xf]
        %v7046 = vld [vmem:[#allocation7 + $0x234] sm:$0xff]
        %v7047 = vld [vmem:[#allocation7 + $0x23c] sm:$0xf]
        %v7048 = vld [vmem:[#allocation7 + $0x240] sm:$0xff]
        %v7049 = vld [vmem:[#allocation7 + $0x248] sm:$0xf]
        %v7050 = vld [vmem:[#allocation7 + $0x24c] sm:$0xff]
        %v7051 = vld [vmem:[#allocation7 + $0x254] sm:$0xf]
        %v7052 = vld [vmem:[#allocation7 + $0x258] sm:$0xff]
        %v7053 = vld [vmem:[#allocation7 + $0x260] sm:$0xf]
        %v7054 = vld [vmem:[#allocation7 + $0x264] sm:$0xff]
        %v7055 = vld [vmem:[#allocation7 + $0x26c] sm:$0xf]
        %v7056 = vld [vmem:[#allocation7 + $0x270] sm:$0xff]
        %v7057 = vld [vmem:[#allocation7 + $0x278] sm:$0xf]
        %v7058 = vld [vmem:[#allocation7 + $0x27c] sm:$0xff]
        %v7059 = vld [vmem:[#allocation7 + $0x284] sm:$0xf]
        %v7060 = vld [vmem:[#allocation7 + $0x288] sm:$0xff]
        %v7061 = vld [vmem:[#allocation7 + $0x290] sm:$0xf]
        %v7062 = vld [vmem:[#allocation7 + $0x294] sm:$0xff]
        %v7063 = vld [vmem:[#allocation7 + $0x29c] sm:$0xf]
        %v7064 = vld [vmem:[#allocation7 + $0x2a0] sm:$0xff]
        %v7065 = vld [vmem:[#allocation7 + $0x2a8] sm:$0xf]
        %v7066 = vld [vmem:[#allocation7 + $0x2ac] sm:$0xff]
        %v7067 = vld [vmem:[#allocation7 + $0x2b4] sm:$0xf]
        %v7068 = vld [vmem:[#allocation7 + $0x2b8] sm:$0xff]
        %v7069 = vld [vmem:[#allocation7 + $0x2c0] sm:$0xf]
        %v7070 = vld [vmem:[#allocation7 + $0x2c4] sm:$0xff]
        %v7071 = vld [vmem:[#allocation7 + $0x2cc] sm:$0xf]
        %v7072 = vld [vmem:[#allocation7 + $0x2d0] sm:$0xff]
        %v7073 = vld [vmem:[#allocation7 + $0x2d8] sm:$0xf]
        %v7074 = vld [vmem:[#allocation7 + $0x2dc] sm:$0xff]
        %v7075 = vld [vmem:[#allocation7 + $0x2e4] sm:$0xf]
        %v7076 = vld [vmem:[#allocation7 + $0x2e8] sm:$0xff]
        %v7077 = vld [vmem:[#allocation7 + $0x2f0] sm:$0xf]
        %v7078 = vld [vmem:[#allocation7 + $0x2f4] sm:$0xff]
        %v7079 = vld [vmem:[#allocation7 + $0x2fc] sm:$0xf]
        %v7080 = vld [vmem:[#allocation7 + $0x300] sm:$0xff]
        %v7081 = vld [vmem:[#allocation7 + $0x308] sm:$0xf]
        %v7082 = vld [vmem:[#allocation7 + $0x30c] sm:$0xff]
        %v7083 = vld [vmem:[#allocation7 + $0x314] sm:$0xf]
        %v7084 = vld [vmem:[#allocation7 + $0x318] sm:$0xff]
        %v7085 = vld [vmem:[#allocation7 + $0x320] sm:$0xf]
        %v7086 = vld [vmem:[#allocation7 + $0x324] sm:$0xff]
        %v7087 = vld [vmem:[#allocation7 + $0x32c] sm:$0xf]
        %v7088 = vld [vmem:[#allocation7 + $0x330] sm:$0xff]
        %v7089 = vld [vmem:[#allocation7 + $0x338] sm:$0xf]
        %v7090 = vld [vmem:[#allocation7 + $0x33c] sm:$0xff]
        %v7091 = vld [vmem:[#allocation7 + $0x344] sm:$0xf]
        %v7092 = vld [vmem:[#allocation7 + $0x348] sm:$0xff]
        %v7093 = vld [vmem:[#allocation7 + $0x350] sm:$0xf]
        %v7094 = vld [vmem:[#allocation7 + $0x354] sm:$0xff]
        %v7095 = vld [vmem:[#allocation7 + $0x35c] sm:$0xf]
        %v7096 = vld [vmem:[#allocation7 + $0x360] sm:$0xff]
        %v7097 = vld [vmem:[#allocation7 + $0x368] sm:$0xf]
        %v7098 = vld [vmem:[#allocation7 + $0x36c] sm:$0xff]
        %v7099 = vld [vmem:[#allocation7 + $0x374] sm:$0xf]
        %v7100 = vld [vmem:[#allocation7 + $0x378] sm:$0xff]
        %v7101 = vld [vmem:[#allocation7 + $0x380] sm:$0xf]
        %v7102 = vld [vmem:[#allocation7 + $0x384] sm:$0xff]
        %v7103 = vld [vmem:[#allocation7 + $0x38c] sm:$0xf]
        %v7104 = vld [vmem:[#allocation7 + $0x390] sm:$0xff]
        %v7105 = vld [vmem:[#allocation7 + $0x398] sm:$0xf]
        %v7106 = vld [vmem:[#allocation7 + $0x39c] sm:$0xff]
        %v7107 = vld [vmem:[#allocation7 + $0x3a4] sm:$0xf]
        %v7108 = vld [vmem:[#allocation7 + $0x3a8] sm:$0xff]
        %v7109 = vld [vmem:[#allocation7 + $0x3b0] sm:$0xf]
        %v7110 = vld [vmem:[#allocation7 + $0x3b4] sm:$0xff]
        %v7111 = vld [vmem:[#allocation7 + $0x3bc] sm:$0xf]
        %v7112 = vld [vmem:[#allocation7 + $0x3c0] sm:$0xff]
        %v7113 = vld [vmem:[#allocation7 + $0x3c8] sm:$0xf]
        %v7114 = vld [vmem:[#allocation7 + $0x3cc] sm:$0xff]
        %v7115 = vld [vmem:[#allocation7 + $0x3d4] sm:$0xf]
        %v7116 = vld [vmem:[#allocation7 + $0x3d8] sm:$0xff]
        %v7117 = vld [vmem:[#allocation7 + $0x3e0] sm:$0xf]
        %v7118 = vld [vmem:[#allocation7 + $0x3e4] sm:$0xff]
        %v7119 = vld [vmem:[#allocation7 + $0x3ec] sm:$0xf]
        %v7120 = vld [vmem:[#allocation7 + $0x3f0] sm:$0xff]
        %v7121 = vld [vmem:[#allocation7 + $0x3f8] sm:$0xf]
        %v7122 = vld [vmem:[#allocation7 + $0x3fc] sm:$0xff]
        %v7123 = vld [vmem:[#allocation7 + $0x404] sm:$0xf]
        %v7124 = vld [vmem:[#allocation7 + $0x408] sm:$0xff]
        %v7125 = vld [vmem:[#allocation7 + $0x410] sm:$0xf]
        %v7126 = vld [vmem:[#allocation7 + $0x414] sm:$0xff]
        %v7127 = vld [vmem:[#allocation7 + $0x41c] sm:$0xf]
        %v7128 = vld [vmem:[#allocation7 + $0x420] sm:$0xff]
        %v7129 = vld [vmem:[#allocation7 + $0x428] sm:$0xf]
        %v7130 = vld [vmem:[#allocation7 + $0x42c] sm:$0xff]
        %v7131 = vld [vmem:[#allocation7 + $0x434] sm:$0xf]
        %v7132 = vld [vmem:[#allocation7 + $0x438] sm:$0xff]
        %v7133 = vld [vmem:[#allocation7 + $0x440] sm:$0xf]
        %v7134 = vld [vmem:[#allocation7 + $0x444] sm:$0xff]
        %v7135 = vld [vmem:[#allocation7 + $0x44c] sm:$0xf]
        %v7136 = vld [vmem:[#allocation7 + $0x450] sm:$0xff]
        %v7137 = vld [vmem:[#allocation7 + $0x458] sm:$0xf]
        %v7138 = vld [vmem:[#allocation7 + $0x45c] sm:$0xff]
        %v7139 = vld [vmem:[#allocation7 + $0x464] sm:$0xf]
        %v7140 = vld [vmem:[#allocation7 + $0x468] sm:$0xff]
        %v7141 = vld [vmem:[#allocation7 + $0x470] sm:$0xf]
        %v7142 = vld [vmem:[#allocation7 + $0x474] sm:$0xff]
        %v7143 = vld [vmem:[#allocation7 + $0x47c] sm:$0xf]
        %v7144 = vld [vmem:[#allocation8] sm:$0x7]
        %v7146 = vlaneseq
        %v7147 = vshrl.u32 %v7146, 7
        %v7148 = vsub.s32 0, %v7147
        %v7149 = vrot.slane %v7144, %v7148
        %v7150 = vlaneseq
        %v7151 = vshrl.u32 %v7150, 7
        %v7152 = vsub.s32 1, %v7151
        %v7153 = vrot.slane %v7144, %v7152
        %v7154 = vlaneseq
        %v7155 = vshrl.u32 %v7154, 7
        %v7156 = vsub.s32 2, %v7155
        %v7157 = vrot.slane %v7144, %v7156
        %v7353 = vunpack.c.l.b16 %v6952
        %v7354 = vunpack.c.h.b16 %v6952
        %v7355 = vunpack.c.l.b16 %v6953
        %v7356 = vunpack.c.l.b16 %v6954
        %v7357 = vunpack.c.h.b16 %v6954
        %v7358 = vunpack.c.l.b16 %v6955
        %v7359 = vunpack.c.l.b16 %v6956
        %v7360 = vunpack.c.h.b16 %v6956
        %v7361 = vunpack.c.l.b16 %v6957
        %v7362 = vunpack.c.l.b16 %v6958
        %v7363 = vunpack.c.h.b16 %v6958
        %v7364 = vunpack.c.l.b16 %v6959
        %v7365 = vunpack.c.l.b16 %v6960
        %v7366 = vunpack.c.h.b16 %v6960
        %v7367 = vunpack.c.l.b16 %v6961
        %v7368 = vunpack.c.l.b16 %v6962
        %v7369 = vunpack.c.h.b16 %v6962
        %v7370 = vunpack.c.l.b16 %v6963
        %v7371 = vunpack.c.l.b16 %v6964
        %v7372 = vunpack.c.h.b16 %v6964
        %v7373 = vunpack.c.l.b16 %v6965
        %v7374 = vunpack.c.l.b16 %v6966
        %v7375 = vunpack.c.h.b16 %v6966
        %v7376 = vunpack.c.l.b16 %v6967
        %v7377 = vunpack.c.l.b16 %v6968
        %v7378 = vunpack.c.h.b16 %v6968
        %v7379 = vunpack.c.l.b16 %v6969
        %v7380 = vunpack.c.l.b16 %v6970
        %v7381 = vunpack.c.h.b16 %v6970
        %v7382 = vunpack.c.l.b16 %v6971
        %v7383 = vunpack.c.l.b16 %v6972
        %v7384 = vunpack.c.h.b16 %v6972
        %v7385 = vunpack.c.l.b16 %v6973
        %v7386 = vunpack.c.l.b16 %v6974
        %v7387 = vunpack.c.h.b16 %v6974
        %v7388 = vunpack.c.l.b16 %v6975
        %v7389 = vunpack.c.l.b16 %v6976
        %v7390 = vunpack.c.h.b16 %v6976
        %v7391 = vunpack.c.l.b16 %v6977
        %v7392 = vunpack.c.l.b16 %v6978
        %v7393 = vunpack.c.h.b16 %v6978
        %v7394 = vunpack.c.l.b16 %v6979
        %v7395 = vunpack.c.l.b16 %v6980
        %v7396 = vunpack.c.h.b16 %v6980
        %v7397 = vunpack.c.l.b16 %v6981
        %v7398 = vunpack.c.l.b16 %v6982
        %v7399 = vunpack.c.h.b16 %v6982
        %v7400 = vunpack.c.l.b16 %v6983
        %v7401 = vunpack.c.l.b16 %v6984
        %v7402 = vunpack.c.h.b16 %v6984
        %v7403 = vunpack.c.l.b16 %v6985
        %v7404 = vunpack.c.l.b16 %v6986
        %v7405 = vunpack.c.h.b16 %v6986
        %v7406 = vunpack.c.l.b16 %v6987
        %v7407 = vunpack.c.l.b16 %v6988
        %v7408 = vunpack.c.h.b16 %v6988
        %v7409 = vunpack.c.l.b16 %v6989
        %v7410 = vunpack.c.l.b16 %v6990
        %v7411 = vunpack.c.h.b16 %v6990
        %v7412 = vunpack.c.l.b16 %v6991
        %v7413 = vunpack.c.l.b16 %v6992
        %v7414 = vunpack.c.h.b16 %v6992
        %v7415 = vunpack.c.l.b16 %v6993
        %v7416 = vunpack.c.l.b16 %v6994
        %v7417 = vunpack.c.h.b16 %v6994
        %v7418 = vunpack.c.l.b16 %v6995
        %v7419 = vunpack.c.l.b16 %v6996
        %v7420 = vunpack.c.h.b16 %v6996
        %v7421 = vunpack.c.l.b16 %v6997
        %v7422 = vunpack.c.l.b16 %v6998
        %v7423 = vunpack.c.h.b16 %v6998
        %v7424 = vunpack.c.l.b16 %v6999
        %v7425 = vunpack.c.l.b16 %v7000
        %v7426 = vunpack.c.h.b16 %v7000
        %v7427 = vunpack.c.l.b16 %v7001
        %v7428 = vunpack.c.l.b16 %v7002
        %v7429 = vunpack.c.h.b16 %v7002
        %v7430 = vunpack.c.l.b16 %v7003
        %v7431 = vunpack.c.l.b16 %v7004
        %v7432 = vunpack.c.h.b16 %v7004
        %v7433 = vunpack.c.l.b16 %v7005
        %v7434 = vunpack.c.l.b16 %v7006
        %v7435 = vunpack.c.h.b16 %v7006
        %v7436 = vunpack.c.l.b16 %v7007
        %v7437 = vunpack.c.l.b16 %v7008
        %v7438 = vunpack.c.h.b16 %v7008
        %v7439 = vunpack.c.l.b16 %v7009
        %v7440 = vunpack.c.l.b16 %v7010
        %v7441 = vunpack.c.h.b16 %v7010
        %v7442 = vunpack.c.l.b16 %v7011
        %v7443 = vunpack.c.l.b16 %v7012
        %v7444 = vunpack.c.h.b16 %v7012
        %v7445 = vunpack.c.l.b16 %v7013
        %v7446 = vunpack.c.l.b16 %v7014
        %v7447 = vunpack.c.h.b16 %v7014
        %v7448 = vunpack.c.l.b16 %v7015
        %v7449 = vunpack.c.l.b16 %v7016
        %v7450 = vunpack.c.h.b16 %v7016
        %v7451 = vunpack.c.l.b16 %v7017
        %v7452 = vunpack.c.l.b16 %v7018
        %v7453 = vunpack.c.h.b16 %v7018
        %v7454 = vunpack.c.l.b16 %v7019
        %v7455 = vunpack.c.l.b16 %v7020
        %v7456 = vunpack.c.h.b16 %v7020
        %v7457 = vunpack.c.l.b16 %v7021
        %v7458 = vunpack.c.l.b16 %v7022
        %v7459 = vunpack.c.h.b16 %v7022
        %v7460 = vunpack.c.l.b16 %v7023
        %v7461 = vunpack.c.l.b16 %v7024
        %v7462 = vunpack.c.h.b16 %v7024
        %v7463 = vunpack.c.l.b16 %v7025
        %v7464 = vunpack.c.l.b16 %v7026
        %v7465 = vunpack.c.h.b16 %v7026
        %v7466 = vunpack.c.l.b16 %v7027
        %v7467 = vunpack.c.l.b16 %v7028
        %v7468 = vunpack.c.h.b16 %v7028
        %v7469 = vunpack.c.l.b16 %v7029
        %v7470 = vunpack.c.l.b16 %v7030
        %v7471 = vunpack.c.h.b16 %v7030
        %v7472 = vunpack.c.l.b16 %v7031
        %v7473 = vunpack.c.l.b16 %v7032
        %v7474 = vunpack.c.h.b16 %v7032
        %v7475 = vunpack.c.l.b16 %v7033
        %v7476 = vunpack.c.l.b16 %v7034
        %v7477 = vunpack.c.h.b16 %v7034
        %v7478 = vunpack.c.l.b16 %v7035
        %v7479 = vunpack.c.l.b16 %v7036
        %v7480 = vunpack.c.h.b16 %v7036
        %v7481 = vunpack.c.l.b16 %v7037
        %v7482 = vunpack.c.l.b16 %v7038
        %v7483 = vunpack.c.h.b16 %v7038
        %v7484 = vunpack.c.l.b16 %v7039
        %v7485 = vunpack.c.l.b16 %v7040
        %v7486 = vunpack.c.h.b16 %v7040
        %v7487 = vunpack.c.l.b16 %v7041
        %v7488 = vunpack.c.l.b16 %v7042
        %v7489 = vunpack.c.h.b16 %v7042
        %v7490 = vunpack.c.l.b16 %v7043
        %v7491 = vunpack.c.l.b16 %v7044
        %v7492 = vunpack.c.h.b16 %v7044
        %v7493 = vunpack.c.l.b16 %v7045
        %v7494 = vunpack.c.l.b16 %v7046
        %v7495 = vunpack.c.h.b16 %v7046
        %v7496 = vunpack.c.l.b16 %v7047
        %v7497 = vunpack.c.l.b16 %v7048
        %v7498 = vunpack.c.h.b16 %v7048
        %v7499 = vunpack.c.l.b16 %v7049
        %v7500 = vunpack.c.l.b16 %v7050
        %v7501 = vunpack.c.h.b16 %v7050
        %v7502 = vunpack.c.l.b16 %v7051
        %v7503 = vunpack.c.l.b16 %v7052
        %v7504 = vunpack.c.h.b16 %v7052
        %v7505 = vunpack.c.l.b16 %v7053
        %v7506 = vunpack.c.l.b16 %v7054
        %v7507 = vunpack.c.h.b16 %v7054
        %v7508 = vunpack.c.l.b16 %v7055
        %v7509 = vunpack.c.l.b16 %v7056
        %v7510 = vunpack.c.h.b16 %v7056
        %v7511 = vunpack.c.l.b16 %v7057
        %v7512 = vunpack.c.l.b16 %v7058
        %v7513 = vunpack.c.h.b16 %v7058
        %v7514 = vunpack.c.l.b16 %v7059
        %v7515 = vunpack.c.l.b16 %v7060
        %v7516 = vunpack.c.h.b16 %v7060
        %v7517 = vunpack.c.l.b16 %v7061
        %v7518 = vunpack.c.l.b16 %v7062
        %v7519 = vunpack.c.h.b16 %v7062
        %v7520 = vunpack.c.l.b16 %v7063
        %v7521 = vunpack.c.l.b16 %v7064
        %v7522 = vunpack.c.h.b16 %v7064
        %v7523 = vunpack.c.l.b16 %v7065
        %v7524 = vunpack.c.l.b16 %v7066
        %v7525 = vunpack.c.h.b16 %v7066
        %v7526 = vunpack.c.l.b16 %v7067
        %v7527 = vunpack.c.l.b16 %v7068
        %v7528 = vunpack.c.h.b16 %v7068
        %v7529 = vunpack.c.l.b16 %v7069
        %v7530 = vunpack.c.l.b16 %v7070
        %v7531 = vunpack.c.h.b16 %v7070
        %v7532 = vunpack.c.l.b16 %v7071
        %v7533 = vunpack.c.l.b16 %v7072
        %v7534 = vunpack.c.h.b16 %v7072
        %v7535 = vunpack.c.l.b16 %v7073
        %v7536 = vunpack.c.l.b16 %v7074
        %v7537 = vunpack.c.h.b16 %v7074
        %v7538 = vunpack.c.l.b16 %v7075
        %v7539 = vunpack.c.l.b16 %v7076
        %v7540 = vunpack.c.h.b16 %v7076
        %v7541 = vunpack.c.l.b16 %v7077
        %v7542 = vunpack.c.l.b16 %v7078
        %v7543 = vunpack.c.h.b16 %v7078
        %v7544 = vunpack.c.l.b16 %v7079
        %v7545 = vunpack.c.l.b16 %v7080
        %v7546 = vunpack.c.h.b16 %v7080
        %v7547 = vunpack.c.l.b16 %v7081
        %v7548 = vunpack.c.l.b16 %v7082
        %v7549 = vunpack.c.h.b16 %v7082
        %v7550 = vunpack.c.l.b16 %v7083
        %v7551 = vunpack.c.l.b16 %v7084
        %v7552 = vunpack.c.h.b16 %v7084
        %v7553 = vunpack.c.l.b16 %v7085
        %v7554 = vunpack.c.l.b16 %v7086
        %v7555 = vunpack.c.h.b16 %v7086
        %v7556 = vunpack.c.l.b16 %v7087
        %v7557 = vunpack.c.l.b16 %v7088
        %v7558 = vunpack.c.h.b16 %v7088
        %v7559 = vunpack.c.l.b16 %v7089
        %v7560 = vunpack.c.l.b16 %v7090
        %v7561 = vunpack.c.h.b16 %v7090
        %v7562 = vunpack.c.l.b16 %v7091
        %v7563 = vunpack.c.l.b16 %v7092
        %v7564 = vunpack.c.h.b16 %v7092
        %v7565 = vunpack.c.l.b16 %v7093
        %v7566 = vunpack.c.l.b16 %v7094
        %v7567 = vunpack.c.h.b16 %v7094
        %v7568 = vunpack.c.l.b16 %v7095
        %v7569 = vunpack.c.l.b16 %v7096
        %v7570 = vunpack.c.h.b16 %v7096
        %v7571 = vunpack.c.l.b16 %v7097
        %v7572 = vunpack.c.l.b16 %v7098
        %v7573 = vunpack.c.h.b16 %v7098
        %v7574 = vunpack.c.l.b16 %v7099
        %v7575 = vunpack.c.l.b16 %v7100
        %v7576 = vunpack.c.h.b16 %v7100
        %v7577 = vunpack.c.l.b16 %v7101
        %v7578 = vunpack.c.l.b16 %v7102
        %v7579 = vunpack.c.h.b16 %v7102
        %v7580 = vunpack.c.l.b16 %v7103
        %v7581 = vunpack.c.l.b16 %v7104
        %v7582 = vunpack.c.h.b16 %v7104
        %v7583 = vunpack.c.l.b16 %v7105
        %v7584 = vunpack.c.l.b16 %v7106
        %v7585 = vunpack.c.h.b16 %v7106
        %v7586 = vunpack.c.l.b16 %v7107
        %v7587 = vunpack.c.l.b16 %v7108
        %v7588 = vunpack.c.h.b16 %v7108
        %v7589 = vunpack.c.l.b16 %v7109
        %v7590 = vunpack.c.l.b16 %v7110
        %v7591 = vunpack.c.h.b16 %v7110
        %v7592 = vunpack.c.l.b16 %v7111
        %v7593 = vunpack.c.l.b16 %v7112
        %v7594 = vunpack.c.h.b16 %v7112
        %v7595 = vunpack.c.l.b16 %v7113
        %v7596 = vunpack.c.l.b16 %v7114
        %v7597 = vunpack.c.h.b16 %v7114
        %v7598 = vunpack.c.l.b16 %v7115
        %v7599 = vunpack.c.l.b16 %v7116
        %v7600 = vunpack.c.h.b16 %v7116
        %v7601 = vunpack.c.l.b16 %v7117
        %v7602 = vunpack.c.l.b16 %v7118
        %v7603 = vunpack.c.h.b16 %v7118
        %v7604 = vunpack.c.l.b16 %v7119
        %v7605 = vunpack.c.l.b16 %v7120
        %v7606 = vunpack.c.h.b16 %v7120
        %v7607 = vunpack.c.l.b16 %v7121
        %v7608 = vunpack.c.l.b16 %v7122
        %v7609 = vunpack.c.h.b16 %v7122
        %v7610 = vunpack.c.l.b16 %v7123
        %v7611 = vunpack.c.l.b16 %v7124
        %v7612 = vunpack.c.h.b16 %v7124
        %v7613 = vunpack.c.l.b16 %v7125
        %v7614 = vunpack.c.l.b16 %v7126
        %v7615 = vunpack.c.h.b16 %v7126
        %v7616 = vunpack.c.l.b16 %v7127
        %v7617 = vunpack.c.l.b16 %v7128
        %v7618 = vunpack.c.h.b16 %v7128
        %v7619 = vunpack.c.l.b16 %v7129
        %v7620 = vunpack.c.l.b16 %v7130
        %v7621 = vunpack.c.h.b16 %v7130
        %v7622 = vunpack.c.l.b16 %v7131
        %v7623 = vunpack.c.l.b16 %v7132
        %v7624 = vunpack.c.h.b16 %v7132
        %v7625 = vunpack.c.l.b16 %v7133
        %v7626 = vunpack.c.l.b16 %v7134
        %v7627 = vunpack.c.h.b16 %v7134
        %v7628 = vunpack.c.l.b16 %v7135
        %v7629 = vunpack.c.l.b16 %v7136
        %v7630 = vunpack.c.h.b16 %v7136
        %v7631 = vunpack.c.l.b16 %v7137
        %v7632 = vunpack.c.l.b16 %v7138
        %v7633 = vunpack.c.h.b16 %v7138
        %v7634 = vunpack.c.l.b16 %v7139
        %v7635 = vunpack.c.l.b16 %v7140
        %v7636 = vunpack.c.h.b16 %v7140
        %v7637 = vunpack.c.l.b16 %v7141
        %v7638 = vunpack.c.l.b16 %v7142
        %v7639 = vunpack.c.h.b16 %v7142
        %v7640 = vunpack.c.l.b16 %v7143
        %v7641 = vpack.c.b16 %v7356, %v7353
        %v7642 = vpack.c.b16 %v7357, %v7354
        %v7643 = vpack.c.b16 %v7358, %v7355
        %v7644 = vpack.c.b16 %v7362, %v7359
        %v7645 = vpack.c.b16 %v7363, %v7360
        %v7646 = vpack.c.b16 %v7364, %v7361
        %v7647 = vpack.c.b16 %v7368, %v7365
        %v7648 = vpack.c.b16 %v7369, %v7366
        %v7649 = vpack.c.b16 %v7370, %v7367
        %v7650 = vpack.c.b16 %v7374, %v7371
        %v7651 = vpack.c.b16 %v7375, %v7372
        %v7652 = vpack.c.b16 %v7376, %v7373
        %v7653 = vpack.c.b16 %v7380, %v7377
        %v7654 = vpack.c.b16 %v7381, %v7378
        %v7655 = vpack.c.b16 %v7382, %v7379
        %v7656 = vpack.c.b16 %v7386, %v7383
        %v7657 = vpack.c.b16 %v7387, %v7384
        %v7658 = vpack.c.b16 %v7388, %v7385
        %v7659 = vpack.c.b16 %v7392, %v7389
        %v7660 = vpack.c.b16 %v7393, %v7390
        %v7661 = vpack.c.b16 %v7394, %v7391
        %v7662 = vpack.c.b16 %v7398, %v7395
        %v7663 = vpack.c.b16 %v7399, %v7396
        %v7664 = vpack.c.b16 %v7400, %v7397
        %v7665 = vpack.c.b16 %v7404, %v7401
        %v7666 = vpack.c.b16 %v7405, %v7402
        %v7667 = vpack.c.b16 %v7406, %v7403
        %v7668 = vpack.c.b16 %v7410, %v7407
        %v7669 = vpack.c.b16 %v7411, %v7408
        %v7670 = vpack.c.b16 %v7412, %v7409
        %v7671 = vpack.c.b16 %v7416, %v7413
        %v7672 = vpack.c.b16 %v7417, %v7414
        %v7673 = vpack.c.b16 %v7418, %v7415
        %v7674 = vpack.c.b16 %v7422, %v7419
        %v7675 = vpack.c.b16 %v7423, %v7420
        %v7676 = vpack.c.b16 %v7424, %v7421
        %v7677 = vpack.c.b16 %v7428, %v7425
        %v7678 = vpack.c.b16 %v7429, %v7426
        %v7679 = vpack.c.b16 %v7430, %v7427
        %v7680 = vpack.c.b16 %v7434, %v7431
        %v7681 = vpack.c.b16 %v7435, %v7432
        %v7682 = vpack.c.b16 %v7436, %v7433
        %v7683 = vpack.c.b16 %v7440, %v7437
        %v7684 = vpack.c.b16 %v7441, %v7438
        %v7685 = vpack.c.b16 %v7442, %v7439
        %v7686 = vpack.c.b16 %v7446, %v7443
        %v7687 = vpack.c.b16 %v7447, %v7444
        %v7688 = vpack.c.b16 %v7448, %v7445
        %v7689 = vpack.c.b16 %v7452, %v7449
        %v7690 = vpack.c.b16 %v7453, %v7450
        %v7691 = vpack.c.b16 %v7454, %v7451
        %v7692 = vpack.c.b16 %v7458, %v7455
        %v7693 = vpack.c.b16 %v7459, %v7456
        %v7694 = vpack.c.b16 %v7460, %v7457
        %v7695 = vpack.c.b16 %v7464, %v7461
        %v7696 = vpack.c.b16 %v7465, %v7462
        %v7697 = vpack.c.b16 %v7466, %v7463
        %v7698 = vpack.c.b16 %v7470, %v7467
        %v7699 = vpack.c.b16 %v7471, %v7468
        %v7700 = vpack.c.b16 %v7472, %v7469
        %v7701 = vpack.c.b16 %v7476, %v7473
        %v7702 = vpack.c.b16 %v7477, %v7474
        %v7703 = vpack.c.b16 %v7478, %v7475
        %v7704 = vpack.c.b16 %v7482, %v7479
        %v7705 = vpack.c.b16 %v7483, %v7480
        %v7706 = vpack.c.b16 %v7484, %v7481
        %v7707 = vpack.c.b16 %v7488, %v7485
        %v7708 = vpack.c.b16 %v7489, %v7486
        %v7709 = vpack.c.b16 %v7490, %v7487
        %v7710 = vpack.c.b16 %v7494, %v7491
        %v7711 = vpack.c.b16 %v7495, %v7492
        %v7712 = vpack.c.b16 %v7496, %v7493
        %v7713 = vpack.c.b16 %v7500, %v7497
        %v7714 = vpack.c.b16 %v7501, %v7498
        %v7715 = vpack.c.b16 %v7502, %v7499
        %v7716 = vpack.c.b16 %v7506, %v7503
        %v7717 = vpack.c.b16 %v7507, %v7504
        %v7718 = vpack.c.b16 %v7508, %v7505
        %v7719 = vpack.c.b16 %v7512, %v7509
        %v7720 = vpack.c.b16 %v7513, %v7510
        %v7721 = vpack.c.b16 %v7514, %v7511
        %v7722 = vpack.c.b16 %v7518, %v7515
        %v7723 = vpack.c.b16 %v7519, %v7516
        %v7724 = vpack.c.b16 %v7520, %v7517
        %v7725 = vpack.c.b16 %v7524, %v7521
        %v7726 = vpack.c.b16 %v7525, %v7522
        %v7727 = vpack.c.b16 %v7526, %v7523
        %v7728 = vpack.c.b16 %v7530, %v7527
        %v7729 = vpack.c.b16 %v7531, %v7528
        %v7730 = vpack.c.b16 %v7532, %v7529
        %v7731 = vpack.c.b16 %v7536, %v7533
        %v7732 = vpack.c.b16 %v7537, %v7534
        %v7733 = vpack.c.b16 %v7538, %v7535
        %v7734 = vpack.c.b16 %v7542, %v7539
        %v7735 = vpack.c.b16 %v7543, %v7540
        %v7736 = vpack.c.b16 %v7544, %v7541
        %v7737 = vpack.c.b16 %v7548, %v7545
        %v7738 = vpack.c.b16 %v7549, %v7546
        %v7739 = vpack.c.b16 %v7550, %v7547
        %v7740 = vpack.c.b16 %v7554, %v7551
        %v7741 = vpack.c.b16 %v7555, %v7552
        %v7742 = vpack.c.b16 %v7556, %v7553
        %v7743 = vpack.c.b16 %v7560, %v7557
        %v7744 = vpack.c.b16 %v7561, %v7558
        %v7745 = vpack.c.b16 %v7562, %v7559
        %v7746 = vpack.c.b16 %v7566, %v7563
        %v7747 = vpack.c.b16 %v7567, %v7564
        %v7748 = vpack.c.b16 %v7568, %v7565
        %v7749 = vpack.c.b16 %v7572, %v7569
        %v7750 = vpack.c.b16 %v7573, %v7570
        %v7751 = vpack.c.b16 %v7574, %v7571
        %v7752 = vpack.c.b16 %v7578, %v7575
        %v7753 = vpack.c.b16 %v7579, %v7576
        %v7754 = vpack.c.b16 %v7580, %v7577
        %v7755 = vpack.c.b16 %v7584, %v7581
        %v7756 = vpack.c.b16 %v7585, %v7582
        %v7757 = vpack.c.b16 %v7586, %v7583
        %v7758 = vpack.c.b16 %v7590, %v7587
        %v7759 = vpack.c.b16 %v7591, %v7588
        %v7760 = vpack.c.b16 %v7592, %v7589
        %v7761 = vpack.c.b16 %v7596, %v7593
        %v7762 = vpack.c.b16 %v7597, %v7594
        %v7763 = vpack.c.b16 %v7598, %v7595
        %v7764 = vpack.c.b16 %v7602, %v7599
        %v7765 = vpack.c.b16 %v7603, %v7600
        %v7766 = vpack.c.b16 %v7604, %v7601
        %v7767 = vpack.c.b16 %v7608, %v7605
        %v7768 = vpack.c.b16 %v7609, %v7606
        %v7769 = vpack.c.b16 %v7610, %v7607
        %v7770 = vpack.c.b16 %v7614, %v7611
        %v7771 = vpack.c.b16 %v7615, %v7612
        %v7772 = vpack.c.b16 %v7616, %v7613
        %v7773 = vpack.c.b16 %v7620, %v7617
        %v7774 = vpack.c.b16 %v7621, %v7618
        %v7775 = vpack.c.b16 %v7622, %v7619
        %v7776 = vpack.c.b16 %v7626, %v7623
        %v7777 = vpack.c.b16 %v7627, %v7624
        %v7778 = vpack.c.b16 %v7628, %v7625
        %v7779 = vpack.c.b16 %v7632, %v7629
        %v7780 = vpack.c.b16 %v7633, %v7630
        %v7781 = vpack.c.b16 %v7634, %v7631
        %v7782 = vpack.c.b16 %v7638, %v7635
        %v7783 = vpack.c.b16 %v7639, %v7636
        %v7784 = vpack.c.b16 %v7640, %v7637
        %7929 = vmatprep.subr.bf16.mxu0 %v7642
        %7930 = vmatpush1.bf16.msra.mxu0 %v7641
        %7931 = vmatprep.subr.bf16.mxu0 %v7645
        %7932 = vmatpush1.bf16.msra.mxu0 %v7644
        %7933 = vmatprep.subr.bf16.mxu0 %v7648
        %7934 = vmatpush1.bf16.msra.mxu0 %v7647
        %7935 = vmatprep.subr.bf16.mxu0 %v7651
        %7936 = vmatpush1.bf16.msra.mxu0 %v7650
        %7937 = vmatprep.subr.bf16.mxu0 %v7654
        %7938 = vmatpush1.bf16.msra.mxu0 %v7653
        %7939 = vmatprep.subr.bf16.mxu0 %v7657
        %7940 = vmatpush1.bf16.msra.mxu0 %v7656
        %7941 = vmatprep.subr.bf16.mxu0 %v7660
        %7942 = vmatpush1.bf16.msra.mxu0 %v7659
        %7943 = vmatprep.subr.bf16.mxu0 %v7663
        %7944 = vmatpush1.bf16.msra.mxu0 %v7662
        %7945 = vmatprep.subr.bf16.mxu0 %v7666
        %7946 = vmatpush1.bf16.msra.mxu0 %v7665
        %7947 = vmatprep.subr.bf16.mxu0 %v7669
        %7948 = vmatpush1.bf16.msra.mxu0 %v7668
        %7949 = vmatprep.subr.bf16.mxu0 %v7672
        %7950 = vmatpush1.bf16.msra.mxu0 %v7671
        %7951 = vmatprep.subr.bf16.mxu0 %v7675
        %7952 = vmatpush1.bf16.msra.mxu0 %v7674
        %7953 = vmatprep.subr.bf16.mxu0 %v7678
        %7954 = vmatpush1.bf16.msra.mxu0 %v7677
        %7955 = vmatprep.subr.bf16.mxu0 %v7681
        %7956 = vmatpush1.bf16.msra.mxu0 %v7680
        %7957 = vmatprep.subr.bf16.mxu0 %v7684
        %7958 = vmatpush1.bf16.msra.mxu0 %v7683
        %7959 = vmatprep.subr.bf16.mxu0 %v7687
        %7960 = vmatpush1.bf16.msra.mxu0 %v7686
        %7961 = vmatprep.mubr.bf16.mxu0 %v5124
        %7962 = vmatmul.mubr.bf16.gmra.mrb[0].mxu0 %v4668
        %v7963 = vpop.f32.mrb[0].mxu0
        %v7964 = vadd.f32 %v7149, %v7963
        %v7965 = vpop.f32.mrb[0].mxu0
        %v7966 = vadd.f32 %v7153, %v7965
        %v7967 = vpop.f32.mrb[0].mxu0
        %v7968 = vadd.f32 %v7149, %v7967
        %v7969 = vpop.f32.mrb[0].mxu0
        %v7970 = vadd.f32 %v7153, %v7969
        %7971 = vmatprep.mubr.bf16.mxu0 %v5125
        %7972 = vmatmul.mubr.bf16.gmra.mrb[0].mxu0 %v4669
        %v7973 = vpop.f32.mrb[0].mxu0
        %v7974 = vadd.f32 %v7149, %v7973
        %v7975 = vpop.f32.mrb[0].mxu0
        %v7976 = vadd.f32 %v7153, %v7975
        %v7977 = vpop.f32.mrb[0].mxu0
        %v7978 = vadd.f32 %v7149, %v7977
        %v7979 = vpop.f32.mrb[0].mxu0
        %v7980 = vadd.f32 %v7153, %v7979
        %7981 = vmatprep.mubr.bf16.mxu0 %v5126
        %7982 = vmatmul.mubr.bf16.gmra.mrb[0].mxu0 %v4670
        %v7983 = vpop.f32.mrb[0].mxu0
        %v7984 = vadd.f32 %v7149, %v7983
        %v7985 = vpop.f32.mrb[0].mxu0
        %v7986 = vadd.f32 %v7153, %v7985
        %v7987 = vpop.f32.mrb[0].mxu0
        %v7988 = vadd.f32 %v7149, %v7987
        %v7989 = vpop.f32.mrb[0].mxu0
        %v7990 = vadd.f32 %v7153, %v7989
        %7991 = vmatprep.mubr.bf16.mxu0 %v5127
        %7992 = vmatmul.mubr.bf16.gmra.mrb[0].mxu0 %v4671
        %v7993 = vpop.f32.mrb[0].mxu0
        %v7994 = vadd.f32 %v7149, %v7993
        %v7995 = vpop.f32.mrb[0].mxu0
        %v7996 = vadd.f32 %v7153, %v7995
        %v7997 = vpop.f32.mrb[0].mxu0
        %v7998 = vadd.f32 %v7149, %v7997
        %v7999 = vpop.f32.mrb[0].mxu0
        %v8000 = vadd.f32 %v7153, %v7999
        %8001 = vdwg.mxu0
        %8002 = vmatprep.subr.bf16.mxu0 %v7690
        %8003 = vmatpush1.bf16.msra.mxu0 %v7689
        %8004 = vmatprep.subr.bf16.mxu0 %v7693
        %8005 = vmatpush1.bf16.msra.mxu0 %v7692
        %8006 = vmatprep.subr.bf16.mxu0 %v7696
        %8007 = vmatpush1.bf16.msra.mxu0 %v7695
        %8008 = vmatprep.subr.bf16.mxu0 %v7699
        %8009 = vmatpush1.bf16.msra.mxu0 %v7698
        %8010 = vmatprep.subr.bf16.mxu0 %v7702
        %8011 = vmatpush1.bf16.msra.mxu0 %v7701
        %8012 = vmatprep.subr.bf16.mxu0 %v7705
        %8013 = vmatpush1.bf16.msra.mxu0 %v7704
        %8014 = vmatprep.subr.bf16.mxu0 %v7708
        %8015 = vmatpush1.bf16.msra.mxu0 %v7707
        %8016 = vmatprep.subr.bf16.mxu0 %v7711
        %8017 = vmatpush1.bf16.msra.mxu0 %v7710
        %8018 = vmatprep.subr.bf16.mxu0 %v7714
        %8019 = vmatpush1.bf16.msra.mxu0 %v7713
        %8020 = vmatprep.subr.bf16.mxu0 %v7717
        %8021 = vmatpush1.bf16.msra.mxu0 %v7716
        %8022 = vmatprep.subr.bf16.mxu0 %v7720
        %8023 = vmatpush1.bf16.msra.mxu0 %v7719
        %8024 = vmatprep.subr.bf16.mxu0 %v7723
        %8025 = vmatpush1.bf16.msra.mxu0 %v7722
        %8026 = vmatprep.subr.bf16.mxu0 %v7726
        %8027 = vmatpush1.bf16.msra.mxu0 %v7725
        %8028 = vmatprep.subr.bf16.mxu0 %v7729
        %8029 = vmatpush1.bf16.msra.mxu0 %v7728
        %8030 = vmatprep.subr.bf16.mxu0 %v7732
        %8031 = vmatpush1.bf16.msra.mxu0 %v7731
        %8032 = vmatprep.subr.bf16.mxu0 %v7735
        %8033 = vmatpush1.bf16.msra.mxu0 %v7734
        %8034 = vmatprep.mubr.bf16.mxu0 %v6036
        %8035 = vmatmul.mubr.bf16.gmra.mrb[0].mxu0 %v5580
        %v8036 = vpop.f32.mrb[0].mxu0
        %v8037 = vadd.f32 %v7964, %v8036
        %v8038 = vpop.f32.mrb[0].mxu0
        %v8039 = vadd.f32 %v7966, %v8038
        %v8040 = vpop.f32.mrb[0].mxu0
        %v8041 = vadd.f32 %v7968, %v8040
        %v8042 = vpop.f32.mrb[0].mxu0
        %v8043 = vadd.f32 %v7970, %v8042
        %8044 = vmatprep.mubr.bf16.mxu0 %v6037
        %8045 = vmatmul.mubr.bf16.gmra.mrb[0].mxu0 %v5581
        %v8046 = vpop.f32.mrb[0].mxu0
        %v8047 = vadd.f32 %v7974, %v8046
        %v8048 = vpop.f32.mrb[0].mxu0
        %v8049 = vadd.f32 %v7976, %v8048
        %v8050 = vpop.f32.mrb[0].mxu0
        %v8051 = vadd.f32 %v7978, %v8050
        %v8052 = vpop.f32.mrb[0].mxu0
        %v8053 = vadd.f32 %v7980, %v8052
        %8054 = vmatprep.mubr.bf16.mxu0 %v6038
        %8055 = vmatmul.mubr.bf16.gmra.mrb[0].mxu0 %v5582
        %v8056 = vpop.f32.mrb[0].mxu0
        %v8057 = vadd.f32 %v7984, %v8056
        %v8058 = vpop.f32.mrb[0].mxu0
        %v8059 = vadd.f32 %v7986, %v8058
        %v8060 = vpop.f32.mrb[0].mxu0
        %v8061 = vadd.f32 %v7988, %v8060
        %v8062 = vpop.f32.mrb[0].mxu0
        %v8063 = vadd.f32 %v7990, %v8062
        %8064 = vmatprep.mubr.bf16.mxu0 %v6039
        %8065 = vmatmul.mubr.bf16.gmra.mrb[0].mxu0 %v5583
        %v8066 = vpop.f32.mrb[0].mxu0
        %v8067 = vadd.f32 %v7994, %v8066
        %v8068 = vpop.f32.mrb[0].mxu0
        %v8069 = vadd.f32 %v7996, %v8068
        %v8070 = vpop.f32.mrb[0].mxu0
        %v8071 = vadd.f32 %v7998, %v8070
        %v8072 = vpop.f32.mrb[0].mxu0
        %v8073 = vadd.f32 %v8000, %v8072
        %8074 = vdwg.mxu0
        %8075 = vmatprep.subr.bf16.mxu0 %v7738
        %8076 = vmatpush1.bf16.msra.mxu0 %v7737
        %8077 = vmatprep.subr.bf16.mxu0 %v7741
        %8078 = vmatpush1.bf16.msra.mxu0 %v7740
        %8079 = vmatprep.subr.bf16.mxu0 %v7744
        %8080 = vmatpush1.bf16.msra.mxu0 %v7743
        %8081 = vmatprep.subr.bf16.mxu0 %v7747
        %8082 = vmatpush1.bf16.msra.mxu0 %v7746
        %8083 = vmatprep.subr.bf16.mxu0 %v7750
        %8084 = vmatpush1.bf16.msra.mxu0 %v7749
        %8085 = vmatprep.subr.bf16.mxu0 %v7753
        %8086 = vmatpush1.bf16.msra.mxu0 %v7752
        %8087 = vmatprep.subr.bf16.mxu0 %v7756
        %8088 = vmatpush1.bf16.msra.mxu0 %v7755
        %8089 = vmatprep.subr.bf16.mxu0 %v7759
        %8090 = vmatpush1.bf16.msra.mxu0 %v7758
        %8091 = vmatprep.subr.bf16.mxu0 %v7762
        %8092 = vmatpush1.bf16.msra.mxu0 %v7761
        %8093 = vmatprep.subr.bf16.mxu0 %v7765
        %8094 = vmatpush1.bf16.msra.mxu0 %v7764
        %8095 = vmatprep.subr.bf16.mxu0 %v7768
        %8096 = vmatpush1.bf16.msra.mxu0 %v7767
        %8097 = vmatprep.subr.bf16.mxu0 %v7771
        %8098 = vmatpush1.bf16.msra.mxu0 %v7770
        %8099 = vmatprep.subr.bf16.mxu0 %v7774
        %8100 = vmatpush1.bf16.msra.mxu0 %v7773
        %8101 = vmatprep.subr.bf16.mxu0 %v7777
        %8102 = vmatpush1.bf16.msra.mxu0 %v7776
        %8103 = vmatprep.subr.bf16.mxu0 %v7780
        %8104 = vmatpush1.bf16.msra.mxu0 %v7779
        %8105 = vmatprep.subr.bf16.mxu0 %v7783
        %8106 = vmatpush1.bf16.msra.mxu0 %v7782
        %8107 = vmatprep.mubr.bf16.mxu0 %v6948
        %8108 = vmatmul.mubr.bf16.gmra.mrb[0].mxu0 %v6492
        %v8109 = vpop.f32.mrb[0].mxu0
        %v8110 = vadd.f32 %v8037, %v8109
        %v8111 = vpop.f32.mrb[0].mxu0
        %v8112 = vadd.f32 %v8039, %v8111
        %v8113 = vpop.f32.mrb[0].mxu0
        %v8114 = vadd.f32 %v8041, %v8113
        %v8115 = vpop.f32.mrb[0].mxu0
        %v8116 = vadd.f32 %v8043, %v8115
        %8117 = vmatprep.mubr.bf16.mxu0 %v6949
        %8118 = vmatmul.mubr.bf16.gmra.mrb[0].mxu0 %v6493
        %v8119 = vpop.f32.mrb[0].mxu0
        %v8120 = vadd.f32 %v8047, %v8119
        %v8121 = vpop.f32.mrb[0].mxu0
        %v8122 = vadd.f32 %v8049, %v8121
        %v8123 = vpop.f32.mrb[0].mxu0
        %v8124 = vadd.f32 %v8051, %v8123
        %v8125 = vpop.f32.mrb[0].mxu0
        %v8126 = vadd.f32 %v8053, %v8125
        %8127 = vmatprep.mubr.bf16.mxu0 %v6950
        %8128 = vmatmul.mubr.bf16.gmra.mrb[0].mxu0 %v6494
        %v8129 = vpop.f32.mrb[0].mxu0
        %v8130 = vadd.f32 %v8057, %v8129
        %v8131 = vpop.f32.mrb[0].mxu0
        %v8132 = vadd.f32 %v8059, %v8131
        %v8133 = vpop.f32.mrb[0].mxu0
        %v8134 = vadd.f32 %v8061, %v8133
        %v8135 = vpop.f32.mrb[0].mxu0
        %v8136 = vadd.f32 %v8063, %v8135
        %8137 = vmatprep.mubr.bf16.mxu0 %v6951
        %8138 = vmatmul.mubr.bf16.gmra.mrb[0].mxu0 %v6495
        %v8139 = vpop.f32.mrb[0].mxu0
        %v8140 = vadd.f32 %v8067, %v8139
        %v8141 = vpop.f32.mrb[0].mxu0
        %v8142 = vadd.f32 %v8069, %v8141
        %v8143 = vpop.f32.mrb[0].mxu0
        %v8144 = vadd.f32 %v8071, %v8143
        %v8145 = vpop.f32.mrb[0].mxu0
        %v8146 = vadd.f32 %v8073, %v8145
        %8147 = vdwg.mxu0
        %8148 = vmatprep.subr.bf16.mxu0 0
        %8149 = vmatpush1.bf16.msra.mxu0 %v7643
        %8150 = vmatprep.subr.bf16.mxu0 0
        %8151 = vmatpush1.bf16.msra.mxu0 %v7646
        %8152 = vmatprep.subr.bf16.mxu0 0
        %8153 = vmatpush1.bf16.msra.mxu0 %v7649
        %8154 = vmatprep.subr.bf16.mxu0 0
        %8155 = vmatpush1.bf16.msra.mxu0 %v7652
        %8156 = vmatprep.subr.bf16.mxu0 0
        %8157 = vmatpush1.bf16.msra.mxu0 %v7655
        %8158 = vmatprep.subr.bf16.mxu0 0
        %8159 = vmatpush1.bf16.msra.mxu0 %v7658
        %8160 = vmatprep.subr.bf16.mxu0 0
        %8161 = vmatpush1.bf16.msra.mxu0 %v7661
        %8162 = vmatprep.subr.bf16.mxu0 0
        %8163 = vmatpush1.bf16.msra.mxu0 %v7664
        %8164 = vmatprep.subr.bf16.mxu0 0
        %8165 = vmatpush1.bf16.msra.mxu0 %v7667
        %8166 = vmatprep.subr.bf16.mxu0 0
        %8167 = vmatpush1.bf16.msra.mxu0 %v7670
        %8168 = vmatprep.subr.bf16.mxu0 0
        %8169 = vmatpush1.bf16.msra.mxu0 %v7673
        %8170 = vmatprep.subr.bf16.mxu0 0
        %8171 = vmatpush1.bf16.msra.mxu0 %v7676
        %8172 = vmatprep.subr.bf16.mxu0 0
        %8173 = vmatpush1.bf16.msra.mxu0 %v7679
        %8174 = vmatprep.subr.bf16.mxu0 0
        %8175 = vmatpush1.bf16.msra.mxu0 %v7682
        %8176 = vmatprep.subr.bf16.mxu0 0
        %8177 = vmatpush1.bf16.msra.mxu0 %v7685
        %8178 = vmatprep.subr.bf16.mxu0 0
        %8179 = vmatpush1.bf16.msra.mxu0 %v7688
        %8180 = vmatprep.mubr.bf16.mxu0 %v5124
        %8181 = vmatmul.mubr.bf16.gmra.mrb[0].mxu0 %v4668
        %v8182 = vpop.f32.mrb[0].mxu0
        %v8183 = vadd.f32 %v7157, %v8182
        %v8184 = vpop.f32.mrb[0].mxu0
        %v8185 = vpop.f32.mrb[0].mxu0
        %v8186 = vadd.f32 %v7157, %v8185
        %v8187 = vpop.f32.mrb[0].mxu0
        %8188 = vmatprep.mubr.bf16.mxu0 %v5125
        %8189 = vmatmul.mubr.bf16.gmra.mrb[0].mxu0 %v4669
        %v8190 = vpop.f32.mrb[0].mxu0
        %v8191 = vadd.f32 %v7157, %v8190
        %v8192 = vpop.f32.mrb[0].mxu0
        %v8193 = vpop.f32.mrb[0].mxu0
        %v8194 = vadd.f32 %v7157, %v8193
        %v8195 = vpop.f32.mrb[0].mxu0
        %8196 = vmatprep.mubr.bf16.mxu0 %v5126
        %8197 = vmatmul.mubr.bf16.gmra.mrb[0].mxu0 %v4670
        %v8198 = vpop.f32.mrb[0].mxu0
        %v8199 = vadd.f32 %v7157, %v8198
        %v8200 = vpop.f32.mrb[0].mxu0
        %v8201 = vpop.f32.mrb[0].mxu0
        %v8202 = vadd.f32 %v7157, %v8201
        %v8203 = vpop.f32.mrb[0].mxu0
        %8204 = vmatprep.mubr.bf16.mxu0 %v5127
        %8205 = vmatmul.mubr.bf16.gmra.mrb[0].mxu0 %v4671
        %v8206 = vpop.f32.mrb[0].mxu0
        %v8207 = vadd.f32 %v7157, %v8206
        %v8208 = vpop.f32.mrb[0].mxu0
        %v8209 = vpop.f32.mrb[0].mxu0
        %v8210 = vadd.f32 %v7157, %v8209
        %v8211 = vpop.f32.mrb[0].mxu0
        %8212 = vdwg.mxu0
        %8213 = vmatprep.subr.bf16.mxu0 0
        %8214 = vmatpush1.bf16.msra.mxu0 %v7691
        %8215 = vmatprep.subr.bf16.mxu0 0
        %8216 = vmatpush1.bf16.msra.mxu0 %v7694
        %8217 = vmatprep.subr.bf16.mxu0 0
        %8218 = vmatpush1.bf16.msra.mxu0 %v7697
        %8219 = vmatprep.subr.bf16.mxu0 0
        %8220 = vmatpush1.bf16.msra.mxu0 %v7700
        %8221 = vmatprep.subr.bf16.mxu0 0
        %8222 = vmatpush1.bf16.msra.mxu0 %v7703
        %8223 = vmatprep.subr.bf16.mxu0 0
        %8224 = vmatpush1.bf16.msra.mxu0 %v7706
        %8225 = vmatprep.subr.bf16.mxu0 0
        %8226 = vmatpush1.bf16.msra.mxu0 %v7709
        %8227 = vmatprep.subr.bf16.mxu0 0
        %8228 = vmatpush1.bf16.msra.mxu0 %v7712
        %8229 = vmatprep.subr.bf16.mxu0 0
        %8230 = vmatpush1.bf16.msra.mxu0 %v7715
        %8231 = vmatprep.subr.bf16.mxu0 0
        %8232 = vmatpush1.bf16.msra.mxu0 %v7718
        %8233 = vmatprep.subr.bf16.mxu0 0
        %8234 = vmatpush1.bf16.msra.mxu0 %v7721
        %8235 = vmatprep.subr.bf16.mxu0 0
        %8236 = vmatpush1.bf16.msra.mxu0 %v7724
        %8237 = vmatprep.subr.bf16.mxu0 0
        %8238 = vmatpush1.bf16.msra.mxu0 %v7727
        %8239 = vmatprep.subr.bf16.mxu0 0
        %8240 = vmatpush1.bf16.msra.mxu0 %v7730
        %8241 = vmatprep.subr.bf16.mxu0 0
        %8242 = vmatpush1.bf16.msra.mxu0 %v7733
        %8243 = vmatprep.subr.bf16.mxu0 0
        %8244 = vmatpush1.bf16.msra.mxu0 %v7736
        %8245 = vmatprep.mubr.bf16.mxu0 %v6036
        %8246 = vmatmul.mubr.bf16.gmra.mrb[0].mxu0 %v5580
        %v8247 = vpop.f32.mrb[0].mxu0
        %v8248 = vadd.f32 %v8183, %v8247
        %v8249 = vpop.f32.mrb[0].mxu0
        %v8250 = vpop.f32.mrb[0].mxu0
        %v8251 = vadd.f32 %v8186, %v8250
        %v8252 = vpop.f32.mrb[0].mxu0
        %8253 = vmatprep.mubr.bf16.mxu0 %v6037
        %8254 = vmatmul.mubr.bf16.gmra.mrb[0].mxu0 %v5581
        %v8255 = vpop.f32.mrb[0].mxu0
        %v8256 = vadd.f32 %v8191, %v8255
        %v8257 = vpop.f32.mrb[0].mxu0
        %v8258 = vpop.f32.mrb[0].mxu0
        %v8259 = vadd.f32 %v8194, %v8258
        %v8260 = vpop.f32.mrb[0].mxu0
        %8261 = vmatprep.mubr.bf16.mxu0 %v6038
        %8262 = vmatmul.mubr.bf16.gmra.mrb[0].mxu0 %v5582
        %v8263 = vpop.f32.mrb[0].mxu0
        %v8264 = vadd.f32 %v8199, %v8263
        %v8265 = vpop.f32.mrb[0].mxu0
        %v8266 = vpop.f32.mrb[0].mxu0
        %v8267 = vadd.f32 %v8202, %v8266
        %v8268 = vpop.f32.mrb[0].mxu0
        %8269 = vmatprep.mubr.bf16.mxu0 %v6039
        %8270 = vmatmul.mubr.bf16.gmra.mrb[0].mxu0 %v5583
        %v8271 = vpop.f32.mrb[0].mxu0
        %v8272 = vadd.f32 %v8207, %v8271
        %v8273 = vpop.f32.mrb[0].mxu0
        %v8274 = vpop.f32.mrb[0].mxu0
        %v8275 = vadd.f32 %v8210, %v8274
        %v8276 = vpop.f32.mrb[0].mxu0
        %8277 = vdwg.mxu0
        %8278 = vmatprep.subr.bf16.mxu0 0
        %8279 = vmatpush1.bf16.msra.mxu0 %v7739
        %8280 = vmatprep.subr.bf16.mxu0 0
        %8281 = vmatpush1.bf16.msra.mxu0 %v7742
        %8282 = vmatprep.subr.bf16.mxu0 0
        %8283 = vmatpush1.bf16.msra.mxu0 %v7745
        %8284 = vmatprep.subr.bf16.mxu0 0
        %8285 = vmatpush1.bf16.msra.mxu0 %v7748
        %8286 = vmatprep.subr.bf16.mxu0 0
        %8287 = vmatpush1.bf16.msra.mxu0 %v7751
        %8288 = vmatprep.subr.bf16.mxu0 0
        %8289 = vmatpush1.bf16.msra.mxu0 %v7754
        %8290 = vmatprep.subr.bf16.mxu0 0
        %8291 = vmatpush1.bf16.msra.mxu0 %v7757
        %8292 = vmatprep.subr.bf16.mxu0 0
        %8293 = vmatpush1.bf16.msra.mxu0 %v7760
        %8294 = vmatprep.subr.bf16.mxu0 0
        %8295 = vmatpush1.bf16.msra.mxu0 %v7763
        %8296 = vmatprep.subr.bf16.mxu0 0
        %8297 = vmatpush1.bf16.msra.mxu0 %v7766
        %8298 = vmatprep.subr.bf16.mxu0 0
        %8299 = vmatpush1.bf16.msra.mxu0 %v7769
        %8300 = vmatprep.subr.bf16.mxu0 0
        %8301 = vmatpush1.bf16.msra.mxu0 %v7772
        %8302 = vmatprep.subr.bf16.mxu0 0
        %8303 = vmatpush1.bf16.msra.mxu0 %v7775
        %8304 = vmatprep.subr.bf16.mxu0 0
        %8305 = vmatpush1.bf16.msra.mxu0 %v7778
        %8306 = vmatprep.subr.bf16.mxu0 0
        %8307 = vmatpush1.bf16.msra.mxu0 %v7781
        %8308 = vmatprep.subr.bf16.mxu0 0
        %8309 = vmatpush1.bf16.msra.mxu0 %v7784
        %8310 = vmatprep.mubr.bf16.mxu0 %v6948
        %8311 = vmatmul.mubr.bf16.gmra.mrb[0].mxu0 %v6492
        %v8312 = vpop.f32.mrb[0].mxu0
        %v8313 = vadd.f32 %v8248, %v8312
        %v8314 = vpop.f32.mrb[0].mxu0
        %v8315 = vpop.f32.mrb[0].mxu0
        %v8316 = vadd.f32 %v8251, %v8315
        %v8317 = vpop.f32.mrb[0].mxu0
        %8318 = vmatprep.mubr.bf16.mxu0 %v6949
        %8319 = vmatmul.mubr.bf16.gmra.mrb[0].mxu0 %v6493
        %v8320 = vpop.f32.mrb[0].mxu0
        %v8321 = vadd.f32 %v8256, %v8320
        %v8322 = vpop.f32.mrb[0].mxu0
        %v8323 = vpop.f32.mrb[0].mxu0
        %v8324 = vadd.f32 %v8259, %v8323
        %v8325 = vpop.f32.mrb[0].mxu0
        %8326 = vmatprep.mubr.bf16.mxu0 %v6950
        %8327 = vmatmul.mubr.bf16.gmra.mrb[0].mxu0 %v6494
        %v8328 = vpop.f32.mrb[0].mxu0
        %v8329 = vadd.f32 %v8264, %v8328
        %v8330 = vpop.f32.mrb[0].mxu0
        %v8331 = vpop.f32.mrb[0].mxu0
        %v8332 = vadd.f32 %v8267, %v8331
        %v8333 = vpop.f32.mrb[0].mxu0
        %8334 = vmatprep.mubr.bf16.mxu0 %v6951
        %8335 = vmatmul.mubr.bf16.gmra.mrb[0].mxu0 %v6495
        %v8336 = vpop.f32.mrb[0].mxu0
        %v8337 = vadd.f32 %v8272, %v8336
        %v8338 = vpop.f32.mrb[0].mxu0
        %v8339 = vpop.f32.mrb[0].mxu0
        %v8340 = vadd.f32 %v8275, %v8339
        %v8341 = vpop.f32.mrb[0].mxu0
        %8342 = vdwg.mxu0
        %v8343 = vpack.c.bf16 %v8114, %v8110
        %v8344 = vpack.c.bf16 %v8116, %v8112
        %v8345 = vpack.c.bf16 %v8316, %v8313
        %v8346 = vpack.c.bf16 %v8124, %v8120
        %v8347 = vpack.c.bf16 %v8126, %v8122
        %v8348 = vpack.c.bf16 %v8324, %v8321
        %v8349 = vpack.c.bf16 %v8134, %v8130
        %v8350 = vpack.c.bf16 %v8136, %v8132
        %v8351 = vpack.c.bf16 %v8332, %v8329
        %v8352 = vpack.c.bf16 %v8144, %v8140
        %v8353 = vpack.c.bf16 %v8146, %v8142
        %v8354 = vpack.c.bf16 %v8340, %v8337
        %v8367 = vunpack.c.l.b16 %v8343
        %v8368 = vunpack.c.l.b16 %v8344
        %v8369 = vunpack.c.l.b16 %v8345
        %v8370 = vunpack.c.h.b16 %v8343
        %v8371 = vunpack.c.h.b16 %v8344
        %v8372 = vunpack.c.h.b16 %v8345
        %v8373 = vunpack.c.l.b16 %v8346
        %v8374 = vunpack.c.l.b16 %v8347
        %v8375 = vunpack.c.l.b16 %v8348
        %v8376 = vunpack.c.h.b16 %v8346
        %v8377 = vunpack.c.h.b16 %v8347
        %v8378 = vunpack.c.h.b16 %v8348
        %v8379 = vunpack.c.l.b16 %v8349
        %v8380 = vunpack.c.l.b16 %v8350
        %v8381 = vunpack.c.l.b16 %v8351
        %v8382 = vunpack.c.h.b16 %v8349
        %v8383 = vunpack.c.h.b16 %v8350
        %v8384 = vunpack.c.h.b16 %v8351
        %v8385 = vunpack.c.l.b16 %v8352
        %v8386 = vunpack.c.l.b16 %v8353
        %v8387 = vunpack.c.l.b16 %v8354
        %v8388 = vunpack.c.h.b16 %v8352
        %v8389 = vunpack.c.h.b16 %v8353
        %v8390 = vunpack.c.h.b16 %v8354
        %v8391 = vpack.c.b16 %v8368, %v8367
        %v8392 = vpack.c.b16 %v8369, %v8369
        %v8393 = vpack.c.b16 %v8371, %v8370
        %v8394 = vpack.c.b16 %v8372, %v8372
        %v8395 = vpack.c.b16 %v8374, %v8373
        %v8396 = vpack.c.b16 %v8375, %v8375
        %v8397 = vpack.c.b16 %v8377, %v8376
        %v8398 = vpack.c.b16 %v8378, %v8378
        %v8399 = vpack.c.b16 %v8380, %v8379
        %v8400 = vpack.c.b16 %v8381, %v8381
        %v8401 = vpack.c.b16 %v8383, %v8382
        %v8402 = vpack.c.b16 %v8384, %v8384
        %v8403 = vpack.c.b16 %v8386, %v8385
        %v8404 = vpack.c.b16 %v8387, %v8387
        %v8405 = vpack.c.b16 %v8389, %v8388
        %v8406 = vpack.c.b16 %v8390, %v8390
        %8423 = vst [vmem:[%s258] sm:$0xff] %v8391
        %8424 = vst [vmem:[%s258 + $0x8] sm:$0xf] %v8392
        %8425 = vst [vmem:[%s258 + $0xc] sm:$0xff] %v8393
        %8426 = vst [vmem:[%s258 + $0x14] sm:$0xf] %v8394
        %8427 = vst [vmem:[%s258 + $0x18] sm:$0xff] %v8395
        %8428 = vst [vmem:[%s258 + $0x20] sm:$0xf] %v8396
        %8429 = vst [vmem:[%s258 + $0x24] sm:$0xff] %v8397
        %8430 = vst [vmem:[%s258 + $0x2c] sm:$0xf] %v8398
        %8431 = vst [vmem:[%s258 + $0x30] sm:$0xff] %v8399
        %8432 = vst [vmem:[%s258 + $0x38] sm:$0xf] %v8400
        %8433 = vst [vmem:[%s258 + $0x3c] sm:$0xff] %v8401
        %8434 = vst [vmem:[%s258 + $0x44] sm:$0xf] %v8402
        %8435 = vst [vmem:[%s258 + $0x48] sm:$0xff] %v8403
        %8436 = vst [vmem:[%s258 + $0x50] sm:$0xf] %v8404
        %8437 = vst [vmem:[%s258 + $0x54] sm:$0xff] %v8405
        %8438 = vst [vmem:[%s258 + $0x5c] sm:$0xf] %v8406
        %s8439 = sand.u32 %s120, 1
        %s8440 = scalar_lea.sflag [#allocation4], %s8439
        %s8441 = sand.u32 %s120, 1
        %s8442 = smul.addr %s8441, 96
        %s8443 = scalar_lea.vmem [#allocation10], %s8442
        // Predicated region
        $region53: #{tpu_custom_call.1} parent=35 // pred_check
          %p8444 = pneg %p130
        $region54: #{tpu_custom_call.1} parent=35 // pred_check_branch
          %8446 = sbr.rel (%p8444) target = $region56
        $region55: #{tpu_custom_call.1} parent=35 // pred_region
          %s8447 = smul.u32 8, %s23
          %s8449 = ssub.s32 1536, 1536
          %8450 = vsyncadd %s8440, %s8449
          %s8451 = smul.addr %s8447, 3
          %s8452 = smul.addr %s8451, 64
          %s8453 = scalar_lea.hbm %s4, %s8452
          %s8454 = sshll.u32 %s8443, 4
          %s8455 = int_to_ptr.vmem [resolvable:$true] %s8454
          %8460 = dma.vmem_to_hbm [thread:$0]  %s8455, 1536, %s8453, %s8440, 192, 192, 12
        $region56: #{tpu_custom_call.1} parent=35 // pred_fallthru
          _
      $region36: #{tpu_custom_call.1} parent=5 // pred_fallthru
        _
      %p8461 = scmp.le.s32.totalorder 2, %s18
      // Predicated region
      $region57: #{tpu_custom_call.1} parent=5 // pred_check
        %p8462 = pneg %p8461
      $region58: #{tpu_custom_call.1} parent=5 // pred_check_branch
        %8464 = sbr.rel (%p8462) target = $region60
      $region59: #{tpu_custom_call.1} parent=5 // pred_region
        %s8465 = ssub.s32 %s18, 2
        // Predicated region
        $region61: #{tpu_custom_call.1} parent=59 // pred_check
          %p8466 = pneg %p136
        $region62: #{tpu_custom_call.1} parent=59 // pred_check_branch
          %8468 = sbr.rel (%p8466) target = $region64
        $region63: #{tpu_custom_call.1} parent=59 // pred_region
          %s8469 = sand.u32 %s121, 1
          %s8470 = scalar_lea.sflag [#allocation4], %s8469
          %s8471 = sand.u32 %s121, 1
          %s8472 = smul.addr %s8471, 96
          %s8473 = scalar_lea.vmem [#allocation10], %s8472
          %8474 = dma.done %s8470, 1536
        $region64: #{tpu_custom_call.1} parent=59 // pred_fallthru
          _
      $region60: #{tpu_custom_call.1} parent=5 // pred_fallthru
        _
    $region6: #{tpu_custom_call.1} parent=1 // loop_footer
      %s22 = sadd.s32 1, %s18
    $region7: #{tpu_custom_call.1} parent=1 // loop_footer_branch
      %17 = sbr.rel target = $region3
    $region8: #{tpu_custom_call.1} parent=1 // loop_exit
      _
    %8475 = vsyncpa [#allocation3], 1
    %s8476 = scalar_lea.sflag [#allocation3], 1
    %8477 = vsyncpa %s8476, 1
    %8478 = vsyncpa [#allocation6], 1
    %8479 = vsyncpa [#allocation9], 1
    %8480 = vsyncpa [#allocation4], 1
    %s8481 = scalar_lea.sflag [#allocation4], 1
    %8482 = vsyncpa %s8481, 1

</llo_original>
